<compile_context>
chip_gen: v7x
topology: tpu7x:2x2x1
jax: 0.10.0
libtpu: 0.0.40
codegen_flags: <defaults>
</compile_context>

<pallas_src>
import jax
import jax.numpy as jnp
from jax.experimental import pallas as pl
from jax.experimental.pallas import tpu as pltpu

EPS = 1e-5  # BatchNorm eps


# ---------------------------------------------------------------------------
# Small helpers (host side)
# ---------------------------------------------------------------------------

def _round_up(x, m):
    return (x + m - 1) // m * m


def _full_spec(arr):
    nd = arr.ndim
    return pl.BlockSpec(arr.shape, lambda n, _nd=nd: (0,) * _nd)


def _interior_mask(H, W):
    """(P, 1) f32 mask: 1 on interior positions of the (H+2, W+2) padded plane."""
    m = jnp.zeros((H + 2, W + 2), jnp.float32).at[1:-1, 1:-1].set(1.0)
    return m.reshape((H + 2) * (W + 2), 1)


def _even_odd_select(W):
    """De, Do: (Wq, W) one-hot selectors for even / odd columns of a row."""
    Wq = W // 2
    rows = jnp.arange(Wq)
    de = jnp.zeros((Wq, W), jnp.float32).at[rows, 2 * rows].set(1.0)
    do = jnp.zeros((Wq, W), jnp.float32).at[rows, 2 * rows + 1].set(1.0)
    return de, do


# ---------------------------------------------------------------------------
# In-kernel helper: 3x3/s1/p1 conv + folded BN + ReLU as one K=9*cin GEMM
# ---------------------------------------------------------------------------

def _conv3x3_gemm(ext_ref, patch_ref, w, scale, bias, *, ci, P, Wp2, halo):
    """ext_ref: (Pe, ci) halo-extended zero-padded plane (VMEM scratch).
    patch_ref: (P, >= 9*ci) VMEM scratch used as the im2col patch.
    w: (9*ci, cout) GEMM weight, rows ordered (dy, dx, ci).
    Returns (P, cout) in padded-plane layout; border rows/cols are garbage and
    must be masked by the caller before further use."""
    for dy in range(3):
        for dx in range(3):
            t = dy * 3 + dx
            off = halo + (dy - 1) * Wp2 + (dx - 1)
            patch_ref[:, t * ci:(t + 1) * ci] = ext_ref[off:off + P, :]
    acc = jnp.dot(patch_ref[:, :9 * ci], w, preferred_element_type=jnp.float32)
    return jnp.maximum(acc * scale + bias, 0.0)


# ---------------------------------------------------------------------------
# Fused block kernels
# ---------------------------------------------------------------------------

def conv_pool_block(x_plane, p_a, p_b, *, H, W):
    """[Conv3x3+BN+ReLU] x2 + 2x2/2 max-pool (packed argmax), fused per image.

    x_plane: (N, (H+2)*(W+2), cin) zero-padded NHWC plane.
    Returns (pooled, idx), both (N, (H//2+2)*(W//2+2), cout) zero-padded
    planes; idx holds the packed 2x2 argmax (0..3 row-major) as float32."""
    N, Pin, cin = x_plane.shape
    w_a, s_a, b_a = p_a
    w_b, s_b, b_b = p_b
    cm = w_a.shape[1]
    co = w_b.shape[1]
    Wp2 = W + 2
    P = (H + 2) * Wp2
    assert Pin == P
    halo = _round_up(Wp2 + 1, 8)
    Pe = P + 2 * halo
    Hq, Wq = H // 2, W // 2
    Wq2 = Wq + 2
    Pq = (Hq + 2) * Wq2
    kmax = 9 * max(cin, cm)

    mask = _interior_mask(H, W)          # (P, 1)
    de, do = _even_odd_select(W)         # (Wq, W) each

    def kernel(x_ref, wa_ref, sa_ref, ba_ref, wb_ref, sb_ref, bb_ref,
               mask_ref, de_ref, do_ref, pooled_ref, idx_ref,
               ext_a, ext_b, patch):
        # ---- conv A: one contiguous fill of the halo-extended plane --------
        ext_a[0:halo, :] = jnp.zeros((halo, cin), jnp.float32)
        ext_a[halo + P:Pe, :] = jnp.zeros((halo, cin), jnp.float32)
        ext_a[halo:halo + P, :] = x_ref[0]
        a1 = _conv3x3_gemm(ext_a, patch, wa_ref[...], sa_ref[...], ba_ref[...],
                           ci=cin, P=P, Wp2=Wp2, halo=halo)

        # ---- conv B (zero a1's garbage border rows/cols via the mask) ------
        ext_b[0:halo, :] = jnp.zeros((halo, cm), jnp.float32)
        ext_b[halo + P:Pe, :] = jnp.zeros((halo, cm), jnp.float32)
        ext_b[halo:halo + P, :] = a1 * mask_ref[...]
        a2 = _conv3x3_gemm(ext_b, patch, wb_ref[...], sb_ref[...], bb_ref[...],
                           ci=cm, P=P, Wp2=Wp2, halo=halo)

        # ---- 2x2/2 max-pool + packed argmax (VPU + tiny selection GEMMs) ---
        pooled_ref[0] = jnp.zeros((Pq, co), jnp.float32)
        idx_ref[0] = jnp.zeros((Pq, co), jnp.float32)
        de_m = de_ref[...]
        do_m = do_ref[...]
        for yq in range(Hq):
            r0 = a2[(2 * yq + 1) * Wp2 + 1:(2 * yq + 1) * Wp2 + 1 + W, :]
            r1 = a2[(2 * yq + 2) * Wp2 + 1:(2 * yq + 2) * Wp2 + 1 + W, :]
            t00 = jnp.dot(de_m, r0, preferred_element_type=jnp.float32)
            t01 = jnp.dot(do_m, r0, preferred_element_type=jnp.float32)
            t10 = jnp.dot(de_m, r1, preferred_element_type=jnp.float32)
            t11 = jnp.dot(do_m, r1, preferred_element_type=jnp.float32)
            m0 = jnp.maximum(t00, t01)
            m1 = jnp.maximum(t10, t11)
            i0 = jnp.where(t01 > t00, 1.0, 0.0)
            i1 = jnp.where(t11 > t10, 1.0, 0.0)
            # first-occurrence tie-break in row-major window order.
            # TODO(synk): NaN inputs route to the first tap instead of
            #             propagating like PyTorch would.
            pk = jnp.where(m1 > m0, 2.0 + i1, i0)
            mx = jnp.maximum(m0, m1)
            base = (yq + 1) * Wq2 + 1
            pooled_ref[0, base:base + Wq, :] = mx
            idx_ref[0, base:base + Wq, :] = pk

    pooled, idx = pl.pallas_call(
        kernel,
        out_shape=(jax.ShapeDtypeStruct((N, Pq, co), jnp.float32),
                   jax.ShapeDtypeStruct((N, Pq, co), jnp.float32)),
        grid=(N,),
        in_specs=[
            pl.BlockSpec((1, P, cin), lambda n: (n, 0, 0)),
            _full_spec(w_a), _full_spec(s_a), _full_spec(b_a),
            _full_spec(w_b), _full_spec(s_b), _full_spec(b_b),
            _full_spec(mask), _full_spec(de), _full_spec(do),
        ],
        out_specs=(pl.BlockSpec((1, Pq, co), lambda n: (n, 0, 0)),
                   pl.BlockSpec((1, Pq, co), lambda n: (n, 0, 0))),
        scratch_shapes=[pltpu.VMEM((Pe, cin), jnp.float32),
                        pltpu.VMEM((Pe, cm), jnp.float32),
                        pltpu.VMEM((P, kmax), jnp.float32)],
        compiler_params=pltpu.CompilerParams(dimension_semantics=("parallel",)),
    )(x_plane, w_a, s_a, b_a, w_b, s_b, b_b, mask, de, do)
    return pooled, idx


def unpool_conv_block(v_plane, idx_plane, p_a, p_b, *, Hq, Wq):
    """max_unpool2d(2,2) + [Conv3x3+BN+ReLU] x2, fused per image.

    v_plane / idx_plane: (N, (Hq+2)*(Wq+2), cin) zero-padded planes (pooled
    values + packed argmax as float32).  Returns a zero-padded plane
    (N, (2Hq+2)*(2Wq+2), cout)."""
    N, Pin, cin = v_plane.shape
    w_a, s_a, b_a = p_a
    w_b, s_b, b_b = p_b
    cm = w_a.shape[1]
    co = w_b.shape[1]
    H, W = 2 * Hq, 2 * Wq
    Wp2 = W + 2
    Wq2 = Wq + 2
    P = (H + 2) * Wp2
    Pq = (Hq + 2) * Wq2
    assert Pin == Pq
    halo = _round_up(Wp2 + 1, 8)
    Pe = P + 2 * halo
    kmax = 9 * max(cin, cm)

    mask = _interior_mask(H, W)          # (P, 1)
    de, do = _even_odd_select(W)
    ue, uo = de.T, do.T                  # (W, Wq) scatter-to-even / odd columns

    def kernel(v_ref, i_ref, wa_ref, sa_ref, ba_ref, wb_ref, sb_ref, bb_ref,
               mask_ref, ue_ref, uo_ref, out_ref, ext_a, ext_b, patch):
        # ---- max_unpool2d: place pooled values at their argmax positions ---
        ext_a[...] = jnp.zeros((Pe, cin), jnp.float32)
        ue_m = ue_ref[...]
        uo_m = uo_ref[...]
        for yq in range(Hq):
            src = (yq + 1) * Wq2 + 1
            v_r = v_ref[0, src:src + Wq, :]       # (Wq, cin)
            i_r = i_ref[0, src:src + Wq, :]       # (Wq, cin), packed idx (f32)
            for ry in range(2):
                ev = jnp.where(i_r == float(2 * ry), v_r, 0.0)
                od = jnp.where(i_r == float(2 * ry + 1), v_r, 0.0)
                row = (jnp.dot(ue_m, ev, preferred_element_type=jnp.float32)
                       + jnp.dot(uo_m, od, preferred_element_type=jnp.float32))
                dst = halo + (2 * yq + ry + 1) * Wp2 + 1
                ext_a[dst:dst + W, :] = row

        # ---- deconv A (as equivalent conv) ----------------------------------
        a1 = _conv3x3_gemm(ext_a, patch, wa_ref[...], sa_ref[...], ba_ref[...],
                           ci=cin, P=P, Wp2=Wp2, halo=halo)

        # ---- deconv B --------------------------------------------------------
        ext_b[0:halo, :] = jnp.zeros((halo, cm), jnp.float32)
        ext_b[halo + P:Pe, :] = jnp.zeros((halo, cm), jnp.float32)
        ext_b[halo:halo + P, :] = a1 * mask_ref[...]
        a2 = _conv3x3_gemm(ext_b, patch, wb_ref[...], sb_ref[...], bb_ref[...],
                           ci=cm, P=P, Wp2=Wp2, halo=halo)

        # one full-plane store (borders zeroed via the mask)
        out_ref[0] = a2 * mask_ref[...]

    return pl.pallas_call(
        kernel,
        out_shape=jax.ShapeDtypeStruct((N, P, co), jnp.float32),
        grid=(N,),
        in_specs=[
            pl.BlockSpec((1, Pq, cin), lambda n: (n, 0, 0)),
            pl.BlockSpec((1, Pq, cin), lambda n: (n, 0, 0)),
            _full_spec(w_a), _full_spec(s_a), _full_spec(b_a),
            _full_spec(w_b), _full_spec(s_b), _full_spec(b_b),
            _full_spec(mask), _full_spec(ue), _full_spec(uo),
        ],
        out_specs=pl.BlockSpec((1, P, co), lambda n: (n, 0, 0)),
        scratch_shapes=[pltpu.VMEM((Pe, cin), jnp.float32),
                        pltpu.VMEM((Pe, cm), jnp.float32),
                        pltpu.VMEM((P, kmax), jnp.float32)],
        compiler_params=pltpu.CompilerParams(dimension_semantics=("parallel",)),
    )(v_plane, idx_plane, w_a, s_a, b_a, w_b, s_b, b_b, mask, ue, uo)


def mlp_head(x, w1, b1, w2, b2, w3, b3, *, training=False):
    """fc1->ReLU->fc2->ReLU->output_layer->(log_)softmax in one kernel.

    Everything stays resident in VMEM (no K-tiling: at these sizes the
    per-grid-step overhead dominates the matmuls).
    TODO(synk): K-tile fc1 with a VMEM accumulator (KT=256/512) and set
                vmem_limit_bytes explicitly once in_features*fc1_out is
                multi-MB (real STL10 head on v7x's 64 MiB VMEM)."""
    B, _ = x.shape
    O = w3.shape[1]

    def kernel(x_ref, w1_ref, b1_ref, w2_ref, b2_ref, w3_ref, b3_ref, o_ref):
        h = jnp.maximum(
            jnp.dot(x_ref[...], w1_ref[...], preferred_element_type=jnp.float32)
            + b1_ref[...], 0.0)
        h = jnp.maximum(
            jnp.dot(h, w2_ref[...], preferred_element_type=jnp.float32)
            + b2_ref[...], 0.0)
        logits = (jnp.dot(h, w3_ref[...], preferred_element_type=jnp.float32)
                  + b3_ref[...])
        z = logits - jnp.max(logits, axis=-1, keepdims=True)
        e = jnp.exp(z)
        s = jnp.sum(e, axis=-1, keepdims=True)
        if training:
            o_ref[...] = z - jnp.log(s)   # log_softmax (training mode)
        else:
            o_ref[...] = e / s            # softmax     (eval mode)

    return pl.pallas_call(
        kernel,
        out_shape=jax.ShapeDtypeStruct((B, O), jnp.float32),
    )(x, w1, b1, w2, b2, w3, b3)


# ---------------------------------------------------------------------------
# Parameter construction (deterministic, synthetic)
# ---------------------------------------------------------------------------

def _fold_bn(conv_b, gamma, beta, mean, var):
    # eval-mode BatchNorm folded into per-channel scale/bias applied post-conv
    scale = gamma / jnp.sqrt(var + EPS)
    bias = scale * (conv_b - mean) + beta
    return scale, bias


def _conv_layer_params(key, cin, cout):
    k = jax.random.split(key, 6)
    w = jax.random.uniform(k[0], (3, 3, cin, cout), jnp.float32, -0.1, 0.1)  # HWIO
    b = jax.random.uniform(k[1], (cout,), jnp.float32, -0.1, 0.1)
    gamma = 1.0 + 0.1 * jax.random.normal(k[2], (cout,), jnp.float32)
    beta = 0.1 * jax.random.normal(k[3], (cout,), jnp.float32)
    mean = 0.1 * jax.random.normal(k[4], (cout,), jnp.float32)
    var = jax.random.uniform(k[5], (cout,), jnp.float32, 0.5, 1.5)
    scale, bias = _fold_bn(b, gamma, beta, mean, var)
    # rows ordered (dy, dx, cin) -> matches the in-kernel patch assembly
    return (w.reshape(9 * cin, cout),
            scale.reshape(1, cout),
            bias.reshape(1, cout))


def _linear_params(key, fin, fout):
    k1, k2 = jax.random.split(key)
    limit = (6.0 / (fin + fout)) ** 0.5            # xavier_uniform, gain=1.0
    w = jax.random.uniform(k1, (fin, fout), jnp.float32, -limit, limit)
    b = jax.random.uniform(k2, (fout,), jnp.float32, -0.1, 0.1)
    return w, b


def init_params(key, cin, c1, c2, H, W, f1, f2, out):
    keys = jax.random.split(key, 11)
    in_features = H * W * c2 // 16
    return {
        "c1a": _conv_layer_params(keys[0], cin, c1),
        "c1b": _conv_layer_params(keys[1], c1, c1),
        "c2a": _conv_layer_params(keys[2], c1, c2),
        "c2b": _conv_layer_params(keys[3], c2, c2),
        # ConvTranspose2d(k=3,s=1,p=1) == Conv2d(k=3,s=1,p=1) with flipped /
        # channel-transposed weights; parameterized directly as the equivalent
        # conv.  TODO(synk): apply the flip/transpose if real PyTorch weights
        # are ever loaded.
        "d1a": _conv_layer_params(keys[4], c2, c1),
        "d1b": _conv_layer_params(keys[5], c1, c1),
        "d2a": _conv_layer_params(keys[6], c1, cin),
        "d2b": _conv_layer_params(keys[7], cin, cin),
        "fc1": _linear_params(keys[8], in_features, f1),
        "fc2": _linear_params(keys[9], f1, f2),
        "out": _linear_params(keys[10], f2, out),
    }


# ---------------------------------------------------------------------------
# Forward pass (mirrors STL10_Network.forward)
# ---------------------------------------------------------------------------

def stl10_forward(params, input_image_nchw, unsupervised=False, training=False):
    # TODO(synk): training-mode BatchNorm (batch statistics) is not implemented;
    #             eval-mode running stats are folded into the conv kernels.
    x = input_image_nchw.astype(jnp.float32)
    N, CIN, H, W = x.shape
    x_nhwc = jnp.transpose(x, (0, 2, 3, 1))
    x_plane = jnp.pad(x_nhwc, ((0, 0), (1, 1), (1, 1), (0, 0))).reshape(
        N, (H + 2) * (W + 2), CIN)

    pooled1, idx1 = conv_pool_block(x_plane, params["c1a"], params["c1b"],
                                    H=H, W=W)
    pooled2, idx2 = conv_pool_block(pooled1, params["c2a"], params["c2b"],
                                    H=H // 2, W=W // 2)
    rec1 = unpool_conv_block(pooled2, idx2, params["d1a"], params["d1b"],
                             Hq=H // 4, Wq=W // 4)
    rec2 = unpool_conv_block(rec1, idx1, params["d2a"], params["d2b"],
                             Hq=H // 2, Wq=W // 2)

    def to_nchw(plane, h, w):
        c = plane.shape[-1]
        img = plane.reshape(N, h + 2, w + 2, c)[:, 1:-1, 1:-1, :]
        return jnp.transpose(img, (0, 3, 1, 2))

    output1 = to_nchw(pooled1, H // 2, W // 2)
    output_rec1 = to_nchw(rec1, H // 2, W // 2)
    output_rec2 = to_nchw(rec2, H, W)
    recs = ((output_rec2, None), (output_rec1, output1))
    if unsupervised:
        return None, recs

    # output2.view(N, -1) in PyTorch flattens NCHW order
    flat = to_nchw(pooled2, H // 4, W // 4).reshape(N, -1)
    w1, b1 = params["fc1"]
    w2, b2 = params["fc2"]
    w3, b3 = params["out"]
    out = mlp_head(flat, w1, b1.reshape(1, -1), w2, b2.reshape(1, -1),
                   w3, b3.reshape(1, -1), training=training)
    return out, recs


# ---------------------------------------------------------------------------

if __name__ == "__main__":
    B, CIN, C1, C2, H, W = 2, 4, 8, 16, 16, 16
    F1, F2, OUT = 32, 32, 10

    key = jax.random.PRNGKey(0)
    pkey, xkey = jax.random.split(key)
    params = init_params(pkey, CIN, C1, C2, H, W, F1, F2, OUT)

    input_image = jax.random.normal(xkey, (B, CIN, H, W), jnp.float32)  # NCHW

    out, ((rec2, _none), (rec1, out1)) = stl10_forward(
        params, input_image, unsupervised=False, training=False)
    jax.block_until_ready((out, rec2, rec1, out1))

    assert out.shape == (B, OUT)
    assert rec2.shape == (B, CIN, H, W)
    assert rec1.shape == (B, C1, H // 2, W // 2)
    assert out1.shape == (B, C1, H // 2, W // 2)
    assert bool(jnp.all(jnp.isfinite(out)))
    assert jnp.allclose(jnp.sum(out, axis=1), 1.0, atol=1e-4)  # softmax rows

    print("KERNEL_OK")
</pallas_src>

<mosaic_0001>
module attributes {stable_mosaic.version = 11 : i64} {
  func.func @kernel(%arg0: i32, %arg1: memref<1x324x4xf32, #tpu.memory_space<vmem>>, %arg2: memref<36x8xf32, #tpu.memory_space<vmem>>, %arg3: memref<1x8xf32, #tpu.memory_space<vmem>>, %arg4: memref<1x8xf32, #tpu.memory_space<vmem>>, %arg5: memref<72x8xf32, #tpu.memory_space<vmem>>, %arg6: memref<1x8xf32, #tpu.memory_space<vmem>>, %arg7: memref<1x8xf32, #tpu.memory_space<vmem>>, %arg8: memref<324x1xf32, #tpu.memory_space<vmem>>, %arg9: memref<8x16xf32, #tpu.memory_space<vmem>>, %arg10: memref<8x16xf32, #tpu.memory_space<vmem>>, %arg11: memref<1x100x8xf32, #tpu.memory_space<vmem>>, %arg12: memref<1x100x8xf32, #tpu.memory_space<vmem>>, %arg13: memref<372x4xf32, #tpu.memory_space<vmem>>, %arg14: memref<372x8xf32, #tpu.memory_space<vmem>>, %arg15: memref<324x72xf32, #tpu.memory_space<vmem>>) attributes {dimension_semantics = [#tpu.dimension_semantics<parallel>], iteration_bounds = array<i64: 2>, scalar_prefetch = 0 : i64, scratch_operands = 3 : i64, tpu.core_type = #tpu.core_type<tc>, window_params = [{transform_indices = @transform_0, window_bounds = array<i64: 1, 324, 4>}, {pipeline_mode = #tpu.pipeline_mode<synchronous>, transform_indices = @transform_1, window_bounds = array<i64: 36, 8>}, {pipeline_mode = #tpu.pipeline_mode<synchronous>, transform_indices = @transform_2, window_bounds = array<i64: 1, 8>}, {pipeline_mode = #tpu.pipeline_mode<synchronous>, transform_indices = @transform_3, window_bounds = array<i64: 1, 8>}, {pipeline_mode = #tpu.pipeline_mode<synchronous>, transform_indices = @transform_4, window_bounds = array<i64: 72, 8>}, {pipeline_mode = #tpu.pipeline_mode<synchronous>, transform_indices = @transform_5, window_bounds = array<i64: 1, 8>}, {pipeline_mode = #tpu.pipeline_mode<synchronous>, transform_indices = @transform_6, window_bounds = array<i64: 1, 8>}, {pipeline_mode = #tpu.pipeline_mode<synchronous>, transform_indices = @transform_7, window_bounds = array<i64: 324, 1>}, {pipeline_mode = #tpu.pipeline_mode<synchronous>, transform_indices = @transform_8, window_bounds = array<i64: 8, 16>}, {pipeline_mode = #tpu.pipeline_mode<synchronous>, transform_indices = @transform_9, window_bounds = array<i64: 8, 16>}, {transform_indices = @transform_10, window_bounds = array<i64: 1, 100, 8>}, {transform_indices = @transform_11, window_bounds = array<i64: 1, 100, 8>}]} {
    %cst = arith.constant 0.000000e+00 : f32
    %0 = vector.broadcast %cst : f32 to vector<24x4xf32>
    %c0 = arith.constant 0 : index
    %c0_0 = arith.constant 0 : index
    %1 = vector.load %arg13[%c0, %c0_0] : memref<372x4xf32, #tpu.memory_space<vmem>>, vector<24x4xf32>
    tpu.vector_store %arg13[%c0, %c0_0], %0 {strides = array<i32>} : memref<372x4xf32, #tpu.memory_space<vmem>>, vector<24x4xf32>,
    %cst_1 = arith.constant 0.000000e+00 : f32
    %2 = vector.broadcast %cst_1 : f32 to vector<24x4xf32>
    %c348 = arith.constant 348 : index
    %c0_2 = arith.constant 0 : index
    %3 = vector.load %arg13[%c348, %c0_2] : memref<372x4xf32, #tpu.memory_space<vmem>>, vector<24x4xf32>
    tpu.vector_store %arg13[%c348, %c0_2], %2 {strides = array<i32>} : memref<372x4xf32, #tpu.memory_space<vmem>>, vector<24x4xf32>,
    %c0_3 = arith.constant 0 : index
    %c0_4 = arith.constant 0 : index
    %c0_5 = arith.constant 0 : index
    %4 = vector.load %arg1[%c0_3, %c0_4, %c0_5] : memref<1x324x4xf32, #tpu.memory_space<vmem>>, vector<1x324x4xf32>
    %5 = vector.shape_cast %4 : vector<1x324x4xf32> to vector<324x4xf32>
    %c24 = arith.constant 24 : index
    %c0_6 = arith.constant 0 : index
    %6 = vector.load %arg13[%c24, %c0_6] : memref<372x4xf32, #tpu.memory_space<vmem>>, vector<324x4xf32>
    tpu.vector_store %arg13[%c24, %c0_6], %5 {strides = array<i32>} : memref<372x4xf32, #tpu.memory_space<vmem>>, vector<324x4xf32>,
    %c0_7 = arith.constant 0 : index
    %c0_8 = arith.constant 0 : index
    %7 = vector.load %arg2[%c0_7, %c0_8] : memref<36x8xf32, #tpu.memory_space<vmem>>, vector<36x8xf32>
    %c0_9 = arith.constant 0 : index
    %c0_10 = arith.constant 0 : index
    %8 = vector.load %arg3[%c0_9, %c0_10] : memref<1x8xf32, #tpu.memory_space<vmem>>, vector<1x8xf32>
    %c0_11 = arith.constant 0 : index
    %c0_12 = arith.constant 0 : index
    %9 = vector.load %arg4[%c0_11, %c0_12] : memref<1x8xf32, #tpu.memory_space<vmem>>, vector<1x8xf32>
    %c5 = arith.constant 5 : index
    %c0_13 = arith.constant 0 : index
    %10 = vector.load %arg13[%c5, %c0_13] : memref<372x4xf32, #tpu.memory_space<vmem>>, vector<324x4xf32>
    %c0_14 = arith.constant 0 : index
    %c0_15 = arith.constant 0 : index
    %11 = vector.load %arg15[%c0_14, %c0_15] : memref<324x72xf32, #tpu.memory_space<vmem>>, vector<324x4xf32>
    tpu.vector_store %arg15[%c0_14, %c0_15], %10 {strides = array<i32>} : memref<324x72xf32, #tpu.memory_space<vmem>>, vector<324x4xf32>,
    %c6 = arith.constant 6 : index
    %c0_16 = arith.constant 0 : index
    %12 = vector.load %arg13[%c6, %c0_16] : memref<372x4xf32, #tpu.memory_space<vmem>>, vector<324x4xf32>
    %c0_17 = arith.constant 0 : index
    %c4 = arith.constant 4 : index
    %13 = vector.load %arg15[%c0_17, %c4] : memref<324x72xf32, #tpu.memory_space<vmem>>, vector<324x4xf32>
    tpu.vector_store %arg15[%c0_17, %c4], %12 {strides = array<i32>} : memref<324x72xf32, #tpu.memory_space<vmem>>, vector<324x4xf32>,
    %c7 = arith.constant 7 : index
    %c0_18 = arith.constant 0 : index
    %14 = vector.load %arg13[%c7, %c0_18] : memref<372x4xf32, #tpu.memory_space<vmem>>, vector<324x4xf32>
    %c0_19 = arith.constant 0 : index
    %c8 = arith.constant 8 : index
    %15 = vector.load %arg15[%c0_19, %c8] : memref<324x72xf32, #tpu.memory_space<vmem>>, vector<324x4xf32>
    tpu.vector_store %arg15[%c0_19, %c8], %14 {strides = array<i32>} : memref<324x72xf32, #tpu.memory_space<vmem>>, vector<324x4xf32>,
    %c23 = arith.constant 23 : index
    %c0_20 = arith.constant 0 : index
    %16 = vector.load %arg13[%c23, %c0_20] : memref<372x4xf32, #tpu.memory_space<vmem>>, vector<324x4xf32>
    %c0_21 = arith.constant 0 : index
    %c12 = arith.constant 12 : index
    %17 = vector.load %arg15[%c0_21, %c12] : memref<324x72xf32, #tpu.memory_space<vmem>>, vector<324x4xf32>
    tpu.vector_store %arg15[%c0_21, %c12], %16 {strides = array<i32>} : memref<324x72xf32, #tpu.memory_space<vmem>>, vector<324x4xf32>,
    %c24_22 = arith.constant 24 : index
    %c0_23 = arith.constant 0 : index
    %18 = vector.load %arg13[%c24_22, %c0_23] : memref<372x4xf32, #tpu.memory_space<vmem>>, vector<324x4xf32>
    %c0_24 = arith.constant 0 : index
    %c16 = arith.constant 16 : index
    %19 = vector.load %arg15[%c0_24, %c16] : memref<324x72xf32, #tpu.memory_space<vmem>>, vector<324x4xf32>
    tpu.vector_store %arg15[%c0_24, %c16], %18 {strides = array<i32>} : memref<324x72xf32, #tpu.memory_space<vmem>>, vector<324x4xf32>,
    %c25 = arith.constant 25 : index
    %c0_25 = arith.constant 0 : index
    %20 = vector.load %arg13[%c25, %c0_25] : memref<372x4xf32, #tpu.memory_space<vmem>>, vector<324x4xf32>
    %c0_26 = arith.constant 0 : index
    %c20 = arith.constant 20 : index
    %21 = vector.load %arg15[%c0_26, %c20] : memref<324x72xf32, #tpu.memory_space<vmem>>, vector<324x4xf32>
    tpu.vector_store %arg15[%c0_26, %c20], %20 {strides = array<i32>} : memref<324x72xf32, #tpu.memory_space<vmem>>, vector<324x4xf32>,
    %c41 = arith.constant 41 : index
    %c0_27 = arith.constant 0 : index
    %22 = vector.load %arg13[%c41, %c0_27] : memref<372x4xf32, #tpu.memory_space<vmem>>, vector<324x4xf32>
    %c0_28 = arith.constant 0 : index
    %c24_29 = arith.constant 24 : index
    %23 = vector.load %arg15[%c0_28, %c24_29] : memref<324x72xf32, #tpu.memory_space<vmem>>, vector<324x4xf32>
    tpu.vector_store %arg15[%c0_28, %c24_29], %22 {strides = array<i32>} : memref<324x72xf32, #tpu.memory_space<vmem>>, vector<324x4xf32>,
    %c42 = arith.constant 42 : index
    %c0_30 = arith.constant 0 : index
    %24 = vector.load %arg13[%c42, %c0_30] : memref<372x4xf32, #tpu.memory_space<vmem>>, vector<324x4xf32>
    %c0_31 = arith.constant 0 : index
    %c28 = arith.constant 28 : index
    %25 = vector.load %arg15[%c0_31, %c28] : memref<324x72xf32, #tpu.memory_space<vmem>>, vector<324x4xf32>
    tpu.vector_store %arg15[%c0_31, %c28], %24 {strides = array<i32>} : memref<324x72xf32, #tpu.memory_space<vmem>>, vector<324x4xf32>,
    %c43 = arith.constant 43 : index
    %c0_32 = arith.constant 0 : index
    %26 = vector.load %arg13[%c43, %c0_32] : memref<372x4xf32, #tpu.memory_space<vmem>>, vector<324x4xf32>
    %c0_33 = arith.constant 0 : index
    %c32 = arith.constant 32 : index
    %27 = vector.load %arg15[%c0_33, %c32] : memref<324x72xf32, #tpu.memory_space<vmem>>, vector<324x4xf32>
    tpu.vector_store %arg15[%c0_33, %c32], %26 {strides = array<i32>} : memref<324x72xf32, #tpu.memory_space<vmem>>, vector<324x4xf32>,
    %c0_34 = arith.constant 0 : index
    %c0_35 = arith.constant 0 : index
    %28 = vector.load %arg15[%c0_34, %c0_35] : memref<324x72xf32, #tpu.memory_space<vmem>>, vector<324x36xf32>
    %cst_36 = arith.constant dense<0.000000e+00> : vector<324x8xf32>
    %29 = tpu.matmul %28, %7, %cst_36 {dimension_numbers = #tpu.dot_dimension_numbers<[1], [0], [0], [1], [0, 0, 1, 1], [], []>} : vector<324x36xf32>, vector<36x8xf32>, vector<324x8xf32> -> vector<324x8xf32>
    %30 = vector.broadcast %8 : vector<1x8xf32> to vector<324x8xf32>
    %31 = arith.mulf %29, %30 : vector<324x8xf32>
    %32 = vector.broadcast %9 : vector<1x8xf32> to vector<324x8xf32>
    %33 = arith.addf %31, %32 : vector<324x8xf32>
    %cst_37 = arith.constant 0.000000e+00 : f32
    %34 = vector.broadcast %cst_37 : f32 to vector<324x8xf32>
    %35 = arith.maximumf %33, %34 : vector<324x8xf32>
    %cst_38 = arith.constant 0.000000e+00 : f32
    %36 = vector.broadcast %cst_38 : f32 to vector<24x8xf32>
    %c0_39 = arith.constant 0 : index
    %c0_40 = arith.constant 0 : index
    %37 = vector.load %arg14[%c0_39, %c0_40] : memref<372x8xf32, #tpu.memory_space<vmem>>, vector<24x8xf32>
    tpu.vector_store %arg14[%c0_39, %c0_40], %36 {strides = array<i32>} : memref<372x8xf32, #tpu.memory_space<vmem>>, vector<24x8xf32>,
    %cst_41 = arith.constant 0.000000e+00 : f32
    %38 = vector.broadcast %cst_41 : f32 to vector<24x8xf32>
    %c348_42 = arith.constant 348 : index
    %c0_43 = arith.constant 0 : index
    %39 = vector.load %arg14[%c348_42, %c0_43] : memref<372x8xf32, #tpu.memory_space<vmem>>, vector<24x8xf32>
    tpu.vector_store %arg14[%c348_42, %c0_43], %38 {strides = array<i32>} : memref<372x8xf32, #tpu.memory_space<vmem>>, vector<24x8xf32>,
    %c0_44 = arith.constant 0 : index
    %c0_45 = arith.constant 0 : index
    %40 = vector.load %arg8[%c0_44, %c0_45] : memref<324x1xf32, #tpu.memory_space<vmem>>, vector<324x1xf32>
    %41 = vector.broadcast %40 : vector<324x1xf32> to vector<324x8xf32>
    %42 = arith.mulf %35, %41 : vector<324x8xf32>
    %c24_46 = arith.constant 24 : index
    %c0_47 = arith.constant 0 : index
    %43 = vector.load %arg14[%c24_46, %c0_47] : memref<372x8xf32, #tpu.memory_space<vmem>>, vector<324x8xf32>
    tpu.vector_store %arg14[%c24_46, %c0_47], %42 {strides = array<i32>} : memref<372x8xf32, #tpu.memory_space<vmem>>, vector<324x8xf32>,
    %c0_48 = arith.constant 0 : index
    %c0_49 = arith.constant 0 : index
    %44 = vector.load %arg5[%c0_48, %c0_49] : memref<72x8xf32, #tpu.memory_space<vmem>>, vector<72x8xf32>
    %c0_50 = arith.constant 0 : index
    %c0_51 = arith.constant 0 : index
    %45 = vector.load %arg6[%c0_50, %c0_51] : memref<1x8xf32, #tpu.memory_space<vmem>>, vector<1x8xf32>
    %c0_52 = arith.constant 0 : index
    %c0_53 = arith.constant 0 : index
    %46 = vector.load %arg7[%c0_52, %c0_53] : memref<1x8xf32, #tpu.memory_space<vmem>>, vector<1x8xf32>
    %c5_54 = arith.constant 5 : index
    %c0_55 = arith.constant 0 : index
    %47 = vector.load %arg14[%c5_54, %c0_55] : memref<372x8xf32, #tpu.memory_space<vmem>>, vector<324x8xf32>
    %c0_56 = arith.constant 0 : index
    %c0_57 = arith.constant 0 : index
    %48 = vector.load %arg15[%c0_56, %c0_57] : memref<324x72xf32, #tpu.memory_space<vmem>>, vector<324x8xf32>
    tpu.vector_store %arg15[%c0_56, %c0_57], %47 {strides = array<i32>} : memref<324x72xf32, #tpu.memory_space<vmem>>, vector<324x8xf32>,
    %c6_58 = arith.constant 6 : index
    %c0_59 = arith.constant 0 : index
    %49 = vector.load %arg14[%c6_58, %c0_59] : memref<372x8xf32, #tpu.memory_space<vmem>>, vector<324x8xf32>
    %c0_60 = arith.constant 0 : index
    %c8_61 = arith.constant 8 : index
    %50 = vector.load %arg15[%c0_60, %c8_61] : memref<324x72xf32, #tpu.memory_space<vmem>>, vector<324x8xf32>
    tpu.vector_store %arg15[%c0_60, %c8_61], %49 {strides = array<i32>} : memref<324x72xf32, #tpu.memory_space<vmem>>, vector<324x8xf32>,
    %c7_62 = arith.constant 7 : index
    %c0_63 = arith.constant 0 : index
    %51 = vector.load %arg14[%c7_62, %c0_63] : memref<372x8xf32, #tpu.memory_space<vmem>>, vector<324x8xf32>
    %c0_64 = arith.constant 0 : index
    %c16_65 = arith.constant 16 : index
    %52 = vector.load %arg15[%c0_64, %c16_65] : memref<324x72xf32, #tpu.memory_space<vmem>>, vector<324x8xf32>
    tpu.vector_store %arg15[%c0_64, %c16_65], %51 {strides = array<i32>} : memref<324x72xf32, #tpu.memory_space<vmem>>, vector<324x8xf32>,
    %c23_66 = arith.constant 23 : index
    %c0_67 = arith.constant 0 : index
    %53 = vector.load %arg14[%c23_66, %c0_67] : memref<372x8xf32, #tpu.memory_space<vmem>>, vector<324x8xf32>
    %c0_68 = arith.constant 0 : index
    %c24_69 = arith.constant 24 : index
    %54 = vector.load %arg15[%c0_68, %c24_69] : memref<324x72xf32, #tpu.memory_space<vmem>>, vector<324x8xf32>
    tpu.vector_store %arg15[%c0_68, %c24_69], %53 {strides = array<i32>} : memref<324x72xf32, #tpu.memory_space<vmem>>, vector<324x8xf32>,
    %c24_70 = arith.constant 24 : index
    %c0_71 = arith.constant 0 : index
    %55 = vector.load %arg14[%c24_70, %c0_71] : memref<372x8xf32, #tpu.memory_space<vmem>>, vector<324x8xf32>
    %c0_72 = arith.constant 0 : index
    %c32_73 = arith.constant 32 : index
    %56 = vector.load %arg15[%c0_72, %c32_73] : memref<324x72xf32, #tpu.memory_space<vmem>>, vector<324x8xf32>
    tpu.vector_store %arg15[%c0_72, %c32_73], %55 {strides = array<i32>} : memref<324x72xf32, #tpu.memory_space<vmem>>, vector<324x8xf32>,
    %c25_74 = arith.constant 25 : index
    %c0_75 = arith.constant 0 : index
    %57 = vector.load %arg14[%c25_74, %c0_75] : memref<372x8xf32, #tpu.memory_space<vmem>>, vector<324x8xf32>
    %c0_76 = arith.constant 0 : index
    %c40 = arith.constant 40 : index
    %58 = vector.load %arg15[%c0_76, %c40] : memref<324x72xf32, #tpu.memory_space<vmem>>, vector<324x8xf32>
    tpu.vector_store %arg15[%c0_76, %c40], %57 {strides = array<i32>} : memref<324x72xf32, #tpu.memory_space<vmem>>, vector<324x8xf32>,
    %c41_77 = arith.constant 41 : index
    %c0_78 = arith.constant 0 : index
    %59 = vector.load %arg14[%c41_77, %c0_78] : memref<372x8xf32, #tpu.memory_space<vmem>>, vector<324x8xf32>
    %c0_79 = arith.constant 0 : index
    %c48 = arith.constant 48 : index
    %60 = vector.load %arg15[%c0_79, %c48] : memref<324x72xf32, #tpu.memory_space<vmem>>, vector<324x8xf32>
    tpu.vector_store %arg15[%c0_79, %c48], %59 {strides = array<i32>} : memref<324x72xf32, #tpu.memory_space<vmem>>, vector<324x8xf32>,
    %c42_80 = arith.constant 42 : index
    %c0_81 = arith.constant 0 : index
    %61 = vector.load %arg14[%c42_80, %c0_81] : memref<372x8xf32, #tpu.memory_space<vmem>>, vector<324x8xf32>
    %c0_82 = arith.constant 0 : index
    %c56 = arith.constant 56 : index
    %62 = vector.load %arg15[%c0_82, %c56] : memref<324x72xf32, #tpu.memory_space<vmem>>, vector<324x8xf32>
    tpu.vector_store %arg15[%c0_82, %c56], %61 {strides = array<i32>} : memref<324x72xf32, #tpu.memory_space<vmem>>, vector<324x8xf32>,
    %c43_83 = arith.constant 43 : index
    %c0_84 = arith.constant 0 : index
    %63 = vector.load %arg14[%c43_83, %c0_84] : memref<372x8xf32, #tpu.memory_space<vmem>>, vector<324x8xf32>
    %c0_85 = arith.constant 0 : index
    %c64 = arith.constant 64 : index
    %64 = vector.load %arg15[%c0_85, %c64] : memref<324x72xf32, #tpu.memory_space<vmem>>, vector<324x8xf32>
    tpu.vector_store %arg15[%c0_85, %c64], %63 {strides = array<i32>} : memref<324x72xf32, #tpu.memory_space<vmem>>, vector<324x8xf32>,
    %c0_86 = arith.constant 0 : index
    %c0_87 = arith.constant 0 : index
    %65 = vector.load %arg15[%c0_86, %c0_87] : memref<324x72xf32, #tpu.memory_space<vmem>>, vector<324x72xf32>
    %cst_88 = arith.constant dense<0.000000e+00> : vector<324x8xf32>
    %66 = tpu.matmul %65, %44, %cst_88 {dimension_numbers = #tpu.dot_dimension_numbers<[1], [0], [0], [1], [0, 0, 1, 1], [], []>} : vector<324x72xf32>, vector<72x8xf32>, vector<324x8xf32> -> vector<324x8xf32>
    %67 = vector.broadcast %45 : vector<1x8xf32> to vector<324x8xf32>
    %68 = arith.mulf %66, %67 : vector<324x8xf32>
    %69 = vector.broadcast %46 : vector<1x8xf32> to vector<324x8xf32>
    %70 = arith.addf %68, %69 : vector<324x8xf32>
    %cst_89 = arith.constant 0.000000e+00 : f32
    %71 = vector.broadcast %cst_89 : f32 to vector<324x8xf32>
    %72 = arith.maximumf %70, %71 : vector<324x8xf32>
    %cst_90 = arith.constant 0.000000e+00 : f32
    %73 = vector.broadcast %cst_90 : f32 to vector<100x8xf32>
    %c0_91 = arith.constant 0 : index
    %c0_92 = arith.constant 0 : index
    %c0_93 = arith.constant 0 : index
    %74 = vector.load %arg11[%c0_91, %c0_92, %c0_93] : memref<1x100x8xf32, #tpu.memory_space<vmem>>, vector<1x100x8xf32>
    %75 = vector.shape_cast %74 : vector<1x100x8xf32> to vector<100x8xf32>
    %76 = vector.shape_cast %73 : vector<100x8xf32> to vector<1x100x8xf32>
    tpu.vector_store %arg11[%c0_91, %c0_92, %c0_93], %76 {strides = array<i32>} : memref<1x100x8xf32, #tpu.memory_space<vmem>>, vector<1x100x8xf32>,
    %cst_94 = arith.constant 0.000000e+00 : f32
    %77 = vector.broadcast %cst_94 : f32 to vector<100x8xf32>
    %c0_95 = arith.constant 0 : index
    %c0_96 = arith.constant 0 : index
    %c0_97 = arith.constant 0 : index
    %78 = vector.load %arg12[%c0_95, %c0_96, %c0_97] : memref<1x100x8xf32, #tpu.memory_space<vmem>>, vector<1x100x8xf32>
    %79 = vector.shape_cast %78 : vector<1x100x8xf32> to vector<100x8xf32>
    %80 = vector.shape_cast %77 : vector<100x8xf32> to vector<1x100x8xf32>
    tpu.vector_store %arg12[%c0_95, %c0_96, %c0_97], %80 {strides = array<i32>} : memref<1x100x8xf32, #tpu.memory_space<vmem>>, vector<1x100x8xf32>,
    %c0_98 = arith.constant 0 : index
    %c0_99 = arith.constant 0 : index
    %81 = vector.load %arg9[%c0_98, %c0_99] : memref<8x16xf32, #tpu.memory_space<vmem>>, vector<8x16xf32>
    %c0_100 = arith.constant 0 : index
    %c0_101 = arith.constant 0 : index
    %82 = vector.load %arg10[%c0_100, %c0_101] : memref<8x16xf32, #tpu.memory_space<vmem>>, vector<8x16xf32>
    %83 = vector.extract_strided_slice %72 {offsets = [19, 0], sizes = [16, 8], strides = [1, 1]} : vector<324x8xf32> to vector<16x8xf32>
    %84 = vector.extract_strided_slice %72 {offsets = [37, 0], sizes = [16, 8], strides = [1, 1]} : vector<324x8xf32> to vector<16x8xf32>
    %cst_102 = arith.constant dense<0.000000e+00> : vector<8x8xf32>
    %85 = tpu.matmul %81, %83, %cst_102 {dimension_numbers = #tpu.dot_dimension_numbers<[1], [0], [0], [1], [0, 0, 1, 1], [], []>} : vector<8x16xf32>, vector<16x8xf32>, vector<8x8xf32> -> vector<8x8xf32>
    %cst_103 = arith.constant dense<0.000000e+00> : vector<8x8xf32>
    %86 = tpu.matmul %82, %83, %cst_103 {dimension_numbers = #tpu.dot_dimension_numbers<[1], [0], [0], [1], [0, 0, 1, 1], [], []>} : vector<8x16xf32>, vector<16x8xf32>, vector<8x8xf32> -> vector<8x8xf32>
    %cst_104 = arith.constant dense<0.000000e+00> : vector<8x8xf32>
    %87 = tpu.matmul %81, %84, %cst_104 {dimension_numbers = #tpu.dot_dimension_numbers<[1], [0], [0], [1], [0, 0, 1, 1], [], []>} : vector<8x16xf32>, vector<16x8xf32>, vector<8x8xf32> -> vector<8x8xf32>
    %cst_105 = arith.constant dense<0.000000e+00> : vector<8x8xf32>
    %88 = tpu.matmul %82, %84, %cst_105 {dimension_numbers = #tpu.dot_dimension_numbers<[1], [0], [0], [1], [0, 0, 1, 1], [], []>} : vector<8x16xf32>, vector<16x8xf32>, vector<8x8xf32> -> vector<8x8xf32>
    %89 = arith.maximumf %85, %86 : vector<8x8xf32>
    %90 = arith.maximumf %87, %88 : vector<8x8xf32>
    %91 = arith.cmpf ogt, %86, %85 : vector<8x8xf32>
    %cst_106 = arith.constant 1.000000e+00 : f32
    %cst_107 = arith.constant 0.000000e+00 : f32
    %92 = vector.broadcast %cst_106 : f32 to vector<8x8xf32>
    %93 = vector.broadcast %cst_107 : f32 to vector<8x8xf32>
    %94 = arith.select %91, %92, %93 : vector<8x8xi1>, vector<8x8xf32>
    %95 = arith.cmpf ogt, %88, %87 : vector<8x8xf32>
    %cst_108 = arith.constant 1.000000e+00 : f32
    %cst_109 = arith.constant 0.000000e+00 : f32
    %96 = vector.broadcast %cst_108 : f32 to vector<8x8xf32>
    %97 = vector.broadcast %cst_109 : f32 to vector<8x8xf32>
    %98 = arith.select %95, %96, %97 : vector<8x8xi1>, vector<8x8xf32>
    %99 = arith.cmpf ogt, %90, %89 : vector<8x8xf32>
    %cst_110 = arith.constant 2.000000e+00 : f32
    %100 = vector.broadcast %cst_110 : f32 to vector<8x8xf32>
    %101 = arith.addf %100, %98 : vector<8x8xf32>
    %102 = arith.select %99, %101, %94 : vector<8x8xi1>, vector<8x8xf32>
    %103 = arith.maximumf %89, %90 : vector<8x8xf32>
    %c0_111 = arith.constant 0 : index
    %c11 = arith.constant 11 : index
    %c0_112 = arith.constant 0 : index
    %104 = vector.load %arg11[%c0_111, %c11, %c0_112] : memref<1x100x8xf32, #tpu.memory_space<vmem>>, vector<1x8x8xf32>
    %105 = vector.shape_cast %104 : vector<1x8x8xf32> to vector<8x8xf32>
    %106 = vector.shape_cast %103 : vector<8x8xf32> to vector<1x8x8xf32>
    tpu.vector_store %arg11[%c0_111, %c11, %c0_112], %106 {strides = array<i32>} : memref<1x100x8xf32, #tpu.memory_space<vmem>>, vector<1x8x8xf32>,
    %c0_113 = arith.constant 0 : index
    %c11_114 = arith.constant 11 : index
    %c0_115 = arith.constant 0 : index
    %107 = vector.load %arg12[%c0_113, %c11_114, %c0_115] : memref<1x100x8xf32, #tpu.memory_space<vmem>>, vector<1x8x8xf32>
    %108 = vector.shape_cast %107 : vector<1x8x8xf32> to vector<8x8xf32>
    %109 = vector.shape_cast %102 : vector<8x8xf32> to vector<1x8x8xf32>
    tpu.vector_store %arg12[%c0_113, %c11_114, %c0_115], %109 {strides = array<i32>} : memref<1x100x8xf32, #tpu.memory_space<vmem>>, vector<1x8x8xf32>,
    %110 = vector.extract_strided_slice %72 {offsets = [55, 0], sizes = [16, 8], strides = [1, 1]} : vector<324x8xf32> to vector<16x8xf32>
    %111 = vector.extract_strided_slice %72 {offsets = [73, 0], sizes = [16, 8], strides = [1, 1]} : vector<324x8xf32> to vector<16x8xf32>
    %cst_116 = arith.constant dense<0.000000e+00> : vector<8x8xf32>
    %112 = tpu.matmul %81, %110, %cst_116 {dimension_numbers = #tpu.dot_dimension_numbers<[1], [0], [0], [1], [0, 0, 1, 1], [], []>} : vector<8x16xf32>, vector<16x8xf32>, vector<8x8xf32> -> vector<8x8xf32>
    %cst_117 = arith.constant dense<0.000000e+00> : vector<8x8xf32>
    %113 = tpu.matmul %82, %110, %cst_117 {dimension_numbers = #tpu.dot_dimension_numbers<[1], [0], [0], [1], [0, 0, 1, 1], [], []>} : vector<8x16xf32>, vector<16x8xf32>, vector<8x8xf32> -> vector<8x8xf32>
    %cst_118 = arith.constant dense<0.000000e+00> : vector<8x8xf32>
    %114 = tpu.matmul %81, %111, %cst_118 {dimension_numbers = #tpu.dot_dimension_numbers<[1], [0], [0], [1], [0, 0, 1, 1], [], []>} : vector<8x16xf32>, vector<16x8xf32>, vector<8x8xf32> -> vector<8x8xf32>
    %cst_119 = arith.constant dense<0.000000e+00> : vector<8x8xf32>
    %115 = tpu.matmul %82, %111, %cst_119 {dimension_numbers = #tpu.dot_dimension_numbers<[1], [0], [0], [1], [0, 0, 1, 1], [], []>} : vector<8x16xf32>, vector<16x8xf32>, vector<8x8xf32> -> vector<8x8xf32>
    %116 = arith.maximumf %112, %113 : vector<8x8xf32>
    %117 = arith.maximumf %114, %115 : vector<8x8xf32>
    %118 = arith.cmpf ogt, %113, %112 : vector<8x8xf32>
    %cst_120 = arith.constant 1.000000e+00 : f32
    %cst_121 = arith.constant 0.000000e+00 : f32
    %119 = vector.broadcast %cst_120 : f32 to vector<8x8xf32>
    %120 = vector.broadcast %cst_121 : f32 to vector<8x8xf32>
    %121 = arith.select %118, %119, %120 : vector<8x8xi1>, vector<8x8xf32>
    %122 = arith.cmpf ogt, %115, %114 : vector<8x8xf32>
    %cst_122 = arith.constant 1.000000e+00 : f32
    %cst_123 = arith.constant 0.000000e+00 : f32
    %123 = vector.broadcast %cst_122 : f32 to vector<8x8xf32>
    %124 = vector.broadcast %cst_123 : f32 to vector<8x8xf32>
    %125 = arith.select %122, %123, %124 : vector<8x8xi1>, vector<8x8xf32>
    %126 = arith.cmpf ogt, %117, %116 : vector<8x8xf32>
    %cst_124 = arith.constant 2.000000e+00 : f32
    %127 = vector.broadcast %cst_124 : f32 to vector<8x8xf32>
    %128 = arith.addf %127, %125 : vector<8x8xf32>
    %129 = arith.select %126, %128, %121 : vector<8x8xi1>, vector<8x8xf32>
    %130 = arith.maximumf %116, %117 : vector<8x8xf32>
    %c0_125 = arith.constant 0 : index
    %c21 = arith.constant 21 : index
    %c0_126 = arith.constant 0 : index
    %131 = vector.load %arg11[%c0_125, %c21, %c0_126] : memref<1x100x8xf32, #tpu.memory_space<vmem>>, vector<1x8x8xf32>
    %132 = vector.shape_cast %131 : vector<1x8x8xf32> to vector<8x8xf32>
    %133 = vector.shape_cast %130 : vector<8x8xf32> to vector<1x8x8xf32>
    tpu.vector_store %arg11[%c0_125, %c21, %c0_126], %133 {strides = array<i32>} : memref<1x100x8xf32, #tpu.memory_space<vmem>>, vector<1x8x8xf32>,
    %c0_127 = arith.constant 0 : index
    %c21_128 = arith.constant 21 : index
    %c0_129 = arith.constant 0 : index
    %134 = vector.load %arg12[%c0_127, %c21_128, %c0_129] : memref<1x100x8xf32, #tpu.memory_space<vmem>>, vector<1x8x8xf32>
    %135 = vector.shape_cast %134 : vector<1x8x8xf32> to vector<8x8xf32>
    %136 = vector.shape_cast %129 : vector<8x8xf32> to vector<1x8x8xf32>
    tpu.vector_store %arg12[%c0_127, %c21_128, %c0_129], %136 {strides = array<i32>} : memref<1x100x8xf32, #tpu.memory_space<vmem>>, vector<1x8x8xf32>,
    %137 = vector.extract_strided_slice %72 {offsets = [91, 0], sizes = [16, 8], strides = [1, 1]} : vector<324x8xf32> to vector<16x8xf32>
    %138 = vector.extract_strided_slice %72 {offsets = [109, 0], sizes = [16, 8], strides = [1, 1]} : vector<324x8xf32> to vector<16x8xf32>
    %cst_130 = arith.constant dense<0.000000e+00> : vector<8x8xf32>
    %139 = tpu.matmul %81, %137, %cst_130 {dimension_numbers = #tpu.dot_dimension_numbers<[1], [0], [0], [1], [0, 0, 1, 1], [], []>} : vector<8x16xf32>, vector<16x8xf32>, vector<8x8xf32> -> vector<8x8xf32>
    %cst_131 = arith.constant dense<0.000000e+00> : vector<8x8xf32>
    %140 = tpu.matmul %82, %137, %cst_131 {dimension_numbers = #tpu.dot_dimension_numbers<[1], [0], [0], [1], [0, 0, 1, 1], [], []>} : vector<8x16xf32>, vector<16x8xf32>, vector<8x8xf32> -> vector<8x8xf32>
    %cst_132 = arith.constant dense<0.000000e+00> : vector<8x8xf32>
    %141 = tpu.matmul %81, %138, %cst_132 {dimension_numbers = #tpu.dot_dimension_numbers<[1], [0], [0], [1], [0, 0, 1, 1], [], []>} : vector<8x16xf32>, vector<16x8xf32>, vector<8x8xf32> -> vector<8x8xf32>
    %cst_133 = arith.constant dense<0.000000e+00> : vector<8x8xf32>
    %142 = tpu.matmul %82, %138, %cst_133 {dimension_numbers = #tpu.dot_dimension_numbers<[1], [0], [0], [1], [0, 0, 1, 1], [], []>} : vector<8x16xf32>, vector<16x8xf32>, vector<8x8xf32> -> vector<8x8xf32>
    %143 = arith.maximumf %139, %140 : vector<8x8xf32>
    %144 = arith.maximumf %141, %142 : vector<8x8xf32>
    %145 = arith.cmpf ogt, %140, %139 : vector<8x8xf32>
    %cst_134 = arith.constant 1.000000e+00 : f32
    %cst_135 = arith.constant 0.000000e+00 : f32
    %146 = vector.broadcast %cst_134 : f32 to vector<8x8xf32>
    %147 = vector.broadcast %cst_135 : f32 to vector<8x8xf32>
    %148 = arith.select %145, %146, %147 : vector<8x8xi1>, vector<8x8xf32>
    %149 = arith.cmpf ogt, %142, %141 : vector<8x8xf32>
    %cst_136 = arith.constant 1.000000e+00 : f32
    %cst_137 = arith.constant 0.000000e+00 : f32
    %150 = vector.broadcast %cst_136 : f32 to vector<8x8xf32>
    %151 = vector.broadcast %cst_137 : f32 to vector<8x8xf32>
    %152 = arith.select %149, %150, %151 : vector<8x8xi1>, vector<8x8xf32>
    %153 = arith.cmpf ogt, %144, %143 : vector<8x8xf32>
    %cst_138 = arith.constant 2.000000e+00 : f32
    %154 = vector.broadcast %cst_138 : f32 to vector<8x8xf32>
    %155 = arith.addf %154, %152 : vector<8x8xf32>
    %156 = arith.select %153, %155, %148 : vector<8x8xi1>, vector<8x8xf32>
    %157 = arith.maximumf %143, %144 : vector<8x8xf32>
    %c0_139 = arith.constant 0 : index
    %c31 = arith.constant 31 : index
    %c0_140 = arith.constant 0 : index
    %158 = vector.load %arg11[%c0_139, %c31, %c0_140] : memref<1x100x8xf32, #tpu.memory_space<vmem>>, vector<1x8x8xf32>
    %159 = vector.shape_cast %158 : vector<1x8x8xf32> to vector<8x8xf32>
    %160 = vector.shape_cast %157 : vector<8x8xf32> to vector<1x8x8xf32>
    tpu.vector_store %arg11[%c0_139, %c31, %c0_140], %160 {strides = array<i32>} : memref<1x100x8xf32, #tpu.memory_space<vmem>>, vector<1x8x8xf32>,
    %c0_141 = arith.constant 0 : index
    %c31_142 = arith.constant 31 : index
    %c0_143 = arith.constant 0 : index
    %161 = vector.load %arg12[%c0_141, %c31_142, %c0_143] : memref<1x100x8xf32, #tpu.memory_space<vmem>>, vector<1x8x8xf32>
    %162 = vector.shape_cast %161 : vector<1x8x8xf32> to vector<8x8xf32>
    %163 = vector.shape_cast %156 : vector<8x8xf32> to vector<1x8x8xf32>
    tpu.vector_store %arg12[%c0_141, %c31_142, %c0_143], %163 {strides = array<i32>} : memref<1x100x8xf32, #tpu.memory_space<vmem>>, vector<1x8x8xf32>,
    %164 = vector.extract_strided_slice %72 {offsets = [127, 0], sizes = [16, 8], strides = [1, 1]} : vector<324x8xf32> to vector<16x8xf32>
    %165 = vector.extract_strided_slice %72 {offsets = [145, 0], sizes = [16, 8], strides = [1, 1]} : vector<324x8xf32> to vector<16x8xf32>
    %cst_144 = arith.constant dense<0.000000e+00> : vector<8x8xf32>
    %166 = tpu.matmul %81, %164, %cst_144 {dimension_numbers = #tpu.dot_dimension_numbers<[1], [0], [0], [1], [0, 0, 1, 1], [], []>} : vector<8x16xf32>, vector<16x8xf32>, vector<8x8xf32> -> vector<8x8xf32>
    %cst_145 = arith.constant dense<0.000000e+00> : vector<8x8xf32>
    %167 = tpu.matmul %82, %164, %cst_145 {dimension_numbers = #tpu.dot_dimension_numbers<[1], [0], [0], [1], [0, 0, 1, 1], [], []>} : vector<8x16xf32>, vector<16x8xf32>, vector<8x8xf32> -> vector<8x8xf32>
    %cst_146 = arith.constant dense<0.000000e+00> : vector<8x8xf32>
    %168 = tpu.matmul %81, %165, %cst_146 {dimension_numbers = #tpu.dot_dimension_numbers<[1], [0], [0], [1], [0, 0, 1, 1], [], []>} : vector<8x16xf32>, vector<16x8xf32>, vector<8x8xf32> -> vector<8x8xf32>
    %cst_147 = arith.constant dense<0.000000e+00> : vector<8x8xf32>
    %169 = tpu.matmul %82, %165, %cst_147 {dimension_numbers = #tpu.dot_dimension_numbers<[1], [0], [0], [1], [0, 0, 1, 1], [], []>} : vector<8x16xf32>, vector<16x8xf32>, vector<8x8xf32> -> vector<8x8xf32>
    %170 = arith.maximumf %166, %167 : vector<8x8xf32>
    %171 = arith.maximumf %168, %169 : vector<8x8xf32>
    %172 = arith.cmpf ogt, %167, %166 : vector<8x8xf32>
    %cst_148 = arith.constant 1.000000e+00 : f32
    %cst_149 = arith.constant 0.000000e+00 : f32
    %173 = vector.broadcast %cst_148 : f32 to vector<8x8xf32>
    %174 = vector.broadcast %cst_149 : f32 to vector<8x8xf32>
    %175 = arith.select %172, %173, %174 : vector<8x8xi1>, vector<8x8xf32>
    %176 = arith.cmpf ogt, %169, %168 : vector<8x8xf32>
    %cst_150 = arith.constant 1.000000e+00 : f32
    %cst_151 = arith.constant 0.000000e+00 : f32
    %177 = vector.broadcast %cst_150 : f32 to vector<8x8xf32>
    %178 = vector.broadcast %cst_151 : f32 to vector<8x8xf32>
    %179 = arith.select %176, %177, %178 : vector<8x8xi1>, vector<8x8xf32>
    %180 = arith.cmpf ogt, %171, %170 : vector<8x8xf32>
    %cst_152 = arith.constant 2.000000e+00 : f32
    %181 = vector.broadcast %cst_152 : f32 to vector<8x8xf32>
    %182 = arith.addf %181, %179 : vector<8x8xf32>
    %183 = arith.select %180, %182, %175 : vector<8x8xi1>, vector<8x8xf32>
    %184 = arith.maximumf %170, %171 : vector<8x8xf32>
    %c0_153 = arith.constant 0 : index
    %c41_154 = arith.constant 41 : index
    %c0_155 = arith.constant 0 : index
    %185 = vector.load %arg11[%c0_153, %c41_154, %c0_155] : memref<1x100x8xf32, #tpu.memory_space<vmem>>, vector<1x8x8xf32>
    %186 = vector.shape_cast %185 : vector<1x8x8xf32> to vector<8x8xf32>
    %187 = vector.shape_cast %184 : vector<8x8xf32> to vector<1x8x8xf32>
    tpu.vector_store %arg11[%c0_153, %c41_154, %c0_155], %187 {strides = array<i32>} : memref<1x100x8xf32, #tpu.memory_space<vmem>>, vector<1x8x8xf32>,
    %c0_156 = arith.constant 0 : index
    %c41_157 = arith.constant 41 : index
    %c0_158 = arith.constant 0 : index
    %188 = vector.load %arg12[%c0_156, %c41_157, %c0_158] : memref<1x100x8xf32, #tpu.memory_space<vmem>>, vector<1x8x8xf32>
    %189 = vector.shape_cast %188 : vector<1x8x8xf32> to vector<8x8xf32>
    %190 = vector.shape_cast %183 : vector<8x8xf32> to vector<1x8x8xf32>
    tpu.vector_store %arg12[%c0_156, %c41_157, %c0_158], %190 {strides = array<i32>} : memref<1x100x8xf32, #tpu.memory_space<vmem>>, vector<1x8x8xf32>,
    %191 = vector.extract_strided_slice %72 {offsets = [163, 0], sizes = [16, 8], strides = [1, 1]} : vector<324x8xf32> to vector<16x8xf32>
    %192 = vector.extract_strided_slice %72 {offsets = [181, 0], sizes = [16, 8], strides = [1, 1]} : vector<324x8xf32> to vector<16x8xf32>
    %cst_159 = arith.constant dense<0.000000e+00> : vector<8x8xf32>
    %193 = tpu.matmul %81, %191, %cst_159 {dimension_numbers = #tpu.dot_dimension_numbers<[1], [0], [0], [1], [0, 0, 1, 1], [], []>} : vector<8x16xf32>, vector<16x8xf32>, vector<8x8xf32> -> vector<8x8xf32>
    %cst_160 = arith.constant dense<0.000000e+00> : vector<8x8xf32>
    %194 = tpu.matmul %82, %191, %cst_160 {dimension_numbers = #tpu.dot_dimension_numbers<[1], [0], [0], [1], [0, 0, 1, 1], [], []>} : vector<8x16xf32>, vector<16x8xf32>, vector<8x8xf32> -> vector<8x8xf32>
    %cst_161 = arith.constant dense<0.000000e+00> : vector<8x8xf32>
    %195 = tpu.matmul %81, %192, %cst_161 {dimension_numbers = #tpu.dot_dimension_numbers<[1], [0], [0], [1], [0, 0, 1, 1], [], []>} : vector<8x16xf32>, vector<16x8xf32>, vector<8x8xf32> -> vector<8x8xf32>
    %cst_162 = arith.constant dense<0.000000e+00> : vector<8x8xf32>
    %196 = tpu.matmul %82, %192, %cst_162 {dimension_numbers = #tpu.dot_dimension_numbers<[1], [0], [0], [1], [0, 0, 1, 1], [], []>} : vector<8x16xf32>, vector<16x8xf32>, vector<8x8xf32> -> vector<8x8xf32>
    %197 = arith.maximumf %193, %194 : vector<8x8xf32>
    %198 = arith.maximumf %195, %196 : vector<8x8xf32>
    %199 = arith.cmpf ogt, %194, %193 : vector<8x8xf32>
    %cst_163 = arith.constant 1.000000e+00 : f32
    %cst_164 = arith.constant 0.000000e+00 : f32
    %200 = vector.broadcast %cst_163 : f32 to vector<8x8xf32>
    %201 = vector.broadcast %cst_164 : f32 to vector<8x8xf32>
    %202 = arith.select %199, %200, %201 : vector<8x8xi1>, vector<8x8xf32>
    %203 = arith.cmpf ogt, %196, %195 : vector<8x8xf32>
    %cst_165 = arith.constant 1.000000e+00 : f32
    %cst_166 = arith.constant 0.000000e+00 : f32
    %204 = vector.broadcast %cst_165 : f32 to vector<8x8xf32>
    %205 = vector.broadcast %cst_166 : f32 to vector<8x8xf32>
    %206 = arith.select %203, %204, %205 : vector<8x8xi1>, vector<8x8xf32>
    %207 = arith.cmpf ogt, %198, %197 : vector<8x8xf32>
    %cst_167 = arith.constant 2.000000e+00 : f32
    %208 = vector.broadcast %cst_167 : f32 to vector<8x8xf32>
    %209 = arith.addf %208, %206 : vector<8x8xf32>
    %210 = arith.select %207, %209, %202 : vector<8x8xi1>, vector<8x8xf32>
    %211 = arith.maximumf %197, %198 : vector<8x8xf32>
    %c0_168 = arith.constant 0 : index
    %c51 = arith.constant 51 : index
    %c0_169 = arith.constant 0 : index
    %212 = vector.load %arg11[%c0_168, %c51, %c0_169] : memref<1x100x8xf32, #tpu.memory_space<vmem>>, vector<1x8x8xf32>
    %213 = vector.shape_cast %212 : vector<1x8x8xf32> to vector<8x8xf32>
    %214 = vector.shape_cast %211 : vector<8x8xf32> to vector<1x8x8xf32>
    tpu.vector_store %arg11[%c0_168, %c51, %c0_169], %214 {strides = array<i32>} : memref<1x100x8xf32, #tpu.memory_space<vmem>>, vector<1x8x8xf32>,
    %c0_170 = arith.constant 0 : index
    %c51_171 = arith.constant 51 : index
    %c0_172 = arith.constant 0 : index
    %215 = vector.load %arg12[%c0_170, %c51_171, %c0_172] : memref<1x100x8xf32, #tpu.memory_space<vmem>>, vector<1x8x8xf32>
    %216 = vector.shape_cast %215 : vector<1x8x8xf32> to vector<8x8xf32>
    %217 = vector.shape_cast %210 : vector<8x8xf32> to vector<1x8x8xf32>
    tpu.vector_store %arg12[%c0_170, %c51_171, %c0_172], %217 {strides = array<i32>} : memref<1x100x8xf32, #tpu.memory_space<vmem>>, vector<1x8x8xf32>,
    %218 = vector.extract_strided_slice %72 {offsets = [199, 0], sizes = [16, 8], strides = [1, 1]} : vector<324x8xf32> to vector<16x8xf32>
    %219 = vector.extract_strided_slice %72 {offsets = [217, 0], sizes = [16, 8], strides = [1, 1]} : vector<324x8xf32> to vector<16x8xf32>
    %cst_173 = arith.constant dense<0.000000e+00> : vector<8x8xf32>
    %220 = tpu.matmul %81, %218, %cst_173 {dimension_numbers = #tpu.dot_dimension_numbers<[1], [0], [0], [1], [0, 0, 1, 1], [], []>} : vector<8x16xf32>, vector<16x8xf32>, vector<8x8xf32> -> vector<8x8xf32>
    %cst_174 = arith.constant dense<0.000000e+00> : vector<8x8xf32>
    %221 = tpu.matmul %82, %218, %cst_174 {dimension_numbers = #tpu.dot_dimension_numbers<[1], [0], [0], [1], [0, 0, 1, 1], [], []>} : vector<8x16xf32>, vector<16x8xf32>, vector<8x8xf32> -> vector<8x8xf32>
    %cst_175 = arith.constant dense<0.000000e+00> : vector<8x8xf32>
    %222 = tpu.matmul %81, %219, %cst_175 {dimension_numbers = #tpu.dot_dimension_numbers<[1], [0], [0], [1], [0, 0, 1, 1], [], []>} : vector<8x16xf32>, vector<16x8xf32>, vector<8x8xf32> -> vector<8x8xf32>
    %cst_176 = arith.constant dense<0.000000e+00> : vector<8x8xf32>
    %223 = tpu.matmul %82, %219, %cst_176 {dimension_numbers = #tpu.dot_dimension_numbers<[1], [0], [0], [1], [0, 0, 1, 1], [], []>} : vector<8x16xf32>, vector<16x8xf32>, vector<8x8xf32> -> vector<8x8xf32>
    %224 = arith.maximumf %220, %221 : vector<8x8xf32>
    %225 = arith.maximumf %222, %223 : vector<8x8xf32>
    %226 = arith.cmpf ogt, %221, %220 : vector<8x8xf32>
    %cst_177 = arith.constant 1.000000e+00 : f32
    %cst_178 = arith.constant 0.000000e+00 : f32
    %227 = vector.broadcast %cst_177 : f32 to vector<8x8xf32>
    %228 = vector.broadcast %cst_178 : f32 to vector<8x8xf32>
    %229 = arith.select %226, %227, %228 : vector<8x8xi1>, vector<8x8xf32>
    %230 = arith.cmpf ogt, %223, %222 : vector<8x8xf32>
    %cst_179 = arith.constant 1.000000e+00 : f32
    %cst_180 = arith.constant 0.000000e+00 : f32
    %231 = vector.broadcast %cst_179 : f32 to vector<8x8xf32>
    %232 = vector.broadcast %cst_180 : f32 to vector<8x8xf32>
    %233 = arith.select %230, %231, %232 : vector<8x8xi1>, vector<8x8xf32>
    %234 = arith.cmpf ogt, %225, %224 : vector<8x8xf32>
    %cst_181 = arith.constant 2.000000e+00 : f32
    %235 = vector.broadcast %cst_181 : f32 to vector<8x8xf32>
    %236 = arith.addf %235, %233 : vector<8x8xf32>
    %237 = arith.select %234, %236, %229 : vector<8x8xi1>, vector<8x8xf32>
    %238 = arith.maximumf %224, %225 : vector<8x8xf32>
    %c0_182 = arith.constant 0 : index
    %c61 = arith.constant 61 : index
    %c0_183 = arith.constant 0 : index
    %239 = vector.load %arg11[%c0_182, %c61, %c0_183] : memref<1x100x8xf32, #tpu.memory_space<vmem>>, vector<1x8x8xf32>
    %240 = vector.shape_cast %239 : vector<1x8x8xf32> to vector<8x8xf32>
    %241 = vector.shape_cast %238 : vector<8x8xf32> to vector<1x8x8xf32>
    tpu.vector_store %arg11[%c0_182, %c61, %c0_183], %241 {strides = array<i32>} : memref<1x100x8xf32, #tpu.memory_space<vmem>>, vector<1x8x8xf32>,
    %c0_184 = arith.constant 0 : index
    %c61_185 = arith.constant 61 : index
    %c0_186 = arith.constant 0 : index
    %242 = vector.load %arg12[%c0_184, %c61_185, %c0_186] : memref<1x100x8xf32, #tpu.memory_space<vmem>>, vector<1x8x8xf32>
    %243 = vector.shape_cast %242 : vector<1x8x8xf32> to vector<8x8xf32>
    %244 = vector.shape_cast %237 : vector<8x8xf32> to vector<1x8x8xf32>
    tpu.vector_store %arg12[%c0_184, %c61_185, %c0_186], %244 {strides = array<i32>} : memref<1x100x8xf32, #tpu.memory_space<vmem>>, vector<1x8x8xf32>,
    %245 = vector.extract_strided_slice %72 {offsets = [235, 0], sizes = [16, 8], strides = [1, 1]} : vector<324x8xf32> to vector<16x8xf32>
    %246 = vector.extract_strided_slice %72 {offsets = [253, 0], sizes = [16, 8], strides = [1, 1]} : vector<324x8xf32> to vector<16x8xf32>
    %cst_187 = arith.constant dense<0.000000e+00> : vector<8x8xf32>
    %247 = tpu.matmul %81, %245, %cst_187 {dimension_numbers = #tpu.dot_dimension_numbers<[1], [0], [0], [1], [0, 0, 1, 1], [], []>} : vector<8x16xf32>, vector<16x8xf32>, vector<8x8xf32> -> vector<8x8xf32>
    %cst_188 = arith.constant dense<0.000000e+00> : vector<8x8xf32>
    %248 = tpu.matmul %82, %245, %cst_188 {dimension_numbers = #tpu.dot_dimension_numbers<[1], [0], [0], [1], [0, 0, 1, 1], [], []>} : vector<8x16xf32>, vector<16x8xf32>, vector<8x8xf32> -> vector<8x8xf32>
    %cst_189 = arith.constant dense<0.000000e+00> : vector<8x8xf32>
    %249 = tpu.matmul %81, %246, %cst_189 {dimension_numbers = #tpu.dot_dimension_numbers<[1], [0], [0], [1], [0, 0, 1, 1], [], []>} : vector<8x16xf32>, vector<16x8xf32>, vector<8x8xf32> -> vector<8x8xf32>
    %cst_190 = arith.constant dense<0.000000e+00> : vector<8x8xf32>
    %250 = tpu.matmul %82, %246, %cst_190 {dimension_numbers = #tpu.dot_dimension_numbers<[1], [0], [0], [1], [0, 0, 1, 1], [], []>} : vector<8x16xf32>, vector<16x8xf32>, vector<8x8xf32> -> vector<8x8xf32>
    %251 = arith.maximumf %247, %248 : vector<8x8xf32>
    %252 = arith.maximumf %249, %250 : vector<8x8xf32>
    %253 = arith.cmpf ogt, %248, %247 : vector<8x8xf32>
    %cst_191 = arith.constant 1.000000e+00 : f32
    %cst_192 = arith.constant 0.000000e+00 : f32
    %254 = vector.broadcast %cst_191 : f32 to vector<8x8xf32>
    %255 = vector.broadcast %cst_192 : f32 to vector<8x8xf32>
    %256 = arith.select %253, %254, %255 : vector<8x8xi1>, vector<8x8xf32>
    %257 = arith.cmpf ogt, %250, %249 : vector<8x8xf32>
    %cst_193 = arith.constant 1.000000e+00 : f32
    %cst_194 = arith.constant 0.000000e+00 : f32
    %258 = vector.broadcast %cst_193 : f32 to vector<8x8xf32>
    %259 = vector.broadcast %cst_194 : f32 to vector<8x8xf32>
    %260 = arith.select %257, %258, %259 : vector<8x8xi1>, vector<8x8xf32>
    %261 = arith.cmpf ogt, %252, %251 : vector<8x8xf32>
    %cst_195 = arith.constant 2.000000e+00 : f32
    %262 = vector.broadcast %cst_195 : f32 to vector<8x8xf32>
    %263 = arith.addf %262, %260 : vector<8x8xf32>
    %264 = arith.select %261, %263, %256 : vector<8x8xi1>, vector<8x8xf32>
    %265 = arith.maximumf %251, %252 : vector<8x8xf32>
    %c0_196 = arith.constant 0 : index
    %c71 = arith.constant 71 : index
    %c0_197 = arith.constant 0 : index
    %266 = vector.load %arg11[%c0_196, %c71, %c0_197] : memref<1x100x8xf32, #tpu.memory_space<vmem>>, vector<1x8x8xf32>
    %267 = vector.shape_cast %266 : vector<1x8x8xf32> to vector<8x8xf32>
    %268 = vector.shape_cast %265 : vector<8x8xf32> to vector<1x8x8xf32>
    tpu.vector_store %arg11[%c0_196, %c71, %c0_197], %268 {strides = array<i32>} : memref<1x100x8xf32, #tpu.memory_space<vmem>>, vector<1x8x8xf32>,
    %c0_198 = arith.constant 0 : index
    %c71_199 = arith.constant 71 : index
    %c0_200 = arith.constant 0 : index
    %269 = vector.load %arg12[%c0_198, %c71_199, %c0_200] : memref<1x100x8xf32, #tpu.memory_space<vmem>>, vector<1x8x8xf32>
    %270 = vector.shape_cast %269 : vector<1x8x8xf32> to vector<8x8xf32>
    %271 = vector.shape_cast %264 : vector<8x8xf32> to vector<1x8x8xf32>
    tpu.vector_store %arg12[%c0_198, %c71_199, %c0_200], %271 {strides = array<i32>} : memref<1x100x8xf32, #tpu.memory_space<vmem>>, vector<1x8x8xf32>,
    %272 = vector.extract_strided_slice %72 {offsets = [271, 0], sizes = [16, 8], strides = [1, 1]} : vector<324x8xf32> to vector<16x8xf32>
    %273 = vector.extract_strided_slice %72 {offsets = [289, 0], sizes = [16, 8], strides = [1, 1]} : vector<324x8xf32> to vector<16x8xf32>
    %cst_201 = arith.constant dense<0.000000e+00> : vector<8x8xf32>
    %274 = tpu.matmul %81, %272, %cst_201 {dimension_numbers = #tpu.dot_dimension_numbers<[1], [0], [0], [1], [0, 0, 1, 1], [], []>} : vector<8x16xf32>, vector<16x8xf32>, vector<8x8xf32> -> vector<8x8xf32>
    %cst_202 = arith.constant dense<0.000000e+00> : vector<8x8xf32>
    %275 = tpu.matmul %82, %272, %cst_202 {dimension_numbers = #tpu.dot_dimension_numbers<[1], [0], [0], [1], [0, 0, 1, 1], [], []>} : vector<8x16xf32>, vector<16x8xf32>, vector<8x8xf32> -> vector<8x8xf32>
    %cst_203 = arith.constant dense<0.000000e+00> : vector<8x8xf32>
    %276 = tpu.matmul %81, %273, %cst_203 {dimension_numbers = #tpu.dot_dimension_numbers<[1], [0], [0], [1], [0, 0, 1, 1], [], []>} : vector<8x16xf32>, vector<16x8xf32>, vector<8x8xf32> -> vector<8x8xf32>
    %cst_204 = arith.constant dense<0.000000e+00> : vector<8x8xf32>
    %277 = tpu.matmul %82, %273, %cst_204 {dimension_numbers = #tpu.dot_dimension_numbers<[1], [0], [0], [1], [0, 0, 1, 1], [], []>} : vector<8x16xf32>, vector<16x8xf32>, vector<8x8xf32> -> vector<8x8xf32>
    %278 = arith.maximumf %274, %275 : vector<8x8xf32>
    %279 = arith.maximumf %276, %277 : vector<8x8xf32>
    %280 = arith.cmpf ogt, %275, %274 : vector<8x8xf32>
    %cst_205 = arith.constant 1.000000e+00 : f32
    %cst_206 = arith.constant 0.000000e+00 : f32
    %281 = vector.broadcast %cst_205 : f32 to vector<8x8xf32>
    %282 = vector.broadcast %cst_206 : f32 to vector<8x8xf32>
    %283 = arith.select %280, %281, %282 : vector<8x8xi1>, vector<8x8xf32>
    %284 = arith.cmpf ogt, %277, %276 : vector<8x8xf32>
    %cst_207 = arith.constant 1.000000e+00 : f32
    %cst_208 = arith.constant 0.000000e+00 : f32
    %285 = vector.broadcast %cst_207 : f32 to vector<8x8xf32>
    %286 = vector.broadcast %cst_208 : f32 to vector<8x8xf32>
    %287 = arith.select %284, %285, %286 : vector<8x8xi1>, vector<8x8xf32>
    %288 = arith.cmpf ogt, %279, %278 : vector<8x8xf32>
    %cst_209 = arith.constant 2.000000e+00 : f32
    %289 = vector.broadcast %cst_209 : f32 to vector<8x8xf32>
    %290 = arith.addf %289, %287 : vector<8x8xf32>
    %291 = arith.select %288, %290, %283 : vector<8x8xi1>, vector<8x8xf32>
    %292 = arith.maximumf %278, %279 : vector<8x8xf32>
    %c0_210 = arith.constant 0 : index
    %c81 = arith.constant 81 : index
    %c0_211 = arith.constant 0 : index
    %293 = vector.load %arg11[%c0_210, %c81, %c0_211] : memref<1x100x8xf32, #tpu.memory_space<vmem>>, vector<1x8x8xf32>
    %294 = vector.shape_cast %293 : vector<1x8x8xf32> to vector<8x8xf32>
    %295 = vector.shape_cast %292 : vector<8x8xf32> to vector<1x8x8xf32>
    tpu.vector_store %arg11[%c0_210, %c81, %c0_211], %295 {strides = array<i32>} : memref<1x100x8xf32, #tpu.memory_space<vmem>>, vector<1x8x8xf32>,
    %c0_212 = arith.constant 0 : index
    %c81_213 = arith.constant 81 : index
    %c0_214 = arith.constant 0 : index
    %296 = vector.load %arg12[%c0_212, %c81_213, %c0_214] : memref<1x100x8xf32, #tpu.memory_space<vmem>>, vector<1x8x8xf32>
    %297 = vector.shape_cast %296 : vector<1x8x8xf32> to vector<8x8xf32>
    %298 = vector.shape_cast %291 : vector<8x8xf32> to vector<1x8x8xf32>
    tpu.vector_store %arg12[%c0_212, %c81_213, %c0_214], %298 {strides = array<i32>} : memref<1x100x8xf32, #tpu.memory_space<vmem>>, vector<1x8x8xf32>,
    return
  }
  func.func @transform_0(%arg0: i32) -> (i32, i32, i32) {
    %c0_i32 = arith.constant 0 : i32
    %c0_i32_0 = arith.constant 0 : i32
    %c0_i32_1 = arith.constant 0 : i32
    return %arg0, %c0_i32, %c0_i32_0 : i32, i32, i32
  }
  func.func @transform_1(%arg0: i32) -> (i32, i32) {
    %c0_i32 = arith.constant 0 : i32
    %c0_i32_0 = arith.constant 0 : i32
    %c0_i32_1 = arith.constant 0 : i32
    return %c0_i32, %c0_i32_0 : i32, i32
  }
  func.func @transform_2(%arg0: i32) -> (i32, i32) {
    %c0_i32 = arith.constant 0 : i32
    %c0_i32_0 = arith.constant 0 : i32
    %c0_i32_1 = arith.constant 0 : i32
    return %c0_i32, %c0_i32_0 : i32, i32
  }
  func.func @transform_3(%arg0: i32) -> (i32, i32) {
    %c0_i32 = arith.constant 0 : i32
    %c0_i32_0 = arith.constant 0 : i32
    %c0_i32_1 = arith.constant 0 : i32
    return %c0_i32, %c0_i32_0 : i32, i32
  }
  func.func @transform_4(%arg0: i32) -> (i32, i32) {
    %c0_i32 = arith.constant 0 : i32
    %c0_i32_0 = arith.constant 0 : i32
    %c0_i32_1 = arith.constant 0 : i32
    return %c0_i32, %c0_i32_0 : i32, i32
  }
  func.func @transform_5(%arg0: i32) -> (i32, i32) {
    %c0_i32 = arith.constant 0 : i32
    %c0_i32_0 = arith.constant 0 : i32
    %c0_i32_1 = arith.constant 0 : i32
    return %c0_i32, %c0_i32_0 : i32, i32
  }
  func.func @transform_6(%arg0: i32) -> (i32, i32) {
    %c0_i32 = arith.constant 0 : i32
    %c0_i32_0 = arith.constant 0 : i32
    %c0_i32_1 = arith.constant 0 : i32
    return %c0_i32, %c0_i32_0 : i32, i32
  }
  func.func @transform_7(%arg0: i32) -> (i32, i32) {
    %c0_i32 = arith.constant 0 : i32
    %c0_i32_0 = arith.constant 0 : i32
    %c0_i32_1 = arith.constant 0 : i32
    return %c0_i32, %c0_i32_0 : i32, i32
  }
  func.func @transform_8(%arg0: i32) -> (i32, i32) {
    %c0_i32 = arith.constant 0 : i32
    %c0_i32_0 = arith.constant 0 : i32
    %c0_i32_1 = arith.constant 0 : i32
    return %c0_i32, %c0_i32_0 : i32, i32
  }
  func.func @transform_9(%arg0: i32) -> (i32, i32) {
    %c0_i32 = arith.constant 0 : i32
    %c0_i32_0 = arith.constant 0 : i32
    %c0_i32_1 = arith.constant 0 : i32
    return %c0_i32, %c0_i32_0 : i32, i32
  }
  func.func @transform_10(%arg0: i32) -> (i32, i32, i32) {
    %c0_i32 = arith.constant 0 : i32
    %c0_i32_0 = arith.constant 0 : i32
    %c0_i32_1 = arith.constant 0 : i32
    return %arg0, %c0_i32, %c0_i32_0 : i32, i32, i32
  }
  func.func @transform_11(%arg0: i32) -> (i32, i32, i32) {
    %c0_i32 = arith.constant 0 : i32
    %c0_i32_0 = arith.constant 0 : i32
    %c0_i32_1 = arith.constant 0 : i32
    return %arg0, %c0_i32, %c0_i32_0 : i32, i32, i32
  }
}

</mosaic_0001>

<llo_original>
// kernel: tpu_custom_call.1
$region0: #{tpu_custom_call.1}
  #allocation0 [shape = 'u32[]', space=smem, size = 0x4, offset = 0x4, fixed_abs, tag = 'smem constant byte address 0x4 - core index']
  #allocation1 [shape = 'u32[144,128]{1,0:T(1,128)}', space=vmem, size = 0x12000, scoped, tag = 'internal scratch']
  #allocation2 [shape = 'f32[372,4]{1,0:T(8,128)}', space=vmem, size = 0x2f000, scoped, tag = 'scratch operand']
  #allocation3 [shape = 'f32[372,8]{1,0:T(8,128)}', space=vmem, size = 0x2f000, scoped, tag = 'scratch operand']
  #allocation4 [shape = 'f32[324,72]{1,0:T(8,128)}', space=vmem, size = 0x29000, scoped, tag = 'scratch operand']
  %s0 = inlined_call_operand.vmem [shape: f32[2,324,4], index: 0, kind: input, shape index: {}]
  %s1 = inlined_call_operand.vmem [shape: f32[36,8], index: 1, kind: input, shape index: {}]
  %s2 = inlined_call_operand.vmem [shape: f32[1,8], index: 2, kind: input, shape index: {}]
  %s3 = inlined_call_operand.vmem [shape: f32[1,8], index: 3, kind: input, shape index: {}]
  %s4 = inlined_call_operand.vmem [shape: f32[72,8], index: 4, kind: input, shape index: {}]
  %s5 = inlined_call_operand.vmem [shape: f32[1,8], index: 5, kind: input, shape index: {}]
  %s6 = inlined_call_operand.vmem [shape: f32[1,8], index: 6, kind: input, shape index: {}]
  %s7 = inlined_call_operand.vmem [shape: f32[324,1], index: 7, kind: input, shape index: {}]
  %s8 = inlined_call_operand.vmem [shape: f32[8,16], index: 8, kind: input, shape index: {}]
  %s9 = inlined_call_operand.vmem [shape: f32[8,16], index: 9, kind: input, shape index: {}]
  %s10 = inlined_call_operand.vmem [shape: f32[2,100,8], index: 10, kind: output, shape index: {0}]
  %s11 = inlined_call_operand.vmem [shape: f32[2,100,8], index: 11, kind: output, shape index: {1}]
  %12 = xla_tuple %s10, %s11
  %s13 = sld [smem:[#allocation0]]
  $region81: #{tpu_custom_call.1} parent=0
    _
  %s15 = ssub.s32 1, %s13
  %s16 = scalar_select 0, %s15, %s13
  loop: start=0, step=1, limit=4
  $region2: #{tpu_custom_call.1} parent=0 // loop_pre_header
    _
  $region3: #{tpu_custom_call.1} parent=0 // loop_header
    %s18 = sphi 0, %s22
    %p19 = scmp.ge.s32.totalorder %s18, 4
    %s28 = sphi 0, %s30
    %s31 = sphi 0, %s28
    %s32 = sphi 0, %s31
    %s48 = sphi 0, %s32
    %s52 = sphi 0, %s52
    %s54 = sphi 0, %s52
    %s55 = sphi 0, %s54
    %s69 = sphi 0, %s55
    %s73 = sphi 0, %s73
    %s75 = sphi 0, %s73
    %s76 = sphi 0, %s75
    %s90 = sphi 0, %s76
    %s94 = sphi 0, %s94
    %s96 = sphi 0, %s94
    %s97 = sphi 0, %s96
    %s111 = sphi 0, %s97
    %s115 = sphi 0, %s115
    %s117 = sphi 0, %s115
    %s118 = sphi 0, %s117
    %s132 = sphi 0, %s118
    %s136 = sphi 0, %s136
    %s138 = sphi 0, %s136
    %s139 = sphi 0, %s138
    %s153 = sphi 0, %s139
    %s157 = sphi 0, %s157
    %s159 = sphi 0, %s157
    %s160 = sphi 0, %s159
    %s174 = sphi 0, %s160
    %s178 = sphi 0, %s178
    %s180 = sphi 0, %s178
    %s181 = sphi 0, %s180
    %s195 = sphi 0, %s181
    %s199 = sphi 0, %s199
    %s201 = sphi 0, %s199
    %s202 = sphi 0, %s201
    %s216 = sphi 0, %s202
    %s220 = sphi 0, %s220
    %s222 = sphi 0, %s220
    %s223 = sphi 0, %s222
    %s237 = sphi 0, %s223
    %s243 = sphi 0, %s245
    %s246 = sphi 0, %s243
    %s247 = sphi 0, %s246
    %s263 = sphi 0, %s247
    %s269 = sphi 0, %s271
    %s272 = sphi 0, %s269
    %s273 = sphi 0, %s272
    %s289 = sphi 0, %s273
  $region4: #{tpu_custom_call.1} parent=0 // loop_header_branch
    %21 = sbr.rel (%p19) target = $region8
  $region5: #{tpu_custom_call.1} parent=0 // loop_body
    %s23 = ssub.s32 %s18, 1
    %s24 = ssub.s32 %s18, 2
    %s25 = sadd.s32 %s18, 1
    %s26 = ssub.s32 %s18, %s25
    %p27 = scmp.eq.s32.totalorder %s26, 0
    %s29 = sadd.s32 %s28, 1
    %s30 = scalar_select %p27, %s28, %s29
    %p33 = pneg %p27
    %p34 = scmp.eq.s32.totalorder %s18, 1
    %p35 = por %p33, %p34
    %p36 = scmp.ne.s32.totalorder %s28, %s31
    %p37 = scmp.eq.s32.totalorder %s18, 0
    %p38 = por %p36, %p37
    %p39 = scmp.ne.s32.totalorder %s28, %s31
    %p40 = scmp.eq.s32.totalorder %s23, 1
    %p41 = por %p39, %p40
    %p42 = scmp.ne.s32.totalorder %s31, %s32
    %p43 = scmp.eq.s32.totalorder %s23, 0
    %p44 = por %p42, %p43
    %p45 = scmp.ne.s32.totalorder %s31, %s32
    %p46 = scmp.eq.s32.totalorder %s24, 1
    %p47 = por %p45, %p46
    %p49 = scmp.ne.s32.totalorder %s32, %s48
    %p50 = scmp.eq.s32.totalorder %s24, 0
    %p51 = por %p49, %p50
    %s53 = sadd.s32 %s52, 1
    %p56 = scmp.eq.s32.totalorder %s18, 1
    %p57 = scmp.ne.s32.totalorder %s52, %s54
    %p58 = scmp.eq.s32.totalorder %s18, 0
    %p59 = por %p57, %p58
    %p60 = scmp.ne.s32.totalorder %s52, %s54
    %p61 = scmp.eq.s32.totalorder %s23, 1
    %p62 = por %p60, %p61
    %p63 = scmp.ne.s32.totalorder %s54, %s55
    %p64 = scmp.eq.s32.totalorder %s23, 0
    %p65 = por %p63, %p64
    %p66 = scmp.ne.s32.totalorder %s54, %s55
    %p67 = scmp.eq.s32.totalorder %s24, 1
    %p68 = por %p66, %p67
    %p70 = scmp.ne.s32.totalorder %s55, %s69
    %p71 = scmp.eq.s32.totalorder %s24, 0
    %p72 = por %p70, %p71
    %s74 = sadd.s32 %s73, 1
    %p77 = scmp.eq.s32.totalorder %s18, 1
    %p78 = scmp.ne.s32.totalorder %s73, %s75
    %p79 = scmp.eq.s32.totalorder %s18, 0
    %p80 = por %p78, %p79
    %p81 = scmp.ne.s32.totalorder %s73, %s75
    %p82 = scmp.eq.s32.totalorder %s23, 1
    %p83 = por %p81, %p82
    %p84 = scmp.ne.s32.totalorder %s75, %s76
    %p85 = scmp.eq.s32.totalorder %s23, 0
    %p86 = por %p84, %p85
    %p87 = scmp.ne.s32.totalorder %s75, %s76
    %p88 = scmp.eq.s32.totalorder %s24, 1
    %p89 = por %p87, %p88
    %p91 = scmp.ne.s32.totalorder %s76, %s90
    %p92 = scmp.eq.s32.totalorder %s24, 0
    %p93 = por %p91, %p92
    %s95 = sadd.s32 %s94, 1
    %p98 = scmp.eq.s32.totalorder %s18, 1
    %p99 = scmp.ne.s32.totalorder %s94, %s96
    %p100 = scmp.eq.s32.totalorder %s18, 0
    %p101 = por %p99, %p100
    %p102 = scmp.ne.s32.totalorder %s94, %s96
    %p103 = scmp.eq.s32.totalorder %s23, 1
    %p104 = por %p102, %p103
    %p105 = scmp.ne.s32.totalorder %s96, %s97
    %p106 = scmp.eq.s32.totalorder %s23, 0
    %p107 = por %p105, %p106
    %p108 = scmp.ne.s32.totalorder %s96, %s97
    %p109 = scmp.eq.s32.totalorder %s24, 1
    %p110 = por %p108, %p109
    %p112 = scmp.ne.s32.totalorder %s97, %s111
    %p113 = scmp.eq.s32.totalorder %s24, 0
    %p114 = por %p112, %p113
    %s116 = sadd.s32 %s115, 1
    %p119 = scmp.eq.s32.totalorder %s18, 1
    %p120 = scmp.ne.s32.totalorder %s115, %s117
    %p121 = scmp.eq.s32.totalorder %s18, 0
    %p122 = por %p120, %p121
    %p123 = scmp.ne.s32.totalorder %s115, %s117
    %p124 = scmp.eq.s32.totalorder %s23, 1
    %p125 = por %p123, %p124
    %p126 = scmp.ne.s32.totalorder %s117, %s118
    %p127 = scmp.eq.s32.totalorder %s23, 0
    %p128 = por %p126, %p127
    %p129 = scmp.ne.s32.totalorder %s117, %s118
    %p130 = scmp.eq.s32.totalorder %s24, 1
    %p131 = por %p129, %p130
    %p133 = scmp.ne.s32.totalorder %s118, %s132
    %p134 = scmp.eq.s32.totalorder %s24, 0
    %p135 = por %p133, %p134
    %s137 = sadd.s32 %s136, 1
    %p140 = scmp.eq.s32.totalorder %s18, 1
    %p141 = scmp.ne.s32.totalorder %s136, %s138
    %p142 = scmp.eq.s32.totalorder %s18, 0
    %p143 = por %p141, %p142
    %p144 = scmp.ne.s32.totalorder %s136, %s138
    %p145 = scmp.eq.s32.totalorder %s23, 1
    %p146 = por %p144, %p145
    %p147 = scmp.ne.s32.totalorder %s138, %s139
    %p148 = scmp.eq.s32.totalorder %s23, 0
    %p149 = por %p147, %p148
    %p150 = scmp.ne.s32.totalorder %s138, %s139
    %p151 = scmp.eq.s32.totalorder %s24, 1
    %p152 = por %p150, %p151
    %p154 = scmp.ne.s32.totalorder %s139, %s153
    %p155 = scmp.eq.s32.totalorder %s24, 0
    %p156 = por %p154, %p155
    %s158 = sadd.s32 %s157, 1
    %p161 = scmp.eq.s32.totalorder %s18, 1
    %p162 = scmp.ne.s32.totalorder %s157, %s159
    %p163 = scmp.eq.s32.totalorder %s18, 0
    %p164 = por %p162, %p163
    %p165 = scmp.ne.s32.totalorder %s157, %s159
    %p166 = scmp.eq.s32.totalorder %s23, 1
    %p167 = por %p165, %p166
    %p168 = scmp.ne.s32.totalorder %s159, %s160
    %p169 = scmp.eq.s32.totalorder %s23, 0
    %p170 = por %p168, %p169
    %p171 = scmp.ne.s32.totalorder %s159, %s160
    %p172 = scmp.eq.s32.totalorder %s24, 1
    %p173 = por %p171, %p172
    %p175 = scmp.ne.s32.totalorder %s160, %s174
    %p176 = scmp.eq.s32.totalorder %s24, 0
    %p177 = por %p175, %p176
    %s179 = sadd.s32 %s178, 1
    %p182 = scmp.eq.s32.totalorder %s18, 1
    %p183 = scmp.ne.s32.totalorder %s178, %s180
    %p184 = scmp.eq.s32.totalorder %s18, 0
    %p185 = por %p183, %p184
    %p186 = scmp.ne.s32.totalorder %s178, %s180
    %p187 = scmp.eq.s32.totalorder %s23, 1
    %p188 = por %p186, %p187
    %p189 = scmp.ne.s32.totalorder %s180, %s181
    %p190 = scmp.eq.s32.totalorder %s23, 0
    %p191 = por %p189, %p190
    %p192 = scmp.ne.s32.totalorder %s180, %s181
    %p193 = scmp.eq.s32.totalorder %s24, 1
    %p194 = por %p192, %p193
    %p196 = scmp.ne.s32.totalorder %s181, %s195
    %p197 = scmp.eq.s32.totalorder %s24, 0
    %p198 = por %p196, %p197
    %s200 = sadd.s32 %s199, 1
    %p203 = scmp.eq.s32.totalorder %s18, 1
    %p204 = scmp.ne.s32.totalorder %s199, %s201
    %p205 = scmp.eq.s32.totalorder %s18, 0
    %p206 = por %p204, %p205
    %p207 = scmp.ne.s32.totalorder %s199, %s201
    %p208 = scmp.eq.s32.totalorder %s23, 1
    %p209 = por %p207, %p208
    %p210 = scmp.ne.s32.totalorder %s201, %s202
    %p211 = scmp.eq.s32.totalorder %s23, 0
    %p212 = por %p210, %p211
    %p213 = scmp.ne.s32.totalorder %s201, %s202
    %p214 = scmp.eq.s32.totalorder %s24, 1
    %p215 = por %p213, %p214
    %p217 = scmp.ne.s32.totalorder %s202, %s216
    %p218 = scmp.eq.s32.totalorder %s24, 0
    %p219 = por %p217, %p218
    %s221 = sadd.s32 %s220, 1
    %p224 = scmp.eq.s32.totalorder %s18, 1
    %p225 = scmp.ne.s32.totalorder %s220, %s222
    %p226 = scmp.eq.s32.totalorder %s18, 0
    %p227 = por %p225, %p226
    %p228 = scmp.ne.s32.totalorder %s220, %s222
    %p229 = scmp.eq.s32.totalorder %s23, 1
    %p230 = por %p228, %p229
    %p231 = scmp.ne.s32.totalorder %s222, %s223
    %p232 = scmp.eq.s32.totalorder %s23, 0
    %p233 = por %p231, %p232
    %p234 = scmp.ne.s32.totalorder %s222, %s223
    %p235 = scmp.eq.s32.totalorder %s24, 1
    %p236 = por %p234, %p235
    %p238 = scmp.ne.s32.totalorder %s223, %s237
    %p239 = scmp.eq.s32.totalorder %s24, 0
    %p240 = por %p238, %p239
    %s241 = ssub.s32 %s18, %s25
    %p242 = scmp.eq.s32.totalorder %s241, 0
    %s244 = sadd.s32 %s243, 1
    %s245 = scalar_select %p242, %s243, %s244
    %p248 = pneg %p242
    %p249 = scmp.eq.s32.totalorder %s18, 1
    %p250 = por %p248, %p249
    %p251 = scmp.ne.s32.totalorder %s243, %s246
    %p252 = scmp.eq.s32.totalorder %s18, 0
    %p253 = por %p251, %p252
    %p254 = scmp.ne.s32.totalorder %s243, %s246
    %p255 = scmp.eq.s32.totalorder %s23, 1
    %p256 = por %p254, %p255
    %p257 = scmp.ne.s32.totalorder %s246, %s247
    %p258 = scmp.eq.s32.totalorder %s23, 0
    %p259 = por %p257, %p258
    %p260 = scmp.ne.s32.totalorder %s246, %s247
    %p261 = scmp.eq.s32.totalorder %s24, 1
    %p262 = por %p260, %p261
    %p264 = scmp.ne.s32.totalorder %s247, %s263
    %p265 = scmp.eq.s32.totalorder %s24, 0
    %p266 = por %p264, %p265
    %s267 = ssub.s32 %s18, %s25
    %p268 = scmp.eq.s32.totalorder %s267, 0
    %s270 = sadd.s32 %s269, 1
    %s271 = scalar_select %p268, %s269, %s270
    %p274 = pneg %p268
    %p275 = scmp.eq.s32.totalorder %s18, 1
    %p276 = por %p274, %p275
    %p277 = scmp.ne.s32.totalorder %s269, %s272
    %p278 = scmp.eq.s32.totalorder %s18, 0
    %p279 = por %p277, %p278
    %p280 = scmp.ne.s32.totalorder %s269, %s272
    %p281 = scmp.eq.s32.totalorder %s23, 1
    %p282 = por %p280, %p281
    %p283 = scmp.ne.s32.totalorder %s272, %s273
    %p284 = scmp.eq.s32.totalorder %s23, 0
    %p285 = por %p283, %p284
    %p286 = scmp.ne.s32.totalorder %s272, %s273
    %p287 = scmp.eq.s32.totalorder %s24, 1
    %p288 = por %p286, %p287
    %p290 = scmp.ne.s32.totalorder %s273, %s289
    %p291 = scmp.eq.s32.totalorder %s24, 0
    %p292 = por %p290, %p291
    %p293 = scmp.le.s32.totalorder 1, %s18
    %p294 = scmp.lt.s32.totalorder %s18, 3
    %p295 = pnand %p293, %p294
    %p296 = pneg %p295
    // Predicated region
    $region9: #{tpu_custom_call.1} parent=5 // pred_check
      _
    $region10: #{tpu_custom_call.1} parent=5 // pred_check_branch
      %298 = sbr.rel (%p295) target = $region12
    $region11: #{tpu_custom_call.1} parent=5 // pred_region
      %s299 = ssub.s32 %s18, 1
      // Predicated region
      $region13: #{tpu_custom_call.1} parent=11 // pred_check
        %p300 = pneg %p65
      $region14: #{tpu_custom_call.1} parent=11 // pred_check_branch
        %302 = sbr.rel (%p300) target = $region16
      $region15: #{tpu_custom_call.1} parent=11 // pred_region
        _
      $region16: #{tpu_custom_call.1} parent=11 // pred_fallthru
        _
      // Predicated region
      $region17: #{tpu_custom_call.1} parent=11 // pred_check
        %p303 = pneg %p86
      $region18: #{tpu_custom_call.1} parent=11 // pred_check_branch
        %305 = sbr.rel (%p303) target = $region20
      $region19: #{tpu_custom_call.1} parent=11 // pred_region
        _
      $region20: #{tpu_custom_call.1} parent=11 // pred_fallthru
        _
      // Predicated region
      $region21: #{tpu_custom_call.1} parent=11 // pred_check
        %p306 = pneg %p107
      $region22: #{tpu_custom_call.1} parent=11 // pred_check_branch
        %308 = sbr.rel (%p306) target = $region24
      $region23: #{tpu_custom_call.1} parent=11 // pred_region
        _
      $region24: #{tpu_custom_call.1} parent=11 // pred_fallthru
        _
      // Predicated region
      $region25: #{tpu_custom_call.1} parent=11 // pred_check
        %p309 = pneg %p128
      $region26: #{tpu_custom_call.1} parent=11 // pred_check_branch
        %311 = sbr.rel (%p309) target = $region28
      $region27: #{tpu_custom_call.1} parent=11 // pred_region
        _
      $region28: #{tpu_custom_call.1} parent=11 // pred_fallthru
        _
      // Predicated region
      $region29: #{tpu_custom_call.1} parent=11 // pred_check
        %p312 = pneg %p149
      $region30: #{tpu_custom_call.1} parent=11 // pred_check_branch
        %314 = sbr.rel (%p312) target = $region32
      $region31: #{tpu_custom_call.1} parent=11 // pred_region
        _
      $region32: #{tpu_custom_call.1} parent=11 // pred_fallthru
        _
      // Predicated region
      $region33: #{tpu_custom_call.1} parent=11 // pred_check
        %p315 = pneg %p170
      $region34: #{tpu_custom_call.1} parent=11 // pred_check_branch
        %317 = sbr.rel (%p315) target = $region36
      $region35: #{tpu_custom_call.1} parent=11 // pred_region
        _
      $region36: #{tpu_custom_call.1} parent=11 // pred_fallthru
        _
      // Predicated region
      $region37: #{tpu_custom_call.1} parent=11 // pred_check
        %p318 = pneg %p191
      $region38: #{tpu_custom_call.1} parent=11 // pred_check_branch
        %320 = sbr.rel (%p318) target = $region40
      $region39: #{tpu_custom_call.1} parent=11 // pred_region
        _
      $region40: #{tpu_custom_call.1} parent=11 // pred_fallthru
        _
      // Predicated region
      $region41: #{tpu_custom_call.1} parent=11 // pred_check
        %p321 = pneg %p212
      $region42: #{tpu_custom_call.1} parent=11 // pred_check_branch
        %323 = sbr.rel (%p321) target = $region44
      $region43: #{tpu_custom_call.1} parent=11 // pred_region
        _
      $region44: #{tpu_custom_call.1} parent=11 // pred_fallthru
        _
      // Predicated region
      $region45: #{tpu_custom_call.1} parent=11 // pred_check
        %p324 = pneg %p233
      $region46: #{tpu_custom_call.1} parent=11 // pred_check_branch
        %326 = sbr.rel (%p324) target = $region48
      $region47: #{tpu_custom_call.1} parent=11 // pred_region
        _
      $region48: #{tpu_custom_call.1} parent=11 // pred_fallthru
        _
    $region12: #{tpu_custom_call.1} parent=5 // pred_fallthru
      _
    %p327 = scmp.lt.s32.totalorder %s18, 2
    // Predicated region
    $region49: #{tpu_custom_call.1} parent=5 // pred_check
      %p328 = pneg %p327
    $region50: #{tpu_custom_call.1} parent=5 // pred_check_branch
      %330 = sbr.rel (%p328) target = $region52
    $region51: #{tpu_custom_call.1} parent=5 // pred_region
      // Predicated region
      $region53: #{tpu_custom_call.1} parent=51 // pred_check
        %p331 = pneg %p38
      $region54: #{tpu_custom_call.1} parent=51 // pred_check_branch
        %333 = sbr.rel (%p331) target = $region56
      $region55: #{tpu_custom_call.1} parent=51 // pred_region
        %p334 = scmp.lt.s32.totalorder %s18, 1
        %s335 = scalar_select %p334, %s18, 1
        %s336 = smul.addr %s335, 41
        %s337 = smul.addr %s336, 8
        %s338 = scalar_lea.vmem %s0, %s337
      $region56: #{tpu_custom_call.1} parent=51 // pred_fallthru
        _
    $region52: #{tpu_custom_call.1} parent=5 // pred_fallthru
      _
    %p339 = scmp.le.s32.totalorder 1, %s18
    %p340 = scmp.lt.s32.totalorder %s18, 3
    %p341 = pnand %p339, %p340
    %p342 = pneg %p341
    // Predicated region
    $region57: #{tpu_custom_call.1} parent=5 // pred_check
      _
    $region58: #{tpu_custom_call.1} parent=5 // pred_check_branch
      %344 = sbr.rel (%p341) target = $region60
    $region59: #{tpu_custom_call.1} parent=5 // pred_region
      %s345 = ssub.s32 %s18, 1
      %p346 = scmp.lt.s32.totalorder %s23, 1
      %s347 = scalar_select %p346, %s23, 1
      %s348 = smul.addr %s347, 41
      %s349 = smul.addr %s348, 8
      %s350 = scalar_lea.vmem %s0, %s349
      %p351 = pneg %p44
      %p352 = pneg %p41
      %p353 = pneg %p65
      %p354 = pneg %p62
      %p355 = pneg %p86
      %p356 = pneg %p83
      %p357 = pneg %p107
      %p358 = pneg %p104
      %p359 = pneg %p128
      %p360 = pneg %p125
      %p361 = pneg %p149
      %p362 = pneg %p146
      %p363 = pneg %p170
      %p364 = pneg %p167
      %p365 = pneg %p191
      %p366 = pneg %p188
      %p367 = pneg %p212
      %p368 = pneg %p209
      %p369 = pneg %p233
      %p370 = pneg %p230
      %p371 = pneg %p259
      %p372 = pneg %p256
      %p373 = scmp.lt.s32.totalorder %s23, 1
      %s374 = scalar_select %p373, %s23, 1
      %s375 = smul.addr %s374, 13
      %s376 = smul.addr %s375, 8
      %s377 = scalar_lea.vmem %s10, %s376
      %p378 = pneg %p285
      %p379 = pneg %p282
      %p380 = scmp.lt.s32.totalorder %s23, 1
      %s381 = scalar_select %p380, %s23, 1
      %s382 = smul.addr %s381, 13
      %s383 = smul.addr %s382, 8
      %s384 = scalar_lea.vmem %s11, %s383
      %p385 = scmp.lt.s32.totalorder %s23, 1
      %s386 = scalar_select %p385, %s23, 1
      %s387 = smul.addr %s386, 41
      %s388 = smul.addr %s387, 8
      %s389 = scalar_lea.vmem %s0, %s388
      %p390 = scmp.lt.s32.totalorder %s23, 1
      %s391 = scalar_select %p390, %s23, 1
      %s392 = smul.addr %s391, 13
      %s393 = smul.addr %s392, 8
      %s394 = scalar_lea.vmem %s10, %s393
      %p395 = scmp.lt.s32.totalorder %s23, 1
      %s396 = scalar_select %p395, %s23, 1
      %s397 = smul.addr %s396, 13
      %s398 = smul.addr %s397, 8
      %s399 = scalar_lea.vmem %s11, %s398
      %vm400 = vcmask 31744
      %401 = vst.msk [vmem:[#allocation2] sm:$0xff] %vm400, 0.0
      %402 = vst.msk [vmem:[#allocation2 + $0x8] sm:$0xff] %vm400, 0.0
      %403 = vst.msk [vmem:[#allocation2 + $0x10] sm:$0xff] %vm400, 0.0
      %404 = vst.msk [vmem:[#allocation2 + $0x15c] sm:$0xff] %vm400, 0.0
      %405 = vst.msk [vmem:[#allocation2 + $0x164] sm:$0xff] %vm400, 0.0
      %406 = vst.msk [vmem:[#allocation2 + $0x16c] sm:$0xff] %vm400, 0.0
      %v407 = vld [vmem:[%s389] sm:$0xff]
      %v408 = vld [vmem:[%s389 + $0x8] sm:$0xff]
      %v409 = vld [vmem:[%s389 + $0x10] sm:$0xff]
      %v410 = vld [vmem:[%s389 + $0x18] sm:$0xff]
      %v411 = vld [vmem:[%s389 + $0x20] sm:$0xff]
      %v412 = vld [vmem:[%s389 + $0x28] sm:$0xff]
      %v413 = vld [vmem:[%s389 + $0x30] sm:$0xff]
      %v414 = vld [vmem:[%s389 + $0x38] sm:$0xff]
      %v415 = vld [vmem:[%s389 + $0x40] sm:$0xff]
      %v416 = vld [vmem:[%s389 + $0x48] sm:$0xff]
      %v417 = vld [vmem:[%s389 + $0x50] sm:$0xff]
      %v418 = vld [vmem:[%s389 + $0x58] sm:$0xff]
      %v419 = vld [vmem:[%s389 + $0x60] sm:$0xff]
      %v420 = vld [vmem:[%s389 + $0x68] sm:$0xff]
      %v421 = vld [vmem:[%s389 + $0x70] sm:$0xff]
      %v422 = vld [vmem:[%s389 + $0x78] sm:$0xff]
      %v423 = vld [vmem:[%s389 + $0x80] sm:$0xff]
      %v424 = vld [vmem:[%s389 + $0x88] sm:$0xff]
      %v425 = vld [vmem:[%s389 + $0x90] sm:$0xff]
      %v426 = vld [vmem:[%s389 + $0x98] sm:$0xff]
      %v427 = vld [vmem:[%s389 + $0xa0] sm:$0xff]
      %v428 = vld [vmem:[%s389 + $0xa8] sm:$0xff]
      %v429 = vld [vmem:[%s389 + $0xb0] sm:$0xff]
      %v430 = vld [vmem:[%s389 + $0xb8] sm:$0xff]
      %v431 = vld [vmem:[%s389 + $0xc0] sm:$0xff]
      %v432 = vld [vmem:[%s389 + $0xc8] sm:$0xff]
      %v433 = vld [vmem:[%s389 + $0xd0] sm:$0xff]
      %v434 = vld [vmem:[%s389 + $0xd8] sm:$0xff]
      %v435 = vld [vmem:[%s389 + $0xe0] sm:$0xff]
      %v436 = vld [vmem:[%s389 + $0xe8] sm:$0xff]
      %v437 = vld [vmem:[%s389 + $0xf0] sm:$0xff]
      %v438 = vld [vmem:[%s389 + $0xf8] sm:$0xff]
      %v439 = vld [vmem:[%s389 + $0x100] sm:$0xff]
      %v440 = vld [vmem:[%s389 + $0x108] sm:$0xff]
      %v441 = vld [vmem:[%s389 + $0x110] sm:$0xff]
      %v442 = vld [vmem:[%s389 + $0x118] sm:$0xff]
      %v443 = vld [vmem:[%s389 + $0x120] sm:$0xff]
      %v444 = vld [vmem:[%s389 + $0x128] sm:$0xff]
      %v445 = vld [vmem:[%s389 + $0x130] sm:$0xff]
      %v446 = vld [vmem:[%s389 + $0x138] sm:$0xff]
      %v447 = vld [vmem:[%s389 + $0x140] sm:$0xf]
      %448 = vst.msk [vmem:[#allocation2 + $0x18] sm:$0xff] %vm400, %v407
      %449 = vst.msk [vmem:[#allocation2 + $0x20] sm:$0xff] %vm400, %v408
      %450 = vst.msk [vmem:[#allocation2 + $0x28] sm:$0xff] %vm400, %v409
      %451 = vst.msk [vmem:[#allocation2 + $0x30] sm:$0xff] %vm400, %v410
      %452 = vst.msk [vmem:[#allocation2 + $0x38] sm:$0xff] %vm400, %v411
      %453 = vst.msk [vmem:[#allocation2 + $0x40] sm:$0xff] %vm400, %v412
      %454 = vst.msk [vmem:[#allocation2 + $0x48] sm:$0xff] %vm400, %v413
      %455 = vst.msk [vmem:[#allocation2 + $0x50] sm:$0xff] %vm400, %v414
      %456 = vst.msk [vmem:[#allocation2 + $0x58] sm:$0xff] %vm400, %v415
      %457 = vst.msk [vmem:[#allocation2 + $0x60] sm:$0xff] %vm400, %v416
      %458 = vst.msk [vmem:[#allocation2 + $0x68] sm:$0xff] %vm400, %v417
      %459 = vst.msk [vmem:[#allocation2 + $0x70] sm:$0xff] %vm400, %v418
      %460 = vst.msk [vmem:[#allocation2 + $0x78] sm:$0xff] %vm400, %v419
      %461 = vst.msk [vmem:[#allocation2 + $0x80] sm:$0xff] %vm400, %v420
      %462 = vst.msk [vmem:[#allocation2 + $0x88] sm:$0xff] %vm400, %v421
      %463 = vst.msk [vmem:[#allocation2 + $0x90] sm:$0xff] %vm400, %v422
      %464 = vst.msk [vmem:[#allocation2 + $0x98] sm:$0xff] %vm400, %v423
      %465 = vst.msk [vmem:[#allocation2 + $0xa0] sm:$0xff] %vm400, %v424
      %466 = vst.msk [vmem:[#allocation2 + $0xa8] sm:$0xff] %vm400, %v425
      %467 = vst.msk [vmem:[#allocation2 + $0xb0] sm:$0xff] %vm400, %v426
      %468 = vst.msk [vmem:[#allocation2 + $0xb8] sm:$0xff] %vm400, %v427
      %469 = vst.msk [vmem:[#allocation2 + $0xc0] sm:$0xff] %vm400, %v428
      %470 = vst.msk [vmem:[#allocation2 + $0xc8] sm:$0xff] %vm400, %v429
      %471 = vst.msk [vmem:[#allocation2 + $0xd0] sm:$0xff] %vm400, %v430
      %472 = vst.msk [vmem:[#allocation2 + $0xd8] sm:$0xff] %vm400, %v431
      %473 = vst.msk [vmem:[#allocation2 + $0xe0] sm:$0xff] %vm400, %v432
      %474 = vst.msk [vmem:[#allocation2 + $0xe8] sm:$0xff] %vm400, %v433
      %475 = vst.msk [vmem:[#allocation2 + $0xf0] sm:$0xff] %vm400, %v434
      %476 = vst.msk [vmem:[#allocation2 + $0xf8] sm:$0xff] %vm400, %v435
      %477 = vst.msk [vmem:[#allocation2 + $0x100] sm:$0xff] %vm400, %v436
      %478 = vst.msk [vmem:[#allocation2 + $0x108] sm:$0xff] %vm400, %v437
      %479 = vst.msk [vmem:[#allocation2 + $0x110] sm:$0xff] %vm400, %v438
      %480 = vst.msk [vmem:[#allocation2 + $0x118] sm:$0xff] %vm400, %v439
      %481 = vst.msk [vmem:[#allocation2 + $0x120] sm:$0xff] %vm400, %v440
      %482 = vst.msk [vmem:[#allocation2 + $0x128] sm:$0xff] %vm400, %v441
      %483 = vst.msk [vmem:[#allocation2 + $0x130] sm:$0xff] %vm400, %v442
      %484 = vst.msk [vmem:[#allocation2 + $0x138] sm:$0xff] %vm400, %v443
      %485 = vst.msk [vmem:[#allocation2 + $0x140] sm:$0xff] %vm400, %v444
      %486 = vst.msk [vmem:[#allocation2 + $0x148] sm:$0xff] %vm400, %v445
      %487 = vst.msk [vmem:[#allocation2 + $0x150] sm:$0xff] %vm400, %v446
      %vm488 = vcmask 27648
      %489 = vst.msk [vmem:[#allocation2 + $0x158] sm:$0xf] %vm488, %v447
      %v490 = vld [vmem:[%s1] sm:$0xff]
      %v491 = vld [vmem:[%s1 + $0x8] sm:$0xff]
      %v492 = vld [vmem:[%s1 + $0x10] sm:$0xff]
      %v493 = vld [vmem:[%s1 + $0x18] sm:$0xff]
      %v494 = vld [vmem:[%s1 + $0x20] sm:$0xf]
      %v495 = vld [vmem:[%s2] sm:$0x1]
      %v496 = vld [vmem:[%s3] sm:$0x1]
      %v497 = vld [vmem:[#allocation2 + $0x5] sm:$0xff]
      %v498 = vld [vmem:[#allocation2 + $0xd] sm:$0xff]
      %v499 = vld [vmem:[#allocation2 + $0x15] sm:$0xff]
      %v500 = vld [vmem:[#allocation2 + $0x1d] sm:$0xff]
      %v501 = vld [vmem:[#allocation2 + $0x25] sm:$0xff]
      %v502 = vld [vmem:[#allocation2 + $0x2d] sm:$0xff]
      %v503 = vld [vmem:[#allocation2 + $0x35] sm:$0xff]
      %v504 = vld [vmem:[#allocation2 + $0x3d] sm:$0xff]
      %v505 = vld [vmem:[#allocation2 + $0x45] sm:$0xff]
      %v506 = vld [vmem:[#allocation2 + $0x4d] sm:$0xff]
      %v507 = vld [vmem:[#allocation2 + $0x55] sm:$0xff]
      %v508 = vld [vmem:[#allocation2 + $0x5d] sm:$0xff]
      %v509 = vld [vmem:[#allocation2 + $0x65] sm:$0xff]
      %v510 = vld [vmem:[#allocation2 + $0x6d] sm:$0xff]
      %v511 = vld [vmem:[#allocation2 + $0x75] sm:$0xff]
      %v512 = vld [vmem:[#allocation2 + $0x7d] sm:$0xff]
      %v513 = vld [vmem:[#allocation2 + $0x85] sm:$0xff]
      %v514 = vld [vmem:[#allocation2 + $0x8d] sm:$0xff]
      %v515 = vld [vmem:[#allocation2 + $0x95] sm:$0xff]
      %v516 = vld [vmem:[#allocation2 + $0x9d] sm:$0xff]
      %v517 = vld [vmem:[#allocation2 + $0xa5] sm:$0xff]
      %v518 = vld [vmem:[#allocation2 + $0xad] sm:$0xff]
      %v519 = vld [vmem:[#allocation2 + $0xb5] sm:$0xff]
      %v520 = vld [vmem:[#allocation2 + $0xbd] sm:$0xff]
      %v521 = vld [vmem:[#allocation2 + $0xc5] sm:$0xff]
      %v522 = vld [vmem:[#allocation2 + $0xcd] sm:$0xff]
      %v523 = vld [vmem:[#allocation2 + $0xd5] sm:$0xff]
      %v524 = vld [vmem:[#allocation2 + $0xdd] sm:$0xff]
      %v525 = vld [vmem:[#allocation2 + $0xe5] sm:$0xff]
      %v526 = vld [vmem:[#allocation2 + $0xed] sm:$0xff]
      %v527 = vld [vmem:[#allocation2 + $0xf5] sm:$0xff]
      %v528 = vld [vmem:[#allocation2 + $0xfd] sm:$0xff]
      %v529 = vld [vmem:[#allocation2 + $0x105] sm:$0xff]
      %v530 = vld [vmem:[#allocation2 + $0x10d] sm:$0xff]
      %v531 = vld [vmem:[#allocation2 + $0x115] sm:$0xff]
      %v532 = vld [vmem:[#allocation2 + $0x11d] sm:$0xff]
      %v533 = vld [vmem:[#allocation2 + $0x125] sm:$0xff]
      %v534 = vld [vmem:[#allocation2 + $0x12d] sm:$0xff]
      %v535 = vld [vmem:[#allocation2 + $0x135] sm:$0xff]
      %v536 = vld [vmem:[#allocation2 + $0x13d] sm:$0xff]
      %v537 = vld [vmem:[#allocation2 + $0x145] sm:$0xf]
      %538 = vst.msk [vmem:[#allocation4] sm:$0xff] %vm400, %v497
      %539 = vst.msk [vmem:[#allocation4 + $0x8] sm:$0xff] %vm400, %v498
      %540 = vst.msk [vmem:[#allocation4 + $0x10] sm:$0xff] %vm400, %v499
      %541 = vst.msk [vmem:[#allocation4 + $0x18] sm:$0xff] %vm400, %v500
      %542 = vst.msk [vmem:[#allocation4 + $0x20] sm:$0xff] %vm400, %v501
      %543 = vst.msk [vmem:[#allocation4 + $0x28] sm:$0xff] %vm400, %v502
      %544 = vst.msk [vmem:[#allocation4 + $0x30] sm:$0xff] %vm400, %v503
      %545 = vst.msk [vmem:[#allocation4 + $0x38] sm:$0xff] %vm400, %v504
      %546 = vst.msk [vmem:[#allocation4 + $0x40] sm:$0xff] %vm400, %v505
      %547 = vst.msk [vmem:[#allocation4 + $0x48] sm:$0xff] %vm400, %v506
      %548 = vst.msk [vmem:[#allocation4 + $0x50] sm:$0xff] %vm400, %v507
      %549 = vst.msk [vmem:[#allocation4 + $0x58] sm:$0xff] %vm400, %v508
      %550 = vst.msk [vmem:[#allocation4 + $0x60] sm:$0xff] %vm400, %v509
      %551 = vst.msk [vmem:[#allocation4 + $0x68] sm:$0xff] %vm400, %v510
      %552 = vst.msk [vmem:[#allocation4 + $0x70] sm:$0xff] %vm400, %v511
      %553 = vst.msk [vmem:[#allocation4 + $0x78] sm:$0xff] %vm400, %v512
      %554 = vst.msk [vmem:[#allocation4 + $0x80] sm:$0xff] %vm400, %v513
      %555 = vst.msk [vmem:[#allocation4 + $0x88] sm:$0xff] %vm400, %v514
      %556 = vst.msk [vmem:[#allocation4 + $0x90] sm:$0xff] %vm400, %v515
      %557 = vst.msk [vmem:[#allocation4 + $0x98] sm:$0xff] %vm400, %v516
      %558 = vst.msk [vmem:[#allocation4 + $0xa0] sm:$0xff] %vm400, %v517
      %559 = vst.msk [vmem:[#allocation4 + $0xa8] sm:$0xff] %vm400, %v518
      %560 = vst.msk [vmem:[#allocation4 + $0xb0] sm:$0xff] %vm400, %v519
      %561 = vst.msk [vmem:[#allocation4 + $0xb8] sm:$0xff] %vm400, %v520
      %562 = vst.msk [vmem:[#allocation4 + $0xc0] sm:$0xff] %vm400, %v521
      %563 = vst.msk [vmem:[#allocation4 + $0xc8] sm:$0xff] %vm400, %v522
      %564 = vst.msk [vmem:[#allocation4 + $0xd0] sm:$0xff] %vm400, %v523
      %565 = vst.msk [vmem:[#allocation4 + $0xd8] sm:$0xff] %vm400, %v524
      %566 = vst.msk [vmem:[#allocation4 + $0xe0] sm:$0xff] %vm400, %v525
      %567 = vst.msk [vmem:[#allocation4 + $0xe8] sm:$0xff] %vm400, %v526
      %568 = vst.msk [vmem:[#allocation4 + $0xf0] sm:$0xff] %vm400, %v527
      %569 = vst.msk [vmem:[#allocation4 + $0xf8] sm:$0xff] %vm400, %v528
      %570 = vst.msk [vmem:[#allocation4 + $0x100] sm:$0xff] %vm400, %v529
      %571 = vst.msk [vmem:[#allocation4 + $0x108] sm:$0xff] %vm400, %v530
      %572 = vst.msk [vmem:[#allocation4 + $0x110] sm:$0xff] %vm400, %v531
      %573 = vst.msk [vmem:[#allocation4 + $0x118] sm:$0xff] %vm400, %v532
      %574 = vst.msk [vmem:[#allocation4 + $0x120] sm:$0xff] %vm400, %v533
      %575 = vst.msk [vmem:[#allocation4 + $0x128] sm:$0xff] %vm400, %v534
      %576 = vst.msk [vmem:[#allocation4 + $0x130] sm:$0xff] %vm400, %v535
      %577 = vst.msk [vmem:[#allocation4 + $0x138] sm:$0xff] %vm400, %v536
      %578 = vst.msk [vmem:[#allocation4 + $0x140] sm:$0xf] %vm488, %v537
      %v579 = vld [vmem:[#allocation2 + $0x6] sm:$0xff]
      %v580 = vld [vmem:[#allocation2 + $0xe] sm:$0xff]
      %v581 = vld [vmem:[#allocation2 + $0x16] sm:$0xff]
      %v582 = vld [vmem:[#allocation2 + $0x1e] sm:$0xff]
      %v583 = vld [vmem:[#allocation2 + $0x26] sm:$0xff]
      %v584 = vld [vmem:[#allocation2 + $0x2e] sm:$0xff]
      %v585 = vld [vmem:[#allocation2 + $0x36] sm:$0xff]
      %v586 = vld [vmem:[#allocation2 + $0x3e] sm:$0xff]
      %v587 = vld [vmem:[#allocation2 + $0x46] sm:$0xff]
      %v588 = vld [vmem:[#allocation2 + $0x4e] sm:$0xff]
      %v589 = vld [vmem:[#allocation2 + $0x56] sm:$0xff]
      %v590 = vld [vmem:[#allocation2 + $0x5e] sm:$0xff]
      %v591 = vld [vmem:[#allocation2 + $0x66] sm:$0xff]
      %v592 = vld [vmem:[#allocation2 + $0x6e] sm:$0xff]
      %v593 = vld [vmem:[#allocation2 + $0x76] sm:$0xff]
      %v594 = vld [vmem:[#allocation2 + $0x7e] sm:$0xff]
      %v595 = vld [vmem:[#allocation2 + $0x86] sm:$0xff]
      %v596 = vld [vmem:[#allocation2 + $0x8e] sm:$0xff]
      %v597 = vld [vmem:[#allocation2 + $0x96] sm:$0xff]
      %v598 = vld [vmem:[#allocation2 + $0x9e] sm:$0xff]
      %v599 = vld [vmem:[#allocation2 + $0xa6] sm:$0xff]
      %v600 = vld [vmem:[#allocation2 + $0xae] sm:$0xff]
      %v601 = vld [vmem:[#allocation2 + $0xb6] sm:$0xff]
      %v602 = vld [vmem:[#allocation2 + $0xbe] sm:$0xff]
      %v603 = vld [vmem:[#allocation2 + $0xc6] sm:$0xff]
      %v604 = vld [vmem:[#allocation2 + $0xce] sm:$0xff]
      %v605 = vld [vmem:[#allocation2 + $0xd6] sm:$0xff]
      %v606 = vld [vmem:[#allocation2 + $0xde] sm:$0xff]
      %v607 = vld [vmem:[#allocation2 + $0xe6] sm:$0xff]
      %v608 = vld [vmem:[#allocation2 + $0xee] sm:$0xff]
      %v609 = vld [vmem:[#allocation2 + $0xf6] sm:$0xff]
      %v610 = vld [vmem:[#allocation2 + $0xfe] sm:$0xff]
      %v611 = vld [vmem:[#allocation2 + $0x106] sm:$0xff]
      %v612 = vld [vmem:[#allocation2 + $0x10e] sm:$0xff]
      %v613 = vld [vmem:[#allocation2 + $0x116] sm:$0xff]
      %v614 = vld [vmem:[#allocation2 + $0x11e] sm:$0xff]
      %v615 = vld [vmem:[#allocation2 + $0x126] sm:$0xff]
      %v616 = vld [vmem:[#allocation2 + $0x12e] sm:$0xff]
      %v617 = vld [vmem:[#allocation2 + $0x136] sm:$0xff]
      %v618 = vld [vmem:[#allocation2 + $0x13e] sm:$0xff]
      %v619 = vld [vmem:[#allocation2 + $0x146] sm:$0xf]
      %661 = vrot.lane.b32.xlu0 %v579, 4
      %v662 = vpop.permute.xlu0 %661
      %663 = vrot.lane.b32.xlu0 %v580, 4
      %v664 = vpop.permute.xlu0 %663
      %665 = vrot.lane.b32.xlu0 %v581, 4
      %v666 = vpop.permute.xlu0 %665
      %667 = vrot.lane.b32.xlu0 %v582, 4
      %v668 = vpop.permute.xlu0 %667
      %669 = vrot.lane.b32.xlu0 %v583, 4
      %v670 = vpop.permute.xlu0 %669
      %671 = vrot.lane.b32.xlu0 %v584, 4
      %v672 = vpop.permute.xlu0 %671
      %673 = vrot.lane.b32.xlu0 %v585, 4
      %v674 = vpop.permute.xlu0 %673
      %675 = vrot.lane.b32.xlu0 %v586, 4
      %v676 = vpop.permute.xlu0 %675
      %677 = vrot.lane.b32.xlu0 %v587, 4
      %v678 = vpop.permute.xlu0 %677
      %679 = vrot.lane.b32.xlu0 %v588, 4
      %v680 = vpop.permute.xlu0 %679
      %681 = vrot.lane.b32.xlu0 %v589, 4
      %v682 = vpop.permute.xlu0 %681
      %683 = vrot.lane.b32.xlu0 %v590, 4
      %v684 = vpop.permute.xlu0 %683
      %685 = vrot.lane.b32.xlu0 %v591, 4
      %v686 = vpop.permute.xlu0 %685
      %687 = vrot.lane.b32.xlu0 %v592, 4
      %v688 = vpop.permute.xlu0 %687
      %689 = vrot.lane.b32.xlu0 %v593, 4
      %v690 = vpop.permute.xlu0 %689
      %691 = vrot.lane.b32.xlu0 %v594, 4
      %v692 = vpop.permute.xlu0 %691
      %693 = vrot.lane.b32.xlu0 %v595, 4
      %v694 = vpop.permute.xlu0 %693
      %695 = vrot.lane.b32.xlu0 %v596, 4
      %v696 = vpop.permute.xlu0 %695
      %697 = vrot.lane.b32.xlu0 %v597, 4
      %v698 = vpop.permute.xlu0 %697
      %699 = vrot.lane.b32.xlu0 %v598, 4
      %v700 = vpop.permute.xlu0 %699
      %701 = vrot.lane.b32.xlu0 %v599, 4
      %v702 = vpop.permute.xlu0 %701
      %703 = vrot.lane.b32.xlu0 %v600, 4
      %v704 = vpop.permute.xlu0 %703
      %705 = vrot.lane.b32.xlu0 %v601, 4
      %v706 = vpop.permute.xlu0 %705
      %707 = vrot.lane.b32.xlu0 %v602, 4
      %v708 = vpop.permute.xlu0 %707
      %709 = vrot.lane.b32.xlu0 %v603, 4
      %v710 = vpop.permute.xlu0 %709
      %711 = vrot.lane.b32.xlu0 %v604, 4
      %v712 = vpop.permute.xlu0 %711
      %713 = vrot.lane.b32.xlu0 %v605, 4
      %v714 = vpop.permute.xlu0 %713
      %715 = vrot.lane.b32.xlu0 %v606, 4
      %v716 = vpop.permute.xlu0 %715
      %717 = vrot.lane.b32.xlu0 %v607, 4
      %v718 = vpop.permute.xlu0 %717
      %719 = vrot.lane.b32.xlu0 %v608, 4
      %v720 = vpop.permute.xlu0 %719
      %721 = vrot.lane.b32.xlu0 %v609, 4
      %v722 = vpop.permute.xlu0 %721
      %723 = vrot.lane.b32.xlu0 %v610, 4
      %v724 = vpop.permute.xlu0 %723
      %725 = vrot.lane.b32.xlu0 %v611, 4
      %v726 = vpop.permute.xlu0 %725
      %727 = vrot.lane.b32.xlu0 %v612, 4
      %v728 = vpop.permute.xlu0 %727
      %729 = vrot.lane.b32.xlu0 %v613, 4
      %v730 = vpop.permute.xlu0 %729
      %731 = vrot.lane.b32.xlu0 %v614, 4
      %v732 = vpop.permute.xlu0 %731
      %733 = vrot.lane.b32.xlu0 %v615, 4
      %v734 = vpop.permute.xlu0 %733
      %735 = vrot.lane.b32.xlu0 %v616, 4
      %v736 = vpop.permute.xlu0 %735
      %737 = vrot.lane.b32.xlu0 %v617, 4
      %v738 = vpop.permute.xlu0 %737
      %739 = vrot.lane.b32.xlu0 %v618, 4
      %v740 = vpop.permute.xlu0 %739
      %741 = vrot.lane.b32.xlu0 %v619, 4
      %v742 = vpop.permute.xlu0 %741
      %vm784 = vcmask 64544
      %785 = vst.msk [vmem:[#allocation4] sm:$0xff] %vm784, %v662
      %786 = vst.msk [vmem:[#allocation4 + $0x8] sm:$0xff] %vm784, %v664
      %787 = vst.msk [vmem:[#allocation4 + $0x10] sm:$0xff] %vm784, %v666
      %788 = vst.msk [vmem:[#allocation4 + $0x18] sm:$0xff] %vm784, %v668
      %789 = vst.msk [vmem:[#allocation4 + $0x20] sm:$0xff] %vm784, %v670
      %790 = vst.msk [vmem:[#allocation4 + $0x28] sm:$0xff] %vm784, %v672
      %791 = vst.msk [vmem:[#allocation4 + $0x30] sm:$0xff] %vm784, %v674
      %792 = vst.msk [vmem:[#allocation4 + $0x38] sm:$0xff] %vm784, %v676
      %793 = vst.msk [vmem:[#allocation4 + $0x40] sm:$0xff] %vm784, %v678
      %794 = vst.msk [vmem:[#allocation4 + $0x48] sm:$0xff] %vm784, %v680
      %795 = vst.msk [vmem:[#allocation4 + $0x50] sm:$0xff] %vm784, %v682
      %796 = vst.msk [vmem:[#allocation4 + $0x58] sm:$0xff] %vm784, %v684
      %797 = vst.msk [vmem:[#allocation4 + $0x60] sm:$0xff] %vm784, %v686
      %798 = vst.msk [vmem:[#allocation4 + $0x68] sm:$0xff] %vm784, %v688
      %799 = vst.msk [vmem:[#allocation4 + $0x70] sm:$0xff] %vm784, %v690
      %800 = vst.msk [vmem:[#allocation4 + $0x78] sm:$0xff] %vm784, %v692
      %801 = vst.msk [vmem:[#allocation4 + $0x80] sm:$0xff] %vm784, %v694
      %802 = vst.msk [vmem:[#allocation4 + $0x88] sm:$0xff] %vm784, %v696
      %803 = vst.msk [vmem:[#allocation4 + $0x90] sm:$0xff] %vm784, %v698
      %804 = vst.msk [vmem:[#allocation4 + $0x98] sm:$0xff] %vm784, %v700
      %805 = vst.msk [vmem:[#allocation4 + $0xa0] sm:$0xff] %vm784, %v702
      %806 = vst.msk [vmem:[#allocation4 + $0xa8] sm:$0xff] %vm784, %v704
      %807 = vst.msk [vmem:[#allocation4 + $0xb0] sm:$0xff] %vm784, %v706
      %808 = vst.msk [vmem:[#allocation4 + $0xb8] sm:$0xff] %vm784, %v708
      %809 = vst.msk [vmem:[#allocation4 + $0xc0] sm:$0xff] %vm784, %v710
      %810 = vst.msk [vmem:[#allocation4 + $0xc8] sm:$0xff] %vm784, %v712
      %811 = vst.msk [vmem:[#allocation4 + $0xd0] sm:$0xff] %vm784, %v714
      %812 = vst.msk [vmem:[#allocation4 + $0xd8] sm:$0xff] %vm784, %v716
      %813 = vst.msk [vmem:[#allocation4 + $0xe0] sm:$0xff] %vm784, %v718
      %814 = vst.msk [vmem:[#allocation4 + $0xe8] sm:$0xff] %vm784, %v720
      %815 = vst.msk [vmem:[#allocation4 + $0xf0] sm:$0xff] %vm784, %v722
      %816 = vst.msk [vmem:[#allocation4 + $0xf8] sm:$0xff] %vm784, %v724
      %817 = vst.msk [vmem:[#allocation4 + $0x100] sm:$0xff] %vm784, %v726
      %818 = vst.msk [vmem:[#allocation4 + $0x108] sm:$0xff] %vm784, %v728
      %819 = vst.msk [vmem:[#allocation4 + $0x110] sm:$0xff] %vm784, %v730
      %820 = vst.msk [vmem:[#allocation4 + $0x118] sm:$0xff] %vm784, %v732
      %821 = vst.msk [vmem:[#allocation4 + $0x120] sm:$0xff] %vm784, %v734
      %822 = vst.msk [vmem:[#allocation4 + $0x128] sm:$0xff] %vm784, %v736
      %823 = vst.msk [vmem:[#allocation4 + $0x130] sm:$0xff] %vm784, %v738
      %824 = vst.msk [vmem:[#allocation4 + $0x138] sm:$0xff] %vm784, %v740
      %vm825 = vcmask 60448
      %826 = vst.msk [vmem:[#allocation4 + $0x140] sm:$0xf] %vm825, %v742
      %v827 = vld [vmem:[#allocation2 + $0x7] sm:$0xff]
      %v828 = vld [vmem:[#allocation2 + $0xf] sm:$0xff]
      %v829 = vld [vmem:[#allocation2 + $0x17] sm:$0xff]
      %v830 = vld [vmem:[#allocation2 + $0x1f] sm:$0xff]
      %v831 = vld [vmem:[#allocation2 + $0x27] sm:$0xff]
      %v832 = vld [vmem:[#allocation2 + $0x2f] sm:$0xff]
      %v833 = vld [vmem:[#allocation2 + $0x37] sm:$0xff]
      %v834 = vld [vmem:[#allocation2 + $0x3f] sm:$0xff]
      %v835 = vld [vmem:[#allocation2 + $0x47] sm:$0xff]
      %v836 = vld [vmem:[#allocation2 + $0x4f] sm:$0xff]
      %v837 = vld [vmem:[#allocation2 + $0x57] sm:$0xff]
      %v838 = vld [vmem:[#allocation2 + $0x5f] sm:$0xff]
      %v839 = vld [vmem:[#allocation2 + $0x67] sm:$0xff]
      %v840 = vld [vmem:[#allocation2 + $0x6f] sm:$0xff]
      %v841 = vld [vmem:[#allocation2 + $0x77] sm:$0xff]
      %v842 = vld [vmem:[#allocation2 + $0x7f] sm:$0xff]
      %v843 = vld [vmem:[#allocation2 + $0x87] sm:$0xff]
      %v844 = vld [vmem:[#allocation2 + $0x8f] sm:$0xff]
      %v845 = vld [vmem:[#allocation2 + $0x97] sm:$0xff]
      %v846 = vld [vmem:[#allocation2 + $0x9f] sm:$0xff]
      %v847 = vld [vmem:[#allocation2 + $0xa7] sm:$0xff]
      %v848 = vld [vmem:[#allocation2 + $0xaf] sm:$0xff]
      %v849 = vld [vmem:[#allocation2 + $0xb7] sm:$0xff]
      %v850 = vld [vmem:[#allocation2 + $0xbf] sm:$0xff]
      %v851 = vld [vmem:[#allocation2 + $0xc7] sm:$0xff]
      %v852 = vld [vmem:[#allocation2 + $0xcf] sm:$0xff]
      %v853 = vld [vmem:[#allocation2 + $0xd7] sm:$0xff]
      %v854 = vld [vmem:[#allocation2 + $0xdf] sm:$0xff]
      %v855 = vld [vmem:[#allocation2 + $0xe7] sm:$0xff]
      %v856 = vld [vmem:[#allocation2 + $0xef] sm:$0xff]
      %v857 = vld [vmem:[#allocation2 + $0xf7] sm:$0xff]
      %v858 = vld [vmem:[#allocation2 + $0xff] sm:$0xff]
      %v859 = vld [vmem:[#allocation2 + $0x107] sm:$0xff]
      %v860 = vld [vmem:[#allocation2 + $0x10f] sm:$0xff]
      %v861 = vld [vmem:[#allocation2 + $0x117] sm:$0xff]
      %v862 = vld [vmem:[#allocation2 + $0x11f] sm:$0xff]
      %v863 = vld [vmem:[#allocation2 + $0x127] sm:$0xff]
      %v864 = vld [vmem:[#allocation2 + $0x12f] sm:$0xff]
      %v865 = vld [vmem:[#allocation2 + $0x137] sm:$0xff]
      %v866 = vld [vmem:[#allocation2 + $0x13f] sm:$0xff]
      %v867 = vld [vmem:[#allocation2 + $0x147] sm:$0xf]
      %909 = vrot.lane.b32.xlu0 %v827, 8
      %v910 = vpop.permute.xlu0 %909
      %911 = vrot.lane.b32.xlu0 %v828, 8
      %v912 = vpop.permute.xlu0 %911
      %913 = vrot.lane.b32.xlu0 %v829, 8
      %v914 = vpop.permute.xlu0 %913
      %915 = vrot.lane.b32.xlu0 %v830, 8
      %v916 = vpop.permute.xlu0 %915
      %917 = vrot.lane.b32.xlu0 %v831, 8
      %v918 = vpop.permute.xlu0 %917
      %919 = vrot.lane.b32.xlu0 %v832, 8
      %v920 = vpop.permute.xlu0 %919
      %921 = vrot.lane.b32.xlu0 %v833, 8
      %v922 = vpop.permute.xlu0 %921
      %923 = vrot.lane.b32.xlu0 %v834, 8
      %v924 = vpop.permute.xlu0 %923
      %925 = vrot.lane.b32.xlu0 %v835, 8
      %v926 = vpop.permute.xlu0 %925
      %927 = vrot.lane.b32.xlu0 %v836, 8
      %v928 = vpop.permute.xlu0 %927
      %929 = vrot.lane.b32.xlu0 %v837, 8
      %v930 = vpop.permute.xlu0 %929
      %931 = vrot.lane.b32.xlu0 %v838, 8
      %v932 = vpop.permute.xlu0 %931
      %933 = vrot.lane.b32.xlu0 %v839, 8
      %v934 = vpop.permute.xlu0 %933
      %935 = vrot.lane.b32.xlu0 %v840, 8
      %v936 = vpop.permute.xlu0 %935
      %937 = vrot.lane.b32.xlu0 %v841, 8
      %v938 = vpop.permute.xlu0 %937
      %939 = vrot.lane.b32.xlu0 %v842, 8
      %v940 = vpop.permute.xlu0 %939
      %941 = vrot.lane.b32.xlu0 %v843, 8
      %v942 = vpop.permute.xlu0 %941
      %943 = vrot.lane.b32.xlu0 %v844, 8
      %v944 = vpop.permute.xlu0 %943
      %945 = vrot.lane.b32.xlu0 %v845, 8
      %v946 = vpop.permute.xlu0 %945
      %947 = vrot.lane.b32.xlu0 %v846, 8
      %v948 = vpop.permute.xlu0 %947
      %949 = vrot.lane.b32.xlu0 %v847, 8
      %v950 = vpop.permute.xlu0 %949
      %951 = vrot.lane.b32.xlu0 %v848, 8
      %v952 = vpop.permute.xlu0 %951
      %953 = vrot.lane.b32.xlu0 %v849, 8
      %v954 = vpop.permute.xlu0 %953
      %955 = vrot.lane.b32.xlu0 %v850, 8
      %v956 = vpop.permute.xlu0 %955
      %957 = vrot.lane.b32.xlu0 %v851, 8
      %v958 = vpop.permute.xlu0 %957
      %959 = vrot.lane.b32.xlu0 %v852, 8
      %v960 = vpop.permute.xlu0 %959
      %961 = vrot.lane.b32.xlu0 %v853, 8
      %v962 = vpop.permute.xlu0 %961
      %963 = vrot.lane.b32.xlu0 %v854, 8
      %v964 = vpop.permute.xlu0 %963
      %965 = vrot.lane.b32.xlu0 %v855, 8
      %v966 = vpop.permute.xlu0 %965
      %967 = vrot.lane.b32.xlu0 %v856, 8
      %v968 = vpop.permute.xlu0 %967
      %969 = vrot.lane.b32.xlu0 %v857, 8
      %v970 = vpop.permute.xlu0 %969
      %971 = vrot.lane.b32.xlu0 %v858, 8
      %v972 = vpop.permute.xlu0 %971
      %973 = vrot.lane.b32.xlu0 %v859, 8
      %v974 = vpop.permute.xlu0 %973
      %975 = vrot.lane.b32.xlu0 %v860, 8
      %v976 = vpop.permute.xlu0 %975
      %977 = vrot.lane.b32.xlu0 %v861, 8
      %v978 = vpop.permute.xlu0 %977
      %979 = vrot.lane.b32.xlu0 %v862, 8
      %v980 = vpop.permute.xlu0 %979
      %981 = vrot.lane.b32.xlu0 %v863, 8
      %v982 = vpop.permute.xlu0 %981
      %983 = vrot.lane.b32.xlu0 %v864, 8
      %v984 = vpop.permute.xlu0 %983
      %985 = vrot.lane.b32.xlu0 %v865, 8
      %v986 = vpop.permute.xlu0 %985
      %987 = vrot.lane.b32.xlu0 %v866, 8
      %v988 = vpop.permute.xlu0 %987
      %989 = vrot.lane.b32.xlu0 %v867, 8
      %v990 = vpop.permute.xlu0 %989
      %vm1032 = vcmask 97344
      %1033 = vst.msk [vmem:[#allocation4] sm:$0xff] %vm1032, %v910
      %1034 = vst.msk [vmem:[#allocation4 + $0x8] sm:$0xff] %vm1032, %v912
      %1035 = vst.msk [vmem:[#allocation4 + $0x10] sm:$0xff] %vm1032, %v914
      %1036 = vst.msk [vmem:[#allocation4 + $0x18] sm:$0xff] %vm1032, %v916
      %1037 = vst.msk [vmem:[#allocation4 + $0x20] sm:$0xff] %vm1032, %v918
      %1038 = vst.msk [vmem:[#allocation4 + $0x28] sm:$0xff] %vm1032, %v920
      %1039 = vst.msk [vmem:[#allocation4 + $0x30] sm:$0xff] %vm1032, %v922
      %1040 = vst.msk [vmem:[#allocation4 + $0x38] sm:$0xff] %vm1032, %v924
      %1041 = vst.msk [vmem:[#allocation4 + $0x40] sm:$0xff] %vm1032, %v926
      %1042 = vst.msk [vmem:[#allocation4 + $0x48] sm:$0xff] %vm1032, %v928
      %1043 = vst.msk [vmem:[#allocation4 + $0x50] sm:$0xff] %vm1032, %v930
      %1044 = vst.msk [vmem:[#allocation4 + $0x58] sm:$0xff] %vm1032, %v932
      %1045 = vst.msk [vmem:[#allocation4 + $0x60] sm:$0xff] %vm1032, %v934
      %1046 = vst.msk [vmem:[#allocation4 + $0x68] sm:$0xff] %vm1032, %v936
      %1047 = vst.msk [vmem:[#allocation4 + $0x70] sm:$0xff] %vm1032, %v938
      %1048 = vst.msk [vmem:[#allocation4 + $0x78] sm:$0xff] %vm1032, %v940
      %1049 = vst.msk [vmem:[#allocation4 + $0x80] sm:$0xff] %vm1032, %v942
      %1050 = vst.msk [vmem:[#allocation4 + $0x88] sm:$0xff] %vm1032, %v944
      %1051 = vst.msk [vmem:[#allocation4 + $0x90] sm:$0xff] %vm1032, %v946
      %1052 = vst.msk [vmem:[#allocation4 + $0x98] sm:$0xff] %vm1032, %v948
      %1053 = vst.msk [vmem:[#allocation4 + $0xa0] sm:$0xff] %vm1032, %v950
      %1054 = vst.msk [vmem:[#allocation4 + $0xa8] sm:$0xff] %vm1032, %v952
      %1055 = vst.msk [vmem:[#allocation4 + $0xb0] sm:$0xff] %vm1032, %v954
      %1056 = vst.msk [vmem:[#allocation4 + $0xb8] sm:$0xff] %vm1032, %v956
      %1057 = vst.msk [vmem:[#allocation4 + $0xc0] sm:$0xff] %vm1032, %v958
      %1058 = vst.msk [vmem:[#allocation4 + $0xc8] sm:$0xff] %vm1032, %v960
      %1059 = vst.msk [vmem:[#allocation4 + $0xd0] sm:$0xff] %vm1032, %v962
      %1060 = vst.msk [vmem:[#allocation4 + $0xd8] sm:$0xff] %vm1032, %v964
      %1061 = vst.msk [vmem:[#allocation4 + $0xe0] sm:$0xff] %vm1032, %v966
      %1062 = vst.msk [vmem:[#allocation4 + $0xe8] sm:$0xff] %vm1032, %v968
      %1063 = vst.msk [vmem:[#allocation4 + $0xf0] sm:$0xff] %vm1032, %v970
      %1064 = vst.msk [vmem:[#allocation4 + $0xf8] sm:$0xff] %vm1032, %v972
      %1065 = vst.msk [vmem:[#allocation4 + $0x100] sm:$0xff] %vm1032, %v974
      %1066 = vst.msk [vmem:[#allocation4 + $0x108] sm:$0xff] %vm1032, %v976
      %1067 = vst.msk [vmem:[#allocation4 + $0x110] sm:$0xff] %vm1032, %v978
      %1068 = vst.msk [vmem:[#allocation4 + $0x118] sm:$0xff] %vm1032, %v980
      %1069 = vst.msk [vmem:[#allocation4 + $0x120] sm:$0xff] %vm1032, %v982
      %1070 = vst.msk [vmem:[#allocation4 + $0x128] sm:$0xff] %vm1032, %v984
      %1071 = vst.msk [vmem:[#allocation4 + $0x130] sm:$0xff] %vm1032, %v986
      %1072 = vst.msk [vmem:[#allocation4 + $0x138] sm:$0xff] %vm1032, %v988
      %vm1073 = vcmask 93248
      %1074 = vst.msk [vmem:[#allocation4 + $0x140] sm:$0xf] %vm1073, %v990
      %v1075 = vld [vmem:[#allocation2 + $0x17] sm:$0xff]
      %v1076 = vld [vmem:[#allocation2 + $0x1f] sm:$0xff]
      %v1077 = vld [vmem:[#allocation2 + $0x27] sm:$0xff]
      %v1078 = vld [vmem:[#allocation2 + $0x2f] sm:$0xff]
      %v1079 = vld [vmem:[#allocation2 + $0x37] sm:$0xff]
      %v1080 = vld [vmem:[#allocation2 + $0x3f] sm:$0xff]
      %v1081 = vld [vmem:[#allocation2 + $0x47] sm:$0xff]
      %v1082 = vld [vmem:[#allocation2 + $0x4f] sm:$0xff]
      %v1083 = vld [vmem:[#allocation2 + $0x57] sm:$0xff]
      %v1084 = vld [vmem:[#allocation2 + $0x5f] sm:$0xff]
      %v1085 = vld [vmem:[#allocation2 + $0x67] sm:$0xff]
      %v1086 = vld [vmem:[#allocation2 + $0x6f] sm:$0xff]
      %v1087 = vld [vmem:[#allocation2 + $0x77] sm:$0xff]
      %v1088 = vld [vmem:[#allocation2 + $0x7f] sm:$0xff]
      %v1089 = vld [vmem:[#allocation2 + $0x87] sm:$0xff]
      %v1090 = vld [vmem:[#allocation2 + $0x8f] sm:$0xff]
      %v1091 = vld [vmem:[#allocation2 + $0x97] sm:$0xff]
      %v1092 = vld [vmem:[#allocation2 + $0x9f] sm:$0xff]
      %v1093 = vld [vmem:[#allocation2 + $0xa7] sm:$0xff]
      %v1094 = vld [vmem:[#allocation2 + $0xaf] sm:$0xff]
      %v1095 = vld [vmem:[#allocation2 + $0xb7] sm:$0xff]
      %v1096 = vld [vmem:[#allocation2 + $0xbf] sm:$0xff]
      %v1097 = vld [vmem:[#allocation2 + $0xc7] sm:$0xff]
      %v1098 = vld [vmem:[#allocation2 + $0xcf] sm:$0xff]
      %v1099 = vld [vmem:[#allocation2 + $0xd7] sm:$0xff]
      %v1100 = vld [vmem:[#allocation2 + $0xdf] sm:$0xff]
      %v1101 = vld [vmem:[#allocation2 + $0xe7] sm:$0xff]
      %v1102 = vld [vmem:[#allocation2 + $0xef] sm:$0xff]
      %v1103 = vld [vmem:[#allocation2 + $0xf7] sm:$0xff]
      %v1104 = vld [vmem:[#allocation2 + $0xff] sm:$0xff]
      %v1105 = vld [vmem:[#allocation2 + $0x107] sm:$0xff]
      %v1106 = vld [vmem:[#allocation2 + $0x10f] sm:$0xff]
      %v1107 = vld [vmem:[#allocation2 + $0x117] sm:$0xff]
      %v1108 = vld [vmem:[#allocation2 + $0x11f] sm:$0xff]
      %v1109 = vld [vmem:[#allocation2 + $0x127] sm:$0xff]
      %v1110 = vld [vmem:[#allocation2 + $0x12f] sm:$0xff]
      %v1111 = vld [vmem:[#allocation2 + $0x137] sm:$0xff]
      %v1112 = vld [vmem:[#allocation2 + $0x13f] sm:$0xff]
      %v1113 = vld [vmem:[#allocation2 + $0x147] sm:$0xff]
      %v1114 = vld [vmem:[#allocation2 + $0x14f] sm:$0xff]
      %v1115 = vld [vmem:[#allocation2 + $0x157] sm:$0xf]
      %1157 = vrot.lane.b32.xlu0 %v1075, 12
      %v1158 = vpop.permute.xlu0 %1157
      %1159 = vrot.lane.b32.xlu0 %v1076, 12
      %v1160 = vpop.permute.xlu0 %1159
      %1161 = vrot.lane.b32.xlu0 %v1077, 12
      %v1162 = vpop.permute.xlu0 %1161
      %1163 = vrot.lane.b32.xlu0 %v1078, 12
      %v1164 = vpop.permute.xlu0 %1163
      %1165 = vrot.lane.b32.xlu0 %v1079, 12
      %v1166 = vpop.permute.xlu0 %1165
      %1167 = vrot.lane.b32.xlu0 %v1080, 12
      %v1168 = vpop.permute.xlu0 %1167
      %1169 = vrot.lane.b32.xlu0 %v1081, 12
      %v1170 = vpop.permute.xlu0 %1169
      %1171 = vrot.lane.b32.xlu0 %v1082, 12
      %v1172 = vpop.permute.xlu0 %1171
      %1173 = vrot.lane.b32.xlu0 %v1083, 12
      %v1174 = vpop.permute.xlu0 %1173
      %1175 = vrot.lane.b32.xlu0 %v1084, 12
      %v1176 = vpop.permute.xlu0 %1175
      %1177 = vrot.lane.b32.xlu0 %v1085, 12
      %v1178 = vpop.permute.xlu0 %1177
      %1179 = vrot.lane.b32.xlu0 %v1086, 12
      %v1180 = vpop.permute.xlu0 %1179
      %1181 = vrot.lane.b32.xlu0 %v1087, 12
      %v1182 = vpop.permute.xlu0 %1181
      %1183 = vrot.lane.b32.xlu0 %v1088, 12
      %v1184 = vpop.permute.xlu0 %1183
      %1185 = vrot.lane.b32.xlu0 %v1089, 12
      %v1186 = vpop.permute.xlu0 %1185
      %1187 = vrot.lane.b32.xlu0 %v1090, 12
      %v1188 = vpop.permute.xlu0 %1187
      %1189 = vrot.lane.b32.xlu0 %v1091, 12
      %v1190 = vpop.permute.xlu0 %1189
      %1191 = vrot.lane.b32.xlu0 %v1092, 12
      %v1192 = vpop.permute.xlu0 %1191
      %1193 = vrot.lane.b32.xlu0 %v1093, 12
      %v1194 = vpop.permute.xlu0 %1193
      %1195 = vrot.lane.b32.xlu0 %v1094, 12
      %v1196 = vpop.permute.xlu0 %1195
      %1197 = vrot.lane.b32.xlu0 %v1095, 12
      %v1198 = vpop.permute.xlu0 %1197
      %1199 = vrot.lane.b32.xlu0 %v1096, 12
      %v1200 = vpop.permute.xlu0 %1199
      %1201 = vrot.lane.b32.xlu0 %v1097, 12
      %v1202 = vpop.permute.xlu0 %1201
      %1203 = vrot.lane.b32.xlu0 %v1098, 12
      %v1204 = vpop.permute.xlu0 %1203
      %1205 = vrot.lane.b32.xlu0 %v1099, 12
      %v1206 = vpop.permute.xlu0 %1205
      %1207 = vrot.lane.b32.xlu0 %v1100, 12
      %v1208 = vpop.permute.xlu0 %1207
      %1209 = vrot.lane.b32.xlu0 %v1101, 12
      %v1210 = vpop.permute.xlu0 %1209
      %1211 = vrot.lane.b32.xlu0 %v1102, 12
      %v1212 = vpop.permute.xlu0 %1211
      %1213 = vrot.lane.b32.xlu0 %v1103, 12
      %v1214 = vpop.permute.xlu0 %1213
      %1215 = vrot.lane.b32.xlu0 %v1104, 12
      %v1216 = vpop.permute.xlu0 %1215
      %1217 = vrot.lane.b32.xlu0 %v1105, 12
      %v1218 = vpop.permute.xlu0 %1217
      %1219 = vrot.lane.b32.xlu0 %v1106, 12
      %v1220 = vpop.permute.xlu0 %1219
      %1221 = vrot.lane.b32.xlu0 %v1107, 12
      %v1222 = vpop.permute.xlu0 %1221
      %1223 = vrot.lane.b32.xlu0 %v1108, 12
      %v1224 = vpop.permute.xlu0 %1223
      %1225 = vrot.lane.b32.xlu0 %v1109, 12
      %v1226 = vpop.permute.xlu0 %1225
      %1227 = vrot.lane.b32.xlu0 %v1110, 12
      %v1228 = vpop.permute.xlu0 %1227
      %1229 = vrot.lane.b32.xlu0 %v1111, 12
      %v1230 = vpop.permute.xlu0 %1229
      %1231 = vrot.lane.b32.xlu0 %v1112, 12
      %v1232 = vpop.permute.xlu0 %1231
      %1233 = vrot.lane.b32.xlu0 %v1113, 12
      %v1234 = vpop.permute.xlu0 %1233
      %1235 = vrot.lane.b32.xlu0 %v1114, 12
      %v1236 = vpop.permute.xlu0 %1235
      %1237 = vrot.lane.b32.xlu0 %v1115, 12
      %v1238 = vpop.permute.xlu0 %1237
      %vm1280 = vcmask 130144
      %1281 = vst.msk [vmem:[#allocation4] sm:$0xff] %vm1280, %v1158
      %1282 = vst.msk [vmem:[#allocation4 + $0x8] sm:$0xff] %vm1280, %v1160
      %1283 = vst.msk [vmem:[#allocation4 + $0x10] sm:$0xff] %vm1280, %v1162
      %1284 = vst.msk [vmem:[#allocation4 + $0x18] sm:$0xff] %vm1280, %v1164
      %1285 = vst.msk [vmem:[#allocation4 + $0x20] sm:$0xff] %vm1280, %v1166
      %1286 = vst.msk [vmem:[#allocation4 + $0x28] sm:$0xff] %vm1280, %v1168
      %1287 = vst.msk [vmem:[#allocation4 + $0x30] sm:$0xff] %vm1280, %v1170
      %1288 = vst.msk [vmem:[#allocation4 + $0x38] sm:$0xff] %vm1280, %v1172
      %1289 = vst.msk [vmem:[#allocation4 + $0x40] sm:$0xff] %vm1280, %v1174
      %1290 = vst.msk [vmem:[#allocation4 + $0x48] sm:$0xff] %vm1280, %v1176
      %1291 = vst.msk [vmem:[#allocation4 + $0x50] sm:$0xff] %vm1280, %v1178
      %1292 = vst.msk [vmem:[#allocation4 + $0x58] sm:$0xff] %vm1280, %v1180
      %1293 = vst.msk [vmem:[#allocation4 + $0x60] sm:$0xff] %vm1280, %v1182
      %1294 = vst.msk [vmem:[#allocation4 + $0x68] sm:$0xff] %vm1280, %v1184
      %1295 = vst.msk [vmem:[#allocation4 + $0x70] sm:$0xff] %vm1280, %v1186
      %1296 = vst.msk [vmem:[#allocation4 + $0x78] sm:$0xff] %vm1280, %v1188
      %1297 = vst.msk [vmem:[#allocation4 + $0x80] sm:$0xff] %vm1280, %v1190
      %1298 = vst.msk [vmem:[#allocation4 + $0x88] sm:$0xff] %vm1280, %v1192
      %1299 = vst.msk [vmem:[#allocation4 + $0x90] sm:$0xff] %vm1280, %v1194
      %1300 = vst.msk [vmem:[#allocation4 + $0x98] sm:$0xff] %vm1280, %v1196
      %1301 = vst.msk [vmem:[#allocation4 + $0xa0] sm:$0xff] %vm1280, %v1198
      %1302 = vst.msk [vmem:[#allocation4 + $0xa8] sm:$0xff] %vm1280, %v1200
      %1303 = vst.msk [vmem:[#allocation4 + $0xb0] sm:$0xff] %vm1280, %v1202
      %1304 = vst.msk [vmem:[#allocation4 + $0xb8] sm:$0xff] %vm1280, %v1204
      %1305 = vst.msk [vmem:[#allocation4 + $0xc0] sm:$0xff] %vm1280, %v1206
      %1306 = vst.msk [vmem:[#allocation4 + $0xc8] sm:$0xff] %vm1280, %v1208
      %1307 = vst.msk [vmem:[#allocation4 + $0xd0] sm:$0xff] %vm1280, %v1210
      %1308 = vst.msk [vmem:[#allocation4 + $0xd8] sm:$0xff] %vm1280, %v1212
      %1309 = vst.msk [vmem:[#allocation4 + $0xe0] sm:$0xff] %vm1280, %v1214
      %1310 = vst.msk [vmem:[#allocation4 + $0xe8] sm:$0xff] %vm1280, %v1216
      %1311 = vst.msk [vmem:[#allocation4 + $0xf0] sm:$0xff] %vm1280, %v1218
      %1312 = vst.msk [vmem:[#allocation4 + $0xf8] sm:$0xff] %vm1280, %v1220
      %1313 = vst.msk [vmem:[#allocation4 + $0x100] sm:$0xff] %vm1280, %v1222
      %1314 = vst.msk [vmem:[#allocation4 + $0x108] sm:$0xff] %vm1280, %v1224
      %1315 = vst.msk [vmem:[#allocation4 + $0x110] sm:$0xff] %vm1280, %v1226
      %1316 = vst.msk [vmem:[#allocation4 + $0x118] sm:$0xff] %vm1280, %v1228
      %1317 = vst.msk [vmem:[#allocation4 + $0x120] sm:$0xff] %vm1280, %v1230
      %1318 = vst.msk [vmem:[#allocation4 + $0x128] sm:$0xff] %vm1280, %v1232
      %1319 = vst.msk [vmem:[#allocation4 + $0x130] sm:$0xff] %vm1280, %v1234
      %1320 = vst.msk [vmem:[#allocation4 + $0x138] sm:$0xff] %vm1280, %v1236
      %vm1321 = vcmask 126048
      %1322 = vst.msk [vmem:[#allocation4 + $0x140] sm:$0xf] %vm1321, %v1238
      %v1323 = vld [vmem:[#allocation2 + $0x18] sm:$0xff]
      %v1324 = vld [vmem:[#allocation2 + $0x20] sm:$0xff]
      %v1325 = vld [vmem:[#allocation2 + $0x28] sm:$0xff]
      %v1326 = vld [vmem:[#allocation2 + $0x30] sm:$0xff]
      %v1327 = vld [vmem:[#allocation2 + $0x38] sm:$0xff]
      %v1328 = vld [vmem:[#allocation2 + $0x40] sm:$0xff]
      %v1329 = vld [vmem:[#allocation2 + $0x48] sm:$0xff]
      %v1330 = vld [vmem:[#allocation2 + $0x50] sm:$0xff]
      %v1331 = vld [vmem:[#allocation2 + $0x58] sm:$0xff]
      %v1332 = vld [vmem:[#allocation2 + $0x60] sm:$0xff]
      %v1333 = vld [vmem:[#allocation2 + $0x68] sm:$0xff]
      %v1334 = vld [vmem:[#allocation2 + $0x70] sm:$0xff]
      %v1335 = vld [vmem:[#allocation2 + $0x78] sm:$0xff]
      %v1336 = vld [vmem:[#allocation2 + $0x80] sm:$0xff]
      %v1337 = vld [vmem:[#allocation2 + $0x88] sm:$0xff]
      %v1338 = vld [vmem:[#allocation2 + $0x90] sm:$0xff]
      %v1339 = vld [vmem:[#allocation2 + $0x98] sm:$0xff]
      %v1340 = vld [vmem:[#allocation2 + $0xa0] sm:$0xff]
      %v1341 = vld [vmem:[#allocation2 + $0xa8] sm:$0xff]
      %v1342 = vld [vmem:[#allocation2 + $0xb0] sm:$0xff]
      %v1343 = vld [vmem:[#allocation2 + $0xb8] sm:$0xff]
      %v1344 = vld [vmem:[#allocation2 + $0xc0] sm:$0xff]
      %v1345 = vld [vmem:[#allocation2 + $0xc8] sm:$0xff]
      %v1346 = vld [vmem:[#allocation2 + $0xd0] sm:$0xff]
      %v1347 = vld [vmem:[#allocation2 + $0xd8] sm:$0xff]
      %v1348 = vld [vmem:[#allocation2 + $0xe0] sm:$0xff]
      %v1349 = vld [vmem:[#allocation2 + $0xe8] sm:$0xff]
      %v1350 = vld [vmem:[#allocation2 + $0xf0] sm:$0xff]
      %v1351 = vld [vmem:[#allocation2 + $0xf8] sm:$0xff]
      %v1352 = vld [vmem:[#allocation2 + $0x100] sm:$0xff]
      %v1353 = vld [vmem:[#allocation2 + $0x108] sm:$0xff]
      %v1354 = vld [vmem:[#allocation2 + $0x110] sm:$0xff]
      %v1355 = vld [vmem:[#allocation2 + $0x118] sm:$0xff]
      %v1356 = vld [vmem:[#allocation2 + $0x120] sm:$0xff]
      %v1357 = vld [vmem:[#allocation2 + $0x128] sm:$0xff]
      %v1358 = vld [vmem:[#allocation2 + $0x130] sm:$0xff]
      %v1359 = vld [vmem:[#allocation2 + $0x138] sm:$0xff]
      %v1360 = vld [vmem:[#allocation2 + $0x140] sm:$0xff]
      %v1361 = vld [vmem:[#allocation2 + $0x148] sm:$0xff]
      %v1362 = vld [vmem:[#allocation2 + $0x150] sm:$0xff]
      %v1363 = vld [vmem:[#allocation2 + $0x158] sm:$0xf]
      %1405 = vrot.lane.b32.xlu0 %v1323, 16
      %v1406 = vpop.permute.xlu0 %1405
      %1407 = vrot.lane.b32.xlu0 %v1324, 16
      %v1408 = vpop.permute.xlu0 %1407
      %1409 = vrot.lane.b32.xlu0 %v1325, 16
      %v1410 = vpop.permute.xlu0 %1409
      %1411 = vrot.lane.b32.xlu0 %v1326, 16
      %v1412 = vpop.permute.xlu0 %1411
      %1413 = vrot.lane.b32.xlu0 %v1327, 16
      %v1414 = vpop.permute.xlu0 %1413
      %1415 = vrot.lane.b32.xlu0 %v1328, 16
      %v1416 = vpop.permute.xlu0 %1415
      %1417 = vrot.lane.b32.xlu0 %v1329, 16
      %v1418 = vpop.permute.xlu0 %1417
      %1419 = vrot.lane.b32.xlu0 %v1330, 16
      %v1420 = vpop.permute.xlu0 %1419
      %1421 = vrot.lane.b32.xlu0 %v1331, 16
      %v1422 = vpop.permute.xlu0 %1421
      %1423 = vrot.lane.b32.xlu0 %v1332, 16
      %v1424 = vpop.permute.xlu0 %1423
      %1425 = vrot.lane.b32.xlu0 %v1333, 16
      %v1426 = vpop.permute.xlu0 %1425
      %1427 = vrot.lane.b32.xlu0 %v1334, 16
      %v1428 = vpop.permute.xlu0 %1427
      %1429 = vrot.lane.b32.xlu0 %v1335, 16
      %v1430 = vpop.permute.xlu0 %1429
      %1431 = vrot.lane.b32.xlu0 %v1336, 16
      %v1432 = vpop.permute.xlu0 %1431
      %1433 = vrot.lane.b32.xlu0 %v1337, 16
      %v1434 = vpop.permute.xlu0 %1433
      %1435 = vrot.lane.b32.xlu0 %v1338, 16
      %v1436 = vpop.permute.xlu0 %1435
      %1437 = vrot.lane.b32.xlu0 %v1339, 16
      %v1438 = vpop.permute.xlu0 %1437
      %1439 = vrot.lane.b32.xlu0 %v1340, 16
      %v1440 = vpop.permute.xlu0 %1439
      %1441 = vrot.lane.b32.xlu0 %v1341, 16
      %v1442 = vpop.permute.xlu0 %1441
      %1443 = vrot.lane.b32.xlu0 %v1342, 16
      %v1444 = vpop.permute.xlu0 %1443
      %1445 = vrot.lane.b32.xlu0 %v1343, 16
      %v1446 = vpop.permute.xlu0 %1445
      %1447 = vrot.lane.b32.xlu0 %v1344, 16
      %v1448 = vpop.permute.xlu0 %1447
      %1449 = vrot.lane.b32.xlu0 %v1345, 16
      %v1450 = vpop.permute.xlu0 %1449
      %1451 = vrot.lane.b32.xlu0 %v1346, 16
      %v1452 = vpop.permute.xlu0 %1451
      %1453 = vrot.lane.b32.xlu0 %v1347, 16
      %v1454 = vpop.permute.xlu0 %1453
      %1455 = vrot.lane.b32.xlu0 %v1348, 16
      %v1456 = vpop.permute.xlu0 %1455
      %1457 = vrot.lane.b32.xlu0 %v1349, 16
      %v1458 = vpop.permute.xlu0 %1457
      %1459 = vrot.lane.b32.xlu0 %v1350, 16
      %v1460 = vpop.permute.xlu0 %1459
      %1461 = vrot.lane.b32.xlu0 %v1351, 16
      %v1462 = vpop.permute.xlu0 %1461
      %1463 = vrot.lane.b32.xlu0 %v1352, 16
      %v1464 = vpop.permute.xlu0 %1463
      %1465 = vrot.lane.b32.xlu0 %v1353, 16
      %v1466 = vpop.permute.xlu0 %1465
      %1467 = vrot.lane.b32.xlu0 %v1354, 16
      %v1468 = vpop.permute.xlu0 %1467
      %1469 = vrot.lane.b32.xlu0 %v1355, 16
      %v1470 = vpop.permute.xlu0 %1469
      %1471 = vrot.lane.b32.xlu0 %v1356, 16
      %v1472 = vpop.permute.xlu0 %1471
      %1473 = vrot.lane.b32.xlu0 %v1357, 16
      %v1474 = vpop.permute.xlu0 %1473
      %1475 = vrot.lane.b32.xlu0 %v1358, 16
      %v1476 = vpop.permute.xlu0 %1475
      %1477 = vrot.lane.b32.xlu0 %v1359, 16
      %v1478 = vpop.permute.xlu0 %1477
      %1479 = vrot.lane.b32.xlu0 %v1360, 16
      %v1480 = vpop.permute.xlu0 %1479
      %1481 = vrot.lane.b32.xlu0 %v1361, 16
      %v1482 = vpop.permute.xlu0 %1481
      %1483 = vrot.lane.b32.xlu0 %v1362, 16
      %v1484 = vpop.permute.xlu0 %1483
      %1485 = vrot.lane.b32.xlu0 %v1363, 16
      %v1486 = vpop.permute.xlu0 %1485
      %vm1528 = vcmask 162944
      %1529 = vst.msk [vmem:[#allocation4] sm:$0xff] %vm1528, %v1406
      %1530 = vst.msk [vmem:[#allocation4 + $0x8] sm:$0xff] %vm1528, %v1408
      %1531 = vst.msk [vmem:[#allocation4 + $0x10] sm:$0xff] %vm1528, %v1410
      %1532 = vst.msk [vmem:[#allocation4 + $0x18] sm:$0xff] %vm1528, %v1412
      %1533 = vst.msk [vmem:[#allocation4 + $0x20] sm:$0xff] %vm1528, %v1414
      %1534 = vst.msk [vmem:[#allocation4 + $0x28] sm:$0xff] %vm1528, %v1416
      %1535 = vst.msk [vmem:[#allocation4 + $0x30] sm:$0xff] %vm1528, %v1418
      %1536 = vst.msk [vmem:[#allocation4 + $0x38] sm:$0xff] %vm1528, %v1420
      %1537 = vst.msk [vmem:[#allocation4 + $0x40] sm:$0xff] %vm1528, %v1422
      %1538 = vst.msk [vmem:[#allocation4 + $0x48] sm:$0xff] %vm1528, %v1424
      %1539 = vst.msk [vmem:[#allocation4 + $0x50] sm:$0xff] %vm1528, %v1426
      %1540 = vst.msk [vmem:[#allocation4 + $0x58] sm:$0xff] %vm1528, %v1428
      %1541 = vst.msk [vmem:[#allocation4 + $0x60] sm:$0xff] %vm1528, %v1430
      %1542 = vst.msk [vmem:[#allocation4 + $0x68] sm:$0xff] %vm1528, %v1432
      %1543 = vst.msk [vmem:[#allocation4 + $0x70] sm:$0xff] %vm1528, %v1434
      %1544 = vst.msk [vmem:[#allocation4 + $0x78] sm:$0xff] %vm1528, %v1436
      %1545 = vst.msk [vmem:[#allocation4 + $0x80] sm:$0xff] %vm1528, %v1438
      %1546 = vst.msk [vmem:[#allocation4 + $0x88] sm:$0xff] %vm1528, %v1440
      %1547 = vst.msk [vmem:[#allocation4 + $0x90] sm:$0xff] %vm1528, %v1442
      %1548 = vst.msk [vmem:[#allocation4 + $0x98] sm:$0xff] %vm1528, %v1444
      %1549 = vst.msk [vmem:[#allocation4 + $0xa0] sm:$0xff] %vm1528, %v1446
      %1550 = vst.msk [vmem:[#allocation4 + $0xa8] sm:$0xff] %vm1528, %v1448
      %1551 = vst.msk [vmem:[#allocation4 + $0xb0] sm:$0xff] %vm1528, %v1450
      %1552 = vst.msk [vmem:[#allocation4 + $0xb8] sm:$0xff] %vm1528, %v1452
      %1553 = vst.msk [vmem:[#allocation4 + $0xc0] sm:$0xff] %vm1528, %v1454
      %1554 = vst.msk [vmem:[#allocation4 + $0xc8] sm:$0xff] %vm1528, %v1456
      %1555 = vst.msk [vmem:[#allocation4 + $0xd0] sm:$0xff] %vm1528, %v1458
      %1556 = vst.msk [vmem:[#allocation4 + $0xd8] sm:$0xff] %vm1528, %v1460
      %1557 = vst.msk [vmem:[#allocation4 + $0xe0] sm:$0xff] %vm1528, %v1462
      %1558 = vst.msk [vmem:[#allocation4 + $0xe8] sm:$0xff] %vm1528, %v1464
      %1559 = vst.msk [vmem:[#allocation4 + $0xf0] sm:$0xff] %vm1528, %v1466
      %1560 = vst.msk [vmem:[#allocation4 + $0xf8] sm:$0xff] %vm1528, %v1468
      %1561 = vst.msk [vmem:[#allocation4 + $0x100] sm:$0xff] %vm1528, %v1470
      %1562 = vst.msk [vmem:[#allocation4 + $0x108] sm:$0xff] %vm1528, %v1472
      %1563 = vst.msk [vmem:[#allocation4 + $0x110] sm:$0xff] %vm1528, %v1474
      %1564 = vst.msk [vmem:[#allocation4 + $0x118] sm:$0xff] %vm1528, %v1476
      %1565 = vst.msk [vmem:[#allocation4 + $0x120] sm:$0xff] %vm1528, %v1478
      %1566 = vst.msk [vmem:[#allocation4 + $0x128] sm:$0xff] %vm1528, %v1480
      %1567 = vst.msk [vmem:[#allocation4 + $0x130] sm:$0xff] %vm1528, %v1482
      %1568 = vst.msk [vmem:[#allocation4 + $0x138] sm:$0xff] %vm1528, %v1484
      %vm1569 = vcmask 158848
      %1570 = vst.msk [vmem:[#allocation4 + $0x140] sm:$0xf] %vm1569, %v1486
      %v1571 = vld [vmem:[#allocation2 + $0x19] sm:$0xff]
      %v1572 = vld [vmem:[#allocation2 + $0x21] sm:$0xff]
      %v1573 = vld [vmem:[#allocation2 + $0x29] sm:$0xff]
      %v1574 = vld [vmem:[#allocation2 + $0x31] sm:$0xff]
      %v1575 = vld [vmem:[#allocation2 + $0x39] sm:$0xff]
      %v1576 = vld [vmem:[#allocation2 + $0x41] sm:$0xff]
      %v1577 = vld [vmem:[#allocation2 + $0x49] sm:$0xff]
      %v1578 = vld [vmem:[#allocation2 + $0x51] sm:$0xff]
      %v1579 = vld [vmem:[#allocation2 + $0x59] sm:$0xff]
      %v1580 = vld [vmem:[#allocation2 + $0x61] sm:$0xff]
      %v1581 = vld [vmem:[#allocation2 + $0x69] sm:$0xff]
      %v1582 = vld [vmem:[#allocation2 + $0x71] sm:$0xff]
      %v1583 = vld [vmem:[#allocation2 + $0x79] sm:$0xff]
      %v1584 = vld [vmem:[#allocation2 + $0x81] sm:$0xff]
      %v1585 = vld [vmem:[#allocation2 + $0x89] sm:$0xff]
      %v1586 = vld [vmem:[#allocation2 + $0x91] sm:$0xff]
      %v1587 = vld [vmem:[#allocation2 + $0x99] sm:$0xff]
      %v1588 = vld [vmem:[#allocation2 + $0xa1] sm:$0xff]
      %v1589 = vld [vmem:[#allocation2 + $0xa9] sm:$0xff]
      %v1590 = vld [vmem:[#allocation2 + $0xb1] sm:$0xff]
      %v1591 = vld [vmem:[#allocation2 + $0xb9] sm:$0xff]
      %v1592 = vld [vmem:[#allocation2 + $0xc1] sm:$0xff]
      %v1593 = vld [vmem:[#allocation2 + $0xc9] sm:$0xff]
      %v1594 = vld [vmem:[#allocation2 + $0xd1] sm:$0xff]
      %v1595 = vld [vmem:[#allocation2 + $0xd9] sm:$0xff]
      %v1596 = vld [vmem:[#allocation2 + $0xe1] sm:$0xff]
      %v1597 = vld [vmem:[#allocation2 + $0xe9] sm:$0xff]
      %v1598 = vld [vmem:[#allocation2 + $0xf1] sm:$0xff]
      %v1599 = vld [vmem:[#allocation2 + $0xf9] sm:$0xff]
      %v1600 = vld [vmem:[#allocation2 + $0x101] sm:$0xff]
      %v1601 = vld [vmem:[#allocation2 + $0x109] sm:$0xff]
      %v1602 = vld [vmem:[#allocation2 + $0x111] sm:$0xff]
      %v1603 = vld [vmem:[#allocation2 + $0x119] sm:$0xff]
      %v1604 = vld [vmem:[#allocation2 + $0x121] sm:$0xff]
      %v1605 = vld [vmem:[#allocation2 + $0x129] sm:$0xff]
      %v1606 = vld [vmem:[#allocation2 + $0x131] sm:$0xff]
      %v1607 = vld [vmem:[#allocation2 + $0x139] sm:$0xff]
      %v1608 = vld [vmem:[#allocation2 + $0x141] sm:$0xff]
      %v1609 = vld [vmem:[#allocation2 + $0x149] sm:$0xff]
      %v1610 = vld [vmem:[#allocation2 + $0x151] sm:$0xff]
      %v1611 = vld [vmem:[#allocation2 + $0x159] sm:$0xf]
      %1653 = vrot.lane.b32.xlu0 %v1571, 20
      %v1654 = vpop.permute.xlu0 %1653
      %1655 = vrot.lane.b32.xlu0 %v1572, 20
      %v1656 = vpop.permute.xlu0 %1655
      %1657 = vrot.lane.b32.xlu0 %v1573, 20
      %v1658 = vpop.permute.xlu0 %1657
      %1659 = vrot.lane.b32.xlu0 %v1574, 20
      %v1660 = vpop.permute.xlu0 %1659
      %1661 = vrot.lane.b32.xlu0 %v1575, 20
      %v1662 = vpop.permute.xlu0 %1661
      %1663 = vrot.lane.b32.xlu0 %v1576, 20
      %v1664 = vpop.permute.xlu0 %1663
      %1665 = vrot.lane.b32.xlu0 %v1577, 20
      %v1666 = vpop.permute.xlu0 %1665
      %1667 = vrot.lane.b32.xlu0 %v1578, 20
      %v1668 = vpop.permute.xlu0 %1667
      %1669 = vrot.lane.b32.xlu0 %v1579, 20
      %v1670 = vpop.permute.xlu0 %1669
      %1671 = vrot.lane.b32.xlu0 %v1580, 20
      %v1672 = vpop.permute.xlu0 %1671
      %1673 = vrot.lane.b32.xlu0 %v1581, 20
      %v1674 = vpop.permute.xlu0 %1673
      %1675 = vrot.lane.b32.xlu0 %v1582, 20
      %v1676 = vpop.permute.xlu0 %1675
      %1677 = vrot.lane.b32.xlu0 %v1583, 20
      %v1678 = vpop.permute.xlu0 %1677
      %1679 = vrot.lane.b32.xlu0 %v1584, 20
      %v1680 = vpop.permute.xlu0 %1679
      %1681 = vrot.lane.b32.xlu0 %v1585, 20
      %v1682 = vpop.permute.xlu0 %1681
      %1683 = vrot.lane.b32.xlu0 %v1586, 20
      %v1684 = vpop.permute.xlu0 %1683
      %1685 = vrot.lane.b32.xlu0 %v1587, 20
      %v1686 = vpop.permute.xlu0 %1685
      %1687 = vrot.lane.b32.xlu0 %v1588, 20
      %v1688 = vpop.permute.xlu0 %1687
      %1689 = vrot.lane.b32.xlu0 %v1589, 20
      %v1690 = vpop.permute.xlu0 %1689
      %1691 = vrot.lane.b32.xlu0 %v1590, 20
      %v1692 = vpop.permute.xlu0 %1691
      %1693 = vrot.lane.b32.xlu0 %v1591, 20
      %v1694 = vpop.permute.xlu0 %1693
      %1695 = vrot.lane.b32.xlu0 %v1592, 20
      %v1696 = vpop.permute.xlu0 %1695
      %1697 = vrot.lane.b32.xlu0 %v1593, 20
      %v1698 = vpop.permute.xlu0 %1697
      %1699 = vrot.lane.b32.xlu0 %v1594, 20
      %v1700 = vpop.permute.xlu0 %1699
      %1701 = vrot.lane.b32.xlu0 %v1595, 20
      %v1702 = vpop.permute.xlu0 %1701
      %1703 = vrot.lane.b32.xlu0 %v1596, 20
      %v1704 = vpop.permute.xlu0 %1703
      %1705 = vrot.lane.b32.xlu0 %v1597, 20
      %v1706 = vpop.permute.xlu0 %1705
      %1707 = vrot.lane.b32.xlu0 %v1598, 20
      %v1708 = vpop.permute.xlu0 %1707
      %1709 = vrot.lane.b32.xlu0 %v1599, 20
      %v1710 = vpop.permute.xlu0 %1709
      %1711 = vrot.lane.b32.xlu0 %v1600, 20
      %v1712 = vpop.permute.xlu0 %1711
      %1713 = vrot.lane.b32.xlu0 %v1601, 20
      %v1714 = vpop.permute.xlu0 %1713
      %1715 = vrot.lane.b32.xlu0 %v1602, 20
      %v1716 = vpop.permute.xlu0 %1715
      %1717 = vrot.lane.b32.xlu0 %v1603, 20
      %v1718 = vpop.permute.xlu0 %1717
      %1719 = vrot.lane.b32.xlu0 %v1604, 20
      %v1720 = vpop.permute.xlu0 %1719
      %1721 = vrot.lane.b32.xlu0 %v1605, 20
      %v1722 = vpop.permute.xlu0 %1721
      %1723 = vrot.lane.b32.xlu0 %v1606, 20
      %v1724 = vpop.permute.xlu0 %1723
      %1725 = vrot.lane.b32.xlu0 %v1607, 20
      %v1726 = vpop.permute.xlu0 %1725
      %1727 = vrot.lane.b32.xlu0 %v1608, 20
      %v1728 = vpop.permute.xlu0 %1727
      %1729 = vrot.lane.b32.xlu0 %v1609, 20
      %v1730 = vpop.permute.xlu0 %1729
      %1731 = vrot.lane.b32.xlu0 %v1610, 20
      %v1732 = vpop.permute.xlu0 %1731
      %1733 = vrot.lane.b32.xlu0 %v1611, 20
      %v1734 = vpop.permute.xlu0 %1733
      %vm1776 = vcmask 195744
      %1777 = vst.msk [vmem:[#allocation4] sm:$0xff] %vm1776, %v1654
      %1778 = vst.msk [vmem:[#allocation4 + $0x8] sm:$0xff] %vm1776, %v1656
      %1779 = vst.msk [vmem:[#allocation4 + $0x10] sm:$0xff] %vm1776, %v1658
      %1780 = vst.msk [vmem:[#allocation4 + $0x18] sm:$0xff] %vm1776, %v1660
      %1781 = vst.msk [vmem:[#allocation4 + $0x20] sm:$0xff] %vm1776, %v1662
      %1782 = vst.msk [vmem:[#allocation4 + $0x28] sm:$0xff] %vm1776, %v1664
      %1783 = vst.msk [vmem:[#allocation4 + $0x30] sm:$0xff] %vm1776, %v1666
      %1784 = vst.msk [vmem:[#allocation4 + $0x38] sm:$0xff] %vm1776, %v1668
      %1785 = vst.msk [vmem:[#allocation4 + $0x40] sm:$0xff] %vm1776, %v1670
      %1786 = vst.msk [vmem:[#allocation4 + $0x48] sm:$0xff] %vm1776, %v1672
      %1787 = vst.msk [vmem:[#allocation4 + $0x50] sm:$0xff] %vm1776, %v1674
      %1788 = vst.msk [vmem:[#allocation4 + $0x58] sm:$0xff] %vm1776, %v1676
      %1789 = vst.msk [vmem:[#allocation4 + $0x60] sm:$0xff] %vm1776, %v1678
      %1790 = vst.msk [vmem:[#allocation4 + $0x68] sm:$0xff] %vm1776, %v1680
      %1791 = vst.msk [vmem:[#allocation4 + $0x70] sm:$0xff] %vm1776, %v1682
      %1792 = vst.msk [vmem:[#allocation4 + $0x78] sm:$0xff] %vm1776, %v1684
      %1793 = vst.msk [vmem:[#allocation4 + $0x80] sm:$0xff] %vm1776, %v1686
      %1794 = vst.msk [vmem:[#allocation4 + $0x88] sm:$0xff] %vm1776, %v1688
      %1795 = vst.msk [vmem:[#allocation4 + $0x90] sm:$0xff] %vm1776, %v1690
      %1796 = vst.msk [vmem:[#allocation4 + $0x98] sm:$0xff] %vm1776, %v1692
      %1797 = vst.msk [vmem:[#allocation4 + $0xa0] sm:$0xff] %vm1776, %v1694
      %1798 = vst.msk [vmem:[#allocation4 + $0xa8] sm:$0xff] %vm1776, %v1696
      %1799 = vst.msk [vmem:[#allocation4 + $0xb0] sm:$0xff] %vm1776, %v1698
      %1800 = vst.msk [vmem:[#allocation4 + $0xb8] sm:$0xff] %vm1776, %v1700
      %1801 = vst.msk [vmem:[#allocation4 + $0xc0] sm:$0xff] %vm1776, %v1702
      %1802 = vst.msk [vmem:[#allocation4 + $0xc8] sm:$0xff] %vm1776, %v1704
      %1803 = vst.msk [vmem:[#allocation4 + $0xd0] sm:$0xff] %vm1776, %v1706
      %1804 = vst.msk [vmem:[#allocation4 + $0xd8] sm:$0xff] %vm1776, %v1708
      %1805 = vst.msk [vmem:[#allocation4 + $0xe0] sm:$0xff] %vm1776, %v1710
      %1806 = vst.msk [vmem:[#allocation4 + $0xe8] sm:$0xff] %vm1776, %v1712
      %1807 = vst.msk [vmem:[#allocation4 + $0xf0] sm:$0xff] %vm1776, %v1714
      %1808 = vst.msk [vmem:[#allocation4 + $0xf8] sm:$0xff] %vm1776, %v1716
      %1809 = vst.msk [vmem:[#allocation4 + $0x100] sm:$0xff] %vm1776, %v1718
      %1810 = vst.msk [vmem:[#allocation4 + $0x108] sm:$0xff] %vm1776, %v1720
      %1811 = vst.msk [vmem:[#allocation4 + $0x110] sm:$0xff] %vm1776, %v1722
      %1812 = vst.msk [vmem:[#allocation4 + $0x118] sm:$0xff] %vm1776, %v1724
      %1813 = vst.msk [vmem:[#allocation4 + $0x120] sm:$0xff] %vm1776, %v1726
      %1814 = vst.msk [vmem:[#allocation4 + $0x128] sm:$0xff] %vm1776, %v1728
      %1815 = vst.msk [vmem:[#allocation4 + $0x130] sm:$0xff] %vm1776, %v1730
      %1816 = vst.msk [vmem:[#allocation4 + $0x138] sm:$0xff] %vm1776, %v1732
      %vm1817 = vcmask 191648
      %1818 = vst.msk [vmem:[#allocation4 + $0x140] sm:$0xf] %vm1817, %v1734
      %v1819 = vld [vmem:[#allocation2 + $0x29] sm:$0xff]
      %v1820 = vld [vmem:[#allocation2 + $0x31] sm:$0xff]
      %v1821 = vld [vmem:[#allocation2 + $0x39] sm:$0xff]
      %v1822 = vld [vmem:[#allocation2 + $0x41] sm:$0xff]
      %v1823 = vld [vmem:[#allocation2 + $0x49] sm:$0xff]
      %v1824 = vld [vmem:[#allocation2 + $0x51] sm:$0xff]
      %v1825 = vld [vmem:[#allocation2 + $0x59] sm:$0xff]
      %v1826 = vld [vmem:[#allocation2 + $0x61] sm:$0xff]
      %v1827 = vld [vmem:[#allocation2 + $0x69] sm:$0xff]
      %v1828 = vld [vmem:[#allocation2 + $0x71] sm:$0xff]
      %v1829 = vld [vmem:[#allocation2 + $0x79] sm:$0xff]
      %v1830 = vld [vmem:[#allocation2 + $0x81] sm:$0xff]
      %v1831 = vld [vmem:[#allocation2 + $0x89] sm:$0xff]
      %v1832 = vld [vmem:[#allocation2 + $0x91] sm:$0xff]
      %v1833 = vld [vmem:[#allocation2 + $0x99] sm:$0xff]
      %v1834 = vld [vmem:[#allocation2 + $0xa1] sm:$0xff]
      %v1835 = vld [vmem:[#allocation2 + $0xa9] sm:$0xff]
      %v1836 = vld [vmem:[#allocation2 + $0xb1] sm:$0xff]
      %v1837 = vld [vmem:[#allocation2 + $0xb9] sm:$0xff]
      %v1838 = vld [vmem:[#allocation2 + $0xc1] sm:$0xff]
      %v1839 = vld [vmem:[#allocation2 + $0xc9] sm:$0xff]
      %v1840 = vld [vmem:[#allocation2 + $0xd1] sm:$0xff]
      %v1841 = vld [vmem:[#allocation2 + $0xd9] sm:$0xff]
      %v1842 = vld [vmem:[#allocation2 + $0xe1] sm:$0xff]
      %v1843 = vld [vmem:[#allocation2 + $0xe9] sm:$0xff]
      %v1844 = vld [vmem:[#allocation2 + $0xf1] sm:$0xff]
      %v1845 = vld [vmem:[#allocation2 + $0xf9] sm:$0xff]
      %v1846 = vld [vmem:[#allocation2 + $0x101] sm:$0xff]
      %v1847 = vld [vmem:[#allocation2 + $0x109] sm:$0xff]
      %v1848 = vld [vmem:[#allocation2 + $0x111] sm:$0xff]
      %v1849 = vld [vmem:[#allocation2 + $0x119] sm:$0xff]
      %v1850 = vld [vmem:[#allocation2 + $0x121] sm:$0xff]
      %v1851 = vld [vmem:[#allocation2 + $0x129] sm:$0xff]
      %v1852 = vld [vmem:[#allocation2 + $0x131] sm:$0xff]
      %v1853 = vld [vmem:[#allocation2 + $0x139] sm:$0xff]
      %v1854 = vld [vmem:[#allocation2 + $0x141] sm:$0xff]
      %v1855 = vld [vmem:[#allocation2 + $0x149] sm:$0xff]
      %v1856 = vld [vmem:[#allocation2 + $0x151] sm:$0xff]
      %v1857 = vld [vmem:[#allocation2 + $0x159] sm:$0xff]
      %v1858 = vld [vmem:[#allocation2 + $0x161] sm:$0xff]
      %v1859 = vld [vmem:[#allocation2 + $0x169] sm:$0xf]
      %1901 = vrot.lane.b32.xlu0 %v1819, 24
      %v1902 = vpop.permute.xlu0 %1901
      %1903 = vrot.lane.b32.xlu0 %v1820, 24
      %v1904 = vpop.permute.xlu0 %1903
      %1905 = vrot.lane.b32.xlu0 %v1821, 24
      %v1906 = vpop.permute.xlu0 %1905
      %1907 = vrot.lane.b32.xlu0 %v1822, 24
      %v1908 = vpop.permute.xlu0 %1907
      %1909 = vrot.lane.b32.xlu0 %v1823, 24
      %v1910 = vpop.permute.xlu0 %1909
      %1911 = vrot.lane.b32.xlu0 %v1824, 24
      %v1912 = vpop.permute.xlu0 %1911
      %1913 = vrot.lane.b32.xlu0 %v1825, 24
      %v1914 = vpop.permute.xlu0 %1913
      %1915 = vrot.lane.b32.xlu0 %v1826, 24
      %v1916 = vpop.permute.xlu0 %1915
      %1917 = vrot.lane.b32.xlu0 %v1827, 24
      %v1918 = vpop.permute.xlu0 %1917
      %1919 = vrot.lane.b32.xlu0 %v1828, 24
      %v1920 = vpop.permute.xlu0 %1919
      %1921 = vrot.lane.b32.xlu0 %v1829, 24
      %v1922 = vpop.permute.xlu0 %1921
      %1923 = vrot.lane.b32.xlu0 %v1830, 24
      %v1924 = vpop.permute.xlu0 %1923
      %1925 = vrot.lane.b32.xlu0 %v1831, 24
      %v1926 = vpop.permute.xlu0 %1925
      %1927 = vrot.lane.b32.xlu0 %v1832, 24
      %v1928 = vpop.permute.xlu0 %1927
      %1929 = vrot.lane.b32.xlu0 %v1833, 24
      %v1930 = vpop.permute.xlu0 %1929
      %1931 = vrot.lane.b32.xlu0 %v1834, 24
      %v1932 = vpop.permute.xlu0 %1931
      %1933 = vrot.lane.b32.xlu0 %v1835, 24
      %v1934 = vpop.permute.xlu0 %1933
      %1935 = vrot.lane.b32.xlu0 %v1836, 24
      %v1936 = vpop.permute.xlu0 %1935
      %1937 = vrot.lane.b32.xlu0 %v1837, 24
      %v1938 = vpop.permute.xlu0 %1937
      %1939 = vrot.lane.b32.xlu0 %v1838, 24
      %v1940 = vpop.permute.xlu0 %1939
      %1941 = vrot.lane.b32.xlu0 %v1839, 24
      %v1942 = vpop.permute.xlu0 %1941
      %1943 = vrot.lane.b32.xlu0 %v1840, 24
      %v1944 = vpop.permute.xlu0 %1943
      %1945 = vrot.lane.b32.xlu0 %v1841, 24
      %v1946 = vpop.permute.xlu0 %1945
      %1947 = vrot.lane.b32.xlu0 %v1842, 24
      %v1948 = vpop.permute.xlu0 %1947
      %1949 = vrot.lane.b32.xlu0 %v1843, 24
      %v1950 = vpop.permute.xlu0 %1949
      %1951 = vrot.lane.b32.xlu0 %v1844, 24
      %v1952 = vpop.permute.xlu0 %1951
      %1953 = vrot.lane.b32.xlu0 %v1845, 24
      %v1954 = vpop.permute.xlu0 %1953
      %1955 = vrot.lane.b32.xlu0 %v1846, 24
      %v1956 = vpop.permute.xlu0 %1955
      %1957 = vrot.lane.b32.xlu0 %v1847, 24
      %v1958 = vpop.permute.xlu0 %1957
      %1959 = vrot.lane.b32.xlu0 %v1848, 24
      %v1960 = vpop.permute.xlu0 %1959
      %1961 = vrot.lane.b32.xlu0 %v1849, 24
      %v1962 = vpop.permute.xlu0 %1961
      %1963 = vrot.lane.b32.xlu0 %v1850, 24
      %v1964 = vpop.permute.xlu0 %1963
      %1965 = vrot.lane.b32.xlu0 %v1851, 24
      %v1966 = vpop.permute.xlu0 %1965
      %1967 = vrot.lane.b32.xlu0 %v1852, 24
      %v1968 = vpop.permute.xlu0 %1967
      %1969 = vrot.lane.b32.xlu0 %v1853, 24
      %v1970 = vpop.permute.xlu0 %1969
      %1971 = vrot.lane.b32.xlu0 %v1854, 24
      %v1972 = vpop.permute.xlu0 %1971
      %1973 = vrot.lane.b32.xlu0 %v1855, 24
      %v1974 = vpop.permute.xlu0 %1973
      %1975 = vrot.lane.b32.xlu0 %v1856, 24
      %v1976 = vpop.permute.xlu0 %1975
      %1977 = vrot.lane.b32.xlu0 %v1857, 24
      %v1978 = vpop.permute.xlu0 %1977
      %1979 = vrot.lane.b32.xlu0 %v1858, 24
      %v1980 = vpop.permute.xlu0 %1979
      %1981 = vrot.lane.b32.xlu0 %v1859, 24
      %v1982 = vpop.permute.xlu0 %1981
      %vm2024 = vcmask 228544
      %2025 = vst.msk [vmem:[#allocation4] sm:$0xff] %vm2024, %v1902
      %2026 = vst.msk [vmem:[#allocation4 + $0x8] sm:$0xff] %vm2024, %v1904
      %2027 = vst.msk [vmem:[#allocation4 + $0x10] sm:$0xff] %vm2024, %v1906
      %2028 = vst.msk [vmem:[#allocation4 + $0x18] sm:$0xff] %vm2024, %v1908
      %2029 = vst.msk [vmem:[#allocation4 + $0x20] sm:$0xff] %vm2024, %v1910
      %2030 = vst.msk [vmem:[#allocation4 + $0x28] sm:$0xff] %vm2024, %v1912
      %2031 = vst.msk [vmem:[#allocation4 + $0x30] sm:$0xff] %vm2024, %v1914
      %2032 = vst.msk [vmem:[#allocation4 + $0x38] sm:$0xff] %vm2024, %v1916
      %2033 = vst.msk [vmem:[#allocation4 + $0x40] sm:$0xff] %vm2024, %v1918
      %2034 = vst.msk [vmem:[#allocation4 + $0x48] sm:$0xff] %vm2024, %v1920
      %2035 = vst.msk [vmem:[#allocation4 + $0x50] sm:$0xff] %vm2024, %v1922
      %2036 = vst.msk [vmem:[#allocation4 + $0x58] sm:$0xff] %vm2024, %v1924
      %2037 = vst.msk [vmem:[#allocation4 + $0x60] sm:$0xff] %vm2024, %v1926
      %2038 = vst.msk [vmem:[#allocation4 + $0x68] sm:$0xff] %vm2024, %v1928
      %2039 = vst.msk [vmem:[#allocation4 + $0x70] sm:$0xff] %vm2024, %v1930
      %2040 = vst.msk [vmem:[#allocation4 + $0x78] sm:$0xff] %vm2024, %v1932
      %2041 = vst.msk [vmem:[#allocation4 + $0x80] sm:$0xff] %vm2024, %v1934
      %2042 = vst.msk [vmem:[#allocation4 + $0x88] sm:$0xff] %vm2024, %v1936
      %2043 = vst.msk [vmem:[#allocation4 + $0x90] sm:$0xff] %vm2024, %v1938
      %2044 = vst.msk [vmem:[#allocation4 + $0x98] sm:$0xff] %vm2024, %v1940
      %2045 = vst.msk [vmem:[#allocation4 + $0xa0] sm:$0xff] %vm2024, %v1942
      %2046 = vst.msk [vmem:[#allocation4 + $0xa8] sm:$0xff] %vm2024, %v1944
      %2047 = vst.msk [vmem:[#allocation4 + $0xb0] sm:$0xff] %vm2024, %v1946
      %2048 = vst.msk [vmem:[#allocation4 + $0xb8] sm:$0xff] %vm2024, %v1948
      %2049 = vst.msk [vmem:[#allocation4 + $0xc0] sm:$0xff] %vm2024, %v1950
      %2050 = vst.msk [vmem:[#allocation4 + $0xc8] sm:$0xff] %vm2024, %v1952
      %2051 = vst.msk [vmem:[#allocation4 + $0xd0] sm:$0xff] %vm2024, %v1954
      %2052 = vst.msk [vmem:[#allocation4 + $0xd8] sm:$0xff] %vm2024, %v1956
      %2053 = vst.msk [vmem:[#allocation4 + $0xe0] sm:$0xff] %vm2024, %v1958
      %2054 = vst.msk [vmem:[#allocation4 + $0xe8] sm:$0xff] %vm2024, %v1960
      %2055 = vst.msk [vmem:[#allocation4 + $0xf0] sm:$0xff] %vm2024, %v1962
      %2056 = vst.msk [vmem:[#allocation4 + $0xf8] sm:$0xff] %vm2024, %v1964
      %2057 = vst.msk [vmem:[#allocation4 + $0x100] sm:$0xff] %vm2024, %v1966
      %2058 = vst.msk [vmem:[#allocation4 + $0x108] sm:$0xff] %vm2024, %v1968
      %2059 = vst.msk [vmem:[#allocation4 + $0x110] sm:$0xff] %vm2024, %v1970
      %2060 = vst.msk [vmem:[#allocation4 + $0x118] sm:$0xff] %vm2024, %v1972
      %2061 = vst.msk [vmem:[#allocation4 + $0x120] sm:$0xff] %vm2024, %v1974
      %2062 = vst.msk [vmem:[#allocation4 + $0x128] sm:$0xff] %vm2024, %v1976
      %2063 = vst.msk [vmem:[#allocation4 + $0x130] sm:$0xff] %vm2024, %v1978
      %2064 = vst.msk [vmem:[#allocation4 + $0x138] sm:$0xff] %vm2024, %v1980
      %vm2065 = vcmask 224448
      %2066 = vst.msk [vmem:[#allocation4 + $0x140] sm:$0xf] %vm2065, %v1982
      %v2067 = vld [vmem:[#allocation2 + $0x2a] sm:$0xff]
      %v2068 = vld [vmem:[#allocation2 + $0x32] sm:$0xff]
      %v2069 = vld [vmem:[#allocation2 + $0x3a] sm:$0xff]
      %v2070 = vld [vmem:[#allocation2 + $0x42] sm:$0xff]
      %v2071 = vld [vmem:[#allocation2 + $0x4a] sm:$0xff]
      %v2072 = vld [vmem:[#allocation2 + $0x52] sm:$0xff]
      %v2073 = vld [vmem:[#allocation2 + $0x5a] sm:$0xff]
      %v2074 = vld [vmem:[#allocation2 + $0x62] sm:$0xff]
      %v2075 = vld [vmem:[#allocation2 + $0x6a] sm:$0xff]
      %v2076 = vld [vmem:[#allocation2 + $0x72] sm:$0xff]
      %v2077 = vld [vmem:[#allocation2 + $0x7a] sm:$0xff]
      %v2078 = vld [vmem:[#allocation2 + $0x82] sm:$0xff]
      %v2079 = vld [vmem:[#allocation2 + $0x8a] sm:$0xff]
      %v2080 = vld [vmem:[#allocation2 + $0x92] sm:$0xff]
      %v2081 = vld [vmem:[#allocation2 + $0x9a] sm:$0xff]
      %v2082 = vld [vmem:[#allocation2 + $0xa2] sm:$0xff]
      %v2083 = vld [vmem:[#allocation2 + $0xaa] sm:$0xff]
      %v2084 = vld [vmem:[#allocation2 + $0xb2] sm:$0xff]
      %v2085 = vld [vmem:[#allocation2 + $0xba] sm:$0xff]
      %v2086 = vld [vmem:[#allocation2 + $0xc2] sm:$0xff]
      %v2087 = vld [vmem:[#allocation2 + $0xca] sm:$0xff]
      %v2088 = vld [vmem:[#allocation2 + $0xd2] sm:$0xff]
      %v2089 = vld [vmem:[#allocation2 + $0xda] sm:$0xff]
      %v2090 = vld [vmem:[#allocation2 + $0xe2] sm:$0xff]
      %v2091 = vld [vmem:[#allocation2 + $0xea] sm:$0xff]
      %v2092 = vld [vmem:[#allocation2 + $0xf2] sm:$0xff]
      %v2093 = vld [vmem:[#allocation2 + $0xfa] sm:$0xff]
      %v2094 = vld [vmem:[#allocation2 + $0x102] sm:$0xff]
      %v2095 = vld [vmem:[#allocation2 + $0x10a] sm:$0xff]
      %v2096 = vld [vmem:[#allocation2 + $0x112] sm:$0xff]
      %v2097 = vld [vmem:[#allocation2 + $0x11a] sm:$0xff]
      %v2098 = vld [vmem:[#allocation2 + $0x122] sm:$0xff]
      %v2099 = vld [vmem:[#allocation2 + $0x12a] sm:$0xff]
      %v2100 = vld [vmem:[#allocation2 + $0x132] sm:$0xff]
      %v2101 = vld [vmem:[#allocation2 + $0x13a] sm:$0xff]
      %v2102 = vld [vmem:[#allocation2 + $0x142] sm:$0xff]
      %v2103 = vld [vmem:[#allocation2 + $0x14a] sm:$0xff]
      %v2104 = vld [vmem:[#allocation2 + $0x152] sm:$0xff]
      %v2105 = vld [vmem:[#allocation2 + $0x15a] sm:$0xff]
      %v2106 = vld [vmem:[#allocation2 + $0x162] sm:$0xff]
      %v2107 = vld [vmem:[#allocation2 + $0x16a] sm:$0xf]
      %2149 = vrot.lane.b32.xlu0 %v2067, 28
      %v2150 = vpop.permute.xlu0 %2149
      %2151 = vrot.lane.b32.xlu0 %v2068, 28
      %v2152 = vpop.permute.xlu0 %2151
      %2153 = vrot.lane.b32.xlu0 %v2069, 28
      %v2154 = vpop.permute.xlu0 %2153
      %2155 = vrot.lane.b32.xlu0 %v2070, 28
      %v2156 = vpop.permute.xlu0 %2155
      %2157 = vrot.lane.b32.xlu0 %v2071, 28
      %v2158 = vpop.permute.xlu0 %2157
      %2159 = vrot.lane.b32.xlu0 %v2072, 28
      %v2160 = vpop.permute.xlu0 %2159
      %2161 = vrot.lane.b32.xlu0 %v2073, 28
      %v2162 = vpop.permute.xlu0 %2161
      %2163 = vrot.lane.b32.xlu0 %v2074, 28
      %v2164 = vpop.permute.xlu0 %2163
      %2165 = vrot.lane.b32.xlu0 %v2075, 28
      %v2166 = vpop.permute.xlu0 %2165
      %2167 = vrot.lane.b32.xlu0 %v2076, 28
      %v2168 = vpop.permute.xlu0 %2167
      %2169 = vrot.lane.b32.xlu0 %v2077, 28
      %v2170 = vpop.permute.xlu0 %2169
      %2171 = vrot.lane.b32.xlu0 %v2078, 28
      %v2172 = vpop.permute.xlu0 %2171
      %2173 = vrot.lane.b32.xlu0 %v2079, 28
      %v2174 = vpop.permute.xlu0 %2173
      %2175 = vrot.lane.b32.xlu0 %v2080, 28
      %v2176 = vpop.permute.xlu0 %2175
      %2177 = vrot.lane.b32.xlu0 %v2081, 28
      %v2178 = vpop.permute.xlu0 %2177
      %2179 = vrot.lane.b32.xlu0 %v2082, 28
      %v2180 = vpop.permute.xlu0 %2179
      %2181 = vrot.lane.b32.xlu0 %v2083, 28
      %v2182 = vpop.permute.xlu0 %2181
      %2183 = vrot.lane.b32.xlu0 %v2084, 28
      %v2184 = vpop.permute.xlu0 %2183
      %2185 = vrot.lane.b32.xlu0 %v2085, 28
      %v2186 = vpop.permute.xlu0 %2185
      %2187 = vrot.lane.b32.xlu0 %v2086, 28
      %v2188 = vpop.permute.xlu0 %2187
      %2189 = vrot.lane.b32.xlu0 %v2087, 28
      %v2190 = vpop.permute.xlu0 %2189
      %2191 = vrot.lane.b32.xlu0 %v2088, 28
      %v2192 = vpop.permute.xlu0 %2191
      %2193 = vrot.lane.b32.xlu0 %v2089, 28
      %v2194 = vpop.permute.xlu0 %2193
      %2195 = vrot.lane.b32.xlu0 %v2090, 28
      %v2196 = vpop.permute.xlu0 %2195
      %2197 = vrot.lane.b32.xlu0 %v2091, 28
      %v2198 = vpop.permute.xlu0 %2197
      %2199 = vrot.lane.b32.xlu0 %v2092, 28
      %v2200 = vpop.permute.xlu0 %2199
      %2201 = vrot.lane.b32.xlu0 %v2093, 28
      %v2202 = vpop.permute.xlu0 %2201
      %2203 = vrot.lane.b32.xlu0 %v2094, 28
      %v2204 = vpop.permute.xlu0 %2203
      %2205 = vrot.lane.b32.xlu0 %v2095, 28
      %v2206 = vpop.permute.xlu0 %2205
      %2207 = vrot.lane.b32.xlu0 %v2096, 28
      %v2208 = vpop.permute.xlu0 %2207
      %2209 = vrot.lane.b32.xlu0 %v2097, 28
      %v2210 = vpop.permute.xlu0 %2209
      %2211 = vrot.lane.b32.xlu0 %v2098, 28
      %v2212 = vpop.permute.xlu0 %2211
      %2213 = vrot.lane.b32.xlu0 %v2099, 28
      %v2214 = vpop.permute.xlu0 %2213
      %2215 = vrot.lane.b32.xlu0 %v2100, 28
      %v2216 = vpop.permute.xlu0 %2215
      %2217 = vrot.lane.b32.xlu0 %v2101, 28
      %v2218 = vpop.permute.xlu0 %2217
      %2219 = vrot.lane.b32.xlu0 %v2102, 28
      %v2220 = vpop.permute.xlu0 %2219
      %2221 = vrot.lane.b32.xlu0 %v2103, 28
      %v2222 = vpop.permute.xlu0 %2221
      %2223 = vrot.lane.b32.xlu0 %v2104, 28
      %v2224 = vpop.permute.xlu0 %2223
      %2225 = vrot.lane.b32.xlu0 %v2105, 28
      %v2226 = vpop.permute.xlu0 %2225
      %2227 = vrot.lane.b32.xlu0 %v2106, 28
      %v2228 = vpop.permute.xlu0 %2227
      %2229 = vrot.lane.b32.xlu0 %v2107, 28
      %v2230 = vpop.permute.xlu0 %2229
      %vm2272 = vcmask 261344
      %2273 = vst.msk [vmem:[#allocation4] sm:$0xff] %vm2272, %v2150
      %2274 = vst.msk [vmem:[#allocation4 + $0x8] sm:$0xff] %vm2272, %v2152
      %2275 = vst.msk [vmem:[#allocation4 + $0x10] sm:$0xff] %vm2272, %v2154
      %2276 = vst.msk [vmem:[#allocation4 + $0x18] sm:$0xff] %vm2272, %v2156
      %2277 = vst.msk [vmem:[#allocation4 + $0x20] sm:$0xff] %vm2272, %v2158
      %2278 = vst.msk [vmem:[#allocation4 + $0x28] sm:$0xff] %vm2272, %v2160
      %2279 = vst.msk [vmem:[#allocation4 + $0x30] sm:$0xff] %vm2272, %v2162
      %2280 = vst.msk [vmem:[#allocation4 + $0x38] sm:$0xff] %vm2272, %v2164
      %2281 = vst.msk [vmem:[#allocation4 + $0x40] sm:$0xff] %vm2272, %v2166
      %2282 = vst.msk [vmem:[#allocation4 + $0x48] sm:$0xff] %vm2272, %v2168
      %2283 = vst.msk [vmem:[#allocation4 + $0x50] sm:$0xff] %vm2272, %v2170
      %2284 = vst.msk [vmem:[#allocation4 + $0x58] sm:$0xff] %vm2272, %v2172
      %2285 = vst.msk [vmem:[#allocation4 + $0x60] sm:$0xff] %vm2272, %v2174
      %2286 = vst.msk [vmem:[#allocation4 + $0x68] sm:$0xff] %vm2272, %v2176
      %2287 = vst.msk [vmem:[#allocation4 + $0x70] sm:$0xff] %vm2272, %v2178
      %2288 = vst.msk [vmem:[#allocation4 + $0x78] sm:$0xff] %vm2272, %v2180
      %2289 = vst.msk [vmem:[#allocation4 + $0x80] sm:$0xff] %vm2272, %v2182
      %2290 = vst.msk [vmem:[#allocation4 + $0x88] sm:$0xff] %vm2272, %v2184
      %2291 = vst.msk [vmem:[#allocation4 + $0x90] sm:$0xff] %vm2272, %v2186
      %2292 = vst.msk [vmem:[#allocation4 + $0x98] sm:$0xff] %vm2272, %v2188
      %2293 = vst.msk [vmem:[#allocation4 + $0xa0] sm:$0xff] %vm2272, %v2190
      %2294 = vst.msk [vmem:[#allocation4 + $0xa8] sm:$0xff] %vm2272, %v2192
      %2295 = vst.msk [vmem:[#allocation4 + $0xb0] sm:$0xff] %vm2272, %v2194
      %2296 = vst.msk [vmem:[#allocation4 + $0xb8] sm:$0xff] %vm2272, %v2196
      %2297 = vst.msk [vmem:[#allocation4 + $0xc0] sm:$0xff] %vm2272, %v2198
      %2298 = vst.msk [vmem:[#allocation4 + $0xc8] sm:$0xff] %vm2272, %v2200
      %2299 = vst.msk [vmem:[#allocation4 + $0xd0] sm:$0xff] %vm2272, %v2202
      %2300 = vst.msk [vmem:[#allocation4 + $0xd8] sm:$0xff] %vm2272, %v2204
      %2301 = vst.msk [vmem:[#allocation4 + $0xe0] sm:$0xff] %vm2272, %v2206
      %2302 = vst.msk [vmem:[#allocation4 + $0xe8] sm:$0xff] %vm2272, %v2208
      %2303 = vst.msk [vmem:[#allocation4 + $0xf0] sm:$0xff] %vm2272, %v2210
      %2304 = vst.msk [vmem:[#allocation4 + $0xf8] sm:$0xff] %vm2272, %v2212
      %2305 = vst.msk [vmem:[#allocation4 + $0x100] sm:$0xff] %vm2272, %v2214
      %2306 = vst.msk [vmem:[#allocation4 + $0x108] sm:$0xff] %vm2272, %v2216
      %2307 = vst.msk [vmem:[#allocation4 + $0x110] sm:$0xff] %vm2272, %v2218
      %2308 = vst.msk [vmem:[#allocation4 + $0x118] sm:$0xff] %vm2272, %v2220
      %2309 = vst.msk [vmem:[#allocation4 + $0x120] sm:$0xff] %vm2272, %v2222
      %2310 = vst.msk [vmem:[#allocation4 + $0x128] sm:$0xff] %vm2272, %v2224
      %2311 = vst.msk [vmem:[#allocation4 + $0x130] sm:$0xff] %vm2272, %v2226
      %2312 = vst.msk [vmem:[#allocation4 + $0x138] sm:$0xff] %vm2272, %v2228
      %vm2313 = vcmask 257248
      %2314 = vst.msk [vmem:[#allocation4 + $0x140] sm:$0xf] %vm2313, %v2230
      %v2315 = vld [vmem:[#allocation2 + $0x2b] sm:$0xff]
      %v2316 = vld [vmem:[#allocation2 + $0x33] sm:$0xff]
      %v2317 = vld [vmem:[#allocation2 + $0x3b] sm:$0xff]
      %v2318 = vld [vmem:[#allocation2 + $0x43] sm:$0xff]
      %v2319 = vld [vmem:[#allocation2 + $0x4b] sm:$0xff]
      %v2320 = vld [vmem:[#allocation2 + $0x53] sm:$0xff]
      %v2321 = vld [vmem:[#allocation2 + $0x5b] sm:$0xff]
      %v2322 = vld [vmem:[#allocation2 + $0x63] sm:$0xff]
      %v2323 = vld [vmem:[#allocation2 + $0x6b] sm:$0xff]
      %v2324 = vld [vmem:[#allocation2 + $0x73] sm:$0xff]
      %v2325 = vld [vmem:[#allocation2 + $0x7b] sm:$0xff]
      %v2326 = vld [vmem:[#allocation2 + $0x83] sm:$0xff]
      %v2327 = vld [vmem:[#allocation2 + $0x8b] sm:$0xff]
      %v2328 = vld [vmem:[#allocation2 + $0x93] sm:$0xff]
      %v2329 = vld [vmem:[#allocation2 + $0x9b] sm:$0xff]
      %v2330 = vld [vmem:[#allocation2 + $0xa3] sm:$0xff]
      %v2331 = vld [vmem:[#allocation2 + $0xab] sm:$0xff]
      %v2332 = vld [vmem:[#allocation2 + $0xb3] sm:$0xff]
      %v2333 = vld [vmem:[#allocation2 + $0xbb] sm:$0xff]
      %v2334 = vld [vmem:[#allocation2 + $0xc3] sm:$0xff]
      %v2335 = vld [vmem:[#allocation2 + $0xcb] sm:$0xff]
      %v2336 = vld [vmem:[#allocation2 + $0xd3] sm:$0xff]
      %v2337 = vld [vmem:[#allocation2 + $0xdb] sm:$0xff]
      %v2338 = vld [vmem:[#allocation2 + $0xe3] sm:$0xff]
      %v2339 = vld [vmem:[#allocation2 + $0xeb] sm:$0xff]
      %v2340 = vld [vmem:[#allocation2 + $0xf3] sm:$0xff]
      %v2341 = vld [vmem:[#allocation2 + $0xfb] sm:$0xff]
      %v2342 = vld [vmem:[#allocation2 + $0x103] sm:$0xff]
      %v2343 = vld [vmem:[#allocation2 + $0x10b] sm:$0xff]
      %v2344 = vld [vmem:[#allocation2 + $0x113] sm:$0xff]
      %v2345 = vld [vmem:[#allocation2 + $0x11b] sm:$0xff]
      %v2346 = vld [vmem:[#allocation2 + $0x123] sm:$0xff]
      %v2347 = vld [vmem:[#allocation2 + $0x12b] sm:$0xff]
      %v2348 = vld [vmem:[#allocation2 + $0x133] sm:$0xff]
      %v2349 = vld [vmem:[#allocation2 + $0x13b] sm:$0xff]
      %v2350 = vld [vmem:[#allocation2 + $0x143] sm:$0xff]
      %v2351 = vld [vmem:[#allocation2 + $0x14b] sm:$0xff]
      %v2352 = vld [vmem:[#allocation2 + $0x153] sm:$0xff]
      %v2353 = vld [vmem:[#allocation2 + $0x15b] sm:$0xff]
      %v2354 = vld [vmem:[#allocation2 + $0x163] sm:$0xff]
      %v2355 = vld [vmem:[#allocation2 + $0x16b] sm:$0xf]
      %2397 = vrot.lane.b32.xlu0 %v2315, 32
      %v2398 = vpop.permute.xlu0 %2397
      %2399 = vrot.lane.b32.xlu0 %v2316, 32
      %v2400 = vpop.permute.xlu0 %2399
      %2401 = vrot.lane.b32.xlu0 %v2317, 32
      %v2402 = vpop.permute.xlu0 %2401
      %2403 = vrot.lane.b32.xlu0 %v2318, 32
      %v2404 = vpop.permute.xlu0 %2403
      %2405 = vrot.lane.b32.xlu0 %v2319, 32
      %v2406 = vpop.permute.xlu0 %2405
      %2407 = vrot.lane.b32.xlu0 %v2320, 32
      %v2408 = vpop.permute.xlu0 %2407
      %2409 = vrot.lane.b32.xlu0 %v2321, 32
      %v2410 = vpop.permute.xlu0 %2409
      %2411 = vrot.lane.b32.xlu0 %v2322, 32
      %v2412 = vpop.permute.xlu0 %2411
      %2413 = vrot.lane.b32.xlu0 %v2323, 32
      %v2414 = vpop.permute.xlu0 %2413
      %2415 = vrot.lane.b32.xlu0 %v2324, 32
      %v2416 = vpop.permute.xlu0 %2415
      %2417 = vrot.lane.b32.xlu0 %v2325, 32
      %v2418 = vpop.permute.xlu0 %2417
      %2419 = vrot.lane.b32.xlu0 %v2326, 32
      %v2420 = vpop.permute.xlu0 %2419
      %2421 = vrot.lane.b32.xlu0 %v2327, 32
      %v2422 = vpop.permute.xlu0 %2421
      %2423 = vrot.lane.b32.xlu0 %v2328, 32
      %v2424 = vpop.permute.xlu0 %2423
      %2425 = vrot.lane.b32.xlu0 %v2329, 32
      %v2426 = vpop.permute.xlu0 %2425
      %2427 = vrot.lane.b32.xlu0 %v2330, 32
      %v2428 = vpop.permute.xlu0 %2427
      %2429 = vrot.lane.b32.xlu0 %v2331, 32
      %v2430 = vpop.permute.xlu0 %2429
      %2431 = vrot.lane.b32.xlu0 %v2332, 32
      %v2432 = vpop.permute.xlu0 %2431
      %2433 = vrot.lane.b32.xlu0 %v2333, 32
      %v2434 = vpop.permute.xlu0 %2433
      %2435 = vrot.lane.b32.xlu0 %v2334, 32
      %v2436 = vpop.permute.xlu0 %2435
      %2437 = vrot.lane.b32.xlu0 %v2335, 32
      %v2438 = vpop.permute.xlu0 %2437
      %2439 = vrot.lane.b32.xlu0 %v2336, 32
      %v2440 = vpop.permute.xlu0 %2439
      %2441 = vrot.lane.b32.xlu0 %v2337, 32
      %v2442 = vpop.permute.xlu0 %2441
      %2443 = vrot.lane.b32.xlu0 %v2338, 32
      %v2444 = vpop.permute.xlu0 %2443
      %2445 = vrot.lane.b32.xlu0 %v2339, 32
      %v2446 = vpop.permute.xlu0 %2445
      %2447 = vrot.lane.b32.xlu0 %v2340, 32
      %v2448 = vpop.permute.xlu0 %2447
      %2449 = vrot.lane.b32.xlu0 %v2341, 32
      %v2450 = vpop.permute.xlu0 %2449
      %2451 = vrot.lane.b32.xlu0 %v2342, 32
      %v2452 = vpop.permute.xlu0 %2451
      %2453 = vrot.lane.b32.xlu0 %v2343, 32
      %v2454 = vpop.permute.xlu0 %2453
      %2455 = vrot.lane.b32.xlu0 %v2344, 32
      %v2456 = vpop.permute.xlu0 %2455
      %2457 = vrot.lane.b32.xlu0 %v2345, 32
      %v2458 = vpop.permute.xlu0 %2457
      %2459 = vrot.lane.b32.xlu0 %v2346, 32
      %v2460 = vpop.permute.xlu0 %2459
      %2461 = vrot.lane.b32.xlu0 %v2347, 32
      %v2462 = vpop.permute.xlu0 %2461
      %2463 = vrot.lane.b32.xlu0 %v2348, 32
      %v2464 = vpop.permute.xlu0 %2463
      %2465 = vrot.lane.b32.xlu0 %v2349, 32
      %v2466 = vpop.permute.xlu0 %2465
      %2467 = vrot.lane.b32.xlu0 %v2350, 32
      %v2468 = vpop.permute.xlu0 %2467
      %2469 = vrot.lane.b32.xlu0 %v2351, 32
      %v2470 = vpop.permute.xlu0 %2469
      %2471 = vrot.lane.b32.xlu0 %v2352, 32
      %v2472 = vpop.permute.xlu0 %2471
      %2473 = vrot.lane.b32.xlu0 %v2353, 32
      %v2474 = vpop.permute.xlu0 %2473
      %2475 = vrot.lane.b32.xlu0 %v2354, 32
      %v2476 = vpop.permute.xlu0 %2475
      %2477 = vrot.lane.b32.xlu0 %v2355, 32
      %v2478 = vpop.permute.xlu0 %2477
      %vm2520 = vcmask 294144
      %2521 = vst.msk [vmem:[#allocation4] sm:$0xff] %vm2520, %v2398
      %2522 = vst.msk [vmem:[#allocation4 + $0x8] sm:$0xff] %vm2520, %v2400
      %2523 = vst.msk [vmem:[#allocation4 + $0x10] sm:$0xff] %vm2520, %v2402
      %2524 = vst.msk [vmem:[#allocation4 + $0x18] sm:$0xff] %vm2520, %v2404
      %2525 = vst.msk [vmem:[#allocation4 + $0x20] sm:$0xff] %vm2520, %v2406
      %2526 = vst.msk [vmem:[#allocation4 + $0x28] sm:$0xff] %vm2520, %v2408
      %2527 = vst.msk [vmem:[#allocation4 + $0x30] sm:$0xff] %vm2520, %v2410
      %2528 = vst.msk [vmem:[#allocation4 + $0x38] sm:$0xff] %vm2520, %v2412
      %2529 = vst.msk [vmem:[#allocation4 + $0x40] sm:$0xff] %vm2520, %v2414
      %2530 = vst.msk [vmem:[#allocation4 + $0x48] sm:$0xff] %vm2520, %v2416
      %2531 = vst.msk [vmem:[#allocation4 + $0x50] sm:$0xff] %vm2520, %v2418
      %2532 = vst.msk [vmem:[#allocation4 + $0x58] sm:$0xff] %vm2520, %v2420
      %2533 = vst.msk [vmem:[#allocation4 + $0x60] sm:$0xff] %vm2520, %v2422
      %2534 = vst.msk [vmem:[#allocation4 + $0x68] sm:$0xff] %vm2520, %v2424
      %2535 = vst.msk [vmem:[#allocation4 + $0x70] sm:$0xff] %vm2520, %v2426
      %2536 = vst.msk [vmem:[#allocation4 + $0x78] sm:$0xff] %vm2520, %v2428
      %2537 = vst.msk [vmem:[#allocation4 + $0x80] sm:$0xff] %vm2520, %v2430
      %2538 = vst.msk [vmem:[#allocation4 + $0x88] sm:$0xff] %vm2520, %v2432
      %2539 = vst.msk [vmem:[#allocation4 + $0x90] sm:$0xff] %vm2520, %v2434
      %2540 = vst.msk [vmem:[#allocation4 + $0x98] sm:$0xff] %vm2520, %v2436
      %2541 = vst.msk [vmem:[#allocation4 + $0xa0] sm:$0xff] %vm2520, %v2438
      %2542 = vst.msk [vmem:[#allocation4 + $0xa8] sm:$0xff] %vm2520, %v2440
      %2543 = vst.msk [vmem:[#allocation4 + $0xb0] sm:$0xff] %vm2520, %v2442
      %2544 = vst.msk [vmem:[#allocation4 + $0xb8] sm:$0xff] %vm2520, %v2444
      %2545 = vst.msk [vmem:[#allocation4 + $0xc0] sm:$0xff] %vm2520, %v2446
      %2546 = vst.msk [vmem:[#allocation4 + $0xc8] sm:$0xff] %vm2520, %v2448
      %2547 = vst.msk [vmem:[#allocation4 + $0xd0] sm:$0xff] %vm2520, %v2450
      %2548 = vst.msk [vmem:[#allocation4 + $0xd8] sm:$0xff] %vm2520, %v2452
      %2549 = vst.msk [vmem:[#allocation4 + $0xe0] sm:$0xff] %vm2520, %v2454
      %2550 = vst.msk [vmem:[#allocation4 + $0xe8] sm:$0xff] %vm2520, %v2456
      %2551 = vst.msk [vmem:[#allocation4 + $0xf0] sm:$0xff] %vm2520, %v2458
      %2552 = vst.msk [vmem:[#allocation4 + $0xf8] sm:$0xff] %vm2520, %v2460
      %2553 = vst.msk [vmem:[#allocation4 + $0x100] sm:$0xff] %vm2520, %v2462
      %2554 = vst.msk [vmem:[#allocation4 + $0x108] sm:$0xff] %vm2520, %v2464
      %2555 = vst.msk [vmem:[#allocation4 + $0x110] sm:$0xff] %vm2520, %v2466
      %2556 = vst.msk [vmem:[#allocation4 + $0x118] sm:$0xff] %vm2520, %v2468
      %2557 = vst.msk [vmem:[#allocation4 + $0x120] sm:$0xff] %vm2520, %v2470
      %2558 = vst.msk [vmem:[#allocation4 + $0x128] sm:$0xff] %vm2520, %v2472
      %2559 = vst.msk [vmem:[#allocation4 + $0x130] sm:$0xff] %vm2520, %v2474
      %2560 = vst.msk [vmem:[#allocation4 + $0x138] sm:$0xff] %vm2520, %v2476
      %vm2561 = vcmask 290048
      %2562 = vst.msk [vmem:[#allocation4 + $0x140] sm:$0xf] %vm2561, %v2478
      %v2563 = vld [vmem:[#allocation4] sm:$0xff]
      %v2564 = vld [vmem:[#allocation4 + $0x8] sm:$0xff]
      %v2565 = vld [vmem:[#allocation4 + $0x10] sm:$0xff]
      %v2566 = vld [vmem:[#allocation4 + $0x18] sm:$0xff]
      %v2567 = vld [vmem:[#allocation4 + $0x20] sm:$0xff]
      %v2568 = vld [vmem:[#allocation4 + $0x28] sm:$0xff]
      %v2569 = vld [vmem:[#allocation4 + $0x30] sm:$0xff]
      %v2570 = vld [vmem:[#allocation4 + $0x38] sm:$0xff]
      %v2571 = vld [vmem:[#allocation4 + $0x40] sm:$0xff]
      %v2572 = vld [vmem:[#allocation4 + $0x48] sm:$0xff]
      %v2573 = vld [vmem:[#allocation4 + $0x50] sm:$0xff]
      %v2574 = vld [vmem:[#allocation4 + $0x58] sm:$0xff]
      %v2575 = vld [vmem:[#allocation4 + $0x60] sm:$0xff]
      %v2576 = vld [vmem:[#allocation4 + $0x68] sm:$0xff]
      %v2577 = vld [vmem:[#allocation4 + $0x70] sm:$0xff]
      %v2578 = vld [vmem:[#allocation4 + $0x78] sm:$0xff]
      %v2579 = vld [vmem:[#allocation4 + $0x80] sm:$0xff]
      %v2580 = vld [vmem:[#allocation4 + $0x88] sm:$0xff]
      %v2581 = vld [vmem:[#allocation4 + $0x90] sm:$0xff]
      %v2582 = vld [vmem:[#allocation4 + $0x98] sm:$0xff]
      %v2583 = vld [vmem:[#allocation4 + $0xa0] sm:$0xff]
      %v2584 = vld [vmem:[#allocation4 + $0xa8] sm:$0xff]
      %v2585 = vld [vmem:[#allocation4 + $0xb0] sm:$0xff]
      %v2586 = vld [vmem:[#allocation4 + $0xb8] sm:$0xff]
      %v2587 = vld [vmem:[#allocation4 + $0xc0] sm:$0xff]
      %v2588 = vld [vmem:[#allocation4 + $0xc8] sm:$0xff]
      %v2589 = vld [vmem:[#allocation4 + $0xd0] sm:$0xff]
      %v2590 = vld [vmem:[#allocation4 + $0xd8] sm:$0xff]
      %v2591 = vld [vmem:[#allocation4 + $0xe0] sm:$0xff]
      %v2592 = vld [vmem:[#allocation4 + $0xe8] sm:$0xff]
      %v2593 = vld [vmem:[#allocation4 + $0xf0] sm:$0xff]
      %v2594 = vld [vmem:[#allocation4 + $0xf8] sm:$0xff]
      %v2595 = vld [vmem:[#allocation4 + $0x100] sm:$0xff]
      %v2596 = vld [vmem:[#allocation4 + $0x108] sm:$0xff]
      %v2597 = vld [vmem:[#allocation4 + $0x110] sm:$0xff]
      %v2598 = vld [vmem:[#allocation4 + $0x118] sm:$0xff]
      %v2599 = vld [vmem:[#allocation4 + $0x120] sm:$0xff]
      %v2600 = vld [vmem:[#allocation4 + $0x128] sm:$0xff]
      %v2601 = vld [vmem:[#allocation4 + $0x130] sm:$0xff]
      %v2602 = vld [vmem:[#allocation4 + $0x138] sm:$0xff]
      %v2603 = vld [vmem:[#allocation4 + $0x140] sm:$0xf]
      %vm2604 = vcmask 293888
      %v2606 = vsel %vm2604, %v2563, 0
      %v2609 = vsel %vm2604, %v2564, 0
      %v2612 = vsel %vm2604, %v2565, 0
      %v2615 = vsel %vm2604, %v2566, 0
      %v2618 = vsel %vm2604, %v2567, 0
      %v2621 = vsel %vm2604, %v2568, 0
      %v2624 = vsel %vm2604, %v2569, 0
      %v2627 = vsel %vm2604, %v2570, 0
      %v2630 = vsel %vm2604, %v2571, 0
      %v2633 = vsel %vm2604, %v2572, 0
      %v2636 = vsel %vm2604, %v2573, 0
      %v2639 = vsel %vm2604, %v2574, 0
      %v2642 = vsel %vm2604, %v2575, 0
      %v2645 = vsel %vm2604, %v2576, 0
      %v2648 = vsel %vm2604, %v2577, 0
      %v2651 = vsel %vm2604, %v2578, 0
      %v2654 = vsel %vm2604, %v2579, 0
      %v2657 = vsel %vm2604, %v2580, 0
      %v2660 = vsel %vm2604, %v2581, 0
      %v2663 = vsel %vm2604, %v2582, 0
      %v2666 = vsel %vm2604, %v2583, 0
      %v2669 = vsel %vm2604, %v2584, 0
      %v2672 = vsel %vm2604, %v2585, 0
      %v2675 = vsel %vm2604, %v2586, 0
      %v2678 = vsel %vm2604, %v2587, 0
      %v2681 = vsel %vm2604, %v2588, 0
      %v2684 = vsel %vm2604, %v2589, 0
      %v2687 = vsel %vm2604, %v2590, 0
      %v2690 = vsel %vm2604, %v2591, 0
      %v2693 = vsel %vm2604, %v2592, 0
      %v2696 = vsel %vm2604, %v2593, 0
      %v2699 = vsel %vm2604, %v2594, 0
      %v2702 = vsel %vm2604, %v2595, 0
      %v2705 = vsel %vm2604, %v2596, 0
      %v2708 = vsel %vm2604, %v2597, 0
      %v2711 = vsel %vm2604, %v2598, 0
      %v2714 = vsel %vm2604, %v2599, 0
      %v2717 = vsel %vm2604, %v2600, 0
      %v2720 = vsel %vm2604, %v2601, 0
      %v2723 = vsel %vm2604, %v2602, 0
      %v2726 = vsel %vm2604, %v2603, 0
      %vm2728 = vcmask 1043456
      %v2730 = vsel %vm2728, %v494, 0
      %2732 = vmatprep.subr.mxu0 0.0
      %2733 = vmatpush1.msra.mxu0 %v490
      %2734 = vmatprep.subr.mxu0 0.0
      %2735 = vmatpush1.msra.mxu0 %v491
      %2736 = vmatprep.subr.mxu0 0.0
      %2737 = vmatpush1.msra.mxu0 %v492
      %2738 = vmatprep.subr.mxu0 0.0
      %2739 = vmatpush1.msra.mxu0 %v493
      %2740 = vmatprep.subr.mxu0 0.0
      %2741 = vmatpush1.msra.mxu0 %v2730
      %2742 = vmatprep.subr.mxu0 0.0
      %2743 = vmatpush1.msra.mxu0 0.0
      %2744 = vmatprep.subr.mxu0 0.0
      %2745 = vmatpush1.msra.mxu0 0.0
      %2746 = vmatprep.subr.mxu0 0.0
      %2747 = vmatpush1.msra.mxu0 0.0
      %2748 = vmatprep.subr.mxu0 0.0
      %2749 = vmatpush1.msra.mxu0 0.0
      %2750 = vmatprep.subr.mxu0 0.0
      %2751 = vmatpush1.msra.mxu0 0.0
      %2752 = vmatprep.subr.mxu0 0.0
      %2753 = vmatpush1.msra.mxu0 0.0
      %2754 = vmatprep.subr.mxu0 0.0
      %2755 = vmatpush1.msra.mxu0 0.0
      %2756 = vmatprep.subr.mxu0 0.0
      %2757 = vmatpush1.msra.mxu0 0.0
      %2758 = vmatprep.subr.mxu0 0.0
      %2759 = vmatpush1.msra.mxu0 0.0
      %2760 = vmatprep.subr.mxu0 0.0
      %2761 = vmatpush1.msra.mxu0 0.0
      %2762 = vmatprep.subr.mxu0 0.0
      %2763 = vmatpush1.msra.mxu0 0.0
      %2764 = vmatprep.subr.mxu0 0.0
      %2765 = vmatpush1.msra.mxu0 0.0
      %2766 = vmatprep.subr.mxu0 0.0
      %2767 = vmatpush1.msra.mxu0 0.0
      %2768 = vmatprep.subr.mxu0 0.0
      %2769 = vmatpush1.msra.mxu0 0.0
      %2770 = vmatprep.subr.mxu0 0.0
      %2771 = vmatpush1.msra.mxu0 0.0
      %2772 = vmatprep.subr.mxu0 0.0
      %2773 = vmatpush1.msra.mxu0 0.0
      %2774 = vmatprep.subr.mxu0 0.0
      %2775 = vmatpush1.msra.mxu0 0.0
      %2776 = vmatprep.subr.mxu0 0.0
      %2777 = vmatpush1.msra.mxu0 0.0
      %2778 = vmatprep.subr.mxu0 0.0
      %2779 = vmatpush1.msra.mxu0 0.0
      %2780 = vmatprep.subr.mxu0 0.0
      %2781 = vmatpush1.msra.mxu0 0.0
      %2782 = vmatprep.subr.mxu0 0.0
      %2783 = vmatpush1.msra.mxu0 0.0
      %2784 = vmatprep.subr.mxu0 0.0
      %2785 = vmatpush1.msra.mxu0 0.0
      %2786 = vmatprep.subr.mxu0 0.0
      %2787 = vmatpush1.msra.mxu0 0.0
      %2788 = vmatprep.subr.mxu0 0.0
      %2789 = vmatpush1.msra.mxu0 0.0
      %2790 = vmatprep.subr.mxu0 0.0
      %2791 = vmatpush1.msra.mxu0 0.0
      %2792 = vmatprep.subr.mxu0 0.0
      %2793 = vmatpush1.msra.mxu0 0.0
      %2794 = vmatprep.subr.mxu0 0.0
      %2795 = vmatpush1.msra.mxu0 0.0
      %2796 = vmatprep.mubr.f32.mxu0 0.0
      %2797 = vmatmul.mubr.f32.gmra.mrb[0].mxu0 %v2606
      %v2798 = vpop.f32.mrb[0].mxu0
      %v2799 = vadd.f32 0.0, %v2798
      %v2800 = vpop.f32.mrb[0].mxu0
      %2801 = vmatprep.mubr.f32.mxu0 0.0
      %2802 = vmatmul.mubr.f32.gmra.mrb[0].mxu0 %v2609
      %v2803 = vpop.f32.mrb[0].mxu0
      %v2804 = vadd.f32 0.0, %v2803
      %v2805 = vpop.f32.mrb[0].mxu0
      %2806 = vmatprep.mubr.f32.mxu0 0.0
      %2807 = vmatmul.mubr.f32.gmra.mrb[0].mxu0 %v2612
      %v2808 = vpop.f32.mrb[0].mxu0
      %v2809 = vadd.f32 0.0, %v2808
      %v2810 = vpop.f32.mrb[0].mxu0
      %2811 = vmatprep.mubr.f32.mxu0 0.0
      %2812 = vmatmul.mubr.f32.gmra.mrb[0].mxu0 %v2615
      %v2813 = vpop.f32.mrb[0].mxu0
      %v2814 = vadd.f32 0.0, %v2813
      %v2815 = vpop.f32.mrb[0].mxu0
      %2816 = vmatprep.mubr.f32.mxu0 0.0
      %2817 = vmatmul.mubr.f32.gmra.mrb[0].mxu0 %v2618
      %v2818 = vpop.f32.mrb[0].mxu0
      %v2819 = vadd.f32 0.0, %v2818
      %v2820 = vpop.f32.mrb[0].mxu0
      %2821 = vmatprep.mubr.f32.mxu0 0.0
      %2822 = vmatmul.mubr.f32.gmra.mrb[0].mxu0 %v2621
      %v2823 = vpop.f32.mrb[0].mxu0
      %v2824 = vadd.f32 0.0, %v2823
      %v2825 = vpop.f32.mrb[0].mxu0
      %2826 = vmatprep.mubr.f32.mxu0 0.0
      %2827 = vmatmul.mubr.f32.gmra.mrb[0].mxu0 %v2624
      %v2828 = vpop.f32.mrb[0].mxu0
      %v2829 = vadd.f32 0.0, %v2828
      %v2830 = vpop.f32.mrb[0].mxu0
      %2831 = vmatprep.mubr.f32.mxu0 0.0
      %2832 = vmatmul.mubr.f32.gmra.mrb[0].mxu0 %v2627
      %v2833 = vpop.f32.mrb[0].mxu0
      %v2834 = vadd.f32 0.0, %v2833
      %v2835 = vpop.f32.mrb[0].mxu0
      %2836 = vmatprep.mubr.f32.mxu0 0.0
      %2837 = vmatmul.mubr.f32.gmra.mrb[0].mxu0 %v2630
      %v2838 = vpop.f32.mrb[0].mxu0
      %v2839 = vadd.f32 0.0, %v2838
      %v2840 = vpop.f32.mrb[0].mxu0
      %2841 = vmatprep.mubr.f32.mxu0 0.0
      %2842 = vmatmul.mubr.f32.gmra.mrb[0].mxu0 %v2633
      %v2843 = vpop.f32.mrb[0].mxu0
      %v2844 = vadd.f32 0.0, %v2843
      %v2845 = vpop.f32.mrb[0].mxu0
      %2846 = vmatprep.mubr.f32.mxu0 0.0
      %2847 = vmatmul.mubr.f32.gmra.mrb[0].mxu0 %v2636
      %v2848 = vpop.f32.mrb[0].mxu0
      %v2849 = vadd.f32 0.0, %v2848
      %v2850 = vpop.f32.mrb[0].mxu0
      %2851 = vmatprep.mubr.f32.mxu0 0.0
      %2852 = vmatmul.mubr.f32.gmra.mrb[0].mxu0 %v2639
      %v2853 = vpop.f32.mrb[0].mxu0
      %v2854 = vadd.f32 0.0, %v2853
      %v2855 = vpop.f32.mrb[0].mxu0
      %2856 = vmatprep.mubr.f32.mxu0 0.0
      %2857 = vmatmul.mubr.f32.gmra.mrb[0].mxu0 %v2642
      %v2858 = vpop.f32.mrb[0].mxu0
      %v2859 = vadd.f32 0.0, %v2858
      %v2860 = vpop.f32.mrb[0].mxu0
      %2861 = vmatprep.mubr.f32.mxu0 0.0
      %2862 = vmatmul.mubr.f32.gmra.mrb[0].mxu0 %v2645
      %v2863 = vpop.f32.mrb[0].mxu0
      %v2864 = vadd.f32 0.0, %v2863
      %v2865 = vpop.f32.mrb[0].mxu0
      %2866 = vmatprep.mubr.f32.mxu0 0.0
      %2867 = vmatmul.mubr.f32.gmra.mrb[0].mxu0 %v2648
      %v2868 = vpop.f32.mrb[0].mxu0
      %v2869 = vadd.f32 0.0, %v2868
      %v2870 = vpop.f32.mrb[0].mxu0
      %2871 = vmatprep.mubr.f32.mxu0 0.0
      %2872 = vmatmul.mubr.f32.gmra.mrb[0].mxu0 %v2651
      %v2873 = vpop.f32.mrb[0].mxu0
      %v2874 = vadd.f32 0.0, %v2873
      %v2875 = vpop.f32.mrb[0].mxu0
      %2876 = vmatprep.mubr.f32.mxu0 0.0
      %2877 = vmatmul.mubr.f32.gmra.mrb[0].mxu0 %v2654
      %v2878 = vpop.f32.mrb[0].mxu0
      %v2879 = vadd.f32 0.0, %v2878
      %v2880 = vpop.f32.mrb[0].mxu0
      %2881 = vmatprep.mubr.f32.mxu0 0.0
      %2882 = vmatmul.mubr.f32.gmra.mrb[0].mxu0 %v2657
      %v2883 = vpop.f32.mrb[0].mxu0
      %v2884 = vadd.f32 0.0, %v2883
      %v2885 = vpop.f32.mrb[0].mxu0
      %2886 = vmatprep.mubr.f32.mxu0 0.0
      %2887 = vmatmul.mubr.f32.gmra.mrb[0].mxu0 %v2660
      %v2888 = vpop.f32.mrb[0].mxu0
      %v2889 = vadd.f32 0.0, %v2888
      %v2890 = vpop.f32.mrb[0].mxu0
      %2891 = vmatprep.mubr.f32.mxu0 0.0
      %2892 = vmatmul.mubr.f32.gmra.mrb[0].mxu0 %v2663
      %v2893 = vpop.f32.mrb[0].mxu0
      %v2894 = vadd.f32 0.0, %v2893
      %v2895 = vpop.f32.mrb[0].mxu0
      %2896 = vmatprep.mubr.f32.mxu0 0.0
      %2897 = vmatmul.mubr.f32.gmra.mrb[0].mxu0 %v2666
      %v2898 = vpop.f32.mrb[0].mxu0
      %v2899 = vadd.f32 0.0, %v2898
      %v2900 = vpop.f32.mrb[0].mxu0
      %2901 = vmatprep.mubr.f32.mxu0 0.0
      %2902 = vmatmul.mubr.f32.gmra.mrb[0].mxu0 %v2669
      %v2903 = vpop.f32.mrb[0].mxu0
      %v2904 = vadd.f32 0.0, %v2903
      %v2905 = vpop.f32.mrb[0].mxu0
      %2906 = vmatprep.mubr.f32.mxu0 0.0
      %2907 = vmatmul.mubr.f32.gmra.mrb[0].mxu0 %v2672
      %v2908 = vpop.f32.mrb[0].mxu0
      %v2909 = vadd.f32 0.0, %v2908
      %v2910 = vpop.f32.mrb[0].mxu0
      %2911 = vmatprep.mubr.f32.mxu0 0.0
      %2912 = vmatmul.mubr.f32.gmra.mrb[0].mxu0 %v2675
      %v2913 = vpop.f32.mrb[0].mxu0
      %v2914 = vadd.f32 0.0, %v2913
      %v2915 = vpop.f32.mrb[0].mxu0
      %2916 = vmatprep.mubr.f32.mxu0 0.0
      %2917 = vmatmul.mubr.f32.gmra.mrb[0].mxu0 %v2678
      %v2918 = vpop.f32.mrb[0].mxu0
      %v2919 = vadd.f32 0.0, %v2918
      %v2920 = vpop.f32.mrb[0].mxu0
      %2921 = vmatprep.mubr.f32.mxu0 0.0
      %2922 = vmatmul.mubr.f32.gmra.mrb[0].mxu0 %v2681
      %v2923 = vpop.f32.mrb[0].mxu0
      %v2924 = vadd.f32 0.0, %v2923
      %v2925 = vpop.f32.mrb[0].mxu0
      %2926 = vmatprep.mubr.f32.mxu0 0.0
      %2927 = vmatmul.mubr.f32.gmra.mrb[0].mxu0 %v2684
      %v2928 = vpop.f32.mrb[0].mxu0
      %v2929 = vadd.f32 0.0, %v2928
      %v2930 = vpop.f32.mrb[0].mxu0
      %2931 = vmatprep.mubr.f32.mxu0 0.0
      %2932 = vmatmul.mubr.f32.gmra.mrb[0].mxu0 %v2687
      %v2933 = vpop.f32.mrb[0].mxu0
      %v2934 = vadd.f32 0.0, %v2933
      %v2935 = vpop.f32.mrb[0].mxu0
      %2936 = vmatprep.mubr.f32.mxu0 0.0
      %2937 = vmatmul.mubr.f32.gmra.mrb[0].mxu0 %v2690
      %v2938 = vpop.f32.mrb[0].mxu0
      %v2939 = vadd.f32 0.0, %v2938
      %v2940 = vpop.f32.mrb[0].mxu0
      %2941 = vmatprep.mubr.f32.mxu0 0.0
      %2942 = vmatmul.mubr.f32.gmra.mrb[0].mxu0 %v2693
      %v2943 = vpop.f32.mrb[0].mxu0
      %v2944 = vadd.f32 0.0, %v2943
      %v2945 = vpop.f32.mrb[0].mxu0
      %2946 = vmatprep.mubr.f32.mxu0 0.0
      %2947 = vmatmul.mubr.f32.gmra.mrb[0].mxu0 %v2696
      %v2948 = vpop.f32.mrb[0].mxu0
      %v2949 = vadd.f32 0.0, %v2948
      %v2950 = vpop.f32.mrb[0].mxu0
      %2951 = vmatprep.mubr.f32.mxu0 0.0
      %2952 = vmatmul.mubr.f32.gmra.mrb[0].mxu0 %v2699
      %v2953 = vpop.f32.mrb[0].mxu0
      %v2954 = vadd.f32 0.0, %v2953
      %v2955 = vpop.f32.mrb[0].mxu0
      %2956 = vmatprep.mubr.f32.mxu0 0.0
      %2957 = vmatmul.mubr.f32.gmra.mrb[0].mxu0 %v2702
      %v2958 = vpop.f32.mrb[0].mxu0
      %v2959 = vadd.f32 0.0, %v2958
      %v2960 = vpop.f32.mrb[0].mxu0
      %2961 = vmatprep.mubr.f32.mxu0 0.0
      %2962 = vmatmul.mubr.f32.gmra.mrb[0].mxu0 %v2705
      %v2963 = vpop.f32.mrb[0].mxu0
      %v2964 = vadd.f32 0.0, %v2963
      %v2965 = vpop.f32.mrb[0].mxu0
      %2966 = vmatprep.mubr.f32.mxu0 0.0
      %2967 = vmatmul.mubr.f32.gmra.mrb[0].mxu0 %v2708
      %v2968 = vpop.f32.mrb[0].mxu0
      %v2969 = vadd.f32 0.0, %v2968
      %v2970 = vpop.f32.mrb[0].mxu0
      %2971 = vmatprep.mubr.f32.mxu0 0.0
      %2972 = vmatmul.mubr.f32.gmra.mrb[0].mxu0 %v2711
      %v2973 = vpop.f32.mrb[0].mxu0
      %v2974 = vadd.f32 0.0, %v2973
      %v2975 = vpop.f32.mrb[0].mxu0
      %2976 = vmatprep.mubr.f32.mxu0 0.0
      %2977 = vmatmul.mubr.f32.gmra.mrb[0].mxu0 %v2714
      %v2978 = vpop.f32.mrb[0].mxu0
      %v2979 = vadd.f32 0.0, %v2978
      %v2980 = vpop.f32.mrb[0].mxu0
      %2981 = vmatprep.mubr.f32.mxu0 0.0
      %2982 = vmatmul.mubr.f32.gmra.mrb[0].mxu0 %v2717
      %v2983 = vpop.f32.mrb[0].mxu0
      %v2984 = vadd.f32 0.0, %v2983
      %v2985 = vpop.f32.mrb[0].mxu0
      %2986 = vmatprep.mubr.f32.mxu0 0.0
      %2987 = vmatmul.mubr.f32.gmra.mrb[0].mxu0 %v2720
      %v2988 = vpop.f32.mrb[0].mxu0
      %v2989 = vadd.f32 0.0, %v2988
      %v2990 = vpop.f32.mrb[0].mxu0
      %2991 = vmatprep.mubr.f32.mxu0 0.0
      %2992 = vmatmul.mubr.f32.gmra.mrb[0].mxu0 %v2723
      %v2993 = vpop.f32.mrb[0].mxu0
      %v2994 = vadd.f32 0.0, %v2993
      %v2995 = vpop.f32.mrb[0].mxu0
      %2996 = vmatprep.mubr.f32.mxu0 0.0
      %2997 = vmatmul.mubr.f32.gmra.mrb[0].mxu0 %v2726
      %v2998 = vpop.f32.mrb[0].mxu0
      %v2999 = vadd.f32 0.0, %v2998
      %v3000 = vpop.f32.mrb[0].mxu0
      %3001 = vdwg.mxu0
      %v3003 = vlaneseq
      %v3004 = vshrl.u32 %v3003, 7
      %v3005 = vsub.s32 0, %v3004
      %v3006 = vrot.slane %v495, %v3005
      %v3008 = vmul.f32 %v2799, %v3006
      %v3009 = vmul.f32 %v2804, %v3006
      %v3010 = vmul.f32 %v2809, %v3006
      %v3011 = vmul.f32 %v2814, %v3006
      %v3012 = vmul.f32 %v2819, %v3006
      %v3013 = vmul.f32 %v2824, %v3006
      %v3014 = vmul.f32 %v2829, %v3006
      %v3015 = vmul.f32 %v2834, %v3006
      %v3016 = vmul.f32 %v2839, %v3006
      %v3017 = vmul.f32 %v2844, %v3006
      %v3018 = vmul.f32 %v2849, %v3006
      %v3019 = vmul.f32 %v2854, %v3006
      %v3020 = vmul.f32 %v2859, %v3006
      %v3021 = vmul.f32 %v2864, %v3006
      %v3022 = vmul.f32 %v2869, %v3006
      %v3023 = vmul.f32 %v2874, %v3006
      %v3024 = vmul.f32 %v2879, %v3006
      %v3025 = vmul.f32 %v2884, %v3006
      %v3026 = vmul.f32 %v2889, %v3006
      %v3027 = vmul.f32 %v2894, %v3006
      %v3028 = vmul.f32 %v2899, %v3006
      %v3029 = vmul.f32 %v2904, %v3006
      %v3030 = vmul.f32 %v2909, %v3006
      %v3031 = vmul.f32 %v2914, %v3006
      %v3032 = vmul.f32 %v2919, %v3006
      %v3033 = vmul.f32 %v2924, %v3006
      %v3034 = vmul.f32 %v2929, %v3006
      %v3035 = vmul.f32 %v2934, %v3006
      %v3036 = vmul.f32 %v2939, %v3006
      %v3037 = vmul.f32 %v2944, %v3006
      %v3038 = vmul.f32 %v2949, %v3006
      %v3039 = vmul.f32 %v2954, %v3006
      %v3040 = vmul.f32 %v2959, %v3006
      %v3041 = vmul.f32 %v2964, %v3006
      %v3042 = vmul.f32 %v2969, %v3006
      %v3043 = vmul.f32 %v2974, %v3006
      %v3044 = vmul.f32 %v2979, %v3006
      %v3045 = vmul.f32 %v2984, %v3006
      %v3046 = vmul.f32 %v2989, %v3006
      %v3047 = vmul.f32 %v2994, %v3006
      %v3048 = vmul.f32 %v2999, %v3006
      %v3050 = vlaneseq
      %v3051 = vshrl.u32 %v3050, 7
      %v3052 = vsub.s32 0, %v3051
      %v3053 = vrot.slane %v496, %v3052
      %v3055 = vadd.f32 %v3008, %v3053
      %v3056 = vadd.f32 %v3009, %v3053
      %v3057 = vadd.f32 %v3010, %v3053
      %v3058 = vadd.f32 %v3011, %v3053
      %v3059 = vadd.f32 %v3012, %v3053
      %v3060 = vadd.f32 %v3013, %v3053
      %v3061 = vadd.f32 %v3014, %v3053
      %v3062 = vadd.f32 %v3015, %v3053
      %v3063 = vadd.f32 %v3016, %v3053
      %v3064 = vadd.f32 %v3017, %v3053
      %v3065 = vadd.f32 %v3018, %v3053
      %v3066 = vadd.f32 %v3019, %v3053
      %v3067 = vadd.f32 %v3020, %v3053
      %v3068 = vadd.f32 %v3021, %v3053
      %v3069 = vadd.f32 %v3022, %v3053
      %v3070 = vadd.f32 %v3023, %v3053
      %v3071 = vadd.f32 %v3024, %v3053
      %v3072 = vadd.f32 %v3025, %v3053
      %v3073 = vadd.f32 %v3026, %v3053
      %v3074 = vadd.f32 %v3027, %v3053
      %v3075 = vadd.f32 %v3028, %v3053
      %v3076 = vadd.f32 %v3029, %v3053
      %v3077 = vadd.f32 %v3030, %v3053
      %v3078 = vadd.f32 %v3031, %v3053
      %v3079 = vadd.f32 %v3032, %v3053
      %v3080 = vadd.f32 %v3033, %v3053
      %v3081 = vadd.f32 %v3034, %v3053
      %v3082 = vadd.f32 %v3035, %v3053
      %v3083 = vadd.f32 %v3036, %v3053
      %v3084 = vadd.f32 %v3037, %v3053
      %v3085 = vadd.f32 %v3038, %v3053
      %v3086 = vadd.f32 %v3039, %v3053
      %v3087 = vadd.f32 %v3040, %v3053
      %v3088 = vadd.f32 %v3041, %v3053
      %v3089 = vadd.f32 %v3042, %v3053
      %v3090 = vadd.f32 %v3043, %v3053
      %v3091 = vadd.f32 %v3044, %v3053
      %v3092 = vadd.f32 %v3045, %v3053
      %v3093 = vadd.f32 %v3046, %v3053
      %v3094 = vadd.f32 %v3047, %v3053
      %v3095 = vadd.f32 %v3048, %v3053
      %v3096 = vmax.f32 %v3055, 0.0
      %v3097 = vmax.f32 %v3056, 0.0
      %v3098 = vmax.f32 %v3057, 0.0
      %v3099 = vmax.f32 %v3058, 0.0
      %v3100 = vmax.f32 %v3059, 0.0
      %v3101 = vmax.f32 %v3060, 0.0
      %v3102 = vmax.f32 %v3061, 0.0
      %v3103 = vmax.f32 %v3062, 0.0
      %v3104 = vmax.f32 %v3063, 0.0
      %v3105 = vmax.f32 %v3064, 0.0
      %v3106 = vmax.f32 %v3065, 0.0
      %v3107 = vmax.f32 %v3066, 0.0
      %v3108 = vmax.f32 %v3067, 0.0
      %v3109 = vmax.f32 %v3068, 0.0
      %v3110 = vmax.f32 %v3069, 0.0
      %v3111 = vmax.f32 %v3070, 0.0
      %v3112 = vmax.f32 %v3071, 0.0
      %v3113 = vmax.f32 %v3072, 0.0
      %v3114 = vmax.f32 %v3073, 0.0
      %v3115 = vmax.f32 %v3074, 0.0
      %v3116 = vmax.f32 %v3075, 0.0
      %v3117 = vmax.f32 %v3076, 0.0
      %v3118 = vmax.f32 %v3077, 0.0
      %v3119 = vmax.f32 %v3078, 0.0
      %v3120 = vmax.f32 %v3079, 0.0
      %v3121 = vmax.f32 %v3080, 0.0
      %v3122 = vmax.f32 %v3081, 0.0
      %v3123 = vmax.f32 %v3082, 0.0
      %v3124 = vmax.f32 %v3083, 0.0
      %v3125 = vmax.f32 %v3084, 0.0
      %v3126 = vmax.f32 %v3085, 0.0
      %v3127 = vmax.f32 %v3086, 0.0
      %v3128 = vmax.f32 %v3087, 0.0
      %v3129 = vmax.f32 %v3088, 0.0
      %v3130 = vmax.f32 %v3089, 0.0
      %v3131 = vmax.f32 %v3090, 0.0
      %v3132 = vmax.f32 %v3091, 0.0
      %v3133 = vmax.f32 %v3092, 0.0
      %v3134 = vmax.f32 %v3093, 0.0
      %v3135 = vmax.f32 %v3094, 0.0
      %v3136 = vmax.f32 %v3095, 0.0
      %vm3137 = vcmask 64512
      %3138 = vst.msk [vmem:[#allocation3] sm:$0xff] %vm3137, 0.0
      %3139 = vst.msk [vmem:[#allocation3 + $0x8] sm:$0xff] %vm3137, 0.0
      %3140 = vst.msk [vmem:[#allocation3 + $0x10] sm:$0xff] %vm3137, 0.0
      %3141 = vst.msk [vmem:[#allocation3 + $0x15c] sm:$0xff] %vm3137, 0.0
      %3142 = vst.msk [vmem:[#allocation3 + $0x164] sm:$0xff] %vm3137, 0.0
      %3143 = vst.msk [vmem:[#allocation3 + $0x16c] sm:$0xff] %vm3137, 0.0
      %v3144 = vld [vmem:[%s7] sm:$0xff]
      %v3145 = vld [vmem:[%s7 + $0x8] sm:$0xff]
      %v3146 = vld [vmem:[%s7 + $0x10] sm:$0xff]
      %v3147 = vld [vmem:[%s7 + $0x18] sm:$0xff]
      %v3148 = vld [vmem:[%s7 + $0x20] sm:$0xff]
      %v3149 = vld [vmem:[%s7 + $0x28] sm:$0xff]
      %v3150 = vld [vmem:[%s7 + $0x30] sm:$0xff]
      %v3151 = vld [vmem:[%s7 + $0x38] sm:$0xff]
      %v3152 = vld [vmem:[%s7 + $0x40] sm:$0xff]
      %v3153 = vld [vmem:[%s7 + $0x48] sm:$0xff]
      %v3154 = vld [vmem:[%s7 + $0x50] sm:$0xff]
      %v3155 = vld [vmem:[%s7 + $0x58] sm:$0xff]
      %v3156 = vld [vmem:[%s7 + $0x60] sm:$0xff]
      %v3157 = vld [vmem:[%s7 + $0x68] sm:$0xff]
      %v3158 = vld [vmem:[%s7 + $0x70] sm:$0xff]
      %v3159 = vld [vmem:[%s7 + $0x78] sm:$0xff]
      %v3160 = vld [vmem:[%s7 + $0x80] sm:$0xff]
      %v3161 = vld [vmem:[%s7 + $0x88] sm:$0xff]
      %v3162 = vld [vmem:[%s7 + $0x90] sm:$0xff]
      %v3163 = vld [vmem:[%s7 + $0x98] sm:$0xff]
      %v3164 = vld [vmem:[%s7 + $0xa0] sm:$0xff]
      %v3165 = vld [vmem:[%s7 + $0xa8] sm:$0xff]
      %v3166 = vld [vmem:[%s7 + $0xb0] sm:$0xff]
      %v3167 = vld [vmem:[%s7 + $0xb8] sm:$0xff]
      %v3168 = vld [vmem:[%s7 + $0xc0] sm:$0xff]
      %v3169 = vld [vmem:[%s7 + $0xc8] sm:$0xff]
      %v3170 = vld [vmem:[%s7 + $0xd0] sm:$0xff]
      %v3171 = vld [vmem:[%s7 + $0xd8] sm:$0xff]
      %v3172 = vld [vmem:[%s7 + $0xe0] sm:$0xff]
      %v3173 = vld [vmem:[%s7 + $0xe8] sm:$0xff]
      %v3174 = vld [vmem:[%s7 + $0xf0] sm:$0xff]
      %v3175 = vld [vmem:[%s7 + $0xf8] sm:$0xff]
      %v3176 = vld [vmem:[%s7 + $0x100] sm:$0xff]
      %v3177 = vld [vmem:[%s7 + $0x108] sm:$0xff]
      %v3178 = vld [vmem:[%s7 + $0x110] sm:$0xff]
      %v3179 = vld [vmem:[%s7 + $0x118] sm:$0xff]
      %v3180 = vld [vmem:[%s7 + $0x120] sm:$0xff]
      %v3181 = vld [vmem:[%s7 + $0x128] sm:$0xff]
      %v3182 = vld [vmem:[%s7 + $0x130] sm:$0xff]
      %v3183 = vld [vmem:[%s7 + $0x138] sm:$0xff]
      %v3184 = vld [vmem:[%s7 + $0x140] sm:$0xf]
      %3186 = vset.pattern.permute.xlu0 0
      %3187 = vperm.xlu0 %3186, %v3144
      %v3188 = vpop.permute.xlu0 %3187
      %3191 = vset.pattern.permute.xlu0 0
      %3192 = vperm.xlu0 %3191, %v3145
      %v3193 = vpop.permute.xlu0 %3192
      %3196 = vset.pattern.permute.xlu0 0
      %3197 = vperm.xlu0 %3196, %v3146
      %v3198 = vpop.permute.xlu0 %3197
      %3201 = vset.pattern.permute.xlu0 0
      %3202 = vperm.xlu0 %3201, %v3147
      %v3203 = vpop.permute.xlu0 %3202
      %3206 = vset.pattern.permute.xlu0 0
      %3207 = vperm.xlu0 %3206, %v3148
      %v3208 = vpop.permute.xlu0 %3207
      %3211 = vset.pattern.permute.xlu0 0
      %3212 = vperm.xlu0 %3211, %v3149
      %v3213 = vpop.permute.xlu0 %3212
      %3216 = vset.pattern.permute.xlu0 0
      %3217 = vperm.xlu0 %3216, %v3150
      %v3218 = vpop.permute.xlu0 %3217
      %3221 = vset.pattern.permute.xlu0 0
      %3222 = vperm.xlu0 %3221, %v3151
      %v3223 = vpop.permute.xlu0 %3222
      %3226 = vset.pattern.permute.xlu0 0
      %3227 = vperm.xlu0 %3226, %v3152
      %v3228 = vpop.permute.xlu0 %3227
      %3231 = vset.pattern.permute.xlu0 0
      %3232 = vperm.xlu0 %3231, %v3153
      %v3233 = vpop.permute.xlu0 %3232
      %3236 = vset.pattern.permute.xlu0 0
      %3237 = vperm.xlu0 %3236, %v3154
      %v3238 = vpop.permute.xlu0 %3237
      %3241 = vset.pattern.permute.xlu0 0
      %3242 = vperm.xlu0 %3241, %v3155
      %v3243 = vpop.permute.xlu0 %3242
      %3246 = vset.pattern.permute.xlu0 0
      %3247 = vperm.xlu0 %3246, %v3156
      %v3248 = vpop.permute.xlu0 %3247
      %3251 = vset.pattern.permute.xlu0 0
      %3252 = vperm.xlu0 %3251, %v3157
      %v3253 = vpop.permute.xlu0 %3252
      %3256 = vset.pattern.permute.xlu0 0
      %3257 = vperm.xlu0 %3256, %v3158
      %v3258 = vpop.permute.xlu0 %3257
      %3261 = vset.pattern.permute.xlu0 0
      %3262 = vperm.xlu0 %3261, %v3159
      %v3263 = vpop.permute.xlu0 %3262
      %3266 = vset.pattern.permute.xlu0 0
      %3267 = vperm.xlu0 %3266, %v3160
      %v3268 = vpop.permute.xlu0 %3267
      %3271 = vset.pattern.permute.xlu0 0
      %3272 = vperm.xlu0 %3271, %v3161
      %v3273 = vpop.permute.xlu0 %3272
      %3276 = vset.pattern.permute.xlu0 0
      %3277 = vperm.xlu0 %3276, %v3162
      %v3278 = vpop.permute.xlu0 %3277
      %3281 = vset.pattern.permute.xlu0 0
      %3282 = vperm.xlu0 %3281, %v3163
      %v3283 = vpop.permute.xlu0 %3282
      %3286 = vset.pattern.permute.xlu0 0
      %3287 = vperm.xlu0 %3286, %v3164
      %v3288 = vpop.permute.xlu0 %3287
      %3291 = vset.pattern.permute.xlu0 0
      %3292 = vperm.xlu0 %3291, %v3165
      %v3293 = vpop.permute.xlu0 %3292
      %3296 = vset.pattern.permute.xlu0 0
      %3297 = vperm.xlu0 %3296, %v3166
      %v3298 = vpop.permute.xlu0 %3297
      %3301 = vset.pattern.permute.xlu0 0
      %3302 = vperm.xlu0 %3301, %v3167
      %v3303 = vpop.permute.xlu0 %3302
      %3306 = vset.pattern.permute.xlu0 0
      %3307 = vperm.xlu0 %3306, %v3168
      %v3308 = vpop.permute.xlu0 %3307
      %3311 = vset.pattern.permute.xlu0 0
      %3312 = vperm.xlu0 %3311, %v3169
      %v3313 = vpop.permute.xlu0 %3312
      %3316 = vset.pattern.permute.xlu0 0
      %3317 = vperm.xlu0 %3316, %v3170
      %v3318 = vpop.permute.xlu0 %3317
      %3321 = vset.pattern.permute.xlu0 0
      %3322 = vperm.xlu0 %3321, %v3171
      %v3323 = vpop.permute.xlu0 %3322
      %3326 = vset.pattern.permute.xlu0 0
      %3327 = vperm.xlu0 %3326, %v3172
      %v3328 = vpop.permute.xlu0 %3327
      %3331 = vset.pattern.permute.xlu0 0
      %3332 = vperm.xlu0 %3331, %v3173
      %v3333 = vpop.permute.xlu0 %3332
      %3336 = vset.pattern.permute.xlu0 0
      %3337 = vperm.xlu0 %3336, %v3174
      %v3338 = vpop.permute.xlu0 %3337
      %3341 = vset.pattern.permute.xlu0 0
      %3342 = vperm.xlu0 %3341, %v3175
      %v3343 = vpop.permute.xlu0 %3342
      %3346 = vset.pattern.permute.xlu0 0
      %3347 = vperm.xlu0 %3346, %v3176
      %v3348 = vpop.permute.xlu0 %3347
      %3351 = vset.pattern.permute.xlu0 0
      %3352 = vperm.xlu0 %3351, %v3177
      %v3353 = vpop.permute.xlu0 %3352
      %3356 = vset.pattern.permute.xlu0 0
      %3357 = vperm.xlu0 %3356, %v3178
      %v3358 = vpop.permute.xlu0 %3357
      %3361 = vset.pattern.permute.xlu0 0
      %3362 = vperm.xlu0 %3361, %v3179
      %v3363 = vpop.permute.xlu0 %3362
      %3366 = vset.pattern.permute.xlu0 0
      %3367 = vperm.xlu0 %3366, %v3180
      %v3368 = vpop.permute.xlu0 %3367
      %3371 = vset.pattern.permute.xlu0 0
      %3372 = vperm.xlu0 %3371, %v3181
      %v3373 = vpop.permute.xlu0 %3372
      %3376 = vset.pattern.permute.xlu0 0
      %3377 = vperm.xlu0 %3376, %v3182
      %v3378 = vpop.permute.xlu0 %3377
      %3381 = vset.pattern.permute.xlu0 0
      %3382 = vperm.xlu0 %3381, %v3183
      %v3383 = vpop.permute.xlu0 %3382
      %3386 = vset.pattern.permute.xlu0 0
      %3387 = vperm.xlu0 %3386, %v3184
      %v3388 = vpop.permute.xlu0 %3387
      %v3390 = vmul.f32 %v3096, %v3188
      %v3391 = vmul.f32 %v3097, %v3193
      %v3392 = vmul.f32 %v3098, %v3198
      %v3393 = vmul.f32 %v3099, %v3203
      %v3394 = vmul.f32 %v3100, %v3208
      %v3395 = vmul.f32 %v3101, %v3213
      %v3396 = vmul.f32 %v3102, %v3218
      %v3397 = vmul.f32 %v3103, %v3223
      %v3398 = vmul.f32 %v3104, %v3228
      %v3399 = vmul.f32 %v3105, %v3233
      %v3400 = vmul.f32 %v3106, %v3238
      %v3401 = vmul.f32 %v3107, %v3243
      %v3402 = vmul.f32 %v3108, %v3248
      %v3403 = vmul.f32 %v3109, %v3253
      %v3404 = vmul.f32 %v3110, %v3258
      %v3405 = vmul.f32 %v3111, %v3263
      %v3406 = vmul.f32 %v3112, %v3268
      %v3407 = vmul.f32 %v3113, %v3273
      %v3408 = vmul.f32 %v3114, %v3278
      %v3409 = vmul.f32 %v3115, %v3283
      %v3410 = vmul.f32 %v3116, %v3288
      %v3411 = vmul.f32 %v3117, %v3293
      %v3412 = vmul.f32 %v3118, %v3298
      %v3413 = vmul.f32 %v3119, %v3303
      %v3414 = vmul.f32 %v3120, %v3308
      %v3415 = vmul.f32 %v3121, %v3313
      %v3416 = vmul.f32 %v3122, %v3318
      %v3417 = vmul.f32 %v3123, %v3323
      %v3418 = vmul.f32 %v3124, %v3328
      %v3419 = vmul.f32 %v3125, %v3333
      %v3420 = vmul.f32 %v3126, %v3338
      %v3421 = vmul.f32 %v3127, %v3343
      %v3422 = vmul.f32 %v3128, %v3348
      %v3423 = vmul.f32 %v3129, %v3353
      %v3424 = vmul.f32 %v3130, %v3358
      %v3425 = vmul.f32 %v3131, %v3363
      %v3426 = vmul.f32 %v3132, %v3368
      %v3427 = vmul.f32 %v3133, %v3373
      %v3428 = vmul.f32 %v3134, %v3378
      %v3429 = vmul.f32 %v3135, %v3383
      %v3430 = vmul.f32 %v3136, %v3388
      %3431 = vst.msk [vmem:[#allocation3 + $0x18] sm:$0xff] %vm3137, %v3390
      %3432 = vst.msk [vmem:[#allocation3 + $0x20] sm:$0xff] %vm3137, %v3391
      %3433 = vst.msk [vmem:[#allocation3 + $0x28] sm:$0xff] %vm3137, %v3392
      %3434 = vst.msk [vmem:[#allocation3 + $0x30] sm:$0xff] %vm3137, %v3393
      %3435 = vst.msk [vmem:[#allocation3 + $0x38] sm:$0xff] %vm3137, %v3394
      %3436 = vst.msk [vmem:[#allocation3 + $0x40] sm:$0xff] %vm3137, %v3395
      %3437 = vst.msk [vmem:[#allocation3 + $0x48] sm:$0xff] %vm3137, %v3396
      %3438 = vst.msk [vmem:[#allocation3 + $0x50] sm:$0xff] %vm3137, %v3397
      %3439 = vst.msk [vmem:[#allocation3 + $0x58] sm:$0xff] %vm3137, %v3398
      %3440 = vst.msk [vmem:[#allocation3 + $0x60] sm:$0xff] %vm3137, %v3399
      %3441 = vst.msk [vmem:[#allocation3 + $0x68] sm:$0xff] %vm3137, %v3400
      %3442 = vst.msk [vmem:[#allocation3 + $0x70] sm:$0xff] %vm3137, %v3401
      %3443 = vst.msk [vmem:[#allocation3 + $0x78] sm:$0xff] %vm3137, %v3402
      %3444 = vst.msk [vmem:[#allocation3 + $0x80] sm:$0xff] %vm3137, %v3403
      %3445 = vst.msk [vmem:[#allocation3 + $0x88] sm:$0xff] %vm3137, %v3404
      %3446 = vst.msk [vmem:[#allocation3 + $0x90] sm:$0xff] %vm3137, %v3405
      %3447 = vst.msk [vmem:[#allocation3 + $0x98] sm:$0xff] %vm3137, %v3406
      %3448 = vst.msk [vmem:[#allocation3 + $0xa0] sm:$0xff] %vm3137, %v3407
      %3449 = vst.msk [vmem:[#allocation3 + $0xa8] sm:$0xff] %vm3137, %v3408
      %3450 = vst.msk [vmem:[#allocation3 + $0xb0] sm:$0xff] %vm3137, %v3409
      %3451 = vst.msk [vmem:[#allocation3 + $0xb8] sm:$0xff] %vm3137, %v3410
      %3452 = vst.msk [vmem:[#allocation3 + $0xc0] sm:$0xff] %vm3137, %v3411
      %3453 = vst.msk [vmem:[#allocation3 + $0xc8] sm:$0xff] %vm3137, %v3412
      %3454 = vst.msk [vmem:[#allocation3 + $0xd0] sm:$0xff] %vm3137, %v3413
      %3455 = vst.msk [vmem:[#allocation3 + $0xd8] sm:$0xff] %vm3137, %v3414
      %3456 = vst.msk [vmem:[#allocation3 + $0xe0] sm:$0xff] %vm3137, %v3415
      %3457 = vst.msk [vmem:[#allocation3 + $0xe8] sm:$0xff] %vm3137, %v3416
      %3458 = vst.msk [vmem:[#allocation3 + $0xf0] sm:$0xff] %vm3137, %v3417
      %3459 = vst.msk [vmem:[#allocation3 + $0xf8] sm:$0xff] %vm3137, %v3418
      %3460 = vst.msk [vmem:[#allocation3 + $0x100] sm:$0xff] %vm3137, %v3419
      %3461 = vst.msk [vmem:[#allocation3 + $0x108] sm:$0xff] %vm3137, %v3420
      %3462 = vst.msk [vmem:[#allocation3 + $0x110] sm:$0xff] %vm3137, %v3421
      %3463 = vst.msk [vmem:[#allocation3 + $0x118] sm:$0xff] %vm3137, %v3422
      %3464 = vst.msk [vmem:[#allocation3 + $0x120] sm:$0xff] %vm3137, %v3423
      %3465 = vst.msk [vmem:[#allocation3 + $0x128] sm:$0xff] %vm3137, %v3424
      %3466 = vst.msk [vmem:[#allocation3 + $0x130] sm:$0xff] %vm3137, %v3425
      %3467 = vst.msk [vmem:[#allocation3 + $0x138] sm:$0xff] %vm3137, %v3426
      %3468 = vst.msk [vmem:[#allocation3 + $0x140] sm:$0xff] %vm3137, %v3427
      %3469 = vst.msk [vmem:[#allocation3 + $0x148] sm:$0xff] %vm3137, %v3428
      %3470 = vst.msk [vmem:[#allocation3 + $0x150] sm:$0xff] %vm3137, %v3429
      %vm3471 = vcmask 60416
      %3472 = vst.msk [vmem:[#allocation3 + $0x158] sm:$0xf] %vm3471, %v3430
      %v3473 = vld [vmem:[%s4] sm:$0xff]
      %v3474 = vld [vmem:[%s4 + $0x8] sm:$0xff]
      %v3475 = vld [vmem:[%s4 + $0x10] sm:$0xff]
      %v3476 = vld [vmem:[%s4 + $0x18] sm:$0xff]
      %v3477 = vld [vmem:[%s4 + $0x20] sm:$0xff]
      %v3478 = vld [vmem:[%s4 + $0x28] sm:$0xff]
      %v3479 = vld [vmem:[%s4 + $0x30] sm:$0xff]
      %v3480 = vld [vmem:[%s4 + $0x38] sm:$0xff]
      %v3481 = vld [vmem:[%s4 + $0x40] sm:$0xff]
      %v3482 = vld [vmem:[%s5] sm:$0x1]
      %v3483 = vld [vmem:[%s6] sm:$0x1]
      %v3484 = vld [vmem:[#allocation3 + $0x5] sm:$0xff]
      %v3485 = vld [vmem:[#allocation3 + $0xd] sm:$0xff]
      %v3486 = vld [vmem:[#allocation3 + $0x15] sm:$0xff]
      %v3487 = vld [vmem:[#allocation3 + $0x1d] sm:$0xff]
      %v3488 = vld [vmem:[#allocation3 + $0x25] sm:$0xff]
      %v3489 = vld [vmem:[#allocation3 + $0x2d] sm:$0xff]
      %v3490 = vld [vmem:[#allocation3 + $0x35] sm:$0xff]
      %v3491 = vld [vmem:[#allocation3 + $0x3d] sm:$0xff]
      %v3492 = vld [vmem:[#allocation3 + $0x45] sm:$0xff]
      %v3493 = vld [vmem:[#allocation3 + $0x4d] sm:$0xff]
      %v3494 = vld [vmem:[#allocation3 + $0x55] sm:$0xff]
      %v3495 = vld [vmem:[#allocation3 + $0x5d] sm:$0xff]
      %v3496 = vld [vmem:[#allocation3 + $0x65] sm:$0xff]
      %v3497 = vld [vmem:[#allocation3 + $0x6d] sm:$0xff]
      %v3498 = vld [vmem:[#allocation3 + $0x75] sm:$0xff]
      %v3499 = vld [vmem:[#allocation3 + $0x7d] sm:$0xff]
      %v3500 = vld [vmem:[#allocation3 + $0x85] sm:$0xff]
      %v3501 = vld [vmem:[#allocation3 + $0x8d] sm:$0xff]
      %v3502 = vld [vmem:[#allocation3 + $0x95] sm:$0xff]
      %v3503 = vld [vmem:[#allocation3 + $0x9d] sm:$0xff]
      %v3504 = vld [vmem:[#allocation3 + $0xa5] sm:$0xff]
      %v3505 = vld [vmem:[#allocation3 + $0xad] sm:$0xff]
      %v3506 = vld [vmem:[#allocation3 + $0xb5] sm:$0xff]
      %v3507 = vld [vmem:[#allocation3 + $0xbd] sm:$0xff]
      %v3508 = vld [vmem:[#allocation3 + $0xc5] sm:$0xff]
      %v3509 = vld [vmem:[#allocation3 + $0xcd] sm:$0xff]
      %v3510 = vld [vmem:[#allocation3 + $0xd5] sm:$0xff]
      %v3511 = vld [vmem:[#allocation3 + $0xdd] sm:$0xff]
      %v3512 = vld [vmem:[#allocation3 + $0xe5] sm:$0xff]
      %v3513 = vld [vmem:[#allocation3 + $0xed] sm:$0xff]
      %v3514 = vld [vmem:[#allocation3 + $0xf5] sm:$0xff]
      %v3515 = vld [vmem:[#allocation3 + $0xfd] sm:$0xff]
      %v3516 = vld [vmem:[#allocation3 + $0x105] sm:$0xff]
      %v3517 = vld [vmem:[#allocation3 + $0x10d] sm:$0xff]
      %v3518 = vld [vmem:[#allocation3 + $0x115] sm:$0xff]
      %v3519 = vld [vmem:[#allocation3 + $0x11d] sm:$0xff]
      %v3520 = vld [vmem:[#allocation3 + $0x125] sm:$0xff]
      %v3521 = vld [vmem:[#allocation3 + $0x12d] sm:$0xff]
      %v3522 = vld [vmem:[#allocation3 + $0x135] sm:$0xff]
      %v3523 = vld [vmem:[#allocation3 + $0x13d] sm:$0xff]
      %v3524 = vld [vmem:[#allocation3 + $0x145] sm:$0xf]
      %3525 = vst.msk [vmem:[#allocation4] sm:$0xff] %vm3137, %v3484
      %3526 = vst.msk [vmem:[#allocation4 + $0x8] sm:$0xff] %vm3137, %v3485
      %3527 = vst.msk [vmem:[#allocation4 + $0x10] sm:$0xff] %vm3137, %v3486
      %3528 = vst.msk [vmem:[#allocation4 + $0x18] sm:$0xff] %vm3137, %v3487
      %3529 = vst.msk [vmem:[#allocation4 + $0x20] sm:$0xff] %vm3137, %v3488
      %3530 = vst.msk [vmem:[#allocation4 + $0x28] sm:$0xff] %vm3137, %v3489
      %3531 = vst.msk [vmem:[#allocation4 + $0x30] sm:$0xff] %vm3137, %v3490
      %3532 = vst.msk [vmem:[#allocation4 + $0x38] sm:$0xff] %vm3137, %v3491
      %3533 = vst.msk [vmem:[#allocation4 + $0x40] sm:$0xff] %vm3137, %v3492
      %3534 = vst.msk [vmem:[#allocation4 + $0x48] sm:$0xff] %vm3137, %v3493
      %3535 = vst.msk [vmem:[#allocation4 + $0x50] sm:$0xff] %vm3137, %v3494
      %3536 = vst.msk [vmem:[#allocation4 + $0x58] sm:$0xff] %vm3137, %v3495
      %3537 = vst.msk [vmem:[#allocation4 + $0x60] sm:$0xff] %vm3137, %v3496
      %3538 = vst.msk [vmem:[#allocation4 + $0x68] sm:$0xff] %vm3137, %v3497
      %3539 = vst.msk [vmem:[#allocation4 + $0x70] sm:$0xff] %vm3137, %v3498
      %3540 = vst.msk [vmem:[#allocation4 + $0x78] sm:$0xff] %vm3137, %v3499
      %3541 = vst.msk [vmem:[#allocation4 + $0x80] sm:$0xff] %vm3137, %v3500
      %3542 = vst.msk [vmem:[#allocation4 + $0x88] sm:$0xff] %vm3137, %v3501
      %3543 = vst.msk [vmem:[#allocation4 + $0x90] sm:$0xff] %vm3137, %v3502
      %3544 = vst.msk [vmem:[#allocation4 + $0x98] sm:$0xff] %vm3137, %v3503
      %3545 = vst.msk [vmem:[#allocation4 + $0xa0] sm:$0xff] %vm3137, %v3504
      %3546 = vst.msk [vmem:[#allocation4 + $0xa8] sm:$0xff] %vm3137, %v3505
      %3547 = vst.msk [vmem:[#allocation4 + $0xb0] sm:$0xff] %vm3137, %v3506
      %3548 = vst.msk [vmem:[#allocation4 + $0xb8] sm:$0xff] %vm3137, %v3507
      %3549 = vst.msk [vmem:[#allocation4 + $0xc0] sm:$0xff] %vm3137, %v3508
      %3550 = vst.msk [vmem:[#allocation4 + $0xc8] sm:$0xff] %vm3137, %v3509
      %3551 = vst.msk [vmem:[#allocation4 + $0xd0] sm:$0xff] %vm3137, %v3510
      %3552 = vst.msk [vmem:[#allocation4 + $0xd8] sm:$0xff] %vm3137, %v3511
      %3553 = vst.msk [vmem:[#allocation4 + $0xe0] sm:$0xff] %vm3137, %v3512
      %3554 = vst.msk [vmem:[#allocation4 + $0xe8] sm:$0xff] %vm3137, %v3513
      %3555 = vst.msk [vmem:[#allocation4 + $0xf0] sm:$0xff] %vm3137, %v3514
      %3556 = vst.msk [vmem:[#allocation4 + $0xf8] sm:$0xff] %vm3137, %v3515
      %3557 = vst.msk [vmem:[#allocation4 + $0x100] sm:$0xff] %vm3137, %v3516
      %3558 = vst.msk [vmem:[#allocation4 + $0x108] sm:$0xff] %vm3137, %v3517
      %3559 = vst.msk [vmem:[#allocation4 + $0x110] sm:$0xff] %vm3137, %v3518
      %3560 = vst.msk [vmem:[#allocation4 + $0x118] sm:$0xff] %vm3137, %v3519
      %3561 = vst.msk [vmem:[#allocation4 + $0x120] sm:$0xff] %vm3137, %v3520
      %3562 = vst.msk [vmem:[#allocation4 + $0x128] sm:$0xff] %vm3137, %v3521
      %3563 = vst.msk [vmem:[#allocation4 + $0x130] sm:$0xff] %vm3137, %v3522
      %3564 = vst.msk [vmem:[#allocation4 + $0x138] sm:$0xff] %vm3137, %v3523
      %3565 = vst.msk [vmem:[#allocation4 + $0x140] sm:$0xf] %vm3471, %v3524
      %v3566 = vld [vmem:[#allocation3 + $0x6] sm:$0xff]
      %v3567 = vld [vmem:[#allocation3 + $0xe] sm:$0xff]
      %v3568 = vld [vmem:[#allocation3 + $0x16] sm:$0xff]
      %v3569 = vld [vmem:[#allocation3 + $0x1e] sm:$0xff]
      %v3570 = vld [vmem:[#allocation3 + $0x26] sm:$0xff]
      %v3571 = vld [vmem:[#allocation3 + $0x2e] sm:$0xff]
      %v3572 = vld [vmem:[#allocation3 + $0x36] sm:$0xff]
      %v3573 = vld [vmem:[#allocation3 + $0x3e] sm:$0xff]
      %v3574 = vld [vmem:[#allocation3 + $0x46] sm:$0xff]
      %v3575 = vld [vmem:[#allocation3 + $0x4e] sm:$0xff]
      %v3576 = vld [vmem:[#allocation3 + $0x56] sm:$0xff]
      %v3577 = vld [vmem:[#allocation3 + $0x5e] sm:$0xff]
      %v3578 = vld [vmem:[#allocation3 + $0x66] sm:$0xff]
      %v3579 = vld [vmem:[#allocation3 + $0x6e] sm:$0xff]
      %v3580 = vld [vmem:[#allocation3 + $0x76] sm:$0xff]
      %v3581 = vld [vmem:[#allocation3 + $0x7e] sm:$0xff]
      %v3582 = vld [vmem:[#allocation3 + $0x86] sm:$0xff]
      %v3583 = vld [vmem:[#allocation3 + $0x8e] sm:$0xff]
      %v3584 = vld [vmem:[#allocation3 + $0x96] sm:$0xff]
      %v3585 = vld [vmem:[#allocation3 + $0x9e] sm:$0xff]
      %v3586 = vld [vmem:[#allocation3 + $0xa6] sm:$0xff]
      %v3587 = vld [vmem:[#allocation3 + $0xae] sm:$0xff]
      %v3588 = vld [vmem:[#allocation3 + $0xb6] sm:$0xff]
      %v3589 = vld [vmem:[#allocation3 + $0xbe] sm:$0xff]
      %v3590 = vld [vmem:[#allocation3 + $0xc6] sm:$0xff]
      %v3591 = vld [vmem:[#allocation3 + $0xce] sm:$0xff]
      %v3592 = vld [vmem:[#allocation3 + $0xd6] sm:$0xff]
      %v3593 = vld [vmem:[#allocation3 + $0xde] sm:$0xff]
      %v3594 = vld [vmem:[#allocation3 + $0xe6] sm:$0xff]
      %v3595 = vld [vmem:[#allocation3 + $0xee] sm:$0xff]
      %v3596 = vld [vmem:[#allocation3 + $0xf6] sm:$0xff]
      %v3597 = vld [vmem:[#allocation3 + $0xfe] sm:$0xff]
      %v3598 = vld [vmem:[#allocation3 + $0x106] sm:$0xff]
      %v3599 = vld [vmem:[#allocation3 + $0x10e] sm:$0xff]
      %v3600 = vld [vmem:[#allocation3 + $0x116] sm:$0xff]
      %v3601 = vld [vmem:[#allocation3 + $0x11e] sm:$0xff]
      %v3602 = vld [vmem:[#allocation3 + $0x126] sm:$0xff]
      %v3603 = vld [vmem:[#allocation3 + $0x12e] sm:$0xff]
      %v3604 = vld [vmem:[#allocation3 + $0x136] sm:$0xff]
      %v3605 = vld [vmem:[#allocation3 + $0x13e] sm:$0xff]
      %v3606 = vld [vmem:[#allocation3 + $0x146] sm:$0xf]
      %3648 = vrot.lane.b32.xlu0 %v3566, 8
      %v3649 = vpop.permute.xlu0 %3648
      %3650 = vrot.lane.b32.xlu0 %v3567, 8
      %v3651 = vpop.permute.xlu0 %3650
      %3652 = vrot.lane.b32.xlu0 %v3568, 8
      %v3653 = vpop.permute.xlu0 %3652
      %3654 = vrot.lane.b32.xlu0 %v3569, 8
      %v3655 = vpop.permute.xlu0 %3654
      %3656 = vrot.lane.b32.xlu0 %v3570, 8
      %v3657 = vpop.permute.xlu0 %3656
      %3658 = vrot.lane.b32.xlu0 %v3571, 8
      %v3659 = vpop.permute.xlu0 %3658
      %3660 = vrot.lane.b32.xlu0 %v3572, 8
      %v3661 = vpop.permute.xlu0 %3660
      %3662 = vrot.lane.b32.xlu0 %v3573, 8
      %v3663 = vpop.permute.xlu0 %3662
      %3664 = vrot.lane.b32.xlu0 %v3574, 8
      %v3665 = vpop.permute.xlu0 %3664
      %3666 = vrot.lane.b32.xlu0 %v3575, 8
      %v3667 = vpop.permute.xlu0 %3666
      %3668 = vrot.lane.b32.xlu0 %v3576, 8
      %v3669 = vpop.permute.xlu0 %3668
      %3670 = vrot.lane.b32.xlu0 %v3577, 8
      %v3671 = vpop.permute.xlu0 %3670
      %3672 = vrot.lane.b32.xlu0 %v3578, 8
      %v3673 = vpop.permute.xlu0 %3672
      %3674 = vrot.lane.b32.xlu0 %v3579, 8
      %v3675 = vpop.permute.xlu0 %3674
      %3676 = vrot.lane.b32.xlu0 %v3580, 8
      %v3677 = vpop.permute.xlu0 %3676
      %3678 = vrot.lane.b32.xlu0 %v3581, 8
      %v3679 = vpop.permute.xlu0 %3678
      %3680 = vrot.lane.b32.xlu0 %v3582, 8
      %v3681 = vpop.permute.xlu0 %3680
      %3682 = vrot.lane.b32.xlu0 %v3583, 8
      %v3683 = vpop.permute.xlu0 %3682
      %3684 = vrot.lane.b32.xlu0 %v3584, 8
      %v3685 = vpop.permute.xlu0 %3684
      %3686 = vrot.lane.b32.xlu0 %v3585, 8
      %v3687 = vpop.permute.xlu0 %3686
      %3688 = vrot.lane.b32.xlu0 %v3586, 8
      %v3689 = vpop.permute.xlu0 %3688
      %3690 = vrot.lane.b32.xlu0 %v3587, 8
      %v3691 = vpop.permute.xlu0 %3690
      %3692 = vrot.lane.b32.xlu0 %v3588, 8
      %v3693 = vpop.permute.xlu0 %3692
      %3694 = vrot.lane.b32.xlu0 %v3589, 8
      %v3695 = vpop.permute.xlu0 %3694
      %3696 = vrot.lane.b32.xlu0 %v3590, 8
      %v3697 = vpop.permute.xlu0 %3696
      %3698 = vrot.lane.b32.xlu0 %v3591, 8
      %v3699 = vpop.permute.xlu0 %3698
      %3700 = vrot.lane.b32.xlu0 %v3592, 8
      %v3701 = vpop.permute.xlu0 %3700
      %3702 = vrot.lane.b32.xlu0 %v3593, 8
      %v3703 = vpop.permute.xlu0 %3702
      %3704 = vrot.lane.b32.xlu0 %v3594, 8
      %v3705 = vpop.permute.xlu0 %3704
      %3706 = vrot.lane.b32.xlu0 %v3595, 8
      %v3707 = vpop.permute.xlu0 %3706
      %3708 = vrot.lane.b32.xlu0 %v3596, 8
      %v3709 = vpop.permute.xlu0 %3708
      %3710 = vrot.lane.b32.xlu0 %v3597, 8
      %v3711 = vpop.permute.xlu0 %3710
      %3712 = vrot.lane.b32.xlu0 %v3598, 8
      %v3713 = vpop.permute.xlu0 %3712
      %3714 = vrot.lane.b32.xlu0 %v3599, 8
      %v3715 = vpop.permute.xlu0 %3714
      %3716 = vrot.lane.b32.xlu0 %v3600, 8
      %v3717 = vpop.permute.xlu0 %3716
      %3718 = vrot.lane.b32.xlu0 %v3601, 8
      %v3719 = vpop.permute.xlu0 %3718
      %3720 = vrot.lane.b32.xlu0 %v3602, 8
      %v3721 = vpop.permute.xlu0 %3720
      %3722 = vrot.lane.b32.xlu0 %v3603, 8
      %v3723 = vpop.permute.xlu0 %3722
      %3724 = vrot.lane.b32.xlu0 %v3604, 8
      %v3725 = vpop.permute.xlu0 %3724
      %3726 = vrot.lane.b32.xlu0 %v3605, 8
      %v3727 = vpop.permute.xlu0 %3726
      %3728 = vrot.lane.b32.xlu0 %v3606, 8
      %v3729 = vpop.permute.xlu0 %3728
      %vm3771 = vcmask 130112
      %3772 = vst.msk [vmem:[#allocation4] sm:$0xff] %vm3771, %v3649
      %3773 = vst.msk [vmem:[#allocation4 + $0x8] sm:$0xff] %vm3771, %v3651
      %3774 = vst.msk [vmem:[#allocation4 + $0x10] sm:$0xff] %vm3771, %v3653
      %3775 = vst.msk [vmem:[#allocation4 + $0x18] sm:$0xff] %vm3771, %v3655
      %3776 = vst.msk [vmem:[#allocation4 + $0x20] sm:$0xff] %vm3771, %v3657
      %3777 = vst.msk [vmem:[#allocation4 + $0x28] sm:$0xff] %vm3771, %v3659
      %3778 = vst.msk [vmem:[#allocation4 + $0x30] sm:$0xff] %vm3771, %v3661
      %3779 = vst.msk [vmem:[#allocation4 + $0x38] sm:$0xff] %vm3771, %v3663
      %3780 = vst.msk [vmem:[#allocation4 + $0x40] sm:$0xff] %vm3771, %v3665
      %3781 = vst.msk [vmem:[#allocation4 + $0x48] sm:$0xff] %vm3771, %v3667
      %3782 = vst.msk [vmem:[#allocation4 + $0x50] sm:$0xff] %vm3771, %v3669
      %3783 = vst.msk [vmem:[#allocation4 + $0x58] sm:$0xff] %vm3771, %v3671
      %3784 = vst.msk [vmem:[#allocation4 + $0x60] sm:$0xff] %vm3771, %v3673
      %3785 = vst.msk [vmem:[#allocation4 + $0x68] sm:$0xff] %vm3771, %v3675
      %3786 = vst.msk [vmem:[#allocation4 + $0x70] sm:$0xff] %vm3771, %v3677
      %3787 = vst.msk [vmem:[#allocation4 + $0x78] sm:$0xff] %vm3771, %v3679
      %3788 = vst.msk [vmem:[#allocation4 + $0x80] sm:$0xff] %vm3771, %v3681
      %3789 = vst.msk [vmem:[#allocation4 + $0x88] sm:$0xff] %vm3771, %v3683
      %3790 = vst.msk [vmem:[#allocation4 + $0x90] sm:$0xff] %vm3771, %v3685
      %3791 = vst.msk [vmem:[#allocation4 + $0x98] sm:$0xff] %vm3771, %v3687
      %3792 = vst.msk [vmem:[#allocation4 + $0xa0] sm:$0xff] %vm3771, %v3689
      %3793 = vst.msk [vmem:[#allocation4 + $0xa8] sm:$0xff] %vm3771, %v3691
      %3794 = vst.msk [vmem:[#allocation4 + $0xb0] sm:$0xff] %vm3771, %v3693
      %3795 = vst.msk [vmem:[#allocation4 + $0xb8] sm:$0xff] %vm3771, %v3695
      %3796 = vst.msk [vmem:[#allocation4 + $0xc0] sm:$0xff] %vm3771, %v3697
      %3797 = vst.msk [vmem:[#allocation4 + $0xc8] sm:$0xff] %vm3771, %v3699
      %3798 = vst.msk [vmem:[#allocation4 + $0xd0] sm:$0xff] %vm3771, %v3701
      %3799 = vst.msk [vmem:[#allocation4 + $0xd8] sm:$0xff] %vm3771, %v3703
      %3800 = vst.msk [vmem:[#allocation4 + $0xe0] sm:$0xff] %vm3771, %v3705
      %3801 = vst.msk [vmem:[#allocation4 + $0xe8] sm:$0xff] %vm3771, %v3707
      %3802 = vst.msk [vmem:[#allocation4 + $0xf0] sm:$0xff] %vm3771, %v3709
      %3803 = vst.msk [vmem:[#allocation4 + $0xf8] sm:$0xff] %vm3771, %v3711
      %3804 = vst.msk [vmem:[#allocation4 + $0x100] sm:$0xff] %vm3771, %v3713
      %3805 = vst.msk [vmem:[#allocation4 + $0x108] sm:$0xff] %vm3771, %v3715
      %3806 = vst.msk [vmem:[#allocation4 + $0x110] sm:$0xff] %vm3771, %v3717
      %3807 = vst.msk [vmem:[#allocation4 + $0x118] sm:$0xff] %vm3771, %v3719
      %3808 = vst.msk [vmem:[#allocation4 + $0x120] sm:$0xff] %vm3771, %v3721
      %3809 = vst.msk [vmem:[#allocation4 + $0x128] sm:$0xff] %vm3771, %v3723
      %3810 = vst.msk [vmem:[#allocation4 + $0x130] sm:$0xff] %vm3771, %v3725
      %3811 = vst.msk [vmem:[#allocation4 + $0x138] sm:$0xff] %vm3771, %v3727
      %vm3812 = vcmask 126016
      %3813 = vst.msk [vmem:[#allocation4 + $0x140] sm:$0xf] %vm3812, %v3729
      %v3814 = vld [vmem:[#allocation3 + $0x7] sm:$0xff]
      %v3815 = vld [vmem:[#allocation3 + $0xf] sm:$0xff]
      %v3816 = vld [vmem:[#allocation3 + $0x17] sm:$0xff]
      %v3817 = vld [vmem:[#allocation3 + $0x1f] sm:$0xff]
      %v3818 = vld [vmem:[#allocation3 + $0x27] sm:$0xff]
      %v3819 = vld [vmem:[#allocation3 + $0x2f] sm:$0xff]
      %v3820 = vld [vmem:[#allocation3 + $0x37] sm:$0xff]
      %v3821 = vld [vmem:[#allocation3 + $0x3f] sm:$0xff]
      %v3822 = vld [vmem:[#allocation3 + $0x47] sm:$0xff]
      %v3823 = vld [vmem:[#allocation3 + $0x4f] sm:$0xff]
      %v3824 = vld [vmem:[#allocation3 + $0x57] sm:$0xff]
      %v3825 = vld [vmem:[#allocation3 + $0x5f] sm:$0xff]
      %v3826 = vld [vmem:[#allocation3 + $0x67] sm:$0xff]
      %v3827 = vld [vmem:[#allocation3 + $0x6f] sm:$0xff]
      %v3828 = vld [vmem:[#allocation3 + $0x77] sm:$0xff]
      %v3829 = vld [vmem:[#allocation3 + $0x7f] sm:$0xff]
      %v3830 = vld [vmem:[#allocation3 + $0x87] sm:$0xff]
      %v3831 = vld [vmem:[#allocation3 + $0x8f] sm:$0xff]
      %v3832 = vld [vmem:[#allocation3 + $0x97] sm:$0xff]
      %v3833 = vld [vmem:[#allocation3 + $0x9f] sm:$0xff]
      %v3834 = vld [vmem:[#allocation3 + $0xa7] sm:$0xff]
      %v3835 = vld [vmem:[#allocation3 + $0xaf] sm:$0xff]
      %v3836 = vld [vmem:[#allocation3 + $0xb7] sm:$0xff]
      %v3837 = vld [vmem:[#allocation3 + $0xbf] sm:$0xff]
      %v3838 = vld [vmem:[#allocation3 + $0xc7] sm:$0xff]
      %v3839 = vld [vmem:[#allocation3 + $0xcf] sm:$0xff]
      %v3840 = vld [vmem:[#allocation3 + $0xd7] sm:$0xff]
      %v3841 = vld [vmem:[#allocation3 + $0xdf] sm:$0xff]
      %v3842 = vld [vmem:[#allocation3 + $0xe7] sm:$0xff]
      %v3843 = vld [vmem:[#allocation3 + $0xef] sm:$0xff]
      %v3844 = vld [vmem:[#allocation3 + $0xf7] sm:$0xff]
      %v3845 = vld [vmem:[#allocation3 + $0xff] sm:$0xff]
      %v3846 = vld [vmem:[#allocation3 + $0x107] sm:$0xff]
      %v3847 = vld [vmem:[#allocation3 + $0x10f] sm:$0xff]
      %v3848 = vld [vmem:[#allocation3 + $0x117] sm:$0xff]
      %v3849 = vld [vmem:[#allocation3 + $0x11f] sm:$0xff]
      %v3850 = vld [vmem:[#allocation3 + $0x127] sm:$0xff]
      %v3851 = vld [vmem:[#allocation3 + $0x12f] sm:$0xff]
      %v3852 = vld [vmem:[#allocation3 + $0x137] sm:$0xff]
      %v3853 = vld [vmem:[#allocation3 + $0x13f] sm:$0xff]
      %v3854 = vld [vmem:[#allocation3 + $0x147] sm:$0xf]
      %3896 = vrot.lane.b32.xlu0 %v3814, 16
      %v3897 = vpop.permute.xlu0 %3896
      %3898 = vrot.lane.b32.xlu0 %v3815, 16
      %v3899 = vpop.permute.xlu0 %3898
      %3900 = vrot.lane.b32.xlu0 %v3816, 16
      %v3901 = vpop.permute.xlu0 %3900
      %3902 = vrot.lane.b32.xlu0 %v3817, 16
      %v3903 = vpop.permute.xlu0 %3902
      %3904 = vrot.lane.b32.xlu0 %v3818, 16
      %v3905 = vpop.permute.xlu0 %3904
      %3906 = vrot.lane.b32.xlu0 %v3819, 16
      %v3907 = vpop.permute.xlu0 %3906
      %3908 = vrot.lane.b32.xlu0 %v3820, 16
      %v3909 = vpop.permute.xlu0 %3908
      %3910 = vrot.lane.b32.xlu0 %v3821, 16
      %v3911 = vpop.permute.xlu0 %3910
      %3912 = vrot.lane.b32.xlu0 %v3822, 16
      %v3913 = vpop.permute.xlu0 %3912
      %3914 = vrot.lane.b32.xlu0 %v3823, 16
      %v3915 = vpop.permute.xlu0 %3914
      %3916 = vrot.lane.b32.xlu0 %v3824, 16
      %v3917 = vpop.permute.xlu0 %3916
      %3918 = vrot.lane.b32.xlu0 %v3825, 16
      %v3919 = vpop.permute.xlu0 %3918
      %3920 = vrot.lane.b32.xlu0 %v3826, 16
      %v3921 = vpop.permute.xlu0 %3920
      %3922 = vrot.lane.b32.xlu0 %v3827, 16
      %v3923 = vpop.permute.xlu0 %3922
      %3924 = vrot.lane.b32.xlu0 %v3828, 16
      %v3925 = vpop.permute.xlu0 %3924
      %3926 = vrot.lane.b32.xlu0 %v3829, 16
      %v3927 = vpop.permute.xlu0 %3926
      %3928 = vrot.lane.b32.xlu0 %v3830, 16
      %v3929 = vpop.permute.xlu0 %3928
      %3930 = vrot.lane.b32.xlu0 %v3831, 16
      %v3931 = vpop.permute.xlu0 %3930
      %3932 = vrot.lane.b32.xlu0 %v3832, 16
      %v3933 = vpop.permute.xlu0 %3932
      %3934 = vrot.lane.b32.xlu0 %v3833, 16
      %v3935 = vpop.permute.xlu0 %3934
      %3936 = vrot.lane.b32.xlu0 %v3834, 16
      %v3937 = vpop.permute.xlu0 %3936
      %3938 = vrot.lane.b32.xlu0 %v3835, 16
      %v3939 = vpop.permute.xlu0 %3938
      %3940 = vrot.lane.b32.xlu0 %v3836, 16
      %v3941 = vpop.permute.xlu0 %3940
      %3942 = vrot.lane.b32.xlu0 %v3837, 16
      %v3943 = vpop.permute.xlu0 %3942
      %3944 = vrot.lane.b32.xlu0 %v3838, 16
      %v3945 = vpop.permute.xlu0 %3944
      %3946 = vrot.lane.b32.xlu0 %v3839, 16
      %v3947 = vpop.permute.xlu0 %3946
      %3948 = vrot.lane.b32.xlu0 %v3840, 16
      %v3949 = vpop.permute.xlu0 %3948
      %3950 = vrot.lane.b32.xlu0 %v3841, 16
      %v3951 = vpop.permute.xlu0 %3950
      %3952 = vrot.lane.b32.xlu0 %v3842, 16
      %v3953 = vpop.permute.xlu0 %3952
      %3954 = vrot.lane.b32.xlu0 %v3843, 16
      %v3955 = vpop.permute.xlu0 %3954
      %3956 = vrot.lane.b32.xlu0 %v3844, 16
      %v3957 = vpop.permute.xlu0 %3956
      %3958 = vrot.lane.b32.xlu0 %v3845, 16
      %v3959 = vpop.permute.xlu0 %3958
      %3960 = vrot.lane.b32.xlu0 %v3846, 16
      %v3961 = vpop.permute.xlu0 %3960
      %3962 = vrot.lane.b32.xlu0 %v3847, 16
      %v3963 = vpop.permute.xlu0 %3962
      %3964 = vrot.lane.b32.xlu0 %v3848, 16
      %v3965 = vpop.permute.xlu0 %3964
      %3966 = vrot.lane.b32.xlu0 %v3849, 16
      %v3967 = vpop.permute.xlu0 %3966
      %3968 = vrot.lane.b32.xlu0 %v3850, 16
      %v3969 = vpop.permute.xlu0 %3968
      %3970 = vrot.lane.b32.xlu0 %v3851, 16
      %v3971 = vpop.permute.xlu0 %3970
      %3972 = vrot.lane.b32.xlu0 %v3852, 16
      %v3973 = vpop.permute.xlu0 %3972
      %3974 = vrot.lane.b32.xlu0 %v3853, 16
      %v3975 = vpop.permute.xlu0 %3974
      %3976 = vrot.lane.b32.xlu0 %v3854, 16
      %v3977 = vpop.permute.xlu0 %3976
      %vm4019 = vcmask 195712
      %4020 = vst.msk [vmem:[#allocation4] sm:$0xff] %vm4019, %v3897
      %4021 = vst.msk [vmem:[#allocation4 + $0x8] sm:$0xff] %vm4019, %v3899
      %4022 = vst.msk [vmem:[#allocation4 + $0x10] sm:$0xff] %vm4019, %v3901
      %4023 = vst.msk [vmem:[#allocation4 + $0x18] sm:$0xff] %vm4019, %v3903
      %4024 = vst.msk [vmem:[#allocation4 + $0x20] sm:$0xff] %vm4019, %v3905
      %4025 = vst.msk [vmem:[#allocation4 + $0x28] sm:$0xff] %vm4019, %v3907
      %4026 = vst.msk [vmem:[#allocation4 + $0x30] sm:$0xff] %vm4019, %v3909
      %4027 = vst.msk [vmem:[#allocation4 + $0x38] sm:$0xff] %vm4019, %v3911
      %4028 = vst.msk [vmem:[#allocation4 + $0x40] sm:$0xff] %vm4019, %v3913
      %4029 = vst.msk [vmem:[#allocation4 + $0x48] sm:$0xff] %vm4019, %v3915
      %4030 = vst.msk [vmem:[#allocation4 + $0x50] sm:$0xff] %vm4019, %v3917
      %4031 = vst.msk [vmem:[#allocation4 + $0x58] sm:$0xff] %vm4019, %v3919
      %4032 = vst.msk [vmem:[#allocation4 + $0x60] sm:$0xff] %vm4019, %v3921
      %4033 = vst.msk [vmem:[#allocation4 + $0x68] sm:$0xff] %vm4019, %v3923
      %4034 = vst.msk [vmem:[#allocation4 + $0x70] sm:$0xff] %vm4019, %v3925
      %4035 = vst.msk [vmem:[#allocation4 + $0x78] sm:$0xff] %vm4019, %v3927
      %4036 = vst.msk [vmem:[#allocation4 + $0x80] sm:$0xff] %vm4019, %v3929
      %4037 = vst.msk [vmem:[#allocation4 + $0x88] sm:$0xff] %vm4019, %v3931
      %4038 = vst.msk [vmem:[#allocation4 + $0x90] sm:$0xff] %vm4019, %v3933
      %4039 = vst.msk [vmem:[#allocation4 + $0x98] sm:$0xff] %vm4019, %v3935
      %4040 = vst.msk [vmem:[#allocation4 + $0xa0] sm:$0xff] %vm4019, %v3937
      %4041 = vst.msk [vmem:[#allocation4 + $0xa8] sm:$0xff] %vm4019, %v3939
      %4042 = vst.msk [vmem:[#allocation4 + $0xb0] sm:$0xff] %vm4019, %v3941
      %4043 = vst.msk [vmem:[#allocation4 + $0xb8] sm:$0xff] %vm4019, %v3943
      %4044 = vst.msk [vmem:[#allocation4 + $0xc0] sm:$0xff] %vm4019, %v3945
      %4045 = vst.msk [vmem:[#allocation4 + $0xc8] sm:$0xff] %vm4019, %v3947
      %4046 = vst.msk [vmem:[#allocation4 + $0xd0] sm:$0xff] %vm4019, %v3949
      %4047 = vst.msk [vmem:[#allocation4 + $0xd8] sm:$0xff] %vm4019, %v3951
      %4048 = vst.msk [vmem:[#allocation4 + $0xe0] sm:$0xff] %vm4019, %v3953
      %4049 = vst.msk [vmem:[#allocation4 + $0xe8] sm:$0xff] %vm4019, %v3955
      %4050 = vst.msk [vmem:[#allocation4 + $0xf0] sm:$0xff] %vm4019, %v3957
      %4051 = vst.msk [vmem:[#allocation4 + $0xf8] sm:$0xff] %vm4019, %v3959
      %4052 = vst.msk [vmem:[#allocation4 + $0x100] sm:$0xff] %vm4019, %v3961
      %4053 = vst.msk [vmem:[#allocation4 + $0x108] sm:$0xff] %vm4019, %v3963
      %4054 = vst.msk [vmem:[#allocation4 + $0x110] sm:$0xff] %vm4019, %v3965
      %4055 = vst.msk [vmem:[#allocation4 + $0x118] sm:$0xff] %vm4019, %v3967
      %4056 = vst.msk [vmem:[#allocation4 + $0x120] sm:$0xff] %vm4019, %v3969
      %4057 = vst.msk [vmem:[#allocation4 + $0x128] sm:$0xff] %vm4019, %v3971
      %4058 = vst.msk [vmem:[#allocation4 + $0x130] sm:$0xff] %vm4019, %v3973
      %4059 = vst.msk [vmem:[#allocation4 + $0x138] sm:$0xff] %vm4019, %v3975
      %vm4060 = vcmask 191616
      %4061 = vst.msk [vmem:[#allocation4 + $0x140] sm:$0xf] %vm4060, %v3977
      %v4062 = vld [vmem:[#allocation3 + $0x17] sm:$0xff]
      %v4063 = vld [vmem:[#allocation3 + $0x1f] sm:$0xff]
      %v4064 = vld [vmem:[#allocation3 + $0x27] sm:$0xff]
      %v4065 = vld [vmem:[#allocation3 + $0x2f] sm:$0xff]
      %v4066 = vld [vmem:[#allocation3 + $0x37] sm:$0xff]
      %v4067 = vld [vmem:[#allocation3 + $0x3f] sm:$0xff]
      %v4068 = vld [vmem:[#allocation3 + $0x47] sm:$0xff]
      %v4069 = vld [vmem:[#allocation3 + $0x4f] sm:$0xff]
      %v4070 = vld [vmem:[#allocation3 + $0x57] sm:$0xff]
      %v4071 = vld [vmem:[#allocation3 + $0x5f] sm:$0xff]
      %v4072 = vld [vmem:[#allocation3 + $0x67] sm:$0xff]
      %v4073 = vld [vmem:[#allocation3 + $0x6f] sm:$0xff]
      %v4074 = vld [vmem:[#allocation3 + $0x77] sm:$0xff]
      %v4075 = vld [vmem:[#allocation3 + $0x7f] sm:$0xff]
      %v4076 = vld [vmem:[#allocation3 + $0x87] sm:$0xff]
      %v4077 = vld [vmem:[#allocation3 + $0x8f] sm:$0xff]
      %v4078 = vld [vmem:[#allocation3 + $0x97] sm:$0xff]
      %v4079 = vld [vmem:[#allocation3 + $0x9f] sm:$0xff]
      %v4080 = vld [vmem:[#allocation3 + $0xa7] sm:$0xff]
      %v4081 = vld [vmem:[#allocation3 + $0xaf] sm:$0xff]
      %v4082 = vld [vmem:[#allocation3 + $0xb7] sm:$0xff]
      %v4083 = vld [vmem:[#allocation3 + $0xbf] sm:$0xff]
      %v4084 = vld [vmem:[#allocation3 + $0xc7] sm:$0xff]
      %v4085 = vld [vmem:[#allocation3 + $0xcf] sm:$0xff]
      %v4086 = vld [vmem:[#allocation3 + $0xd7] sm:$0xff]
      %v4087 = vld [vmem:[#allocation3 + $0xdf] sm:$0xff]
      %v4088 = vld [vmem:[#allocation3 + $0xe7] sm:$0xff]
      %v4089 = vld [vmem:[#allocation3 + $0xef] sm:$0xff]
      %v4090 = vld [vmem:[#allocation3 + $0xf7] sm:$0xff]
      %v4091 = vld [vmem:[#allocation3 + $0xff] sm:$0xff]
      %v4092 = vld [vmem:[#allocation3 + $0x107] sm:$0xff]
      %v4093 = vld [vmem:[#allocation3 + $0x10f] sm:$0xff]
      %v4094 = vld [vmem:[#allocation3 + $0x117] sm:$0xff]
      %v4095 = vld [vmem:[#allocation3 + $0x11f] sm:$0xff]
      %v4096 = vld [vmem:[#allocation3 + $0x127] sm:$0xff]
      %v4097 = vld [vmem:[#allocation3 + $0x12f] sm:$0xff]
      %v4098 = vld [vmem:[#allocation3 + $0x137] sm:$0xff]
      %v4099 = vld [vmem:[#allocation3 + $0x13f] sm:$0xff]
      %v4100 = vld [vmem:[#allocation3 + $0x147] sm:$0xff]
      %v4101 = vld [vmem:[#allocation3 + $0x14f] sm:$0xff]
      %v4102 = vld [vmem:[#allocation3 + $0x157] sm:$0xf]
      %4144 = vrot.lane.b32.xlu0 %v4062, 24
      %v4145 = vpop.permute.xlu0 %4144
      %4146 = vrot.lane.b32.xlu0 %v4063, 24
      %v4147 = vpop.permute.xlu0 %4146
      %4148 = vrot.lane.b32.xlu0 %v4064, 24
      %v4149 = vpop.permute.xlu0 %4148
      %4150 = vrot.lane.b32.xlu0 %v4065, 24
      %v4151 = vpop.permute.xlu0 %4150
      %4152 = vrot.lane.b32.xlu0 %v4066, 24
      %v4153 = vpop.permute.xlu0 %4152
      %4154 = vrot.lane.b32.xlu0 %v4067, 24
      %v4155 = vpop.permute.xlu0 %4154
      %4156 = vrot.lane.b32.xlu0 %v4068, 24
      %v4157 = vpop.permute.xlu0 %4156
      %4158 = vrot.lane.b32.xlu0 %v4069, 24
      %v4159 = vpop.permute.xlu0 %4158
      %4160 = vrot.lane.b32.xlu0 %v4070, 24
      %v4161 = vpop.permute.xlu0 %4160
      %4162 = vrot.lane.b32.xlu0 %v4071, 24
      %v4163 = vpop.permute.xlu0 %4162
      %4164 = vrot.lane.b32.xlu0 %v4072, 24
      %v4165 = vpop.permute.xlu0 %4164
      %4166 = vrot.lane.b32.xlu0 %v4073, 24
      %v4167 = vpop.permute.xlu0 %4166
      %4168 = vrot.lane.b32.xlu0 %v4074, 24
      %v4169 = vpop.permute.xlu0 %4168
      %4170 = vrot.lane.b32.xlu0 %v4075, 24
      %v4171 = vpop.permute.xlu0 %4170
      %4172 = vrot.lane.b32.xlu0 %v4076, 24
      %v4173 = vpop.permute.xlu0 %4172
      %4174 = vrot.lane.b32.xlu0 %v4077, 24
      %v4175 = vpop.permute.xlu0 %4174
      %4176 = vrot.lane.b32.xlu0 %v4078, 24
      %v4177 = vpop.permute.xlu0 %4176
      %4178 = vrot.lane.b32.xlu0 %v4079, 24
      %v4179 = vpop.permute.xlu0 %4178
      %4180 = vrot.lane.b32.xlu0 %v4080, 24
      %v4181 = vpop.permute.xlu0 %4180
      %4182 = vrot.lane.b32.xlu0 %v4081, 24
      %v4183 = vpop.permute.xlu0 %4182
      %4184 = vrot.lane.b32.xlu0 %v4082, 24
      %v4185 = vpop.permute.xlu0 %4184
      %4186 = vrot.lane.b32.xlu0 %v4083, 24
      %v4187 = vpop.permute.xlu0 %4186
      %4188 = vrot.lane.b32.xlu0 %v4084, 24
      %v4189 = vpop.permute.xlu0 %4188
      %4190 = vrot.lane.b32.xlu0 %v4085, 24
      %v4191 = vpop.permute.xlu0 %4190
      %4192 = vrot.lane.b32.xlu0 %v4086, 24
      %v4193 = vpop.permute.xlu0 %4192
      %4194 = vrot.lane.b32.xlu0 %v4087, 24
      %v4195 = vpop.permute.xlu0 %4194
      %4196 = vrot.lane.b32.xlu0 %v4088, 24
      %v4197 = vpop.permute.xlu0 %4196
      %4198 = vrot.lane.b32.xlu0 %v4089, 24
      %v4199 = vpop.permute.xlu0 %4198
      %4200 = vrot.lane.b32.xlu0 %v4090, 24
      %v4201 = vpop.permute.xlu0 %4200
      %4202 = vrot.lane.b32.xlu0 %v4091, 24
      %v4203 = vpop.permute.xlu0 %4202
      %4204 = vrot.lane.b32.xlu0 %v4092, 24
      %v4205 = vpop.permute.xlu0 %4204
      %4206 = vrot.lane.b32.xlu0 %v4093, 24
      %v4207 = vpop.permute.xlu0 %4206
      %4208 = vrot.lane.b32.xlu0 %v4094, 24
      %v4209 = vpop.permute.xlu0 %4208
      %4210 = vrot.lane.b32.xlu0 %v4095, 24
      %v4211 = vpop.permute.xlu0 %4210
      %4212 = vrot.lane.b32.xlu0 %v4096, 24
      %v4213 = vpop.permute.xlu0 %4212
      %4214 = vrot.lane.b32.xlu0 %v4097, 24
      %v4215 = vpop.permute.xlu0 %4214
      %4216 = vrot.lane.b32.xlu0 %v4098, 24
      %v4217 = vpop.permute.xlu0 %4216
      %4218 = vrot.lane.b32.xlu0 %v4099, 24
      %v4219 = vpop.permute.xlu0 %4218
      %4220 = vrot.lane.b32.xlu0 %v4100, 24
      %v4221 = vpop.permute.xlu0 %4220
      %4222 = vrot.lane.b32.xlu0 %v4101, 24
      %v4223 = vpop.permute.xlu0 %4222
      %4224 = vrot.lane.b32.xlu0 %v4102, 24
      %v4225 = vpop.permute.xlu0 %4224
      %vm4267 = vcmask 261312
      %4268 = vst.msk [vmem:[#allocation4] sm:$0xff] %vm4267, %v4145
      %4269 = vst.msk [vmem:[#allocation4 + $0x8] sm:$0xff] %vm4267, %v4147
      %4270 = vst.msk [vmem:[#allocation4 + $0x10] sm:$0xff] %vm4267, %v4149
      %4271 = vst.msk [vmem:[#allocation4 + $0x18] sm:$0xff] %vm4267, %v4151
      %4272 = vst.msk [vmem:[#allocation4 + $0x20] sm:$0xff] %vm4267, %v4153
      %4273 = vst.msk [vmem:[#allocation4 + $0x28] sm:$0xff] %vm4267, %v4155
      %4274 = vst.msk [vmem:[#allocation4 + $0x30] sm:$0xff] %vm4267, %v4157
      %4275 = vst.msk [vmem:[#allocation4 + $0x38] sm:$0xff] %vm4267, %v4159
      %4276 = vst.msk [vmem:[#allocation4 + $0x40] sm:$0xff] %vm4267, %v4161
      %4277 = vst.msk [vmem:[#allocation4 + $0x48] sm:$0xff] %vm4267, %v4163
      %4278 = vst.msk [vmem:[#allocation4 + $0x50] sm:$0xff] %vm4267, %v4165
      %4279 = vst.msk [vmem:[#allocation4 + $0x58] sm:$0xff] %vm4267, %v4167
      %4280 = vst.msk [vmem:[#allocation4 + $0x60] sm:$0xff] %vm4267, %v4169
      %4281 = vst.msk [vmem:[#allocation4 + $0x68] sm:$0xff] %vm4267, %v4171
      %4282 = vst.msk [vmem:[#allocation4 + $0x70] sm:$0xff] %vm4267, %v4173
      %4283 = vst.msk [vmem:[#allocation4 + $0x78] sm:$0xff] %vm4267, %v4175
      %4284 = vst.msk [vmem:[#allocation4 + $0x80] sm:$0xff] %vm4267, %v4177
      %4285 = vst.msk [vmem:[#allocation4 + $0x88] sm:$0xff] %vm4267, %v4179
      %4286 = vst.msk [vmem:[#allocation4 + $0x90] sm:$0xff] %vm4267, %v4181
      %4287 = vst.msk [vmem:[#allocation4 + $0x98] sm:$0xff] %vm4267, %v4183
      %4288 = vst.msk [vmem:[#allocation4 + $0xa0] sm:$0xff] %vm4267, %v4185
      %4289 = vst.msk [vmem:[#allocation4 + $0xa8] sm:$0xff] %vm4267, %v4187
      %4290 = vst.msk [vmem:[#allocation4 + $0xb0] sm:$0xff] %vm4267, %v4189
      %4291 = vst.msk [vmem:[#allocation4 + $0xb8] sm:$0xff] %vm4267, %v4191
      %4292 = vst.msk [vmem:[#allocation4 + $0xc0] sm:$0xff] %vm4267, %v4193
      %4293 = vst.msk [vmem:[#allocation4 + $0xc8] sm:$0xff] %vm4267, %v4195
      %4294 = vst.msk [vmem:[#allocation4 + $0xd0] sm:$0xff] %vm4267, %v4197
      %4295 = vst.msk [vmem:[#allocation4 + $0xd8] sm:$0xff] %vm4267, %v4199
      %4296 = vst.msk [vmem:[#allocation4 + $0xe0] sm:$0xff] %vm4267, %v4201
      %4297 = vst.msk [vmem:[#allocation4 + $0xe8] sm:$0xff] %vm4267, %v4203
      %4298 = vst.msk [vmem:[#allocation4 + $0xf0] sm:$0xff] %vm4267, %v4205
      %4299 = vst.msk [vmem:[#allocation4 + $0xf8] sm:$0xff] %vm4267, %v4207
      %4300 = vst.msk [vmem:[#allocation4 + $0x100] sm:$0xff] %vm4267, %v4209
      %4301 = vst.msk [vmem:[#allocation4 + $0x108] sm:$0xff] %vm4267, %v4211
      %4302 = vst.msk [vmem:[#allocation4 + $0x110] sm:$0xff] %vm4267, %v4213
      %4303 = vst.msk [vmem:[#allocation4 + $0x118] sm:$0xff] %vm4267, %v4215
      %4304 = vst.msk [vmem:[#allocation4 + $0x120] sm:$0xff] %vm4267, %v4217
      %4305 = vst.msk [vmem:[#allocation4 + $0x128] sm:$0xff] %vm4267, %v4219
      %4306 = vst.msk [vmem:[#allocation4 + $0x130] sm:$0xff] %vm4267, %v4221
      %4307 = vst.msk [vmem:[#allocation4 + $0x138] sm:$0xff] %vm4267, %v4223
      %vm4308 = vcmask 257216
      %4309 = vst.msk [vmem:[#allocation4 + $0x140] sm:$0xf] %vm4308, %v4225
      %v4310 = vld [vmem:[#allocation3 + $0x18] sm:$0xff]
      %v4311 = vld [vmem:[#allocation3 + $0x20] sm:$0xff]
      %v4312 = vld [vmem:[#allocation3 + $0x28] sm:$0xff]
      %v4313 = vld [vmem:[#allocation3 + $0x30] sm:$0xff]
      %v4314 = vld [vmem:[#allocation3 + $0x38] sm:$0xff]
      %v4315 = vld [vmem:[#allocation3 + $0x40] sm:$0xff]
      %v4316 = vld [vmem:[#allocation3 + $0x48] sm:$0xff]
      %v4317 = vld [vmem:[#allocation3 + $0x50] sm:$0xff]
      %v4318 = vld [vmem:[#allocation3 + $0x58] sm:$0xff]
      %v4319 = vld [vmem:[#allocation3 + $0x60] sm:$0xff]
      %v4320 = vld [vmem:[#allocation3 + $0x68] sm:$0xff]
      %v4321 = vld [vmem:[#allocation3 + $0x70] sm:$0xff]
      %v4322 = vld [vmem:[#allocation3 + $0x78] sm:$0xff]
      %v4323 = vld [vmem:[#allocation3 + $0x80] sm:$0xff]
      %v4324 = vld [vmem:[#allocation3 + $0x88] sm:$0xff]
      %v4325 = vld [vmem:[#allocation3 + $0x90] sm:$0xff]
      %v4326 = vld [vmem:[#allocation3 + $0x98] sm:$0xff]
      %v4327 = vld [vmem:[#allocation3 + $0xa0] sm:$0xff]
      %v4328 = vld [vmem:[#allocation3 + $0xa8] sm:$0xff]
      %v4329 = vld [vmem:[#allocation3 + $0xb0] sm:$0xff]
      %v4330 = vld [vmem:[#allocation3 + $0xb8] sm:$0xff]
      %v4331 = vld [vmem:[#allocation3 + $0xc0] sm:$0xff]
      %v4332 = vld [vmem:[#allocation3 + $0xc8] sm:$0xff]
      %v4333 = vld [vmem:[#allocation3 + $0xd0] sm:$0xff]
      %v4334 = vld [vmem:[#allocation3 + $0xd8] sm:$0xff]
      %v4335 = vld [vmem:[#allocation3 + $0xe0] sm:$0xff]
      %v4336 = vld [vmem:[#allocation3 + $0xe8] sm:$0xff]
      %v4337 = vld [vmem:[#allocation3 + $0xf0] sm:$0xff]
      %v4338 = vld [vmem:[#allocation3 + $0xf8] sm:$0xff]
      %v4339 = vld [vmem:[#allocation3 + $0x100] sm:$0xff]
      %v4340 = vld [vmem:[#allocation3 + $0x108] sm:$0xff]
      %v4341 = vld [vmem:[#allocation3 + $0x110] sm:$0xff]
      %v4342 = vld [vmem:[#allocation3 + $0x118] sm:$0xff]
      %v4343 = vld [vmem:[#allocation3 + $0x120] sm:$0xff]
      %v4344 = vld [vmem:[#allocation3 + $0x128] sm:$0xff]
      %v4345 = vld [vmem:[#allocation3 + $0x130] sm:$0xff]
      %v4346 = vld [vmem:[#allocation3 + $0x138] sm:$0xff]
      %v4347 = vld [vmem:[#allocation3 + $0x140] sm:$0xff]
      %v4348 = vld [vmem:[#allocation3 + $0x148] sm:$0xff]
      %v4349 = vld [vmem:[#allocation3 + $0x150] sm:$0xff]
      %v4350 = vld [vmem:[#allocation3 + $0x158] sm:$0xf]
      %4392 = vrot.lane.b32.xlu0 %v4310, 32
      %v4393 = vpop.permute.xlu0 %4392
      %4394 = vrot.lane.b32.xlu0 %v4311, 32
      %v4395 = vpop.permute.xlu0 %4394
      %4396 = vrot.lane.b32.xlu0 %v4312, 32
      %v4397 = vpop.permute.xlu0 %4396
      %4398 = vrot.lane.b32.xlu0 %v4313, 32
      %v4399 = vpop.permute.xlu0 %4398
      %4400 = vrot.lane.b32.xlu0 %v4314, 32
      %v4401 = vpop.permute.xlu0 %4400
      %4402 = vrot.lane.b32.xlu0 %v4315, 32
      %v4403 = vpop.permute.xlu0 %4402
      %4404 = vrot.lane.b32.xlu0 %v4316, 32
      %v4405 = vpop.permute.xlu0 %4404
      %4406 = vrot.lane.b32.xlu0 %v4317, 32
      %v4407 = vpop.permute.xlu0 %4406
      %4408 = vrot.lane.b32.xlu0 %v4318, 32
      %v4409 = vpop.permute.xlu0 %4408
      %4410 = vrot.lane.b32.xlu0 %v4319, 32
      %v4411 = vpop.permute.xlu0 %4410
      %4412 = vrot.lane.b32.xlu0 %v4320, 32
      %v4413 = vpop.permute.xlu0 %4412
      %4414 = vrot.lane.b32.xlu0 %v4321, 32
      %v4415 = vpop.permute.xlu0 %4414
      %4416 = vrot.lane.b32.xlu0 %v4322, 32
      %v4417 = vpop.permute.xlu0 %4416
      %4418 = vrot.lane.b32.xlu0 %v4323, 32
      %v4419 = vpop.permute.xlu0 %4418
      %4420 = vrot.lane.b32.xlu0 %v4324, 32
      %v4421 = vpop.permute.xlu0 %4420
      %4422 = vrot.lane.b32.xlu0 %v4325, 32
      %v4423 = vpop.permute.xlu0 %4422
      %4424 = vrot.lane.b32.xlu0 %v4326, 32
      %v4425 = vpop.permute.xlu0 %4424
      %4426 = vrot.lane.b32.xlu0 %v4327, 32
      %v4427 = vpop.permute.xlu0 %4426
      %4428 = vrot.lane.b32.xlu0 %v4328, 32
      %v4429 = vpop.permute.xlu0 %4428
      %4430 = vrot.lane.b32.xlu0 %v4329, 32
      %v4431 = vpop.permute.xlu0 %4430
      %4432 = vrot.lane.b32.xlu0 %v4330, 32
      %v4433 = vpop.permute.xlu0 %4432
      %4434 = vrot.lane.b32.xlu0 %v4331, 32
      %v4435 = vpop.permute.xlu0 %4434
      %4436 = vrot.lane.b32.xlu0 %v4332, 32
      %v4437 = vpop.permute.xlu0 %4436
      %4438 = vrot.lane.b32.xlu0 %v4333, 32
      %v4439 = vpop.permute.xlu0 %4438
      %4440 = vrot.lane.b32.xlu0 %v4334, 32
      %v4441 = vpop.permute.xlu0 %4440
      %4442 = vrot.lane.b32.xlu0 %v4335, 32
      %v4443 = vpop.permute.xlu0 %4442
      %4444 = vrot.lane.b32.xlu0 %v4336, 32
      %v4445 = vpop.permute.xlu0 %4444
      %4446 = vrot.lane.b32.xlu0 %v4337, 32
      %v4447 = vpop.permute.xlu0 %4446
      %4448 = vrot.lane.b32.xlu0 %v4338, 32
      %v4449 = vpop.permute.xlu0 %4448
      %4450 = vrot.lane.b32.xlu0 %v4339, 32
      %v4451 = vpop.permute.xlu0 %4450
      %4452 = vrot.lane.b32.xlu0 %v4340, 32
      %v4453 = vpop.permute.xlu0 %4452
      %4454 = vrot.lane.b32.xlu0 %v4341, 32
      %v4455 = vpop.permute.xlu0 %4454
      %4456 = vrot.lane.b32.xlu0 %v4342, 32
      %v4457 = vpop.permute.xlu0 %4456
      %4458 = vrot.lane.b32.xlu0 %v4343, 32
      %v4459 = vpop.permute.xlu0 %4458
      %4460 = vrot.lane.b32.xlu0 %v4344, 32
      %v4461 = vpop.permute.xlu0 %4460
      %4462 = vrot.lane.b32.xlu0 %v4345, 32
      %v4463 = vpop.permute.xlu0 %4462
      %4464 = vrot.lane.b32.xlu0 %v4346, 32
      %v4465 = vpop.permute.xlu0 %4464
      %4466 = vrot.lane.b32.xlu0 %v4347, 32
      %v4467 = vpop.permute.xlu0 %4466
      %4468 = vrot.lane.b32.xlu0 %v4348, 32
      %v4469 = vpop.permute.xlu0 %4468
      %4470 = vrot.lane.b32.xlu0 %v4349, 32
      %v4471 = vpop.permute.xlu0 %4470
      %4472 = vrot.lane.b32.xlu0 %v4350, 32
      %v4473 = vpop.permute.xlu0 %4472
      %vm4515 = vcmask 326912
      %4516 = vst.msk [vmem:[#allocation4] sm:$0xff] %vm4515, %v4393
      %4517 = vst.msk [vmem:[#allocation4 + $0x8] sm:$0xff] %vm4515, %v4395
      %4518 = vst.msk [vmem:[#allocation4 + $0x10] sm:$0xff] %vm4515, %v4397
      %4519 = vst.msk [vmem:[#allocation4 + $0x18] sm:$0xff] %vm4515, %v4399
      %4520 = vst.msk [vmem:[#allocation4 + $0x20] sm:$0xff] %vm4515, %v4401
      %4521 = vst.msk [vmem:[#allocation4 + $0x28] sm:$0xff] %vm4515, %v4403
      %4522 = vst.msk [vmem:[#allocation4 + $0x30] sm:$0xff] %vm4515, %v4405
      %4523 = vst.msk [vmem:[#allocation4 + $0x38] sm:$0xff] %vm4515, %v4407
      %4524 = vst.msk [vmem:[#allocation4 + $0x40] sm:$0xff] %vm4515, %v4409
      %4525 = vst.msk [vmem:[#allocation4 + $0x48] sm:$0xff] %vm4515, %v4411
      %4526 = vst.msk [vmem:[#allocation4 + $0x50] sm:$0xff] %vm4515, %v4413
      %4527 = vst.msk [vmem:[#allocation4 + $0x58] sm:$0xff] %vm4515, %v4415
      %4528 = vst.msk [vmem:[#allocation4 + $0x60] sm:$0xff] %vm4515, %v4417
      %4529 = vst.msk [vmem:[#allocation4 + $0x68] sm:$0xff] %vm4515, %v4419
      %4530 = vst.msk [vmem:[#allocation4 + $0x70] sm:$0xff] %vm4515, %v4421
      %4531 = vst.msk [vmem:[#allocation4 + $0x78] sm:$0xff] %vm4515, %v4423
      %4532 = vst.msk [vmem:[#allocation4 + $0x80] sm:$0xff] %vm4515, %v4425
      %4533 = vst.msk [vmem:[#allocation4 + $0x88] sm:$0xff] %vm4515, %v4427
      %4534 = vst.msk [vmem:[#allocation4 + $0x90] sm:$0xff] %vm4515, %v4429
      %4535 = vst.msk [vmem:[#allocation4 + $0x98] sm:$0xff] %vm4515, %v4431
      %4536 = vst.msk [vmem:[#allocation4 + $0xa0] sm:$0xff] %vm4515, %v4433
      %4537 = vst.msk [vmem:[#allocation4 + $0xa8] sm:$0xff] %vm4515, %v4435
      %4538 = vst.msk [vmem:[#allocation4 + $0xb0] sm:$0xff] %vm4515, %v4437
      %4539 = vst.msk [vmem:[#allocation4 + $0xb8] sm:$0xff] %vm4515, %v4439
      %4540 = vst.msk [vmem:[#allocation4 + $0xc0] sm:$0xff] %vm4515, %v4441
      %4541 = vst.msk [vmem:[#allocation4 + $0xc8] sm:$0xff] %vm4515, %v4443
      %4542 = vst.msk [vmem:[#allocation4 + $0xd0] sm:$0xff] %vm4515, %v4445
      %4543 = vst.msk [vmem:[#allocation4 + $0xd8] sm:$0xff] %vm4515, %v4447
      %4544 = vst.msk [vmem:[#allocation4 + $0xe0] sm:$0xff] %vm4515, %v4449
      %4545 = vst.msk [vmem:[#allocation4 + $0xe8] sm:$0xff] %vm4515, %v4451
      %4546 = vst.msk [vmem:[#allocation4 + $0xf0] sm:$0xff] %vm4515, %v4453
      %4547 = vst.msk [vmem:[#allocation4 + $0xf8] sm:$0xff] %vm4515, %v4455
      %4548 = vst.msk [vmem:[#allocation4 + $0x100] sm:$0xff] %vm4515, %v4457
      %4549 = vst.msk [vmem:[#allocation4 + $0x108] sm:$0xff] %vm4515, %v4459
      %4550 = vst.msk [vmem:[#allocation4 + $0x110] sm:$0xff] %vm4515, %v4461
      %4551 = vst.msk [vmem:[#allocation4 + $0x118] sm:$0xff] %vm4515, %v4463
      %4552 = vst.msk [vmem:[#allocation4 + $0x120] sm:$0xff] %vm4515, %v4465
      %4553 = vst.msk [vmem:[#allocation4 + $0x128] sm:$0xff] %vm4515, %v4467
      %4554 = vst.msk [vmem:[#allocation4 + $0x130] sm:$0xff] %vm4515, %v4469
      %4555 = vst.msk [vmem:[#allocation4 + $0x138] sm:$0xff] %vm4515, %v4471
      %vm4556 = vcmask 322816
      %4557 = vst.msk [vmem:[#allocation4 + $0x140] sm:$0xf] %vm4556, %v4473
      %v4558 = vld [vmem:[#allocation3 + $0x19] sm:$0xff]
      %v4559 = vld [vmem:[#allocation3 + $0x21] sm:$0xff]
      %v4560 = vld [vmem:[#allocation3 + $0x29] sm:$0xff]
      %v4561 = vld [vmem:[#allocation3 + $0x31] sm:$0xff]
      %v4562 = vld [vmem:[#allocation3 + $0x39] sm:$0xff]
      %v4563 = vld [vmem:[#allocation3 + $0x41] sm:$0xff]
      %v4564 = vld [vmem:[#allocation3 + $0x49] sm:$0xff]
      %v4565 = vld [vmem:[#allocation3 + $0x51] sm:$0xff]
      %v4566 = vld [vmem:[#allocation3 + $0x59] sm:$0xff]
      %v4567 = vld [vmem:[#allocation3 + $0x61] sm:$0xff]
      %v4568 = vld [vmem:[#allocation3 + $0x69] sm:$0xff]
      %v4569 = vld [vmem:[#allocation3 + $0x71] sm:$0xff]
      %v4570 = vld [vmem:[#allocation3 + $0x79] sm:$0xff]
      %v4571 = vld [vmem:[#allocation3 + $0x81] sm:$0xff]
      %v4572 = vld [vmem:[#allocation3 + $0x89] sm:$0xff]
      %v4573 = vld [vmem:[#allocation3 + $0x91] sm:$0xff]
      %v4574 = vld [vmem:[#allocation3 + $0x99] sm:$0xff]
      %v4575 = vld [vmem:[#allocation3 + $0xa1] sm:$0xff]
      %v4576 = vld [vmem:[#allocation3 + $0xa9] sm:$0xff]
      %v4577 = vld [vmem:[#allocation3 + $0xb1] sm:$0xff]
      %v4578 = vld [vmem:[#allocation3 + $0xb9] sm:$0xff]
      %v4579 = vld [vmem:[#allocation3 + $0xc1] sm:$0xff]
      %v4580 = vld [vmem:[#allocation3 + $0xc9] sm:$0xff]
      %v4581 = vld [vmem:[#allocation3 + $0xd1] sm:$0xff]
      %v4582 = vld [vmem:[#allocation3 + $0xd9] sm:$0xff]
      %v4583 = vld [vmem:[#allocation3 + $0xe1] sm:$0xff]
      %v4584 = vld [vmem:[#allocation3 + $0xe9] sm:$0xff]
      %v4585 = vld [vmem:[#allocation3 + $0xf1] sm:$0xff]
      %v4586 = vld [vmem:[#allocation3 + $0xf9] sm:$0xff]
      %v4587 = vld [vmem:[#allocation3 + $0x101] sm:$0xff]
      %v4588 = vld [vmem:[#allocation3 + $0x109] sm:$0xff]
      %v4589 = vld [vmem:[#allocation3 + $0x111] sm:$0xff]
      %v4590 = vld [vmem:[#allocation3 + $0x119] sm:$0xff]
      %v4591 = vld [vmem:[#allocation3 + $0x121] sm:$0xff]
      %v4592 = vld [vmem:[#allocation3 + $0x129] sm:$0xff]
      %v4593 = vld [vmem:[#allocation3 + $0x131] sm:$0xff]
      %v4594 = vld [vmem:[#allocation3 + $0x139] sm:$0xff]
      %v4595 = vld [vmem:[#allocation3 + $0x141] sm:$0xff]
      %v4596 = vld [vmem:[#allocation3 + $0x149] sm:$0xff]
      %v4597 = vld [vmem:[#allocation3 + $0x151] sm:$0xff]
      %v4598 = vld [vmem:[#allocation3 + $0x159] sm:$0xf]
      %4640 = vrot.lane.b32.xlu0 %v4558, 40
      %v4641 = vpop.permute.xlu0 %4640
      %4642 = vrot.lane.b32.xlu0 %v4559, 40
      %v4643 = vpop.permute.xlu0 %4642
      %4644 = vrot.lane.b32.xlu0 %v4560, 40
      %v4645 = vpop.permute.xlu0 %4644
      %4646 = vrot.lane.b32.xlu0 %v4561, 40
      %v4647 = vpop.permute.xlu0 %4646
      %4648 = vrot.lane.b32.xlu0 %v4562, 40
      %v4649 = vpop.permute.xlu0 %4648
      %4650 = vrot.lane.b32.xlu0 %v4563, 40
      %v4651 = vpop.permute.xlu0 %4650
      %4652 = vrot.lane.b32.xlu0 %v4564, 40
      %v4653 = vpop.permute.xlu0 %4652
      %4654 = vrot.lane.b32.xlu0 %v4565, 40
      %v4655 = vpop.permute.xlu0 %4654
      %4656 = vrot.lane.b32.xlu0 %v4566, 40
      %v4657 = vpop.permute.xlu0 %4656
      %4658 = vrot.lane.b32.xlu0 %v4567, 40
      %v4659 = vpop.permute.xlu0 %4658
      %4660 = vrot.lane.b32.xlu0 %v4568, 40
      %v4661 = vpop.permute.xlu0 %4660
      %4662 = vrot.lane.b32.xlu0 %v4569, 40
      %v4663 = vpop.permute.xlu0 %4662
      %4664 = vrot.lane.b32.xlu0 %v4570, 40
      %v4665 = vpop.permute.xlu0 %4664
      %4666 = vrot.lane.b32.xlu0 %v4571, 40
      %v4667 = vpop.permute.xlu0 %4666
      %4668 = vrot.lane.b32.xlu0 %v4572, 40
      %v4669 = vpop.permute.xlu0 %4668
      %4670 = vrot.lane.b32.xlu0 %v4573, 40
      %v4671 = vpop.permute.xlu0 %4670
      %4672 = vrot.lane.b32.xlu0 %v4574, 40
      %v4673 = vpop.permute.xlu0 %4672
      %4674 = vrot.lane.b32.xlu0 %v4575, 40
      %v4675 = vpop.permute.xlu0 %4674
      %4676 = vrot.lane.b32.xlu0 %v4576, 40
      %v4677 = vpop.permute.xlu0 %4676
      %4678 = vrot.lane.b32.xlu0 %v4577, 40
      %v4679 = vpop.permute.xlu0 %4678
      %4680 = vrot.lane.b32.xlu0 %v4578, 40
      %v4681 = vpop.permute.xlu0 %4680
      %4682 = vrot.lane.b32.xlu0 %v4579, 40
      %v4683 = vpop.permute.xlu0 %4682
      %4684 = vrot.lane.b32.xlu0 %v4580, 40
      %v4685 = vpop.permute.xlu0 %4684
      %4686 = vrot.lane.b32.xlu0 %v4581, 40
      %v4687 = vpop.permute.xlu0 %4686
      %4688 = vrot.lane.b32.xlu0 %v4582, 40
      %v4689 = vpop.permute.xlu0 %4688
      %4690 = vrot.lane.b32.xlu0 %v4583, 40
      %v4691 = vpop.permute.xlu0 %4690
      %4692 = vrot.lane.b32.xlu0 %v4584, 40
      %v4693 = vpop.permute.xlu0 %4692
      %4694 = vrot.lane.b32.xlu0 %v4585, 40
      %v4695 = vpop.permute.xlu0 %4694
      %4696 = vrot.lane.b32.xlu0 %v4586, 40
      %v4697 = vpop.permute.xlu0 %4696
      %4698 = vrot.lane.b32.xlu0 %v4587, 40
      %v4699 = vpop.permute.xlu0 %4698
      %4700 = vrot.lane.b32.xlu0 %v4588, 40
      %v4701 = vpop.permute.xlu0 %4700
      %4702 = vrot.lane.b32.xlu0 %v4589, 40
      %v4703 = vpop.permute.xlu0 %4702
      %4704 = vrot.lane.b32.xlu0 %v4590, 40
      %v4705 = vpop.permute.xlu0 %4704
      %4706 = vrot.lane.b32.xlu0 %v4591, 40
      %v4707 = vpop.permute.xlu0 %4706
      %4708 = vrot.lane.b32.xlu0 %v4592, 40
      %v4709 = vpop.permute.xlu0 %4708
      %4710 = vrot.lane.b32.xlu0 %v4593, 40
      %v4711 = vpop.permute.xlu0 %4710
      %4712 = vrot.lane.b32.xlu0 %v4594, 40
      %v4713 = vpop.permute.xlu0 %4712
      %4714 = vrot.lane.b32.xlu0 %v4595, 40
      %v4715 = vpop.permute.xlu0 %4714
      %4716 = vrot.lane.b32.xlu0 %v4596, 40
      %v4717 = vpop.permute.xlu0 %4716
      %4718 = vrot.lane.b32.xlu0 %v4597, 40
      %v4719 = vpop.permute.xlu0 %4718
      %4720 = vrot.lane.b32.xlu0 %v4598, 40
      %v4721 = vpop.permute.xlu0 %4720
      %vm4763 = vcmask 392512
      %4764 = vst.msk [vmem:[#allocation4] sm:$0xff] %vm4763, %v4641
      %4765 = vst.msk [vmem:[#allocation4 + $0x8] sm:$0xff] %vm4763, %v4643
      %4766 = vst.msk [vmem:[#allocation4 + $0x10] sm:$0xff] %vm4763, %v4645
      %4767 = vst.msk [vmem:[#allocation4 + $0x18] sm:$0xff] %vm4763, %v4647
      %4768 = vst.msk [vmem:[#allocation4 + $0x20] sm:$0xff] %vm4763, %v4649
      %4769 = vst.msk [vmem:[#allocation4 + $0x28] sm:$0xff] %vm4763, %v4651
      %4770 = vst.msk [vmem:[#allocation4 + $0x30] sm:$0xff] %vm4763, %v4653
      %4771 = vst.msk [vmem:[#allocation4 + $0x38] sm:$0xff] %vm4763, %v4655
      %4772 = vst.msk [vmem:[#allocation4 + $0x40] sm:$0xff] %vm4763, %v4657
      %4773 = vst.msk [vmem:[#allocation4 + $0x48] sm:$0xff] %vm4763, %v4659
      %4774 = vst.msk [vmem:[#allocation4 + $0x50] sm:$0xff] %vm4763, %v4661
      %4775 = vst.msk [vmem:[#allocation4 + $0x58] sm:$0xff] %vm4763, %v4663
      %4776 = vst.msk [vmem:[#allocation4 + $0x60] sm:$0xff] %vm4763, %v4665
      %4777 = vst.msk [vmem:[#allocation4 + $0x68] sm:$0xff] %vm4763, %v4667
      %4778 = vst.msk [vmem:[#allocation4 + $0x70] sm:$0xff] %vm4763, %v4669
      %4779 = vst.msk [vmem:[#allocation4 + $0x78] sm:$0xff] %vm4763, %v4671
      %4780 = vst.msk [vmem:[#allocation4 + $0x80] sm:$0xff] %vm4763, %v4673
      %4781 = vst.msk [vmem:[#allocation4 + $0x88] sm:$0xff] %vm4763, %v4675
      %4782 = vst.msk [vmem:[#allocation4 + $0x90] sm:$0xff] %vm4763, %v4677
      %4783 = vst.msk [vmem:[#allocation4 + $0x98] sm:$0xff] %vm4763, %v4679
      %4784 = vst.msk [vmem:[#allocation4 + $0xa0] sm:$0xff] %vm4763, %v4681
      %4785 = vst.msk [vmem:[#allocation4 + $0xa8] sm:$0xff] %vm4763, %v4683
      %4786 = vst.msk [vmem:[#allocation4 + $0xb0] sm:$0xff] %vm4763, %v4685
      %4787 = vst.msk [vmem:[#allocation4 + $0xb8] sm:$0xff] %vm4763, %v4687
      %4788 = vst.msk [vmem:[#allocation4 + $0xc0] sm:$0xff] %vm4763, %v4689
      %4789 = vst.msk [vmem:[#allocation4 + $0xc8] sm:$0xff] %vm4763, %v4691
      %4790 = vst.msk [vmem:[#allocation4 + $0xd0] sm:$0xff] %vm4763, %v4693
      %4791 = vst.msk [vmem:[#allocation4 + $0xd8] sm:$0xff] %vm4763, %v4695
      %4792 = vst.msk [vmem:[#allocation4 + $0xe0] sm:$0xff] %vm4763, %v4697
      %4793 = vst.msk [vmem:[#allocation4 + $0xe8] sm:$0xff] %vm4763, %v4699
      %4794 = vst.msk [vmem:[#allocation4 + $0xf0] sm:$0xff] %vm4763, %v4701
      %4795 = vst.msk [vmem:[#allocation4 + $0xf8] sm:$0xff] %vm4763, %v4703
      %4796 = vst.msk [vmem:[#allocation4 + $0x100] sm:$0xff] %vm4763, %v4705
      %4797 = vst.msk [vmem:[#allocation4 + $0x108] sm:$0xff] %vm4763, %v4707
      %4798 = vst.msk [vmem:[#allocation4 + $0x110] sm:$0xff] %vm4763, %v4709
      %4799 = vst.msk [vmem:[#allocation4 + $0x118] sm:$0xff] %vm4763, %v4711
      %4800 = vst.msk [vmem:[#allocation4 + $0x120] sm:$0xff] %vm4763, %v4713
      %4801 = vst.msk [vmem:[#allocation4 + $0x128] sm:$0xff] %vm4763, %v4715
      %4802 = vst.msk [vmem:[#allocation4 + $0x130] sm:$0xff] %vm4763, %v4717
      %4803 = vst.msk [vmem:[#allocation4 + $0x138] sm:$0xff] %vm4763, %v4719
      %vm4804 = vcmask 388416
      %4805 = vst.msk [vmem:[#allocation4 + $0x140] sm:$0xf] %vm4804, %v4721
      %v4806 = vld [vmem:[#allocation3 + $0x29] sm:$0xff]
      %v4807 = vld [vmem:[#allocation3 + $0x31] sm:$0xff]
      %v4808 = vld [vmem:[#allocation3 + $0x39] sm:$0xff]
      %v4809 = vld [vmem:[#allocation3 + $0x41] sm:$0xff]
      %v4810 = vld [vmem:[#allocation3 + $0x49] sm:$0xff]
      %v4811 = vld [vmem:[#allocation3 + $0x51] sm:$0xff]
      %v4812 = vld [vmem:[#allocation3 + $0x59] sm:$0xff]
      %v4813 = vld [vmem:[#allocation3 + $0x61] sm:$0xff]
      %v4814 = vld [vmem:[#allocation3 + $0x69] sm:$0xff]
      %v4815 = vld [vmem:[#allocation3 + $0x71] sm:$0xff]
      %v4816 = vld [vmem:[#allocation3 + $0x79] sm:$0xff]
      %v4817 = vld [vmem:[#allocation3 + $0x81] sm:$0xff]
      %v4818 = vld [vmem:[#allocation3 + $0x89] sm:$0xff]
      %v4819 = vld [vmem:[#allocation3 + $0x91] sm:$0xff]
      %v4820 = vld [vmem:[#allocation3 + $0x99] sm:$0xff]
      %v4821 = vld [vmem:[#allocation3 + $0xa1] sm:$0xff]
      %v4822 = vld [vmem:[#allocation3 + $0xa9] sm:$0xff]
      %v4823 = vld [vmem:[#allocation3 + $0xb1] sm:$0xff]
      %v4824 = vld [vmem:[#allocation3 + $0xb9] sm:$0xff]
      %v4825 = vld [vmem:[#allocation3 + $0xc1] sm:$0xff]
      %v4826 = vld [vmem:[#allocation3 + $0xc9] sm:$0xff]
      %v4827 = vld [vmem:[#allocation3 + $0xd1] sm:$0xff]
      %v4828 = vld [vmem:[#allocation3 + $0xd9] sm:$0xff]
      %v4829 = vld [vmem:[#allocation3 + $0xe1] sm:$0xff]
      %v4830 = vld [vmem:[#allocation3 + $0xe9] sm:$0xff]
      %v4831 = vld [vmem:[#allocation3 + $0xf1] sm:$0xff]
      %v4832 = vld [vmem:[#allocation3 + $0xf9] sm:$0xff]
      %v4833 = vld [vmem:[#allocation3 + $0x101] sm:$0xff]
      %v4834 = vld [vmem:[#allocation3 + $0x109] sm:$0xff]
      %v4835 = vld [vmem:[#allocation3 + $0x111] sm:$0xff]
      %v4836 = vld [vmem:[#allocation3 + $0x119] sm:$0xff]
      %v4837 = vld [vmem:[#allocation3 + $0x121] sm:$0xff]
      %v4838 = vld [vmem:[#allocation3 + $0x129] sm:$0xff]
      %v4839 = vld [vmem:[#allocation3 + $0x131] sm:$0xff]
      %v4840 = vld [vmem:[#allocation3 + $0x139] sm:$0xff]
      %v4841 = vld [vmem:[#allocation3 + $0x141] sm:$0xff]
      %v4842 = vld [vmem:[#allocation3 + $0x149] sm:$0xff]
      %v4843 = vld [vmem:[#allocation3 + $0x151] sm:$0xff]
      %v4844 = vld [vmem:[#allocation3 + $0x159] sm:$0xff]
      %v4845 = vld [vmem:[#allocation3 + $0x161] sm:$0xff]
      %v4846 = vld [vmem:[#allocation3 + $0x169] sm:$0xf]
      %4888 = vrot.lane.b32.xlu0 %v4806, 48
      %v4889 = vpop.permute.xlu0 %4888
      %4890 = vrot.lane.b32.xlu0 %v4807, 48
      %v4891 = vpop.permute.xlu0 %4890
      %4892 = vrot.lane.b32.xlu0 %v4808, 48
      %v4893 = vpop.permute.xlu0 %4892
      %4894 = vrot.lane.b32.xlu0 %v4809, 48
      %v4895 = vpop.permute.xlu0 %4894
      %4896 = vrot.lane.b32.xlu0 %v4810, 48
      %v4897 = vpop.permute.xlu0 %4896
      %4898 = vrot.lane.b32.xlu0 %v4811, 48
      %v4899 = vpop.permute.xlu0 %4898
      %4900 = vrot.lane.b32.xlu0 %v4812, 48
      %v4901 = vpop.permute.xlu0 %4900
      %4902 = vrot.lane.b32.xlu0 %v4813, 48
      %v4903 = vpop.permute.xlu0 %4902
      %4904 = vrot.lane.b32.xlu0 %v4814, 48
      %v4905 = vpop.permute.xlu0 %4904
      %4906 = vrot.lane.b32.xlu0 %v4815, 48
      %v4907 = vpop.permute.xlu0 %4906
      %4908 = vrot.lane.b32.xlu0 %v4816, 48
      %v4909 = vpop.permute.xlu0 %4908
      %4910 = vrot.lane.b32.xlu0 %v4817, 48
      %v4911 = vpop.permute.xlu0 %4910
      %4912 = vrot.lane.b32.xlu0 %v4818, 48
      %v4913 = vpop.permute.xlu0 %4912
      %4914 = vrot.lane.b32.xlu0 %v4819, 48
      %v4915 = vpop.permute.xlu0 %4914
      %4916 = vrot.lane.b32.xlu0 %v4820, 48
      %v4917 = vpop.permute.xlu0 %4916
      %4918 = vrot.lane.b32.xlu0 %v4821, 48
      %v4919 = vpop.permute.xlu0 %4918
      %4920 = vrot.lane.b32.xlu0 %v4822, 48
      %v4921 = vpop.permute.xlu0 %4920
      %4922 = vrot.lane.b32.xlu0 %v4823, 48
      %v4923 = vpop.permute.xlu0 %4922
      %4924 = vrot.lane.b32.xlu0 %v4824, 48
      %v4925 = vpop.permute.xlu0 %4924
      %4926 = vrot.lane.b32.xlu0 %v4825, 48
      %v4927 = vpop.permute.xlu0 %4926
      %4928 = vrot.lane.b32.xlu0 %v4826, 48
      %v4929 = vpop.permute.xlu0 %4928
      %4930 = vrot.lane.b32.xlu0 %v4827, 48
      %v4931 = vpop.permute.xlu0 %4930
      %4932 = vrot.lane.b32.xlu0 %v4828, 48
      %v4933 = vpop.permute.xlu0 %4932
      %4934 = vrot.lane.b32.xlu0 %v4829, 48
      %v4935 = vpop.permute.xlu0 %4934
      %4936 = vrot.lane.b32.xlu0 %v4830, 48
      %v4937 = vpop.permute.xlu0 %4936
      %4938 = vrot.lane.b32.xlu0 %v4831, 48
      %v4939 = vpop.permute.xlu0 %4938
      %4940 = vrot.lane.b32.xlu0 %v4832, 48
      %v4941 = vpop.permute.xlu0 %4940
      %4942 = vrot.lane.b32.xlu0 %v4833, 48
      %v4943 = vpop.permute.xlu0 %4942
      %4944 = vrot.lane.b32.xlu0 %v4834, 48
      %v4945 = vpop.permute.xlu0 %4944
      %4946 = vrot.lane.b32.xlu0 %v4835, 48
      %v4947 = vpop.permute.xlu0 %4946
      %4948 = vrot.lane.b32.xlu0 %v4836, 48
      %v4949 = vpop.permute.xlu0 %4948
      %4950 = vrot.lane.b32.xlu0 %v4837, 48
      %v4951 = vpop.permute.xlu0 %4950
      %4952 = vrot.lane.b32.xlu0 %v4838, 48
      %v4953 = vpop.permute.xlu0 %4952
      %4954 = vrot.lane.b32.xlu0 %v4839, 48
      %v4955 = vpop.permute.xlu0 %4954
      %4956 = vrot.lane.b32.xlu0 %v4840, 48
      %v4957 = vpop.permute.xlu0 %4956
      %4958 = vrot.lane.b32.xlu0 %v4841, 48
      %v4959 = vpop.permute.xlu0 %4958
      %4960 = vrot.lane.b32.xlu0 %v4842, 48
      %v4961 = vpop.permute.xlu0 %4960
      %4962 = vrot.lane.b32.xlu0 %v4843, 48
      %v4963 = vpop.permute.xlu0 %4962
      %4964 = vrot.lane.b32.xlu0 %v4844, 48
      %v4965 = vpop.permute.xlu0 %4964
      %4966 = vrot.lane.b32.xlu0 %v4845, 48
      %v4967 = vpop.permute.xlu0 %4966
      %4968 = vrot.lane.b32.xlu0 %v4846, 48
      %v4969 = vpop.permute.xlu0 %4968
      %vm5011 = vcmask 458112
      %5012 = vst.msk [vmem:[#allocation4] sm:$0xff] %vm5011, %v4889
      %5013 = vst.msk [vmem:[#allocation4 + $0x8] sm:$0xff] %vm5011, %v4891
      %5014 = vst.msk [vmem:[#allocation4 + $0x10] sm:$0xff] %vm5011, %v4893
      %5015 = vst.msk [vmem:[#allocation4 + $0x18] sm:$0xff] %vm5011, %v4895
      %5016 = vst.msk [vmem:[#allocation4 + $0x20] sm:$0xff] %vm5011, %v4897
      %5017 = vst.msk [vmem:[#allocation4 + $0x28] sm:$0xff] %vm5011, %v4899
      %5018 = vst.msk [vmem:[#allocation4 + $0x30] sm:$0xff] %vm5011, %v4901
      %5019 = vst.msk [vmem:[#allocation4 + $0x38] sm:$0xff] %vm5011, %v4903
      %5020 = vst.msk [vmem:[#allocation4 + $0x40] sm:$0xff] %vm5011, %v4905
      %5021 = vst.msk [vmem:[#allocation4 + $0x48] sm:$0xff] %vm5011, %v4907
      %5022 = vst.msk [vmem:[#allocation4 + $0x50] sm:$0xff] %vm5011, %v4909
      %5023 = vst.msk [vmem:[#allocation4 + $0x58] sm:$0xff] %vm5011, %v4911
      %5024 = vst.msk [vmem:[#allocation4 + $0x60] sm:$0xff] %vm5011, %v4913
      %5025 = vst.msk [vmem:[#allocation4 + $0x68] sm:$0xff] %vm5011, %v4915
      %5026 = vst.msk [vmem:[#allocation4 + $0x70] sm:$0xff] %vm5011, %v4917
      %5027 = vst.msk [vmem:[#allocation4 + $0x78] sm:$0xff] %vm5011, %v4919
      %5028 = vst.msk [vmem:[#allocation4 + $0x80] sm:$0xff] %vm5011, %v4921
      %5029 = vst.msk [vmem:[#allocation4 + $0x88] sm:$0xff] %vm5011, %v4923
      %5030 = vst.msk [vmem:[#allocation4 + $0x90] sm:$0xff] %vm5011, %v4925
      %5031 = vst.msk [vmem:[#allocation4 + $0x98] sm:$0xff] %vm5011, %v4927
      %5032 = vst.msk [vmem:[#allocation4 + $0xa0] sm:$0xff] %vm5011, %v4929
      %5033 = vst.msk [vmem:[#allocation4 + $0xa8] sm:$0xff] %vm5011, %v4931
      %5034 = vst.msk [vmem:[#allocation4 + $0xb0] sm:$0xff] %vm5011, %v4933
      %5035 = vst.msk [vmem:[#allocation4 + $0xb8] sm:$0xff] %vm5011, %v4935
      %5036 = vst.msk [vmem:[#allocation4 + $0xc0] sm:$0xff] %vm5011, %v4937
      %5037 = vst.msk [vmem:[#allocation4 + $0xc8] sm:$0xff] %vm5011, %v4939
      %5038 = vst.msk [vmem:[#allocation4 + $0xd0] sm:$0xff] %vm5011, %v4941
      %5039 = vst.msk [vmem:[#allocation4 + $0xd8] sm:$0xff] %vm5011, %v4943
      %5040 = vst.msk [vmem:[#allocation4 + $0xe0] sm:$0xff] %vm5011, %v4945
      %5041 = vst.msk [vmem:[#allocation4 + $0xe8] sm:$0xff] %vm5011, %v4947
      %5042 = vst.msk [vmem:[#allocation4 + $0xf0] sm:$0xff] %vm5011, %v4949
      %5043 = vst.msk [vmem:[#allocation4 + $0xf8] sm:$0xff] %vm5011, %v4951
      %5044 = vst.msk [vmem:[#allocation4 + $0x100] sm:$0xff] %vm5011, %v4953
      %5045 = vst.msk [vmem:[#allocation4 + $0x108] sm:$0xff] %vm5011, %v4955
      %5046 = vst.msk [vmem:[#allocation4 + $0x110] sm:$0xff] %vm5011, %v4957
      %5047 = vst.msk [vmem:[#allocation4 + $0x118] sm:$0xff] %vm5011, %v4959
      %5048 = vst.msk [vmem:[#allocation4 + $0x120] sm:$0xff] %vm5011, %v4961
      %5049 = vst.msk [vmem:[#allocation4 + $0x128] sm:$0xff] %vm5011, %v4963
      %5050 = vst.msk [vmem:[#allocation4 + $0x130] sm:$0xff] %vm5011, %v4965
      %5051 = vst.msk [vmem:[#allocation4 + $0x138] sm:$0xff] %vm5011, %v4967
      %vm5052 = vcmask 454016
      %5053 = vst.msk [vmem:[#allocation4 + $0x140] sm:$0xf] %vm5052, %v4969
      %v5054 = vld [vmem:[#allocation3 + $0x2a] sm:$0xff]
      %v5055 = vld [vmem:[#allocation3 + $0x32] sm:$0xff]
      %v5056 = vld [vmem:[#allocation3 + $0x3a] sm:$0xff]
      %v5057 = vld [vmem:[#allocation3 + $0x42] sm:$0xff]
      %v5058 = vld [vmem:[#allocation3 + $0x4a] sm:$0xff]
      %v5059 = vld [vmem:[#allocation3 + $0x52] sm:$0xff]
      %v5060 = vld [vmem:[#allocation3 + $0x5a] sm:$0xff]
      %v5061 = vld [vmem:[#allocation3 + $0x62] sm:$0xff]
      %v5062 = vld [vmem:[#allocation3 + $0x6a] sm:$0xff]
      %v5063 = vld [vmem:[#allocation3 + $0x72] sm:$0xff]
      %v5064 = vld [vmem:[#allocation3 + $0x7a] sm:$0xff]
      %v5065 = vld [vmem:[#allocation3 + $0x82] sm:$0xff]
      %v5066 = vld [vmem:[#allocation3 + $0x8a] sm:$0xff]
      %v5067 = vld [vmem:[#allocation3 + $0x92] sm:$0xff]
      %v5068 = vld [vmem:[#allocation3 + $0x9a] sm:$0xff]
      %v5069 = vld [vmem:[#allocation3 + $0xa2] sm:$0xff]
      %v5070 = vld [vmem:[#allocation3 + $0xaa] sm:$0xff]
      %v5071 = vld [vmem:[#allocation3 + $0xb2] sm:$0xff]
      %v5072 = vld [vmem:[#allocation3 + $0xba] sm:$0xff]
      %v5073 = vld [vmem:[#allocation3 + $0xc2] sm:$0xff]
      %v5074 = vld [vmem:[#allocation3 + $0xca] sm:$0xff]
      %v5075 = vld [vmem:[#allocation3 + $0xd2] sm:$0xff]
      %v5076 = vld [vmem:[#allocation3 + $0xda] sm:$0xff]
      %v5077 = vld [vmem:[#allocation3 + $0xe2] sm:$0xff]
      %v5078 = vld [vmem:[#allocation3 + $0xea] sm:$0xff]
      %v5079 = vld [vmem:[#allocation3 + $0xf2] sm:$0xff]
      %v5080 = vld [vmem:[#allocation3 + $0xfa] sm:$0xff]
      %v5081 = vld [vmem:[#allocation3 + $0x102] sm:$0xff]
      %v5082 = vld [vmem:[#allocation3 + $0x10a] sm:$0xff]
      %v5083 = vld [vmem:[#allocation3 + $0x112] sm:$0xff]
      %v5084 = vld [vmem:[#allocation3 + $0x11a] sm:$0xff]
      %v5085 = vld [vmem:[#allocation3 + $0x122] sm:$0xff]
      %v5086 = vld [vmem:[#allocation3 + $0x12a] sm:$0xff]
      %v5087 = vld [vmem:[#allocation3 + $0x132] sm:$0xff]
      %v5088 = vld [vmem:[#allocation3 + $0x13a] sm:$0xff]
      %v5089 = vld [vmem:[#allocation3 + $0x142] sm:$0xff]
      %v5090 = vld [vmem:[#allocation3 + $0x14a] sm:$0xff]
      %v5091 = vld [vmem:[#allocation3 + $0x152] sm:$0xff]
      %v5092 = vld [vmem:[#allocation3 + $0x15a] sm:$0xff]
      %v5093 = vld [vmem:[#allocation3 + $0x162] sm:$0xff]
      %v5094 = vld [vmem:[#allocation3 + $0x16a] sm:$0xf]
      %5136 = vrot.lane.b32.xlu0 %v5054, 56
      %v5137 = vpop.permute.xlu0 %5136
      %5138 = vrot.lane.b32.xlu0 %v5055, 56
      %v5139 = vpop.permute.xlu0 %5138
      %5140 = vrot.lane.b32.xlu0 %v5056, 56
      %v5141 = vpop.permute.xlu0 %5140
      %5142 = vrot.lane.b32.xlu0 %v5057, 56
      %v5143 = vpop.permute.xlu0 %5142
      %5144 = vrot.lane.b32.xlu0 %v5058, 56
      %v5145 = vpop.permute.xlu0 %5144
      %5146 = vrot.lane.b32.xlu0 %v5059, 56
      %v5147 = vpop.permute.xlu0 %5146
      %5148 = vrot.lane.b32.xlu0 %v5060, 56
      %v5149 = vpop.permute.xlu0 %5148
      %5150 = vrot.lane.b32.xlu0 %v5061, 56
      %v5151 = vpop.permute.xlu0 %5150
      %5152 = vrot.lane.b32.xlu0 %v5062, 56
      %v5153 = vpop.permute.xlu0 %5152
      %5154 = vrot.lane.b32.xlu0 %v5063, 56
      %v5155 = vpop.permute.xlu0 %5154
      %5156 = vrot.lane.b32.xlu0 %v5064, 56
      %v5157 = vpop.permute.xlu0 %5156
      %5158 = vrot.lane.b32.xlu0 %v5065, 56
      %v5159 = vpop.permute.xlu0 %5158
      %5160 = vrot.lane.b32.xlu0 %v5066, 56
      %v5161 = vpop.permute.xlu0 %5160
      %5162 = vrot.lane.b32.xlu0 %v5067, 56
      %v5163 = vpop.permute.xlu0 %5162
      %5164 = vrot.lane.b32.xlu0 %v5068, 56
      %v5165 = vpop.permute.xlu0 %5164
      %5166 = vrot.lane.b32.xlu0 %v5069, 56
      %v5167 = vpop.permute.xlu0 %5166
      %5168 = vrot.lane.b32.xlu0 %v5070, 56
      %v5169 = vpop.permute.xlu0 %5168
      %5170 = vrot.lane.b32.xlu0 %v5071, 56
      %v5171 = vpop.permute.xlu0 %5170
      %5172 = vrot.lane.b32.xlu0 %v5072, 56
      %v5173 = vpop.permute.xlu0 %5172
      %5174 = vrot.lane.b32.xlu0 %v5073, 56
      %v5175 = vpop.permute.xlu0 %5174
      %5176 = vrot.lane.b32.xlu0 %v5074, 56
      %v5177 = vpop.permute.xlu0 %5176
      %5178 = vrot.lane.b32.xlu0 %v5075, 56
      %v5179 = vpop.permute.xlu0 %5178
      %5180 = vrot.lane.b32.xlu0 %v5076, 56
      %v5181 = vpop.permute.xlu0 %5180
      %5182 = vrot.lane.b32.xlu0 %v5077, 56
      %v5183 = vpop.permute.xlu0 %5182
      %5184 = vrot.lane.b32.xlu0 %v5078, 56
      %v5185 = vpop.permute.xlu0 %5184
      %5186 = vrot.lane.b32.xlu0 %v5079, 56
      %v5187 = vpop.permute.xlu0 %5186
      %5188 = vrot.lane.b32.xlu0 %v5080, 56
      %v5189 = vpop.permute.xlu0 %5188
      %5190 = vrot.lane.b32.xlu0 %v5081, 56
      %v5191 = vpop.permute.xlu0 %5190
      %5192 = vrot.lane.b32.xlu0 %v5082, 56
      %v5193 = vpop.permute.xlu0 %5192
      %5194 = vrot.lane.b32.xlu0 %v5083, 56
      %v5195 = vpop.permute.xlu0 %5194
      %5196 = vrot.lane.b32.xlu0 %v5084, 56
      %v5197 = vpop.permute.xlu0 %5196
      %5198 = vrot.lane.b32.xlu0 %v5085, 56
      %v5199 = vpop.permute.xlu0 %5198
      %5200 = vrot.lane.b32.xlu0 %v5086, 56
      %v5201 = vpop.permute.xlu0 %5200
      %5202 = vrot.lane.b32.xlu0 %v5087, 56
      %v5203 = vpop.permute.xlu0 %5202
      %5204 = vrot.lane.b32.xlu0 %v5088, 56
      %v5205 = vpop.permute.xlu0 %5204
      %5206 = vrot.lane.b32.xlu0 %v5089, 56
      %v5207 = vpop.permute.xlu0 %5206
      %5208 = vrot.lane.b32.xlu0 %v5090, 56
      %v5209 = vpop.permute.xlu0 %5208
      %5210 = vrot.lane.b32.xlu0 %v5091, 56
      %v5211 = vpop.permute.xlu0 %5210
      %5212 = vrot.lane.b32.xlu0 %v5092, 56
      %v5213 = vpop.permute.xlu0 %5212
      %5214 = vrot.lane.b32.xlu0 %v5093, 56
      %v5215 = vpop.permute.xlu0 %5214
      %5216 = vrot.lane.b32.xlu0 %v5094, 56
      %v5217 = vpop.permute.xlu0 %5216
      %vm5259 = vcmask 523712
      %5260 = vst.msk [vmem:[#allocation4] sm:$0xff] %vm5259, %v5137
      %5261 = vst.msk [vmem:[#allocation4 + $0x8] sm:$0xff] %vm5259, %v5139
      %5262 = vst.msk [vmem:[#allocation4 + $0x10] sm:$0xff] %vm5259, %v5141
      %5263 = vst.msk [vmem:[#allocation4 + $0x18] sm:$0xff] %vm5259, %v5143
      %5264 = vst.msk [vmem:[#allocation4 + $0x20] sm:$0xff] %vm5259, %v5145
      %5265 = vst.msk [vmem:[#allocation4 + $0x28] sm:$0xff] %vm5259, %v5147
      %5266 = vst.msk [vmem:[#allocation4 + $0x30] sm:$0xff] %vm5259, %v5149
      %5267 = vst.msk [vmem:[#allocation4 + $0x38] sm:$0xff] %vm5259, %v5151
      %5268 = vst.msk [vmem:[#allocation4 + $0x40] sm:$0xff] %vm5259, %v5153
      %5269 = vst.msk [vmem:[#allocation4 + $0x48] sm:$0xff] %vm5259, %v5155
      %5270 = vst.msk [vmem:[#allocation4 + $0x50] sm:$0xff] %vm5259, %v5157
      %5271 = vst.msk [vmem:[#allocation4 + $0x58] sm:$0xff] %vm5259, %v5159
      %5272 = vst.msk [vmem:[#allocation4 + $0x60] sm:$0xff] %vm5259, %v5161
      %5273 = vst.msk [vmem:[#allocation4 + $0x68] sm:$0xff] %vm5259, %v5163
      %5274 = vst.msk [vmem:[#allocation4 + $0x70] sm:$0xff] %vm5259, %v5165
      %5275 = vst.msk [vmem:[#allocation4 + $0x78] sm:$0xff] %vm5259, %v5167
      %5276 = vst.msk [vmem:[#allocation4 + $0x80] sm:$0xff] %vm5259, %v5169
      %5277 = vst.msk [vmem:[#allocation4 + $0x88] sm:$0xff] %vm5259, %v5171
      %5278 = vst.msk [vmem:[#allocation4 + $0x90] sm:$0xff] %vm5259, %v5173
      %5279 = vst.msk [vmem:[#allocation4 + $0x98] sm:$0xff] %vm5259, %v5175
      %5280 = vst.msk [vmem:[#allocation4 + $0xa0] sm:$0xff] %vm5259, %v5177
      %5281 = vst.msk [vmem:[#allocation4 + $0xa8] sm:$0xff] %vm5259, %v5179
      %5282 = vst.msk [vmem:[#allocation4 + $0xb0] sm:$0xff] %vm5259, %v5181
      %5283 = vst.msk [vmem:[#allocation4 + $0xb8] sm:$0xff] %vm5259, %v5183
      %5284 = vst.msk [vmem:[#allocation4 + $0xc0] sm:$0xff] %vm5259, %v5185
      %5285 = vst.msk [vmem:[#allocation4 + $0xc8] sm:$0xff] %vm5259, %v5187
      %5286 = vst.msk [vmem:[#allocation4 + $0xd0] sm:$0xff] %vm5259, %v5189
      %5287 = vst.msk [vmem:[#allocation4 + $0xd8] sm:$0xff] %vm5259, %v5191
      %5288 = vst.msk [vmem:[#allocation4 + $0xe0] sm:$0xff] %vm5259, %v5193
      %5289 = vst.msk [vmem:[#allocation4 + $0xe8] sm:$0xff] %vm5259, %v5195
      %5290 = vst.msk [vmem:[#allocation4 + $0xf0] sm:$0xff] %vm5259, %v5197
      %5291 = vst.msk [vmem:[#allocation4 + $0xf8] sm:$0xff] %vm5259, %v5199
      %5292 = vst.msk [vmem:[#allocation4 + $0x100] sm:$0xff] %vm5259, %v5201
      %5293 = vst.msk [vmem:[#allocation4 + $0x108] sm:$0xff] %vm5259, %v5203
      %5294 = vst.msk [vmem:[#allocation4 + $0x110] sm:$0xff] %vm5259, %v5205
      %5295 = vst.msk [vmem:[#allocation4 + $0x118] sm:$0xff] %vm5259, %v5207
      %5296 = vst.msk [vmem:[#allocation4 + $0x120] sm:$0xff] %vm5259, %v5209
      %5297 = vst.msk [vmem:[#allocation4 + $0x128] sm:$0xff] %vm5259, %v5211
      %5298 = vst.msk [vmem:[#allocation4 + $0x130] sm:$0xff] %vm5259, %v5213
      %5299 = vst.msk [vmem:[#allocation4 + $0x138] sm:$0xff] %vm5259, %v5215
      %vm5300 = vcmask 519616
      %5301 = vst.msk [vmem:[#allocation4 + $0x140] sm:$0xf] %vm5300, %v5217
      %v5302 = vld [vmem:[#allocation3 + $0x2b] sm:$0xff]
      %v5303 = vld [vmem:[#allocation3 + $0x33] sm:$0xff]
      %v5304 = vld [vmem:[#allocation3 + $0x3b] sm:$0xff]
      %v5305 = vld [vmem:[#allocation3 + $0x43] sm:$0xff]
      %v5306 = vld [vmem:[#allocation3 + $0x4b] sm:$0xff]
      %v5307 = vld [vmem:[#allocation3 + $0x53] sm:$0xff]
      %v5308 = vld [vmem:[#allocation3 + $0x5b] sm:$0xff]
      %v5309 = vld [vmem:[#allocation3 + $0x63] sm:$0xff]
      %v5310 = vld [vmem:[#allocation3 + $0x6b] sm:$0xff]
      %v5311 = vld [vmem:[#allocation3 + $0x73] sm:$0xff]
      %v5312 = vld [vmem:[#allocation3 + $0x7b] sm:$0xff]
      %v5313 = vld [vmem:[#allocation3 + $0x83] sm:$0xff]
      %v5314 = vld [vmem:[#allocation3 + $0x8b] sm:$0xff]
      %v5315 = vld [vmem:[#allocation3 + $0x93] sm:$0xff]
      %v5316 = vld [vmem:[#allocation3 + $0x9b] sm:$0xff]
      %v5317 = vld [vmem:[#allocation3 + $0xa3] sm:$0xff]
      %v5318 = vld [vmem:[#allocation3 + $0xab] sm:$0xff]
      %v5319 = vld [vmem:[#allocation3 + $0xb3] sm:$0xff]
      %v5320 = vld [vmem:[#allocation3 + $0xbb] sm:$0xff]
      %v5321 = vld [vmem:[#allocation3 + $0xc3] sm:$0xff]
      %v5322 = vld [vmem:[#allocation3 + $0xcb] sm:$0xff]
      %v5323 = vld [vmem:[#allocation3 + $0xd3] sm:$0xff]
      %v5324 = vld [vmem:[#allocation3 + $0xdb] sm:$0xff]
      %v5325 = vld [vmem:[#allocation3 + $0xe3] sm:$0xff]
      %v5326 = vld [vmem:[#allocation3 + $0xeb] sm:$0xff]
      %v5327 = vld [vmem:[#allocation3 + $0xf3] sm:$0xff]
      %v5328 = vld [vmem:[#allocation3 + $0xfb] sm:$0xff]
      %v5329 = vld [vmem:[#allocation3 + $0x103] sm:$0xff]
      %v5330 = vld [vmem:[#allocation3 + $0x10b] sm:$0xff]
      %v5331 = vld [vmem:[#allocation3 + $0x113] sm:$0xff]
      %v5332 = vld [vmem:[#allocation3 + $0x11b] sm:$0xff]
      %v5333 = vld [vmem:[#allocation3 + $0x123] sm:$0xff]
      %v5334 = vld [vmem:[#allocation3 + $0x12b] sm:$0xff]
      %v5335 = vld [vmem:[#allocation3 + $0x133] sm:$0xff]
      %v5336 = vld [vmem:[#allocation3 + $0x13b] sm:$0xff]
      %v5337 = vld [vmem:[#allocation3 + $0x143] sm:$0xff]
      %v5338 = vld [vmem:[#allocation3 + $0x14b] sm:$0xff]
      %v5339 = vld [vmem:[#allocation3 + $0x153] sm:$0xff]
      %v5340 = vld [vmem:[#allocation3 + $0x15b] sm:$0xff]
      %v5341 = vld [vmem:[#allocation3 + $0x163] sm:$0xff]
      %v5342 = vld [vmem:[#allocation3 + $0x16b] sm:$0xf]
      %5384 = vrot.lane.b32.xlu0 %v5302, 64
      %v5385 = vpop.permute.xlu0 %5384
      %5386 = vrot.lane.b32.xlu0 %v5303, 64
      %v5387 = vpop.permute.xlu0 %5386
      %5388 = vrot.lane.b32.xlu0 %v5304, 64
      %v5389 = vpop.permute.xlu0 %5388
      %5390 = vrot.lane.b32.xlu0 %v5305, 64
      %v5391 = vpop.permute.xlu0 %5390
      %5392 = vrot.lane.b32.xlu0 %v5306, 64
      %v5393 = vpop.permute.xlu0 %5392
      %5394 = vrot.lane.b32.xlu0 %v5307, 64
      %v5395 = vpop.permute.xlu0 %5394
      %5396 = vrot.lane.b32.xlu0 %v5308, 64
      %v5397 = vpop.permute.xlu0 %5396
      %5398 = vrot.lane.b32.xlu0 %v5309, 64
      %v5399 = vpop.permute.xlu0 %5398
      %5400 = vrot.lane.b32.xlu0 %v5310, 64
      %v5401 = vpop.permute.xlu0 %5400
      %5402 = vrot.lane.b32.xlu0 %v5311, 64
      %v5403 = vpop.permute.xlu0 %5402
      %5404 = vrot.lane.b32.xlu0 %v5312, 64
      %v5405 = vpop.permute.xlu0 %5404
      %5406 = vrot.lane.b32.xlu0 %v5313, 64
      %v5407 = vpop.permute.xlu0 %5406
      %5408 = vrot.lane.b32.xlu0 %v5314, 64
      %v5409 = vpop.permute.xlu0 %5408
      %5410 = vrot.lane.b32.xlu0 %v5315, 64
      %v5411 = vpop.permute.xlu0 %5410
      %5412 = vrot.lane.b32.xlu0 %v5316, 64
      %v5413 = vpop.permute.xlu0 %5412
      %5414 = vrot.lane.b32.xlu0 %v5317, 64
      %v5415 = vpop.permute.xlu0 %5414
      %5416 = vrot.lane.b32.xlu0 %v5318, 64
      %v5417 = vpop.permute.xlu0 %5416
      %5418 = vrot.lane.b32.xlu0 %v5319, 64
      %v5419 = vpop.permute.xlu0 %5418
      %5420 = vrot.lane.b32.xlu0 %v5320, 64
      %v5421 = vpop.permute.xlu0 %5420
      %5422 = vrot.lane.b32.xlu0 %v5321, 64
      %v5423 = vpop.permute.xlu0 %5422
      %5424 = vrot.lane.b32.xlu0 %v5322, 64
      %v5425 = vpop.permute.xlu0 %5424
      %5426 = vrot.lane.b32.xlu0 %v5323, 64
      %v5427 = vpop.permute.xlu0 %5426
      %5428 = vrot.lane.b32.xlu0 %v5324, 64
      %v5429 = vpop.permute.xlu0 %5428
      %5430 = vrot.lane.b32.xlu0 %v5325, 64
      %v5431 = vpop.permute.xlu0 %5430
      %5432 = vrot.lane.b32.xlu0 %v5326, 64
      %v5433 = vpop.permute.xlu0 %5432
      %5434 = vrot.lane.b32.xlu0 %v5327, 64
      %v5435 = vpop.permute.xlu0 %5434
      %5436 = vrot.lane.b32.xlu0 %v5328, 64
      %v5437 = vpop.permute.xlu0 %5436
      %5438 = vrot.lane.b32.xlu0 %v5329, 64
      %v5439 = vpop.permute.xlu0 %5438
      %5440 = vrot.lane.b32.xlu0 %v5330, 64
      %v5441 = vpop.permute.xlu0 %5440
      %5442 = vrot.lane.b32.xlu0 %v5331, 64
      %v5443 = vpop.permute.xlu0 %5442
      %5444 = vrot.lane.b32.xlu0 %v5332, 64
      %v5445 = vpop.permute.xlu0 %5444
      %5446 = vrot.lane.b32.xlu0 %v5333, 64
      %v5447 = vpop.permute.xlu0 %5446
      %5448 = vrot.lane.b32.xlu0 %v5334, 64
      %v5449 = vpop.permute.xlu0 %5448
      %5450 = vrot.lane.b32.xlu0 %v5335, 64
      %v5451 = vpop.permute.xlu0 %5450
      %5452 = vrot.lane.b32.xlu0 %v5336, 64
      %v5453 = vpop.permute.xlu0 %5452
      %5454 = vrot.lane.b32.xlu0 %v5337, 64
      %v5455 = vpop.permute.xlu0 %5454
      %5456 = vrot.lane.b32.xlu0 %v5338, 64
      %v5457 = vpop.permute.xlu0 %5456
      %5458 = vrot.lane.b32.xlu0 %v5339, 64
      %v5459 = vpop.permute.xlu0 %5458
      %5460 = vrot.lane.b32.xlu0 %v5340, 64
      %v5461 = vpop.permute.xlu0 %5460
      %5462 = vrot.lane.b32.xlu0 %v5341, 64
      %v5463 = vpop.permute.xlu0 %5462
      %5464 = vrot.lane.b32.xlu0 %v5342, 64
      %v5465 = vpop.permute.xlu0 %5464
      %vm5507 = vcmask 589312
      %5508 = vst.msk [vmem:[#allocation4] sm:$0xff] %vm5507, %v5385
      %5509 = vst.msk [vmem:[#allocation4 + $0x8] sm:$0xff] %vm5507, %v5387
      %5510 = vst.msk [vmem:[#allocation4 + $0x10] sm:$0xff] %vm5507, %v5389
      %5511 = vst.msk [vmem:[#allocation4 + $0x18] sm:$0xff] %vm5507, %v5391
      %5512 = vst.msk [vmem:[#allocation4 + $0x20] sm:$0xff] %vm5507, %v5393
      %5513 = vst.msk [vmem:[#allocation4 + $0x28] sm:$0xff] %vm5507, %v5395
      %5514 = vst.msk [vmem:[#allocation4 + $0x30] sm:$0xff] %vm5507, %v5397
      %5515 = vst.msk [vmem:[#allocation4 + $0x38] sm:$0xff] %vm5507, %v5399
      %5516 = vst.msk [vmem:[#allocation4 + $0x40] sm:$0xff] %vm5507, %v5401
      %5517 = vst.msk [vmem:[#allocation4 + $0x48] sm:$0xff] %vm5507, %v5403
      %5518 = vst.msk [vmem:[#allocation4 + $0x50] sm:$0xff] %vm5507, %v5405
      %5519 = vst.msk [vmem:[#allocation4 + $0x58] sm:$0xff] %vm5507, %v5407
      %5520 = vst.msk [vmem:[#allocation4 + $0x60] sm:$0xff] %vm5507, %v5409
      %5521 = vst.msk [vmem:[#allocation4 + $0x68] sm:$0xff] %vm5507, %v5411
      %5522 = vst.msk [vmem:[#allocation4 + $0x70] sm:$0xff] %vm5507, %v5413
      %5523 = vst.msk [vmem:[#allocation4 + $0x78] sm:$0xff] %vm5507, %v5415
      %5524 = vst.msk [vmem:[#allocation4 + $0x80] sm:$0xff] %vm5507, %v5417
      %5525 = vst.msk [vmem:[#allocation4 + $0x88] sm:$0xff] %vm5507, %v5419
      %5526 = vst.msk [vmem:[#allocation4 + $0x90] sm:$0xff] %vm5507, %v5421
      %5527 = vst.msk [vmem:[#allocation4 + $0x98] sm:$0xff] %vm5507, %v5423
      %5528 = vst.msk [vmem:[#allocation4 + $0xa0] sm:$0xff] %vm5507, %v5425
      %5529 = vst.msk [vmem:[#allocation4 + $0xa8] sm:$0xff] %vm5507, %v5427
      %5530 = vst.msk [vmem:[#allocation4 + $0xb0] sm:$0xff] %vm5507, %v5429
      %5531 = vst.msk [vmem:[#allocation4 + $0xb8] sm:$0xff] %vm5507, %v5431
      %5532 = vst.msk [vmem:[#allocation4 + $0xc0] sm:$0xff] %vm5507, %v5433
      %5533 = vst.msk [vmem:[#allocation4 + $0xc8] sm:$0xff] %vm5507, %v5435
      %5534 = vst.msk [vmem:[#allocation4 + $0xd0] sm:$0xff] %vm5507, %v5437
      %5535 = vst.msk [vmem:[#allocation4 + $0xd8] sm:$0xff] %vm5507, %v5439
      %5536 = vst.msk [vmem:[#allocation4 + $0xe0] sm:$0xff] %vm5507, %v5441
      %5537 = vst.msk [vmem:[#allocation4 + $0xe8] sm:$0xff] %vm5507, %v5443
      %5538 = vst.msk [vmem:[#allocation4 + $0xf0] sm:$0xff] %vm5507, %v5445
      %5539 = vst.msk [vmem:[#allocation4 + $0xf8] sm:$0xff] %vm5507, %v5447
      %5540 = vst.msk [vmem:[#allocation4 + $0x100] sm:$0xff] %vm5507, %v5449
      %5541 = vst.msk [vmem:[#allocation4 + $0x108] sm:$0xff] %vm5507, %v5451
      %5542 = vst.msk [vmem:[#allocation4 + $0x110] sm:$0xff] %vm5507, %v5453
      %5543 = vst.msk [vmem:[#allocation4 + $0x118] sm:$0xff] %vm5507, %v5455
      %5544 = vst.msk [vmem:[#allocation4 + $0x120] sm:$0xff] %vm5507, %v5457
      %5545 = vst.msk [vmem:[#allocation4 + $0x128] sm:$0xff] %vm5507, %v5459
      %5546 = vst.msk [vmem:[#allocation4 + $0x130] sm:$0xff] %vm5507, %v5461
      %5547 = vst.msk [vmem:[#allocation4 + $0x138] sm:$0xff] %vm5507, %v5463
      %vm5548 = vcmask 585216
      %5549 = vst.msk [vmem:[#allocation4 + $0x140] sm:$0xf] %vm5548, %v5465
      %v5550 = vld [vmem:[#allocation4] sm:$0xff]
      %v5551 = vld [vmem:[#allocation4 + $0x8] sm:$0xff]
      %v5552 = vld [vmem:[#allocation4 + $0x10] sm:$0xff]
      %v5553 = vld [vmem:[#allocation4 + $0x18] sm:$0xff]
      %v5554 = vld [vmem:[#allocation4 + $0x20] sm:$0xff]
      %v5555 = vld [vmem:[#allocation4 + $0x28] sm:$0xff]
      %v5556 = vld [vmem:[#allocation4 + $0x30] sm:$0xff]
      %v5557 = vld [vmem:[#allocation4 + $0x38] sm:$0xff]
      %v5558 = vld [vmem:[#allocation4 + $0x40] sm:$0xff]
      %v5559 = vld [vmem:[#allocation4 + $0x48] sm:$0xff]
      %v5560 = vld [vmem:[#allocation4 + $0x50] sm:$0xff]
      %v5561 = vld [vmem:[#allocation4 + $0x58] sm:$0xff]
      %v5562 = vld [vmem:[#allocation4 + $0x60] sm:$0xff]
      %v5563 = vld [vmem:[#allocation4 + $0x68] sm:$0xff]
      %v5564 = vld [vmem:[#allocation4 + $0x70] sm:$0xff]
      %v5565 = vld [vmem:[#allocation4 + $0x78] sm:$0xff]
      %v5566 = vld [vmem:[#allocation4 + $0x80] sm:$0xff]
      %v5567 = vld [vmem:[#allocation4 + $0x88] sm:$0xff]
      %v5568 = vld [vmem:[#allocation4 + $0x90] sm:$0xff]
      %v5569 = vld [vmem:[#allocation4 + $0x98] sm:$0xff]
      %v5570 = vld [vmem:[#allocation4 + $0xa0] sm:$0xff]
      %v5571 = vld [vmem:[#allocation4 + $0xa8] sm:$0xff]
      %v5572 = vld [vmem:[#allocation4 + $0xb0] sm:$0xff]
      %v5573 = vld [vmem:[#allocation4 + $0xb8] sm:$0xff]
      %v5574 = vld [vmem:[#allocation4 + $0xc0] sm:$0xff]
      %v5575 = vld [vmem:[#allocation4 + $0xc8] sm:$0xff]
      %v5576 = vld [vmem:[#allocation4 + $0xd0] sm:$0xff]
      %v5577 = vld [vmem:[#allocation4 + $0xd8] sm:$0xff]
      %v5578 = vld [vmem:[#allocation4 + $0xe0] sm:$0xff]
      %v5579 = vld [vmem:[#allocation4 + $0xe8] sm:$0xff]
      %v5580 = vld [vmem:[#allocation4 + $0xf0] sm:$0xff]
      %v5581 = vld [vmem:[#allocation4 + $0xf8] sm:$0xff]
      %v5582 = vld [vmem:[#allocation4 + $0x100] sm:$0xff]
      %v5583 = vld [vmem:[#allocation4 + $0x108] sm:$0xff]
      %v5584 = vld [vmem:[#allocation4 + $0x110] sm:$0xff]
      %v5585 = vld [vmem:[#allocation4 + $0x118] sm:$0xff]
      %v5586 = vld [vmem:[#allocation4 + $0x120] sm:$0xff]
      %v5587 = vld [vmem:[#allocation4 + $0x128] sm:$0xff]
      %v5588 = vld [vmem:[#allocation4 + $0x130] sm:$0xff]
      %v5589 = vld [vmem:[#allocation4 + $0x138] sm:$0xff]
      %v5590 = vld [vmem:[#allocation4 + $0x140] sm:$0xf]
      %vm5591 = vcmask 588800
      %v5593 = vsel %vm5591, %v5550, 0
      %v5596 = vsel %vm5591, %v5551, 0
      %v5599 = vsel %vm5591, %v5552, 0
      %v5602 = vsel %vm5591, %v5553, 0
      %v5605 = vsel %vm5591, %v5554, 0
      %v5608 = vsel %vm5591, %v5555, 0
      %v5611 = vsel %vm5591, %v5556, 0
      %v5614 = vsel %vm5591, %v5557, 0
      %v5617 = vsel %vm5591, %v5558, 0
      %v5620 = vsel %vm5591, %v5559, 0
      %v5623 = vsel %vm5591, %v5560, 0
      %v5626 = vsel %vm5591, %v5561, 0
      %v5629 = vsel %vm5591, %v5562, 0
      %v5632 = vsel %vm5591, %v5563, 0
      %v5635 = vsel %vm5591, %v5564, 0
      %v5638 = vsel %vm5591, %v5565, 0
      %v5641 = vsel %vm5591, %v5566, 0
      %v5644 = vsel %vm5591, %v5567, 0
      %v5647 = vsel %vm5591, %v5568, 0
      %v5650 = vsel %vm5591, %v5569, 0
      %v5653 = vsel %vm5591, %v5570, 0
      %v5656 = vsel %vm5591, %v5571, 0
      %v5659 = vsel %vm5591, %v5572, 0
      %v5662 = vsel %vm5591, %v5573, 0
      %v5665 = vsel %vm5591, %v5574, 0
      %v5668 = vsel %vm5591, %v5575, 0
      %v5671 = vsel %vm5591, %v5576, 0
      %v5674 = vsel %vm5591, %v5577, 0
      %v5677 = vsel %vm5591, %v5578, 0
      %v5680 = vsel %vm5591, %v5579, 0
      %v5683 = vsel %vm5591, %v5580, 0
      %v5686 = vsel %vm5591, %v5581, 0
      %v5689 = vsel %vm5591, %v5582, 0
      %v5692 = vsel %vm5591, %v5583, 0
      %v5695 = vsel %vm5591, %v5584, 0
      %v5698 = vsel %vm5591, %v5585, 0
      %v5701 = vsel %vm5591, %v5586, 0
      %v5704 = vsel %vm5591, %v5587, 0
      %v5707 = vsel %vm5591, %v5588, 0
      %v5710 = vsel %vm5591, %v5589, 0
      %v5713 = vsel %vm5591, %v5590, 0
      %5715 = vmatprep.subr.mxu0 0.0
      %5716 = vmatpush1.msra.mxu0 %v3473
      %5717 = vmatprep.subr.mxu0 0.0
      %5718 = vmatpush1.msra.mxu0 %v3474
      %5719 = vmatprep.subr.mxu0 0.0
      %5720 = vmatpush1.msra.mxu0 %v3475
      %5721 = vmatprep.subr.mxu0 0.0
      %5722 = vmatpush1.msra.mxu0 %v3476
      %5723 = vmatprep.subr.mxu0 0.0
      %5724 = vmatpush1.msra.mxu0 %v3477
      %5725 = vmatprep.subr.mxu0 0.0
      %5726 = vmatpush1.msra.mxu0 %v3478
      %5727 = vmatprep.subr.mxu0 0.0
      %5728 = vmatpush1.msra.mxu0 %v3479
      %5729 = vmatprep.subr.mxu0 0.0
      %5730 = vmatpush1.msra.mxu0 %v3480
      %5731 = vmatprep.subr.mxu0 0.0
      %5732 = vmatpush1.msra.mxu0 %v3481
      %5733 = vmatprep.subr.mxu0 0.0
      %5734 = vmatpush1.msra.mxu0 0.0
      %5735 = vmatprep.subr.mxu0 0.0
      %5736 = vmatpush1.msra.mxu0 0.0
      %5737 = vmatprep.subr.mxu0 0.0
      %5738 = vmatpush1.msra.mxu0 0.0
      %5739 = vmatprep.subr.mxu0 0.0
      %5740 = vmatpush1.msra.mxu0 0.0
      %5741 = vmatprep.subr.mxu0 0.0
      %5742 = vmatpush1.msra.mxu0 0.0
      %5743 = vmatprep.subr.mxu0 0.0
      %5744 = vmatpush1.msra.mxu0 0.0
      %5745 = vmatprep.subr.mxu0 0.0
      %5746 = vmatpush1.msra.mxu0 0.0
      %5747 = vmatprep.subr.mxu0 0.0
      %5748 = vmatpush1.msra.mxu0 0.0
      %5749 = vmatprep.subr.mxu0 0.0
      %5750 = vmatpush1.msra.mxu0 0.0
      %5751 = vmatprep.subr.mxu0 0.0
      %5752 = vmatpush1.msra.mxu0 0.0
      %5753 = vmatprep.subr.mxu0 0.0
      %5754 = vmatpush1.msra.mxu0 0.0
      %5755 = vmatprep.subr.mxu0 0.0
      %5756 = vmatpush1.msra.mxu0 0.0
      %5757 = vmatprep.subr.mxu0 0.0
      %5758 = vmatpush1.msra.mxu0 0.0
      %5759 = vmatprep.subr.mxu0 0.0
      %5760 = vmatpush1.msra.mxu0 0.0
      %5761 = vmatprep.subr.mxu0 0.0
      %5762 = vmatpush1.msra.mxu0 0.0
      %5763 = vmatprep.subr.mxu0 0.0
      %5764 = vmatpush1.msra.mxu0 0.0
      %5765 = vmatprep.subr.mxu0 0.0
      %5766 = vmatpush1.msra.mxu0 0.0
      %5767 = vmatprep.subr.mxu0 0.0
      %5768 = vmatpush1.msra.mxu0 0.0
      %5769 = vmatprep.subr.mxu0 0.0
      %5770 = vmatpush1.msra.mxu0 0.0
      %5771 = vmatprep.subr.mxu0 0.0
      %5772 = vmatpush1.msra.mxu0 0.0
      %5773 = vmatprep.subr.mxu0 0.0
      %5774 = vmatpush1.msra.mxu0 0.0
      %5775 = vmatprep.subr.mxu0 0.0
      %5776 = vmatpush1.msra.mxu0 0.0
      %5777 = vmatprep.subr.mxu0 0.0
      %5778 = vmatpush1.msra.mxu0 0.0
      %5779 = vmatprep.mubr.f32.mxu0 0.0
      %5780 = vmatmul.mubr.f32.gmra.mrb[0].mxu0 %v5593
      %v5781 = vpop.f32.mrb[0].mxu0
      %v5782 = vpop.f32.mrb[0].mxu0
      %5783 = vmatprep.mubr.f32.mxu0 0.0
      %5784 = vmatmul.mubr.f32.gmra.mrb[0].mxu0 %v5596
      %v5785 = vpop.f32.mrb[0].mxu0
      %v5786 = vpop.f32.mrb[0].mxu0
      %5787 = vmatprep.mubr.f32.mxu0 0.0
      %5788 = vmatmul.mubr.f32.gmra.mrb[0].mxu0 %v5599
      %v5789 = vpop.f32.mrb[0].mxu0
      %v5790 = vadd.f32 0.0, %v5789
      %v5791 = vpop.f32.mrb[0].mxu0
      %5792 = vmatprep.mubr.f32.mxu0 0.0
      %5793 = vmatmul.mubr.f32.gmra.mrb[0].mxu0 %v5602
      %v5794 = vpop.f32.mrb[0].mxu0
      %v5795 = vadd.f32 0.0, %v5794
      %v5796 = vpop.f32.mrb[0].mxu0
      %5797 = vmatprep.mubr.f32.mxu0 0.0
      %5798 = vmatmul.mubr.f32.gmra.mrb[0].mxu0 %v5605
      %v5799 = vpop.f32.mrb[0].mxu0
      %v5800 = vadd.f32 0.0, %v5799
      %v5801 = vpop.f32.mrb[0].mxu0
      %5802 = vmatprep.mubr.f32.mxu0 0.0
      %5803 = vmatmul.mubr.f32.gmra.mrb[0].mxu0 %v5608
      %v5804 = vpop.f32.mrb[0].mxu0
      %v5805 = vadd.f32 0.0, %v5804
      %v5806 = vpop.f32.mrb[0].mxu0
      %5807 = vmatprep.mubr.f32.mxu0 0.0
      %5808 = vmatmul.mubr.f32.gmra.mrb[0].mxu0 %v5611
      %v5809 = vpop.f32.mrb[0].mxu0
      %v5810 = vadd.f32 0.0, %v5809
      %v5811 = vpop.f32.mrb[0].mxu0
      %5812 = vmatprep.mubr.f32.mxu0 0.0
      %5813 = vmatmul.mubr.f32.gmra.mrb[0].mxu0 %v5614
      %v5814 = vpop.f32.mrb[0].mxu0
      %v5815 = vadd.f32 0.0, %v5814
      %v5816 = vpop.f32.mrb[0].mxu0
      %5817 = vmatprep.mubr.f32.mxu0 0.0
      %5818 = vmatmul.mubr.f32.gmra.mrb[0].mxu0 %v5617
      %v5819 = vpop.f32.mrb[0].mxu0
      %v5820 = vadd.f32 0.0, %v5819
      %v5821 = vpop.f32.mrb[0].mxu0
      %5822 = vmatprep.mubr.f32.mxu0 0.0
      %5823 = vmatmul.mubr.f32.gmra.mrb[0].mxu0 %v5620
      %v5824 = vpop.f32.mrb[0].mxu0
      %v5825 = vadd.f32 0.0, %v5824
      %v5826 = vpop.f32.mrb[0].mxu0
      %5827 = vmatprep.mubr.f32.mxu0 0.0
      %5828 = vmatmul.mubr.f32.gmra.mrb[0].mxu0 %v5623
      %v5829 = vpop.f32.mrb[0].mxu0
      %v5830 = vadd.f32 0.0, %v5829
      %v5831 = vpop.f32.mrb[0].mxu0
      %5832 = vmatprep.mubr.f32.mxu0 0.0
      %5833 = vmatmul.mubr.f32.gmra.mrb[0].mxu0 %v5626
      %v5834 = vpop.f32.mrb[0].mxu0
      %v5835 = vadd.f32 0.0, %v5834
      %v5836 = vpop.f32.mrb[0].mxu0
      %5837 = vmatprep.mubr.f32.mxu0 0.0
      %5838 = vmatmul.mubr.f32.gmra.mrb[0].mxu0 %v5629
      %v5839 = vpop.f32.mrb[0].mxu0
      %v5840 = vadd.f32 0.0, %v5839
      %v5841 = vpop.f32.mrb[0].mxu0
      %5842 = vmatprep.mubr.f32.mxu0 0.0
      %5843 = vmatmul.mubr.f32.gmra.mrb[0].mxu0 %v5632
      %v5844 = vpop.f32.mrb[0].mxu0
      %v5845 = vadd.f32 0.0, %v5844
      %v5846 = vpop.f32.mrb[0].mxu0
      %5847 = vmatprep.mubr.f32.mxu0 0.0
      %5848 = vmatmul.mubr.f32.gmra.mrb[0].mxu0 %v5635
      %v5849 = vpop.f32.mrb[0].mxu0
      %v5850 = vadd.f32 0.0, %v5849
      %v5851 = vpop.f32.mrb[0].mxu0
      %5852 = vmatprep.mubr.f32.mxu0 0.0
      %5853 = vmatmul.mubr.f32.gmra.mrb[0].mxu0 %v5638
      %v5854 = vpop.f32.mrb[0].mxu0
      %v5855 = vadd.f32 0.0, %v5854
      %v5856 = vpop.f32.mrb[0].mxu0
      %5857 = vmatprep.mubr.f32.mxu0 0.0
      %5858 = vmatmul.mubr.f32.gmra.mrb[0].mxu0 %v5641
      %v5859 = vpop.f32.mrb[0].mxu0
      %v5860 = vadd.f32 0.0, %v5859
      %v5861 = vpop.f32.mrb[0].mxu0
      %5862 = vmatprep.mubr.f32.mxu0 0.0
      %5863 = vmatmul.mubr.f32.gmra.mrb[0].mxu0 %v5644
      %v5864 = vpop.f32.mrb[0].mxu0
      %v5865 = vadd.f32 0.0, %v5864
      %v5866 = vpop.f32.mrb[0].mxu0
      %5867 = vmatprep.mubr.f32.mxu0 0.0
      %5868 = vmatmul.mubr.f32.gmra.mrb[0].mxu0 %v5647
      %v5869 = vpop.f32.mrb[0].mxu0
      %v5870 = vadd.f32 0.0, %v5869
      %v5871 = vpop.f32.mrb[0].mxu0
      %5872 = vmatprep.mubr.f32.mxu0 0.0
      %5873 = vmatmul.mubr.f32.gmra.mrb[0].mxu0 %v5650
      %v5874 = vpop.f32.mrb[0].mxu0
      %v5875 = vadd.f32 0.0, %v5874
      %v5876 = vpop.f32.mrb[0].mxu0
      %5877 = vmatprep.mubr.f32.mxu0 0.0
      %5878 = vmatmul.mubr.f32.gmra.mrb[0].mxu0 %v5653
      %v5879 = vpop.f32.mrb[0].mxu0
      %v5880 = vadd.f32 0.0, %v5879
      %v5881 = vpop.f32.mrb[0].mxu0
      %5882 = vmatprep.mubr.f32.mxu0 0.0
      %5883 = vmatmul.mubr.f32.gmra.mrb[0].mxu0 %v5656
      %v5884 = vpop.f32.mrb[0].mxu0
      %v5885 = vadd.f32 0.0, %v5884
      %v5886 = vpop.f32.mrb[0].mxu0
      %5887 = vmatprep.mubr.f32.mxu0 0.0
      %5888 = vmatmul.mubr.f32.gmra.mrb[0].mxu0 %v5659
      %v5889 = vpop.f32.mrb[0].mxu0
      %v5890 = vadd.f32 0.0, %v5889
      %v5891 = vpop.f32.mrb[0].mxu0
      %5892 = vmatprep.mubr.f32.mxu0 0.0
      %5893 = vmatmul.mubr.f32.gmra.mrb[0].mxu0 %v5662
      %v5894 = vpop.f32.mrb[0].mxu0
      %v5895 = vadd.f32 0.0, %v5894
      %v5896 = vpop.f32.mrb[0].mxu0
      %5897 = vmatprep.mubr.f32.mxu0 0.0
      %5898 = vmatmul.mubr.f32.gmra.mrb[0].mxu0 %v5665
      %v5899 = vpop.f32.mrb[0].mxu0
      %v5900 = vadd.f32 0.0, %v5899
      %v5901 = vpop.f32.mrb[0].mxu0
      %5902 = vmatprep.mubr.f32.mxu0 0.0
      %5903 = vmatmul.mubr.f32.gmra.mrb[0].mxu0 %v5668
      %v5904 = vpop.f32.mrb[0].mxu0
      %v5905 = vadd.f32 0.0, %v5904
      %v5906 = vpop.f32.mrb[0].mxu0
      %5907 = vmatprep.mubr.f32.mxu0 0.0
      %5908 = vmatmul.mubr.f32.gmra.mrb[0].mxu0 %v5671
      %v5909 = vpop.f32.mrb[0].mxu0
      %v5910 = vadd.f32 0.0, %v5909
      %v5911 = vpop.f32.mrb[0].mxu0
      %5912 = vmatprep.mubr.f32.mxu0 0.0
      %5913 = vmatmul.mubr.f32.gmra.mrb[0].mxu0 %v5674
      %v5914 = vpop.f32.mrb[0].mxu0
      %v5915 = vadd.f32 0.0, %v5914
      %v5916 = vpop.f32.mrb[0].mxu0
      %5917 = vmatprep.mubr.f32.mxu0 0.0
      %5918 = vmatmul.mubr.f32.gmra.mrb[0].mxu0 %v5677
      %v5919 = vpop.f32.mrb[0].mxu0
      %v5920 = vadd.f32 0.0, %v5919
      %v5921 = vpop.f32.mrb[0].mxu0
      %5922 = vmatprep.mubr.f32.mxu0 0.0
      %5923 = vmatmul.mubr.f32.gmra.mrb[0].mxu0 %v5680
      %v5924 = vpop.f32.mrb[0].mxu0
      %v5925 = vadd.f32 0.0, %v5924
      %v5926 = vpop.f32.mrb[0].mxu0
      %5927 = vmatprep.mubr.f32.mxu0 0.0
      %5928 = vmatmul.mubr.f32.gmra.mrb[0].mxu0 %v5683
      %v5929 = vpop.f32.mrb[0].mxu0
      %v5930 = vadd.f32 0.0, %v5929
      %v5931 = vpop.f32.mrb[0].mxu0
      %5932 = vmatprep.mubr.f32.mxu0 0.0
      %5933 = vmatmul.mubr.f32.gmra.mrb[0].mxu0 %v5686
      %v5934 = vpop.f32.mrb[0].mxu0
      %v5935 = vadd.f32 0.0, %v5934
      %v5936 = vpop.f32.mrb[0].mxu0
      %5937 = vmatprep.mubr.f32.mxu0 0.0
      %5938 = vmatmul.mubr.f32.gmra.mrb[0].mxu0 %v5689
      %v5939 = vpop.f32.mrb[0].mxu0
      %v5940 = vadd.f32 0.0, %v5939
      %v5941 = vpop.f32.mrb[0].mxu0
      %5942 = vmatprep.mubr.f32.mxu0 0.0
      %5943 = vmatmul.mubr.f32.gmra.mrb[0].mxu0 %v5692
      %v5944 = vpop.f32.mrb[0].mxu0
      %v5945 = vadd.f32 0.0, %v5944
      %v5946 = vpop.f32.mrb[0].mxu0
      %5947 = vmatprep.mubr.f32.mxu0 0.0
      %5948 = vmatmul.mubr.f32.gmra.mrb[0].mxu0 %v5695
      %v5949 = vpop.f32.mrb[0].mxu0
      %v5950 = vadd.f32 0.0, %v5949
      %v5951 = vpop.f32.mrb[0].mxu0
      %5952 = vmatprep.mubr.f32.mxu0 0.0
      %5953 = vmatmul.mubr.f32.gmra.mrb[0].mxu0 %v5698
      %v5954 = vpop.f32.mrb[0].mxu0
      %v5955 = vadd.f32 0.0, %v5954
      %v5956 = vpop.f32.mrb[0].mxu0
      %5957 = vmatprep.mubr.f32.mxu0 0.0
      %5958 = vmatmul.mubr.f32.gmra.mrb[0].mxu0 %v5701
      %v5959 = vpop.f32.mrb[0].mxu0
      %v5960 = vadd.f32 0.0, %v5959
      %v5961 = vpop.f32.mrb[0].mxu0
      %5962 = vmatprep.mubr.f32.mxu0 0.0
      %5963 = vmatmul.mubr.f32.gmra.mrb[0].mxu0 %v5704
      %v5964 = vpop.f32.mrb[0].mxu0
      %v5965 = vadd.f32 0.0, %v5964
      %v5966 = vpop.f32.mrb[0].mxu0
      %5967 = vmatprep.mubr.f32.mxu0 0.0
      %5968 = vmatmul.mubr.f32.gmra.mrb[0].mxu0 %v5707
      %v5969 = vpop.f32.mrb[0].mxu0
      %v5970 = vadd.f32 0.0, %v5969
      %v5971 = vpop.f32.mrb[0].mxu0
      %5972 = vmatprep.mubr.f32.mxu0 0.0
      %5973 = vmatmul.mubr.f32.gmra.mrb[0].mxu0 %v5710
      %v5974 = vpop.f32.mrb[0].mxu0
      %v5975 = vpop.f32.mrb[0].mxu0
      %5976 = vmatprep.mubr.f32.mxu0 0.0
      %5977 = vmatmul.mubr.f32.gmra.mrb[0].mxu0 %v5713
      %v5978 = vpop.f32.mrb[0].mxu0
      %v5979 = vpop.f32.mrb[0].mxu0
      %5980 = vdwg.mxu0
      %v5982 = vlaneseq
      %v5983 = vshrl.u32 %v5982, 7
      %v5984 = vsub.s32 0, %v5983
      %v5985 = vrot.slane %v3482, %v5984
      %v5987 = vmul.f32 %v5790, %v5985
      %v5988 = vmul.f32 %v5795, %v5985
      %v5989 = vmul.f32 %v5800, %v5985
      %v5990 = vmul.f32 %v5805, %v5985
      %v5991 = vmul.f32 %v5810, %v5985
      %v5992 = vmul.f32 %v5815, %v5985
      %v5993 = vmul.f32 %v5820, %v5985
      %v5994 = vmul.f32 %v5825, %v5985
      %v5995 = vmul.f32 %v5830, %v5985
      %v5996 = vmul.f32 %v5835, %v5985
      %v5997 = vmul.f32 %v5840, %v5985
      %v5998 = vmul.f32 %v5845, %v5985
      %v5999 = vmul.f32 %v5850, %v5985
      %v6000 = vmul.f32 %v5855, %v5985
      %v6001 = vmul.f32 %v5860, %v5985
      %v6002 = vmul.f32 %v5865, %v5985
      %v6003 = vmul.f32 %v5870, %v5985
      %v6004 = vmul.f32 %v5875, %v5985
      %v6005 = vmul.f32 %v5880, %v5985
      %v6006 = vmul.f32 %v5885, %v5985
      %v6007 = vmul.f32 %v5890, %v5985
      %v6008 = vmul.f32 %v5895, %v5985
      %v6009 = vmul.f32 %v5900, %v5985
      %v6010 = vmul.f32 %v5905, %v5985
      %v6011 = vmul.f32 %v5910, %v5985
      %v6012 = vmul.f32 %v5915, %v5985
      %v6013 = vmul.f32 %v5920, %v5985
      %v6014 = vmul.f32 %v5925, %v5985
      %v6015 = vmul.f32 %v5930, %v5985
      %v6016 = vmul.f32 %v5935, %v5985
      %v6017 = vmul.f32 %v5940, %v5985
      %v6018 = vmul.f32 %v5945, %v5985
      %v6019 = vmul.f32 %v5950, %v5985
      %v6020 = vmul.f32 %v5955, %v5985
      %v6021 = vmul.f32 %v5960, %v5985
      %v6022 = vmul.f32 %v5965, %v5985
      %v6023 = vmul.f32 %v5970, %v5985
      %v6025 = vlaneseq
      %v6026 = vshrl.u32 %v6025, 7
      %v6027 = vsub.s32 0, %v6026
      %v6028 = vrot.slane %v3483, %v6027
      %v6030 = vadd.f32 %v5987, %v6028
      %v6031 = vadd.f32 %v5988, %v6028
      %v6032 = vadd.f32 %v5989, %v6028
      %v6033 = vadd.f32 %v5990, %v6028
      %v6034 = vadd.f32 %v5991, %v6028
      %v6035 = vadd.f32 %v5992, %v6028
      %v6036 = vadd.f32 %v5993, %v6028
      %v6037 = vadd.f32 %v5994, %v6028
      %v6038 = vadd.f32 %v5995, %v6028
      %v6039 = vadd.f32 %v5996, %v6028
      %v6040 = vadd.f32 %v5997, %v6028
      %v6041 = vadd.f32 %v5998, %v6028
      %v6042 = vadd.f32 %v5999, %v6028
      %v6043 = vadd.f32 %v6000, %v6028
      %v6044 = vadd.f32 %v6001, %v6028
      %v6045 = vadd.f32 %v6002, %v6028
      %v6046 = vadd.f32 %v6003, %v6028
      %v6047 = vadd.f32 %v6004, %v6028
      %v6048 = vadd.f32 %v6005, %v6028
      %v6049 = vadd.f32 %v6006, %v6028
      %v6050 = vadd.f32 %v6007, %v6028
      %v6051 = vadd.f32 %v6008, %v6028
      %v6052 = vadd.f32 %v6009, %v6028
      %v6053 = vadd.f32 %v6010, %v6028
      %v6054 = vadd.f32 %v6011, %v6028
      %v6055 = vadd.f32 %v6012, %v6028
      %v6056 = vadd.f32 %v6013, %v6028
      %v6057 = vadd.f32 %v6014, %v6028
      %v6058 = vadd.f32 %v6015, %v6028
      %v6059 = vadd.f32 %v6016, %v6028
      %v6060 = vadd.f32 %v6017, %v6028
      %v6061 = vadd.f32 %v6018, %v6028
      %v6062 = vadd.f32 %v6019, %v6028
      %v6063 = vadd.f32 %v6020, %v6028
      %v6064 = vadd.f32 %v6021, %v6028
      %v6065 = vadd.f32 %v6022, %v6028
      %v6066 = vadd.f32 %v6023, %v6028
      %v6067 = vmax.f32 %v6030, 0.0
      %v6068 = vmax.f32 %v6031, 0.0
      %v6069 = vmax.f32 %v6032, 0.0
      %v6070 = vmax.f32 %v6033, 0.0
      %v6071 = vmax.f32 %v6034, 0.0
      %v6072 = vmax.f32 %v6035, 0.0
      %v6073 = vmax.f32 %v6036, 0.0
      %v6074 = vmax.f32 %v6037, 0.0
      %v6075 = vmax.f32 %v6038, 0.0
      %v6076 = vmax.f32 %v6039, 0.0
      %v6077 = vmax.f32 %v6040, 0.0
      %v6078 = vmax.f32 %v6041, 0.0
      %v6079 = vmax.f32 %v6042, 0.0
      %v6080 = vmax.f32 %v6043, 0.0
      %v6081 = vmax.f32 %v6044, 0.0
      %v6082 = vmax.f32 %v6045, 0.0
      %v6083 = vmax.f32 %v6046, 0.0
      %v6084 = vmax.f32 %v6047, 0.0
      %v6085 = vmax.f32 %v6048, 0.0
      %v6086 = vmax.f32 %v6049, 0.0
      %v6087 = vmax.f32 %v6050, 0.0
      %v6088 = vmax.f32 %v6051, 0.0
      %v6089 = vmax.f32 %v6052, 0.0
      %v6090 = vmax.f32 %v6053, 0.0
      %v6091 = vmax.f32 %v6054, 0.0
      %v6092 = vmax.f32 %v6055, 0.0
      %v6093 = vmax.f32 %v6056, 0.0
      %v6094 = vmax.f32 %v6057, 0.0
      %v6095 = vmax.f32 %v6058, 0.0
      %v6096 = vmax.f32 %v6059, 0.0
      %v6097 = vmax.f32 %v6060, 0.0
      %v6098 = vmax.f32 %v6061, 0.0
      %v6099 = vmax.f32 %v6062, 0.0
      %v6100 = vmax.f32 %v6063, 0.0
      %v6101 = vmax.f32 %v6064, 0.0
      %v6102 = vmax.f32 %v6065, 0.0
      %v6103 = vmax.f32 %v6066, 0.0
      %6104 = vst.msk [vmem:[%s394] sm:$0xff] %vm3137, 0.0
      %6105 = vst.msk [vmem:[%s394 + $0x8] sm:$0xff] %vm3137, 0.0
      %6106 = vst.msk [vmem:[%s394 + $0x10] sm:$0xff] %vm3137, 0.0
      %6107 = vst.msk [vmem:[%s394 + $0x18] sm:$0xff] %vm3137, 0.0
      %6108 = vst.msk [vmem:[%s394 + $0x20] sm:$0xff] %vm3137, 0.0
      %6109 = vst.msk [vmem:[%s394 + $0x28] sm:$0xff] %vm3137, 0.0
      %6110 = vst.msk [vmem:[%s394 + $0x30] sm:$0xff] %vm3137, 0.0
      %6111 = vst.msk [vmem:[%s394 + $0x38] sm:$0xff] %vm3137, 0.0
      %6112 = vst.msk [vmem:[%s394 + $0x40] sm:$0xff] %vm3137, 0.0
      %6113 = vst.msk [vmem:[%s394 + $0x48] sm:$0xff] %vm3137, 0.0
      %6114 = vst.msk [vmem:[%s394 + $0x50] sm:$0xff] %vm3137, 0.0
      %6115 = vst.msk [vmem:[%s394 + $0x58] sm:$0xff] %vm3137, 0.0
      %6116 = vst.msk [vmem:[%s394 + $0x60] sm:$0xf] %vm3471, 0.0
      %6117 = vst.msk [vmem:[%s399] sm:$0xff] %vm3137, 0.0
      %6118 = vst.msk [vmem:[%s399 + $0x8] sm:$0xff] %vm3137, 0.0
      %6119 = vst.msk [vmem:[%s399 + $0x10] sm:$0xff] %vm3137, 0.0
      %6120 = vst.msk [vmem:[%s399 + $0x18] sm:$0xff] %vm3137, 0.0
      %6121 = vst.msk [vmem:[%s399 + $0x20] sm:$0xff] %vm3137, 0.0
      %6122 = vst.msk [vmem:[%s399 + $0x28] sm:$0xff] %vm3137, 0.0
      %6123 = vst.msk [vmem:[%s399 + $0x30] sm:$0xff] %vm3137, 0.0
      %6124 = vst.msk [vmem:[%s399 + $0x38] sm:$0xff] %vm3137, 0.0
      %6125 = vst.msk [vmem:[%s399 + $0x40] sm:$0xff] %vm3137, 0.0
      %6126 = vst.msk [vmem:[%s399 + $0x48] sm:$0xff] %vm3137, 0.0
      %6127 = vst.msk [vmem:[%s399 + $0x50] sm:$0xff] %vm3137, 0.0
      %6128 = vst.msk [vmem:[%s399 + $0x58] sm:$0xff] %vm3137, 0.0
      %6129 = vst.msk [vmem:[%s399 + $0x60] sm:$0xf] %vm3471, 0.0
      %v6130 = vld [vmem:[%s8] sm:$0xff]
      %v6131 = vld [vmem:[%s9] sm:$0xff]
      %vm6135 = vcmask 1044480
      %v6136 = vrot.slane %v6067, 3
      %v6137 = vrot.slane %v6068, 3
      %v6138 = vsel %vm6135, %v6136, %v6137
      %v6139 = vrot.slane %v6069, 3
      %v6140 = vsel %vm6135, %v6137, %v6139
      %vm6143 = vcmask 130048
      %v6145 = vsel %vm6143, %v6130, 0
      %6147 = vmatprep.subr.mxu0 0.0
      %6148 = vmatpush1.msra.mxu0 %v6138
      %6149 = vmatprep.subr.mxu0 0.0
      %6150 = vmatpush1.msra.mxu0 %v6140
      %6151 = vmatprep.subr.mxu0 0.0
      %6152 = vmatpush1.msra.mxu0 0.0
      %6153 = vmatprep.subr.mxu0 0.0
      %6154 = vmatpush1.msra.mxu0 0.0
      %6155 = vmatprep.subr.mxu0 0.0
      %6156 = vmatpush1.msra.mxu0 0.0
      %6157 = vmatprep.subr.mxu0 0.0
      %6158 = vmatpush1.msra.mxu0 0.0
      %6159 = vmatprep.subr.mxu0 0.0
      %6160 = vmatpush1.msra.mxu0 0.0
      %6161 = vmatprep.subr.mxu0 0.0
      %6162 = vmatpush1.msra.mxu0 0.0
      %6163 = vmatprep.subr.mxu0 0.0
      %6164 = vmatpush1.msra.mxu0 0.0
      %6165 = vmatprep.subr.mxu0 0.0
      %6166 = vmatpush1.msra.mxu0 0.0
      %6167 = vmatprep.subr.mxu0 0.0
      %6168 = vmatpush1.msra.mxu0 0.0
      %6169 = vmatprep.subr.mxu0 0.0
      %6170 = vmatpush1.msra.mxu0 0.0
      %6171 = vmatprep.subr.mxu0 0.0
      %6172 = vmatpush1.msra.mxu0 0.0
      %6173 = vmatprep.subr.mxu0 0.0
      %6174 = vmatpush1.msra.mxu0 0.0
      %6175 = vmatprep.subr.mxu0 0.0
      %6176 = vmatpush1.msra.mxu0 0.0
      %6177 = vmatprep.subr.mxu0 0.0
      %6178 = vmatpush1.msra.mxu0 0.0
      %6179 = vmatprep.subr.mxu0 0.0
      %6180 = vmatpush1.msra.mxu0 0.0
      %6181 = vmatprep.subr.mxu0 0.0
      %6182 = vmatpush1.msra.mxu0 0.0
      %6183 = vmatprep.subr.mxu0 0.0
      %6184 = vmatpush1.msra.mxu0 0.0
      %6185 = vmatprep.subr.mxu0 0.0
      %6186 = vmatpush1.msra.mxu0 0.0
      %6187 = vmatprep.subr.mxu0 0.0
      %6188 = vmatpush1.msra.mxu0 0.0
      %6189 = vmatprep.subr.mxu0 0.0
      %6190 = vmatpush1.msra.mxu0 0.0
      %6191 = vmatprep.subr.mxu0 0.0
      %6192 = vmatpush1.msra.mxu0 0.0
      %6193 = vmatprep.subr.mxu0 0.0
      %6194 = vmatpush1.msra.mxu0 0.0
      %6195 = vmatprep.subr.mxu0 0.0
      %6196 = vmatpush1.msra.mxu0 0.0
      %6197 = vmatprep.subr.mxu0 0.0
      %6198 = vmatpush1.msra.mxu0 0.0
      %6199 = vmatprep.subr.mxu0 0.0
      %6200 = vmatpush1.msra.mxu0 0.0
      %6201 = vmatprep.subr.mxu0 0.0
      %6202 = vmatpush1.msra.mxu0 0.0
      %6203 = vmatprep.subr.mxu0 0.0
      %6204 = vmatpush1.msra.mxu0 0.0
      %6205 = vmatprep.subr.mxu0 0.0
      %6206 = vmatpush1.msra.mxu0 0.0
      %6207 = vmatprep.subr.mxu0 0.0
      %6208 = vmatpush1.msra.mxu0 0.0
      %6209 = vmatprep.subr.mxu0 0.0
      %6210 = vmatpush1.msra.mxu0 0.0
      %6211 = vmatprep.mubr.f32.mxu0 0.0
      %6212 = vmatmul.mubr.f32.gmra.mrb[0].mxu0 %v6145
      %v6213 = vpop.f32.mrb[0].mxu0
      %v6214 = vadd.f32 0.0, %v6213
      %v6215 = vpop.f32.mrb[0].mxu0
      %6216 = vdwg.mxu0
      %v6218 = vsel %vm6143, %v6131, 0
      %6220 = vmatprep.subr.mxu0 0.0
      %6221 = vmatpush1.msra.mxu0 %v6138
      %6222 = vmatprep.subr.mxu0 0.0
      %6223 = vmatpush1.msra.mxu0 %v6140
      %6224 = vmatprep.subr.mxu0 0.0
      %6225 = vmatpush1.msra.mxu0 0.0
      %6226 = vmatprep.subr.mxu0 0.0
      %6227 = vmatpush1.msra.mxu0 0.0
      %6228 = vmatprep.subr.mxu0 0.0
      %6229 = vmatpush1.msra.mxu0 0.0
      %6230 = vmatprep.subr.mxu0 0.0
      %6231 = vmatpush1.msra.mxu0 0.0
      %6232 = vmatprep.subr.mxu0 0.0
      %6233 = vmatpush1.msra.mxu0 0.0
      %6234 = vmatprep.subr.mxu0 0.0
      %6235 = vmatpush1.msra.mxu0 0.0
      %6236 = vmatprep.subr.mxu0 0.0
      %6237 = vmatpush1.msra.mxu0 0.0
      %6238 = vmatprep.subr.mxu0 0.0
      %6239 = vmatpush1.msra.mxu0 0.0
      %6240 = vmatprep.subr.mxu0 0.0
      %6241 = vmatpush1.msra.mxu0 0.0
      %6242 = vmatprep.subr.mxu0 0.0
      %6243 = vmatpush1.msra.mxu0 0.0
      %6244 = vmatprep.subr.mxu0 0.0
      %6245 = vmatpush1.msra.mxu0 0.0
      %6246 = vmatprep.subr.mxu0 0.0
      %6247 = vmatpush1.msra.mxu0 0.0
      %6248 = vmatprep.subr.mxu0 0.0
      %6249 = vmatpush1.msra.mxu0 0.0
      %6250 = vmatprep.subr.mxu0 0.0
      %6251 = vmatpush1.msra.mxu0 0.0
      %6252 = vmatprep.subr.mxu0 0.0
      %6253 = vmatpush1.msra.mxu0 0.0
      %6254 = vmatprep.subr.mxu0 0.0
      %6255 = vmatpush1.msra.mxu0 0.0
      %6256 = vmatprep.subr.mxu0 0.0
      %6257 = vmatpush1.msra.mxu0 0.0
      %6258 = vmatprep.subr.mxu0 0.0
      %6259 = vmatpush1.msra.mxu0 0.0
      %6260 = vmatprep.subr.mxu0 0.0
      %6261 = vmatpush1.msra.mxu0 0.0
      %6262 = vmatprep.subr.mxu0 0.0
      %6263 = vmatpush1.msra.mxu0 0.0
      %6264 = vmatprep.subr.mxu0 0.0
      %6265 = vmatpush1.msra.mxu0 0.0
      %6266 = vmatprep.subr.mxu0 0.0
      %6267 = vmatpush1.msra.mxu0 0.0
      %6268 = vmatprep.subr.mxu0 0.0
      %6269 = vmatpush1.msra.mxu0 0.0
      %6270 = vmatprep.subr.mxu0 0.0
      %6271 = vmatpush1.msra.mxu0 0.0
      %6272 = vmatprep.subr.mxu0 0.0
      %6273 = vmatpush1.msra.mxu0 0.0
      %6274 = vmatprep.subr.mxu0 0.0
      %6275 = vmatpush1.msra.mxu0 0.0
      %6276 = vmatprep.subr.mxu0 0.0
      %6277 = vmatpush1.msra.mxu0 0.0
      %6278 = vmatprep.subr.mxu0 0.0
      %6279 = vmatpush1.msra.mxu0 0.0
      %6280 = vmatprep.subr.mxu0 0.0
      %6281 = vmatpush1.msra.mxu0 0.0
      %6282 = vmatprep.subr.mxu0 0.0
      %6283 = vmatpush1.msra.mxu0 0.0
      %6284 = vmatprep.mubr.f32.mxu0 0.0
      %6285 = vmatmul.mubr.f32.gmra.mrb[0].mxu0 %v6218
      %v6286 = vpop.f32.mrb[0].mxu0
      %v6287 = vadd.f32 0.0, %v6286
      %v6288 = vpop.f32.mrb[0].mxu0
      %6289 = vdwg.mxu0
      %vm6292 = vcmask 1042432
      %v6293 = vrot.slane %v6069, 5
      %v6294 = vrot.slane %v6070, 5
      %v6295 = vsel %vm6292, %v6293, %v6294
      %v6296 = vrot.slane %v6071, 5
      %v6297 = vsel %vm6292, %v6294, %v6296
      %6300 = vmatprep.subr.mxu0 0.0
      %6301 = vmatpush1.msra.mxu0 %v6295
      %6302 = vmatprep.subr.mxu0 0.0
      %6303 = vmatpush1.msra.mxu0 %v6297
      %6304 = vmatprep.subr.mxu0 0.0
      %6305 = vmatpush1.msra.mxu0 0.0
      %6306 = vmatprep.subr.mxu0 0.0
      %6307 = vmatpush1.msra.mxu0 0.0
      %6308 = vmatprep.subr.mxu0 0.0
      %6309 = vmatpush1.msra.mxu0 0.0
      %6310 = vmatprep.subr.mxu0 0.0
      %6311 = vmatpush1.msra.mxu0 0.0
      %6312 = vmatprep.subr.mxu0 0.0
      %6313 = vmatpush1.msra.mxu0 0.0
      %6314 = vmatprep.subr.mxu0 0.0
      %6315 = vmatpush1.msra.mxu0 0.0
      %6316 = vmatprep.subr.mxu0 0.0
      %6317 = vmatpush1.msra.mxu0 0.0
      %6318 = vmatprep.subr.mxu0 0.0
      %6319 = vmatpush1.msra.mxu0 0.0
      %6320 = vmatprep.subr.mxu0 0.0
      %6321 = vmatpush1.msra.mxu0 0.0
      %6322 = vmatprep.subr.mxu0 0.0
      %6323 = vmatpush1.msra.mxu0 0.0
      %6324 = vmatprep.subr.mxu0 0.0
      %6325 = vmatpush1.msra.mxu0 0.0
      %6326 = vmatprep.subr.mxu0 0.0
      %6327 = vmatpush1.msra.mxu0 0.0
      %6328 = vmatprep.subr.mxu0 0.0
      %6329 = vmatpush1.msra.mxu0 0.0
      %6330 = vmatprep.subr.mxu0 0.0
      %6331 = vmatpush1.msra.mxu0 0.0
      %6332 = vmatprep.subr.mxu0 0.0
      %6333 = vmatpush1.msra.mxu0 0.0
      %6334 = vmatprep.subr.mxu0 0.0
      %6335 = vmatpush1.msra.mxu0 0.0
      %6336 = vmatprep.subr.mxu0 0.0
      %6337 = vmatpush1.msra.mxu0 0.0
      %6338 = vmatprep.subr.mxu0 0.0
      %6339 = vmatpush1.msra.mxu0 0.0
      %6340 = vmatprep.subr.mxu0 0.0
      %6341 = vmatpush1.msra.mxu0 0.0
      %6342 = vmatprep.subr.mxu0 0.0
      %6343 = vmatpush1.msra.mxu0 0.0
      %6344 = vmatprep.subr.mxu0 0.0
      %6345 = vmatpush1.msra.mxu0 0.0
      %6346 = vmatprep.subr.mxu0 0.0
      %6347 = vmatpush1.msra.mxu0 0.0
      %6348 = vmatprep.subr.mxu0 0.0
      %6349 = vmatpush1.msra.mxu0 0.0
      %6350 = vmatprep.subr.mxu0 0.0
      %6351 = vmatpush1.msra.mxu0 0.0
      %6352 = vmatprep.subr.mxu0 0.0
      %6353 = vmatpush1.msra.mxu0 0.0
      %6354 = vmatprep.subr.mxu0 0.0
      %6355 = vmatpush1.msra.mxu0 0.0
      %6356 = vmatprep.subr.mxu0 0.0
      %6357 = vmatpush1.msra.mxu0 0.0
      %6358 = vmatprep.subr.mxu0 0.0
      %6359 = vmatpush1.msra.mxu0 0.0
      %6360 = vmatprep.subr.mxu0 0.0
      %6361 = vmatpush1.msra.mxu0 0.0
      %6362 = vmatprep.subr.mxu0 0.0
      %6363 = vmatpush1.msra.mxu0 0.0
      %6364 = vmatprep.mubr.f32.mxu0 0.0
      %6365 = vmatmul.mubr.f32.gmra.mrb[0].mxu0 %v6145
      %v6366 = vpop.f32.mrb[0].mxu0
      %v6367 = vadd.f32 0.0, %v6366
      %v6368 = vpop.f32.mrb[0].mxu0
      %6369 = vdwg.mxu0
      %6370 = vmatprep.subr.mxu0 0.0
      %6371 = vmatpush1.msra.mxu0 %v6295
      %6372 = vmatprep.subr.mxu0 0.0
      %6373 = vmatpush1.msra.mxu0 %v6297
      %6374 = vmatprep.subr.mxu0 0.0
      %6375 = vmatpush1.msra.mxu0 0.0
      %6376 = vmatprep.subr.mxu0 0.0
      %6377 = vmatpush1.msra.mxu0 0.0
      %6378 = vmatprep.subr.mxu0 0.0
      %6379 = vmatpush1.msra.mxu0 0.0
      %6380 = vmatprep.subr.mxu0 0.0
      %6381 = vmatpush1.msra.mxu0 0.0
      %6382 = vmatprep.subr.mxu0 0.0
      %6383 = vmatpush1.msra.mxu0 0.0
      %6384 = vmatprep.subr.mxu0 0.0
      %6385 = vmatpush1.msra.mxu0 0.0
      %6386 = vmatprep.subr.mxu0 0.0
      %6387 = vmatpush1.msra.mxu0 0.0
      %6388 = vmatprep.subr.mxu0 0.0
      %6389 = vmatpush1.msra.mxu0 0.0
      %6390 = vmatprep.subr.mxu0 0.0
      %6391 = vmatpush1.msra.mxu0 0.0
      %6392 = vmatprep.subr.mxu0 0.0
      %6393 = vmatpush1.msra.mxu0 0.0
      %6394 = vmatprep.subr.mxu0 0.0
      %6395 = vmatpush1.msra.mxu0 0.0
      %6396 = vmatprep.subr.mxu0 0.0
      %6397 = vmatpush1.msra.mxu0 0.0
      %6398 = vmatprep.subr.mxu0 0.0
      %6399 = vmatpush1.msra.mxu0 0.0
      %6400 = vmatprep.subr.mxu0 0.0
      %6401 = vmatpush1.msra.mxu0 0.0
      %6402 = vmatprep.subr.mxu0 0.0
      %6403 = vmatpush1.msra.mxu0 0.0
      %6404 = vmatprep.subr.mxu0 0.0
      %6405 = vmatpush1.msra.mxu0 0.0
      %6406 = vmatprep.subr.mxu0 0.0
      %6407 = vmatpush1.msra.mxu0 0.0
      %6408 = vmatprep.subr.mxu0 0.0
      %6409 = vmatpush1.msra.mxu0 0.0
      %6410 = vmatprep.subr.mxu0 0.0
      %6411 = vmatpush1.msra.mxu0 0.0
      %6412 = vmatprep.subr.mxu0 0.0
      %6413 = vmatpush1.msra.mxu0 0.0
      %6414 = vmatprep.subr.mxu0 0.0
      %6415 = vmatpush1.msra.mxu0 0.0
      %6416 = vmatprep.subr.mxu0 0.0
      %6417 = vmatpush1.msra.mxu0 0.0
      %6418 = vmatprep.subr.mxu0 0.0
      %6419 = vmatpush1.msra.mxu0 0.0
      %6420 = vmatprep.subr.mxu0 0.0
      %6421 = vmatpush1.msra.mxu0 0.0
      %6422 = vmatprep.subr.mxu0 0.0
      %6423 = vmatpush1.msra.mxu0 0.0
      %6424 = vmatprep.subr.mxu0 0.0
      %6425 = vmatpush1.msra.mxu0 0.0
      %6426 = vmatprep.subr.mxu0 0.0
      %6427 = vmatpush1.msra.mxu0 0.0
      %6428 = vmatprep.subr.mxu0 0.0
      %6429 = vmatpush1.msra.mxu0 0.0
      %6430 = vmatprep.subr.mxu0 0.0
      %6431 = vmatpush1.msra.mxu0 0.0
      %6432 = vmatprep.subr.mxu0 0.0
      %6433 = vmatpush1.msra.mxu0 0.0
      %6434 = vmatprep.mubr.f32.mxu0 0.0
      %6435 = vmatmul.mubr.f32.gmra.mrb[0].mxu0 %v6218
      %v6436 = vpop.f32.mrb[0].mxu0
      %v6437 = vadd.f32 0.0, %v6436
      %v6438 = vpop.f32.mrb[0].mxu0
      %6439 = vdwg.mxu0
      %v6440 = vmax.f32 %v6214, %v6287
      %v6441 = vmax.f32 %v6367, %v6437
      %vm6442 = vcmp.gt.f32.partialorder %v6287, %v6214
      %v6443 = vsel %vm6442, 1.0, 0.0
      %vm6444 = vcmp.gt.f32.partialorder %v6437, %v6367
      %v6445 = vsel %vm6444, 1.0, 0.0
      %vm6446 = vcmp.gt.f32.partialorder %v6441, %v6440
      %v6447 = vadd.f32 %v6445, 2.0
      %v6448 = vsel %vm6446, %v6447, %v6443
      %v6449 = vmax.f32 %v6440, %v6441
      %6450 = vst.msk [vmem:[%s394 + $0xb] sm:$0xff] %vm3137, %v6449
      %6451 = vst.msk [vmem:[%s399 + $0xb] sm:$0xff] %vm3137, %v6448
      %vm6454 = vcmask 1040384
      %v6455 = vrot.slane %v6071, 7
      %v6456 = vrot.slane %v6072, 7
      %v6457 = vsel %vm6454, %v6455, %v6456
      %v6458 = vrot.slane %v6073, 7
      %v6459 = vsel %vm6454, %v6456, %v6458
      %6462 = vmatprep.subr.mxu0 0.0
      %6463 = vmatpush1.msra.mxu0 %v6457
      %6464 = vmatprep.subr.mxu0 0.0
      %6465 = vmatpush1.msra.mxu0 %v6459
      %6466 = vmatprep.subr.mxu0 0.0
      %6467 = vmatpush1.msra.mxu0 0.0
      %6468 = vmatprep.subr.mxu0 0.0
      %6469 = vmatpush1.msra.mxu0 0.0
      %6470 = vmatprep.subr.mxu0 0.0
      %6471 = vmatpush1.msra.mxu0 0.0
      %6472 = vmatprep.subr.mxu0 0.0
      %6473 = vmatpush1.msra.mxu0 0.0
      %6474 = vmatprep.subr.mxu0 0.0
      %6475 = vmatpush1.msra.mxu0 0.0
      %6476 = vmatprep.subr.mxu0 0.0
      %6477 = vmatpush1.msra.mxu0 0.0
      %6478 = vmatprep.subr.mxu0 0.0
      %6479 = vmatpush1.msra.mxu0 0.0
      %6480 = vmatprep.subr.mxu0 0.0
      %6481 = vmatpush1.msra.mxu0 0.0
      %6482 = vmatprep.subr.mxu0 0.0
      %6483 = vmatpush1.msra.mxu0 0.0
      %6484 = vmatprep.subr.mxu0 0.0
      %6485 = vmatpush1.msra.mxu0 0.0
      %6486 = vmatprep.subr.mxu0 0.0
      %6487 = vmatpush1.msra.mxu0 0.0
      %6488 = vmatprep.subr.mxu0 0.0
      %6489 = vmatpush1.msra.mxu0 0.0
      %6490 = vmatprep.subr.mxu0 0.0
      %6491 = vmatpush1.msra.mxu0 0.0
      %6492 = vmatprep.subr.mxu0 0.0
      %6493 = vmatpush1.msra.mxu0 0.0
      %6494 = vmatprep.subr.mxu0 0.0
      %6495 = vmatpush1.msra.mxu0 0.0
      %6496 = vmatprep.subr.mxu0 0.0
      %6497 = vmatpush1.msra.mxu0 0.0
      %6498 = vmatprep.subr.mxu0 0.0
      %6499 = vmatpush1.msra.mxu0 0.0
      %6500 = vmatprep.subr.mxu0 0.0
      %6501 = vmatpush1.msra.mxu0 0.0
      %6502 = vmatprep.subr.mxu0 0.0
      %6503 = vmatpush1.msra.mxu0 0.0
      %6504 = vmatprep.subr.mxu0 0.0
      %6505 = vmatpush1.msra.mxu0 0.0
      %6506 = vmatprep.subr.mxu0 0.0
      %6507 = vmatpush1.msra.mxu0 0.0
      %6508 = vmatprep.subr.mxu0 0.0
      %6509 = vmatpush1.msra.mxu0 0.0
      %6510 = vmatprep.subr.mxu0 0.0
      %6511 = vmatpush1.msra.mxu0 0.0
      %6512 = vmatprep.subr.mxu0 0.0
      %6513 = vmatpush1.msra.mxu0 0.0
      %6514 = vmatprep.subr.mxu0 0.0
      %6515 = vmatpush1.msra.mxu0 0.0
      %6516 = vmatprep.subr.mxu0 0.0
      %6517 = vmatpush1.msra.mxu0 0.0
      %6518 = vmatprep.subr.mxu0 0.0
      %6519 = vmatpush1.msra.mxu0 0.0
      %6520 = vmatprep.subr.mxu0 0.0
      %6521 = vmatpush1.msra.mxu0 0.0
      %6522 = vmatprep.subr.mxu0 0.0
      %6523 = vmatpush1.msra.mxu0 0.0
      %6524 = vmatprep.subr.mxu0 0.0
      %6525 = vmatpush1.msra.mxu0 0.0
      %6526 = vmatprep.mubr.f32.mxu0 0.0
      %6527 = vmatmul.mubr.f32.gmra.mrb[0].mxu0 %v6145
      %v6528 = vpop.f32.mrb[0].mxu0
      %v6529 = vadd.f32 0.0, %v6528
      %v6530 = vpop.f32.mrb[0].mxu0
      %6531 = vdwg.mxu0
      %6532 = vmatprep.subr.mxu0 0.0
      %6533 = vmatpush1.msra.mxu0 %v6457
      %6534 = vmatprep.subr.mxu0 0.0
      %6535 = vmatpush1.msra.mxu0 %v6459
      %6536 = vmatprep.subr.mxu0 0.0
      %6537 = vmatpush1.msra.mxu0 0.0
      %6538 = vmatprep.subr.mxu0 0.0
      %6539 = vmatpush1.msra.mxu0 0.0
      %6540 = vmatprep.subr.mxu0 0.0
      %6541 = vmatpush1.msra.mxu0 0.0
      %6542 = vmatprep.subr.mxu0 0.0
      %6543 = vmatpush1.msra.mxu0 0.0
      %6544 = vmatprep.subr.mxu0 0.0
      %6545 = vmatpush1.msra.mxu0 0.0
      %6546 = vmatprep.subr.mxu0 0.0
      %6547 = vmatpush1.msra.mxu0 0.0
      %6548 = vmatprep.subr.mxu0 0.0
      %6549 = vmatpush1.msra.mxu0 0.0
      %6550 = vmatprep.subr.mxu0 0.0
      %6551 = vmatpush1.msra.mxu0 0.0
      %6552 = vmatprep.subr.mxu0 0.0
      %6553 = vmatpush1.msra.mxu0 0.0
      %6554 = vmatprep.subr.mxu0 0.0
      %6555 = vmatpush1.msra.mxu0 0.0
      %6556 = vmatprep.subr.mxu0 0.0
      %6557 = vmatpush1.msra.mxu0 0.0
      %6558 = vmatprep.subr.mxu0 0.0
      %6559 = vmatpush1.msra.mxu0 0.0
      %6560 = vmatprep.subr.mxu0 0.0
      %6561 = vmatpush1.msra.mxu0 0.0
      %6562 = vmatprep.subr.mxu0 0.0
      %6563 = vmatpush1.msra.mxu0 0.0
      %6564 = vmatprep.subr.mxu0 0.0
      %6565 = vmatpush1.msra.mxu0 0.0
      %6566 = vmatprep.subr.mxu0 0.0
      %6567 = vmatpush1.msra.mxu0 0.0
      %6568 = vmatprep.subr.mxu0 0.0
      %6569 = vmatpush1.msra.mxu0 0.0
      %6570 = vmatprep.subr.mxu0 0.0
      %6571 = vmatpush1.msra.mxu0 0.0
      %6572 = vmatprep.subr.mxu0 0.0
      %6573 = vmatpush1.msra.mxu0 0.0
      %6574 = vmatprep.subr.mxu0 0.0
      %6575 = vmatpush1.msra.mxu0 0.0
      %6576 = vmatprep.subr.mxu0 0.0
      %6577 = vmatpush1.msra.mxu0 0.0
      %6578 = vmatprep.subr.mxu0 0.0
      %6579 = vmatpush1.msra.mxu0 0.0
      %6580 = vmatprep.subr.mxu0 0.0
      %6581 = vmatpush1.msra.mxu0 0.0
      %6582 = vmatprep.subr.mxu0 0.0
      %6583 = vmatpush1.msra.mxu0 0.0
      %6584 = vmatprep.subr.mxu0 0.0
      %6585 = vmatpush1.msra.mxu0 0.0
      %6586 = vmatprep.subr.mxu0 0.0
      %6587 = vmatpush1.msra.mxu0 0.0
      %6588 = vmatprep.subr.mxu0 0.0
      %6589 = vmatpush1.msra.mxu0 0.0
      %6590 = vmatprep.subr.mxu0 0.0
      %6591 = vmatpush1.msra.mxu0 0.0
      %6592 = vmatprep.subr.mxu0 0.0
      %6593 = vmatpush1.msra.mxu0 0.0
      %6594 = vmatprep.subr.mxu0 0.0
      %6595 = vmatpush1.msra.mxu0 0.0
      %6596 = vmatprep.mubr.f32.mxu0 0.0
      %6597 = vmatmul.mubr.f32.gmra.mrb[0].mxu0 %v6218
      %v6598 = vpop.f32.mrb[0].mxu0
      %v6599 = vadd.f32 0.0, %v6598
      %v6600 = vpop.f32.mrb[0].mxu0
      %6601 = vdwg.mxu0
      %vm6605 = vcmask 1046528
      %v6606 = vrot.slane %v6074, 1
      %v6607 = vrot.slane %v6075, 1
      %v6608 = vsel %vm6605, %v6606, %v6607
      %v6609 = vrot.slane %v6076, 1
      %v6610 = vsel %vm6605, %v6607, %v6609
      %6613 = vmatprep.subr.mxu0 0.0
      %6614 = vmatpush1.msra.mxu0 %v6608
      %6615 = vmatprep.subr.mxu0 0.0
      %6616 = vmatpush1.msra.mxu0 %v6610
      %6617 = vmatprep.subr.mxu0 0.0
      %6618 = vmatpush1.msra.mxu0 0.0
      %6619 = vmatprep.subr.mxu0 0.0
      %6620 = vmatpush1.msra.mxu0 0.0
      %6621 = vmatprep.subr.mxu0 0.0
      %6622 = vmatpush1.msra.mxu0 0.0
      %6623 = vmatprep.subr.mxu0 0.0
      %6624 = vmatpush1.msra.mxu0 0.0
      %6625 = vmatprep.subr.mxu0 0.0
      %6626 = vmatpush1.msra.mxu0 0.0
      %6627 = vmatprep.subr.mxu0 0.0
      %6628 = vmatpush1.msra.mxu0 0.0
      %6629 = vmatprep.subr.mxu0 0.0
      %6630 = vmatpush1.msra.mxu0 0.0
      %6631 = vmatprep.subr.mxu0 0.0
      %6632 = vmatpush1.msra.mxu0 0.0
      %6633 = vmatprep.subr.mxu0 0.0
      %6634 = vmatpush1.msra.mxu0 0.0
      %6635 = vmatprep.subr.mxu0 0.0
      %6636 = vmatpush1.msra.mxu0 0.0
      %6637 = vmatprep.subr.mxu0 0.0
      %6638 = vmatpush1.msra.mxu0 0.0
      %6639 = vmatprep.subr.mxu0 0.0
      %6640 = vmatpush1.msra.mxu0 0.0
      %6641 = vmatprep.subr.mxu0 0.0
      %6642 = vmatpush1.msra.mxu0 0.0
      %6643 = vmatprep.subr.mxu0 0.0
      %6644 = vmatpush1.msra.mxu0 0.0
      %6645 = vmatprep.subr.mxu0 0.0
      %6646 = vmatpush1.msra.mxu0 0.0
      %6647 = vmatprep.subr.mxu0 0.0
      %6648 = vmatpush1.msra.mxu0 0.0
      %6649 = vmatprep.subr.mxu0 0.0
      %6650 = vmatpush1.msra.mxu0 0.0
      %6651 = vmatprep.subr.mxu0 0.0
      %6652 = vmatpush1.msra.mxu0 0.0
      %6653 = vmatprep.subr.mxu0 0.0
      %6654 = vmatpush1.msra.mxu0 0.0
      %6655 = vmatprep.subr.mxu0 0.0
      %6656 = vmatpush1.msra.mxu0 0.0
      %6657 = vmatprep.subr.mxu0 0.0
      %6658 = vmatpush1.msra.mxu0 0.0
      %6659 = vmatprep.subr.mxu0 0.0
      %6660 = vmatpush1.msra.mxu0 0.0
      %6661 = vmatprep.subr.mxu0 0.0
      %6662 = vmatpush1.msra.mxu0 0.0
      %6663 = vmatprep.subr.mxu0 0.0
      %6664 = vmatpush1.msra.mxu0 0.0
      %6665 = vmatprep.subr.mxu0 0.0
      %6666 = vmatpush1.msra.mxu0 0.0
      %6667 = vmatprep.subr.mxu0 0.0
      %6668 = vmatpush1.msra.mxu0 0.0
      %6669 = vmatprep.subr.mxu0 0.0
      %6670 = vmatpush1.msra.mxu0 0.0
      %6671 = vmatprep.subr.mxu0 0.0
      %6672 = vmatpush1.msra.mxu0 0.0
      %6673 = vmatprep.subr.mxu0 0.0
      %6674 = vmatpush1.msra.mxu0 0.0
      %6675 = vmatprep.subr.mxu0 0.0
      %6676 = vmatpush1.msra.mxu0 0.0
      %6677 = vmatprep.mubr.f32.mxu0 0.0
      %6678 = vmatmul.mubr.f32.gmra.mrb[0].mxu0 %v6145
      %v6679 = vpop.f32.mrb[0].mxu0
      %v6680 = vadd.f32 0.0, %v6679
      %v6681 = vpop.f32.mrb[0].mxu0
      %6682 = vdwg.mxu0
      %6683 = vmatprep.subr.mxu0 0.0
      %6684 = vmatpush1.msra.mxu0 %v6608
      %6685 = vmatprep.subr.mxu0 0.0
      %6686 = vmatpush1.msra.mxu0 %v6610
      %6687 = vmatprep.subr.mxu0 0.0
      %6688 = vmatpush1.msra.mxu0 0.0
      %6689 = vmatprep.subr.mxu0 0.0
      %6690 = vmatpush1.msra.mxu0 0.0
      %6691 = vmatprep.subr.mxu0 0.0
      %6692 = vmatpush1.msra.mxu0 0.0
      %6693 = vmatprep.subr.mxu0 0.0
      %6694 = vmatpush1.msra.mxu0 0.0
      %6695 = vmatprep.subr.mxu0 0.0
      %6696 = vmatpush1.msra.mxu0 0.0
      %6697 = vmatprep.subr.mxu0 0.0
      %6698 = vmatpush1.msra.mxu0 0.0
      %6699 = vmatprep.subr.mxu0 0.0
      %6700 = vmatpush1.msra.mxu0 0.0
      %6701 = vmatprep.subr.mxu0 0.0
      %6702 = vmatpush1.msra.mxu0 0.0
      %6703 = vmatprep.subr.mxu0 0.0
      %6704 = vmatpush1.msra.mxu0 0.0
      %6705 = vmatprep.subr.mxu0 0.0
      %6706 = vmatpush1.msra.mxu0 0.0
      %6707 = vmatprep.subr.mxu0 0.0
      %6708 = vmatpush1.msra.mxu0 0.0
      %6709 = vmatprep.subr.mxu0 0.0
      %6710 = vmatpush1.msra.mxu0 0.0
      %6711 = vmatprep.subr.mxu0 0.0
      %6712 = vmatpush1.msra.mxu0 0.0
      %6713 = vmatprep.subr.mxu0 0.0
      %6714 = vmatpush1.msra.mxu0 0.0
      %6715 = vmatprep.subr.mxu0 0.0
      %6716 = vmatpush1.msra.mxu0 0.0
      %6717 = vmatprep.subr.mxu0 0.0
      %6718 = vmatpush1.msra.mxu0 0.0
      %6719 = vmatprep.subr.mxu0 0.0
      %6720 = vmatpush1.msra.mxu0 0.0
      %6721 = vmatprep.subr.mxu0 0.0
      %6722 = vmatpush1.msra.mxu0 0.0
      %6723 = vmatprep.subr.mxu0 0.0
      %6724 = vmatpush1.msra.mxu0 0.0
      %6725 = vmatprep.subr.mxu0 0.0
      %6726 = vmatpush1.msra.mxu0 0.0
      %6727 = vmatprep.subr.mxu0 0.0
      %6728 = vmatpush1.msra.mxu0 0.0
      %6729 = vmatprep.subr.mxu0 0.0
      %6730 = vmatpush1.msra.mxu0 0.0
      %6731 = vmatprep.subr.mxu0 0.0
      %6732 = vmatpush1.msra.mxu0 0.0
      %6733 = vmatprep.subr.mxu0 0.0
      %6734 = vmatpush1.msra.mxu0 0.0
      %6735 = vmatprep.subr.mxu0 0.0
      %6736 = vmatpush1.msra.mxu0 0.0
      %6737 = vmatprep.subr.mxu0 0.0
      %6738 = vmatpush1.msra.mxu0 0.0
      %6739 = vmatprep.subr.mxu0 0.0
      %6740 = vmatpush1.msra.mxu0 0.0
      %6741 = vmatprep.subr.mxu0 0.0
      %6742 = vmatpush1.msra.mxu0 0.0
      %6743 = vmatprep.subr.mxu0 0.0
      %6744 = vmatpush1.msra.mxu0 0.0
      %6745 = vmatprep.subr.mxu0 0.0
      %6746 = vmatpush1.msra.mxu0 0.0
      %6747 = vmatprep.mubr.f32.mxu0 0.0
      %6748 = vmatmul.mubr.f32.gmra.mrb[0].mxu0 %v6218
      %v6749 = vpop.f32.mrb[0].mxu0
      %v6750 = vadd.f32 0.0, %v6749
      %v6751 = vpop.f32.mrb[0].mxu0
      %6752 = vdwg.mxu0
      %v6753 = vmax.f32 %v6529, %v6599
      %v6754 = vmax.f32 %v6680, %v6750
      %vm6755 = vcmp.gt.f32.partialorder %v6599, %v6529
      %v6756 = vsel %vm6755, 1.0, 0.0
      %vm6757 = vcmp.gt.f32.partialorder %v6750, %v6680
      %v6758 = vsel %vm6757, 1.0, 0.0
      %vm6759 = vcmp.gt.f32.partialorder %v6754, %v6753
      %v6760 = vadd.f32 %v6758, 2.0
      %v6761 = vsel %vm6759, %v6760, %v6756
      %v6762 = vmax.f32 %v6753, %v6754
      %6763 = vst.msk [vmem:[%s394 + $0x15] sm:$0xff] %vm3137, %v6762
      %6764 = vst.msk [vmem:[%s399 + $0x15] sm:$0xff] %vm3137, %v6761
      %v6767 = vrot.slane %v6076, 3
      %v6768 = vrot.slane %v6077, 3
      %v6769 = vsel %vm6135, %v6767, %v6768
      %v6770 = vrot.slane %v6078, 3
      %v6771 = vsel %vm6135, %v6768, %v6770
      %6774 = vmatprep.subr.mxu0 0.0
      %6775 = vmatpush1.msra.mxu0 %v6769
      %6776 = vmatprep.subr.mxu0 0.0
      %6777 = vmatpush1.msra.mxu0 %v6771
      %6778 = vmatprep.subr.mxu0 0.0
      %6779 = vmatpush1.msra.mxu0 0.0
      %6780 = vmatprep.subr.mxu0 0.0
      %6781 = vmatpush1.msra.mxu0 0.0
      %6782 = vmatprep.subr.mxu0 0.0
      %6783 = vmatpush1.msra.mxu0 0.0
      %6784 = vmatprep.subr.mxu0 0.0
      %6785 = vmatpush1.msra.mxu0 0.0
      %6786 = vmatprep.subr.mxu0 0.0
      %6787 = vmatpush1.msra.mxu0 0.0
      %6788 = vmatprep.subr.mxu0 0.0
      %6789 = vmatpush1.msra.mxu0 0.0
      %6790 = vmatprep.subr.mxu0 0.0
      %6791 = vmatpush1.msra.mxu0 0.0
      %6792 = vmatprep.subr.mxu0 0.0
      %6793 = vmatpush1.msra.mxu0 0.0
      %6794 = vmatprep.subr.mxu0 0.0
      %6795 = vmatpush1.msra.mxu0 0.0
      %6796 = vmatprep.subr.mxu0 0.0
      %6797 = vmatpush1.msra.mxu0 0.0
      %6798 = vmatprep.subr.mxu0 0.0
      %6799 = vmatpush1.msra.mxu0 0.0
      %6800 = vmatprep.subr.mxu0 0.0
      %6801 = vmatpush1.msra.mxu0 0.0
      %6802 = vmatprep.subr.mxu0 0.0
      %6803 = vmatpush1.msra.mxu0 0.0
      %6804 = vmatprep.subr.mxu0 0.0
      %6805 = vmatpush1.msra.mxu0 0.0
      %6806 = vmatprep.subr.mxu0 0.0
      %6807 = vmatpush1.msra.mxu0 0.0
      %6808 = vmatprep.subr.mxu0 0.0
      %6809 = vmatpush1.msra.mxu0 0.0
      %6810 = vmatprep.subr.mxu0 0.0
      %6811 = vmatpush1.msra.mxu0 0.0
      %6812 = vmatprep.subr.mxu0 0.0
      %6813 = vmatpush1.msra.mxu0 0.0
      %6814 = vmatprep.subr.mxu0 0.0
      %6815 = vmatpush1.msra.mxu0 0.0
      %6816 = vmatprep.subr.mxu0 0.0
      %6817 = vmatpush1.msra.mxu0 0.0
      %6818 = vmatprep.subr.mxu0 0.0
      %6819 = vmatpush1.msra.mxu0 0.0
      %6820 = vmatprep.subr.mxu0 0.0
      %6821 = vmatpush1.msra.mxu0 0.0
      %6822 = vmatprep.subr.mxu0 0.0
      %6823 = vmatpush1.msra.mxu0 0.0
      %6824 = vmatprep.subr.mxu0 0.0
      %6825 = vmatpush1.msra.mxu0 0.0
      %6826 = vmatprep.subr.mxu0 0.0
      %6827 = vmatpush1.msra.mxu0 0.0
      %6828 = vmatprep.subr.mxu0 0.0
      %6829 = vmatpush1.msra.mxu0 0.0
      %6830 = vmatprep.subr.mxu0 0.0
      %6831 = vmatpush1.msra.mxu0 0.0
      %6832 = vmatprep.subr.mxu0 0.0
      %6833 = vmatpush1.msra.mxu0 0.0
      %6834 = vmatprep.subr.mxu0 0.0
      %6835 = vmatpush1.msra.mxu0 0.0
      %6836 = vmatprep.subr.mxu0 0.0
      %6837 = vmatpush1.msra.mxu0 0.0
      %6838 = vmatprep.mubr.f32.mxu0 0.0
      %6839 = vmatmul.mubr.f32.gmra.mrb[0].mxu0 %v6145
      %v6840 = vpop.f32.mrb[0].mxu0
      %v6841 = vadd.f32 0.0, %v6840
      %v6842 = vpop.f32.mrb[0].mxu0
      %6843 = vdwg.mxu0
      %6844 = vmatprep.subr.mxu0 0.0
      %6845 = vmatpush1.msra.mxu0 %v6769
      %6846 = vmatprep.subr.mxu0 0.0
      %6847 = vmatpush1.msra.mxu0 %v6771
      %6848 = vmatprep.subr.mxu0 0.0
      %6849 = vmatpush1.msra.mxu0 0.0
      %6850 = vmatprep.subr.mxu0 0.0
      %6851 = vmatpush1.msra.mxu0 0.0
      %6852 = vmatprep.subr.mxu0 0.0
      %6853 = vmatpush1.msra.mxu0 0.0
      %6854 = vmatprep.subr.mxu0 0.0
      %6855 = vmatpush1.msra.mxu0 0.0
      %6856 = vmatprep.subr.mxu0 0.0
      %6857 = vmatpush1.msra.mxu0 0.0
      %6858 = vmatprep.subr.mxu0 0.0
      %6859 = vmatpush1.msra.mxu0 0.0
      %6860 = vmatprep.subr.mxu0 0.0
      %6861 = vmatpush1.msra.mxu0 0.0
      %6862 = vmatprep.subr.mxu0 0.0
      %6863 = vmatpush1.msra.mxu0 0.0
      %6864 = vmatprep.subr.mxu0 0.0
      %6865 = vmatpush1.msra.mxu0 0.0
      %6866 = vmatprep.subr.mxu0 0.0
      %6867 = vmatpush1.msra.mxu0 0.0
      %6868 = vmatprep.subr.mxu0 0.0
      %6869 = vmatpush1.msra.mxu0 0.0
      %6870 = vmatprep.subr.mxu0 0.0
      %6871 = vmatpush1.msra.mxu0 0.0
      %6872 = vmatprep.subr.mxu0 0.0
      %6873 = vmatpush1.msra.mxu0 0.0
      %6874 = vmatprep.subr.mxu0 0.0
      %6875 = vmatpush1.msra.mxu0 0.0
      %6876 = vmatprep.subr.mxu0 0.0
      %6877 = vmatpush1.msra.mxu0 0.0
      %6878 = vmatprep.subr.mxu0 0.0
      %6879 = vmatpush1.msra.mxu0 0.0
      %6880 = vmatprep.subr.mxu0 0.0
      %6881 = vmatpush1.msra.mxu0 0.0
      %6882 = vmatprep.subr.mxu0 0.0
      %6883 = vmatpush1.msra.mxu0 0.0
      %6884 = vmatprep.subr.mxu0 0.0
      %6885 = vmatpush1.msra.mxu0 0.0
      %6886 = vmatprep.subr.mxu0 0.0
      %6887 = vmatpush1.msra.mxu0 0.0
      %6888 = vmatprep.subr.mxu0 0.0
      %6889 = vmatpush1.msra.mxu0 0.0
      %6890 = vmatprep.subr.mxu0 0.0
      %6891 = vmatpush1.msra.mxu0 0.0
      %6892 = vmatprep.subr.mxu0 0.0
      %6893 = vmatpush1.msra.mxu0 0.0
      %6894 = vmatprep.subr.mxu0 0.0
      %6895 = vmatpush1.msra.mxu0 0.0
      %6896 = vmatprep.subr.mxu0 0.0
      %6897 = vmatpush1.msra.mxu0 0.0
      %6898 = vmatprep.subr.mxu0 0.0
      %6899 = vmatpush1.msra.mxu0 0.0
      %6900 = vmatprep.subr.mxu0 0.0
      %6901 = vmatpush1.msra.mxu0 0.0
      %6902 = vmatprep.subr.mxu0 0.0
      %6903 = vmatpush1.msra.mxu0 0.0
      %6904 = vmatprep.subr.mxu0 0.0
      %6905 = vmatpush1.msra.mxu0 0.0
      %6906 = vmatprep.subr.mxu0 0.0
      %6907 = vmatpush1.msra.mxu0 0.0
      %6908 = vmatprep.mubr.f32.mxu0 0.0
      %6909 = vmatmul.mubr.f32.gmra.mrb[0].mxu0 %v6218
      %v6910 = vpop.f32.mrb[0].mxu0
      %v6911 = vadd.f32 0.0, %v6910
      %v6912 = vpop.f32.mrb[0].mxu0
      %6913 = vdwg.mxu0
      %v6916 = vrot.slane %v6078, 5
      %v6917 = vrot.slane %v6079, 5
      %v6918 = vsel %vm6292, %v6916, %v6917
      %v6919 = vrot.slane %v6080, 5
      %v6920 = vsel %vm6292, %v6917, %v6919
      %6923 = vmatprep.subr.mxu0 0.0
      %6924 = vmatpush1.msra.mxu0 %v6918
      %6925 = vmatprep.subr.mxu0 0.0
      %6926 = vmatpush1.msra.mxu0 %v6920
      %6927 = vmatprep.subr.mxu0 0.0
      %6928 = vmatpush1.msra.mxu0 0.0
      %6929 = vmatprep.subr.mxu0 0.0
      %6930 = vmatpush1.msra.mxu0 0.0
      %6931 = vmatprep.subr.mxu0 0.0
      %6932 = vmatpush1.msra.mxu0 0.0
      %6933 = vmatprep.subr.mxu0 0.0
      %6934 = vmatpush1.msra.mxu0 0.0
      %6935 = vmatprep.subr.mxu0 0.0
      %6936 = vmatpush1.msra.mxu0 0.0
      %6937 = vmatprep.subr.mxu0 0.0
      %6938 = vmatpush1.msra.mxu0 0.0
      %6939 = vmatprep.subr.mxu0 0.0
      %6940 = vmatpush1.msra.mxu0 0.0
      %6941 = vmatprep.subr.mxu0 0.0
      %6942 = vmatpush1.msra.mxu0 0.0
      %6943 = vmatprep.subr.mxu0 0.0
      %6944 = vmatpush1.msra.mxu0 0.0
      %6945 = vmatprep.subr.mxu0 0.0
      %6946 = vmatpush1.msra.mxu0 0.0
      %6947 = vmatprep.subr.mxu0 0.0
      %6948 = vmatpush1.msra.mxu0 0.0
      %6949 = vmatprep.subr.mxu0 0.0
      %6950 = vmatpush1.msra.mxu0 0.0
      %6951 = vmatprep.subr.mxu0 0.0
      %6952 = vmatpush1.msra.mxu0 0.0
      %6953 = vmatprep.subr.mxu0 0.0
      %6954 = vmatpush1.msra.mxu0 0.0
      %6955 = vmatprep.subr.mxu0 0.0
      %6956 = vmatpush1.msra.mxu0 0.0
      %6957 = vmatprep.subr.mxu0 0.0
      %6958 = vmatpush1.msra.mxu0 0.0
      %6959 = vmatprep.subr.mxu0 0.0
      %6960 = vmatpush1.msra.mxu0 0.0
      %6961 = vmatprep.subr.mxu0 0.0
      %6962 = vmatpush1.msra.mxu0 0.0
      %6963 = vmatprep.subr.mxu0 0.0
      %6964 = vmatpush1.msra.mxu0 0.0
      %6965 = vmatprep.subr.mxu0 0.0
      %6966 = vmatpush1.msra.mxu0 0.0
      %6967 = vmatprep.subr.mxu0 0.0
      %6968 = vmatpush1.msra.mxu0 0.0
      %6969 = vmatprep.subr.mxu0 0.0
      %6970 = vmatpush1.msra.mxu0 0.0
      %6971 = vmatprep.subr.mxu0 0.0
      %6972 = vmatpush1.msra.mxu0 0.0
      %6973 = vmatprep.subr.mxu0 0.0
      %6974 = vmatpush1.msra.mxu0 0.0
      %6975 = vmatprep.subr.mxu0 0.0
      %6976 = vmatpush1.msra.mxu0 0.0
      %6977 = vmatprep.subr.mxu0 0.0
      %6978 = vmatpush1.msra.mxu0 0.0
      %6979 = vmatprep.subr.mxu0 0.0
      %6980 = vmatpush1.msra.mxu0 0.0
      %6981 = vmatprep.subr.mxu0 0.0
      %6982 = vmatpush1.msra.mxu0 0.0
      %6983 = vmatprep.subr.mxu0 0.0
      %6984 = vmatpush1.msra.mxu0 0.0
      %6985 = vmatprep.subr.mxu0 0.0
      %6986 = vmatpush1.msra.mxu0 0.0
      %6987 = vmatprep.mubr.f32.mxu0 0.0
      %6988 = vmatmul.mubr.f32.gmra.mrb[0].mxu0 %v6145
      %v6989 = vpop.f32.mrb[0].mxu0
      %v6990 = vadd.f32 0.0, %v6989
      %v6991 = vpop.f32.mrb[0].mxu0
      %6992 = vdwg.mxu0
      %6993 = vmatprep.subr.mxu0 0.0
      %6994 = vmatpush1.msra.mxu0 %v6918
      %6995 = vmatprep.subr.mxu0 0.0
      %6996 = vmatpush1.msra.mxu0 %v6920
      %6997 = vmatprep.subr.mxu0 0.0
      %6998 = vmatpush1.msra.mxu0 0.0
      %6999 = vmatprep.subr.mxu0 0.0
      %7000 = vmatpush1.msra.mxu0 0.0
      %7001 = vmatprep.subr.mxu0 0.0
      %7002 = vmatpush1.msra.mxu0 0.0
      %7003 = vmatprep.subr.mxu0 0.0
      %7004 = vmatpush1.msra.mxu0 0.0
      %7005 = vmatprep.subr.mxu0 0.0
      %7006 = vmatpush1.msra.mxu0 0.0
      %7007 = vmatprep.subr.mxu0 0.0
      %7008 = vmatpush1.msra.mxu0 0.0
      %7009 = vmatprep.subr.mxu0 0.0
      %7010 = vmatpush1.msra.mxu0 0.0
      %7011 = vmatprep.subr.mxu0 0.0
      %7012 = vmatpush1.msra.mxu0 0.0
      %7013 = vmatprep.subr.mxu0 0.0
      %7014 = vmatpush1.msra.mxu0 0.0
      %7015 = vmatprep.subr.mxu0 0.0
      %7016 = vmatpush1.msra.mxu0 0.0
      %7017 = vmatprep.subr.mxu0 0.0
      %7018 = vmatpush1.msra.mxu0 0.0
      %7019 = vmatprep.subr.mxu0 0.0
      %7020 = vmatpush1.msra.mxu0 0.0
      %7021 = vmatprep.subr.mxu0 0.0
      %7022 = vmatpush1.msra.mxu0 0.0
      %7023 = vmatprep.subr.mxu0 0.0
      %7024 = vmatpush1.msra.mxu0 0.0
      %7025 = vmatprep.subr.mxu0 0.0
      %7026 = vmatpush1.msra.mxu0 0.0
      %7027 = vmatprep.subr.mxu0 0.0
      %7028 = vmatpush1.msra.mxu0 0.0
      %7029 = vmatprep.subr.mxu0 0.0
      %7030 = vmatpush1.msra.mxu0 0.0
      %7031 = vmatprep.subr.mxu0 0.0
      %7032 = vmatpush1.msra.mxu0 0.0
      %7033 = vmatprep.subr.mxu0 0.0
      %7034 = vmatpush1.msra.mxu0 0.0
      %7035 = vmatprep.subr.mxu0 0.0
      %7036 = vmatpush1.msra.mxu0 0.0
      %7037 = vmatprep.subr.mxu0 0.0
      %7038 = vmatpush1.msra.mxu0 0.0
      %7039 = vmatprep.subr.mxu0 0.0
      %7040 = vmatpush1.msra.mxu0 0.0
      %7041 = vmatprep.subr.mxu0 0.0
      %7042 = vmatpush1.msra.mxu0 0.0
      %7043 = vmatprep.subr.mxu0 0.0
      %7044 = vmatpush1.msra.mxu0 0.0
      %7045 = vmatprep.subr.mxu0 0.0
      %7046 = vmatpush1.msra.mxu0 0.0
      %7047 = vmatprep.subr.mxu0 0.0
      %7048 = vmatpush1.msra.mxu0 0.0
      %7049 = vmatprep.subr.mxu0 0.0
      %7050 = vmatpush1.msra.mxu0 0.0
      %7051 = vmatprep.subr.mxu0 0.0
      %7052 = vmatpush1.msra.mxu0 0.0
      %7053 = vmatprep.subr.mxu0 0.0
      %7054 = vmatpush1.msra.mxu0 0.0
      %7055 = vmatprep.subr.mxu0 0.0
      %7056 = vmatpush1.msra.mxu0 0.0
      %7057 = vmatprep.mubr.f32.mxu0 0.0
      %7058 = vmatmul.mubr.f32.gmra.mrb[0].mxu0 %v6218
      %v7059 = vpop.f32.mrb[0].mxu0
      %v7060 = vadd.f32 0.0, %v7059
      %v7061 = vpop.f32.mrb[0].mxu0
      %7062 = vdwg.mxu0
      %v7063 = vmax.f32 %v6841, %v6911
      %v7064 = vmax.f32 %v6990, %v7060
      %vm7065 = vcmp.gt.f32.partialorder %v6911, %v6841
      %v7066 = vsel %vm7065, 1.0, 0.0
      %vm7067 = vcmp.gt.f32.partialorder %v7060, %v6990
      %v7068 = vsel %vm7067, 1.0, 0.0
      %vm7069 = vcmp.gt.f32.partialorder %v7064, %v7063
      %v7070 = vadd.f32 %v7068, 2.0
      %v7071 = vsel %vm7069, %v7070, %v7066
      %v7072 = vmax.f32 %v7063, %v7064
      %7073 = vst.msk [vmem:[%s394 + $0x1f] sm:$0xff] %vm3137, %v7072
      %7074 = vst.msk [vmem:[%s399 + $0x1f] sm:$0xff] %vm3137, %v7071
      %v7077 = vrot.slane %v6080, 7
      %v7078 = vrot.slane %v6081, 7
      %v7079 = vsel %vm6454, %v7077, %v7078
      %v7080 = vrot.slane %v6082, 7
      %v7081 = vsel %vm6454, %v7078, %v7080
      %7084 = vmatprep.subr.mxu0 0.0
      %7085 = vmatpush1.msra.mxu0 %v7079
      %7086 = vmatprep.subr.mxu0 0.0
      %7087 = vmatpush1.msra.mxu0 %v7081
      %7088 = vmatprep.subr.mxu0 0.0
      %7089 = vmatpush1.msra.mxu0 0.0
      %7090 = vmatprep.subr.mxu0 0.0
      %7091 = vmatpush1.msra.mxu0 0.0
      %7092 = vmatprep.subr.mxu0 0.0
      %7093 = vmatpush1.msra.mxu0 0.0
      %7094 = vmatprep.subr.mxu0 0.0
      %7095 = vmatpush1.msra.mxu0 0.0
      %7096 = vmatprep.subr.mxu0 0.0
      %7097 = vmatpush1.msra.mxu0 0.0
      %7098 = vmatprep.subr.mxu0 0.0
      %7099 = vmatpush1.msra.mxu0 0.0
      %7100 = vmatprep.subr.mxu0 0.0
      %7101 = vmatpush1.msra.mxu0 0.0
      %7102 = vmatprep.subr.mxu0 0.0
      %7103 = vmatpush1.msra.mxu0 0.0
      %7104 = vmatprep.subr.mxu0 0.0
      %7105 = vmatpush1.msra.mxu0 0.0
      %7106 = vmatprep.subr.mxu0 0.0
      %7107 = vmatpush1.msra.mxu0 0.0
      %7108 = vmatprep.subr.mxu0 0.0
      %7109 = vmatpush1.msra.mxu0 0.0
      %7110 = vmatprep.subr.mxu0 0.0
      %7111 = vmatpush1.msra.mxu0 0.0
      %7112 = vmatprep.subr.mxu0 0.0
      %7113 = vmatpush1.msra.mxu0 0.0
      %7114 = vmatprep.subr.mxu0 0.0
      %7115 = vmatpush1.msra.mxu0 0.0
      %7116 = vmatprep.subr.mxu0 0.0
      %7117 = vmatpush1.msra.mxu0 0.0
      %7118 = vmatprep.subr.mxu0 0.0
      %7119 = vmatpush1.msra.mxu0 0.0
      %7120 = vmatprep.subr.mxu0 0.0
      %7121 = vmatpush1.msra.mxu0 0.0
      %7122 = vmatprep.subr.mxu0 0.0
      %7123 = vmatpush1.msra.mxu0 0.0
      %7124 = vmatprep.subr.mxu0 0.0
      %7125 = vmatpush1.msra.mxu0 0.0
      %7126 = vmatprep.subr.mxu0 0.0
      %7127 = vmatpush1.msra.mxu0 0.0
      %7128 = vmatprep.subr.mxu0 0.0
      %7129 = vmatpush1.msra.mxu0 0.0
      %7130 = vmatprep.subr.mxu0 0.0
      %7131 = vmatpush1.msra.mxu0 0.0
      %7132 = vmatprep.subr.mxu0 0.0
      %7133 = vmatpush1.msra.mxu0 0.0
      %7134 = vmatprep.subr.mxu0 0.0
      %7135 = vmatpush1.msra.mxu0 0.0
      %7136 = vmatprep.subr.mxu0 0.0
      %7137 = vmatpush1.msra.mxu0 0.0
      %7138 = vmatprep.subr.mxu0 0.0
      %7139 = vmatpush1.msra.mxu0 0.0
      %7140 = vmatprep.subr.mxu0 0.0
      %7141 = vmatpush1.msra.mxu0 0.0
      %7142 = vmatprep.subr.mxu0 0.0
      %7143 = vmatpush1.msra.mxu0 0.0
      %7144 = vmatprep.subr.mxu0 0.0
      %7145 = vmatpush1.msra.mxu0 0.0
      %7146 = vmatprep.subr.mxu0 0.0
      %7147 = vmatpush1.msra.mxu0 0.0
      %7148 = vmatprep.mubr.f32.mxu0 0.0
      %7149 = vmatmul.mubr.f32.gmra.mrb[0].mxu0 %v6145
      %v7150 = vpop.f32.mrb[0].mxu0
      %v7151 = vadd.f32 0.0, %v7150
      %v7152 = vpop.f32.mrb[0].mxu0
      %7153 = vdwg.mxu0
      %7154 = vmatprep.subr.mxu0 0.0
      %7155 = vmatpush1.msra.mxu0 %v7079
      %7156 = vmatprep.subr.mxu0 0.0
      %7157 = vmatpush1.msra.mxu0 %v7081
      %7158 = vmatprep.subr.mxu0 0.0
      %7159 = vmatpush1.msra.mxu0 0.0
      %7160 = vmatprep.subr.mxu0 0.0
      %7161 = vmatpush1.msra.mxu0 0.0
      %7162 = vmatprep.subr.mxu0 0.0
      %7163 = vmatpush1.msra.mxu0 0.0
      %7164 = vmatprep.subr.mxu0 0.0
      %7165 = vmatpush1.msra.mxu0 0.0
      %7166 = vmatprep.subr.mxu0 0.0
      %7167 = vmatpush1.msra.mxu0 0.0
      %7168 = vmatprep.subr.mxu0 0.0
      %7169 = vmatpush1.msra.mxu0 0.0
      %7170 = vmatprep.subr.mxu0 0.0
      %7171 = vmatpush1.msra.mxu0 0.0
      %7172 = vmatprep.subr.mxu0 0.0
      %7173 = vmatpush1.msra.mxu0 0.0
      %7174 = vmatprep.subr.mxu0 0.0
      %7175 = vmatpush1.msra.mxu0 0.0
      %7176 = vmatprep.subr.mxu0 0.0
      %7177 = vmatpush1.msra.mxu0 0.0
      %7178 = vmatprep.subr.mxu0 0.0
      %7179 = vmatpush1.msra.mxu0 0.0
      %7180 = vmatprep.subr.mxu0 0.0
      %7181 = vmatpush1.msra.mxu0 0.0
      %7182 = vmatprep.subr.mxu0 0.0
      %7183 = vmatpush1.msra.mxu0 0.0
      %7184 = vmatprep.subr.mxu0 0.0
      %7185 = vmatpush1.msra.mxu0 0.0
      %7186 = vmatprep.subr.mxu0 0.0
      %7187 = vmatpush1.msra.mxu0 0.0
      %7188 = vmatprep.subr.mxu0 0.0
      %7189 = vmatpush1.msra.mxu0 0.0
      %7190 = vmatprep.subr.mxu0 0.0
      %7191 = vmatpush1.msra.mxu0 0.0
      %7192 = vmatprep.subr.mxu0 0.0
      %7193 = vmatpush1.msra.mxu0 0.0
      %7194 = vmatprep.subr.mxu0 0.0
      %7195 = vmatpush1.msra.mxu0 0.0
      %7196 = vmatprep.subr.mxu0 0.0
      %7197 = vmatpush1.msra.mxu0 0.0
      %7198 = vmatprep.subr.mxu0 0.0
      %7199 = vmatpush1.msra.mxu0 0.0
      %7200 = vmatprep.subr.mxu0 0.0
      %7201 = vmatpush1.msra.mxu0 0.0
      %7202 = vmatprep.subr.mxu0 0.0
      %7203 = vmatpush1.msra.mxu0 0.0
      %7204 = vmatprep.subr.mxu0 0.0
      %7205 = vmatpush1.msra.mxu0 0.0
      %7206 = vmatprep.subr.mxu0 0.0
      %7207 = vmatpush1.msra.mxu0 0.0
      %7208 = vmatprep.subr.mxu0 0.0
      %7209 = vmatpush1.msra.mxu0 0.0
      %7210 = vmatprep.subr.mxu0 0.0
      %7211 = vmatpush1.msra.mxu0 0.0
      %7212 = vmatprep.subr.mxu0 0.0
      %7213 = vmatpush1.msra.mxu0 0.0
      %7214 = vmatprep.subr.mxu0 0.0
      %7215 = vmatpush1.msra.mxu0 0.0
      %7216 = vmatprep.subr.mxu0 0.0
      %7217 = vmatpush1.msra.mxu0 0.0
      %7218 = vmatprep.mubr.f32.mxu0 0.0
      %7219 = vmatmul.mubr.f32.gmra.mrb[0].mxu0 %v6218
      %v7220 = vpop.f32.mrb[0].mxu0
      %v7221 = vadd.f32 0.0, %v7220
      %v7222 = vpop.f32.mrb[0].mxu0
      %7223 = vdwg.mxu0
      %v7227 = vrot.slane %v6083, 1
      %v7228 = vrot.slane %v6084, 1
      %v7229 = vsel %vm6605, %v7227, %v7228
      %v7230 = vrot.slane %v6085, 1
      %v7231 = vsel %vm6605, %v7228, %v7230
      %7234 = vmatprep.subr.mxu0 0.0
      %7235 = vmatpush1.msra.mxu0 %v7229
      %7236 = vmatprep.subr.mxu0 0.0
      %7237 = vmatpush1.msra.mxu0 %v7231
      %7238 = vmatprep.subr.mxu0 0.0
      %7239 = vmatpush1.msra.mxu0 0.0
      %7240 = vmatprep.subr.mxu0 0.0
      %7241 = vmatpush1.msra.mxu0 0.0
      %7242 = vmatprep.subr.mxu0 0.0
      %7243 = vmatpush1.msra.mxu0 0.0
      %7244 = vmatprep.subr.mxu0 0.0
      %7245 = vmatpush1.msra.mxu0 0.0
      %7246 = vmatprep.subr.mxu0 0.0
      %7247 = vmatpush1.msra.mxu0 0.0
      %7248 = vmatprep.subr.mxu0 0.0
      %7249 = vmatpush1.msra.mxu0 0.0
      %7250 = vmatprep.subr.mxu0 0.0
      %7251 = vmatpush1.msra.mxu0 0.0
      %7252 = vmatprep.subr.mxu0 0.0
      %7253 = vmatpush1.msra.mxu0 0.0
      %7254 = vmatprep.subr.mxu0 0.0
      %7255 = vmatpush1.msra.mxu0 0.0
      %7256 = vmatprep.subr.mxu0 0.0
      %7257 = vmatpush1.msra.mxu0 0.0
      %7258 = vmatprep.subr.mxu0 0.0
      %7259 = vmatpush1.msra.mxu0 0.0
      %7260 = vmatprep.subr.mxu0 0.0
      %7261 = vmatpush1.msra.mxu0 0.0
      %7262 = vmatprep.subr.mxu0 0.0
      %7263 = vmatpush1.msra.mxu0 0.0
      %7264 = vmatprep.subr.mxu0 0.0
      %7265 = vmatpush1.msra.mxu0 0.0
      %7266 = vmatprep.subr.mxu0 0.0
      %7267 = vmatpush1.msra.mxu0 0.0
      %7268 = vmatprep.subr.mxu0 0.0
      %7269 = vmatpush1.msra.mxu0 0.0
      %7270 = vmatprep.subr.mxu0 0.0
      %7271 = vmatpush1.msra.mxu0 0.0
      %7272 = vmatprep.subr.mxu0 0.0
      %7273 = vmatpush1.msra.mxu0 0.0
      %7274 = vmatprep.subr.mxu0 0.0
      %7275 = vmatpush1.msra.mxu0 0.0
      %7276 = vmatprep.subr.mxu0 0.0
      %7277 = vmatpush1.msra.mxu0 0.0
      %7278 = vmatprep.subr.mxu0 0.0
      %7279 = vmatpush1.msra.mxu0 0.0
      %7280 = vmatprep.subr.mxu0 0.0
      %7281 = vmatpush1.msra.mxu0 0.0
      %7282 = vmatprep.subr.mxu0 0.0
      %7283 = vmatpush1.msra.mxu0 0.0
      %7284 = vmatprep.subr.mxu0 0.0
      %7285 = vmatpush1.msra.mxu0 0.0
      %7286 = vmatprep.subr.mxu0 0.0
      %7287 = vmatpush1.msra.mxu0 0.0
      %7288 = vmatprep.subr.mxu0 0.0
      %7289 = vmatpush1.msra.mxu0 0.0
      %7290 = vmatprep.subr.mxu0 0.0
      %7291 = vmatpush1.msra.mxu0 0.0
      %7292 = vmatprep.subr.mxu0 0.0
      %7293 = vmatpush1.msra.mxu0 0.0
      %7294 = vmatprep.subr.mxu0 0.0
      %7295 = vmatpush1.msra.mxu0 0.0
      %7296 = vmatprep.subr.mxu0 0.0
      %7297 = vmatpush1.msra.mxu0 0.0
      %7298 = vmatprep.mubr.f32.mxu0 0.0
      %7299 = vmatmul.mubr.f32.gmra.mrb[0].mxu0 %v6145
      %v7300 = vpop.f32.mrb[0].mxu0
      %v7301 = vadd.f32 0.0, %v7300
      %v7302 = vpop.f32.mrb[0].mxu0
      %7303 = vdwg.mxu0
      %7304 = vmatprep.subr.mxu0 0.0
      %7305 = vmatpush1.msra.mxu0 %v7229
      %7306 = vmatprep.subr.mxu0 0.0
      %7307 = vmatpush1.msra.mxu0 %v7231
      %7308 = vmatprep.subr.mxu0 0.0
      %7309 = vmatpush1.msra.mxu0 0.0
      %7310 = vmatprep.subr.mxu0 0.0
      %7311 = vmatpush1.msra.mxu0 0.0
      %7312 = vmatprep.subr.mxu0 0.0
      %7313 = vmatpush1.msra.mxu0 0.0
      %7314 = vmatprep.subr.mxu0 0.0
      %7315 = vmatpush1.msra.mxu0 0.0
      %7316 = vmatprep.subr.mxu0 0.0
      %7317 = vmatpush1.msra.mxu0 0.0
      %7318 = vmatprep.subr.mxu0 0.0
      %7319 = vmatpush1.msra.mxu0 0.0
      %7320 = vmatprep.subr.mxu0 0.0
      %7321 = vmatpush1.msra.mxu0 0.0
      %7322 = vmatprep.subr.mxu0 0.0
      %7323 = vmatpush1.msra.mxu0 0.0
      %7324 = vmatprep.subr.mxu0 0.0
      %7325 = vmatpush1.msra.mxu0 0.0
      %7326 = vmatprep.subr.mxu0 0.0
      %7327 = vmatpush1.msra.mxu0 0.0
      %7328 = vmatprep.subr.mxu0 0.0
      %7329 = vmatpush1.msra.mxu0 0.0
      %7330 = vmatprep.subr.mxu0 0.0
      %7331 = vmatpush1.msra.mxu0 0.0
      %7332 = vmatprep.subr.mxu0 0.0
      %7333 = vmatpush1.msra.mxu0 0.0
      %7334 = vmatprep.subr.mxu0 0.0
      %7335 = vmatpush1.msra.mxu0 0.0
      %7336 = vmatprep.subr.mxu0 0.0
      %7337 = vmatpush1.msra.mxu0 0.0
      %7338 = vmatprep.subr.mxu0 0.0
      %7339 = vmatpush1.msra.mxu0 0.0
      %7340 = vmatprep.subr.mxu0 0.0
      %7341 = vmatpush1.msra.mxu0 0.0
      %7342 = vmatprep.subr.mxu0 0.0
      %7343 = vmatpush1.msra.mxu0 0.0
      %7344 = vmatprep.subr.mxu0 0.0
      %7345 = vmatpush1.msra.mxu0 0.0
      %7346 = vmatprep.subr.mxu0 0.0
      %7347 = vmatpush1.msra.mxu0 0.0
      %7348 = vmatprep.subr.mxu0 0.0
      %7349 = vmatpush1.msra.mxu0 0.0
      %7350 = vmatprep.subr.mxu0 0.0
      %7351 = vmatpush1.msra.mxu0 0.0
      %7352 = vmatprep.subr.mxu0 0.0
      %7353 = vmatpush1.msra.mxu0 0.0
      %7354 = vmatprep.subr.mxu0 0.0
      %7355 = vmatpush1.msra.mxu0 0.0
      %7356 = vmatprep.subr.mxu0 0.0
      %7357 = vmatpush1.msra.mxu0 0.0
      %7358 = vmatprep.subr.mxu0 0.0
      %7359 = vmatpush1.msra.mxu0 0.0
      %7360 = vmatprep.subr.mxu0 0.0
      %7361 = vmatpush1.msra.mxu0 0.0
      %7362 = vmatprep.subr.mxu0 0.0
      %7363 = vmatpush1.msra.mxu0 0.0
      %7364 = vmatprep.subr.mxu0 0.0
      %7365 = vmatpush1.msra.mxu0 0.0
      %7366 = vmatprep.subr.mxu0 0.0
      %7367 = vmatpush1.msra.mxu0 0.0
      %7368 = vmatprep.mubr.f32.mxu0 0.0
      %7369 = vmatmul.mubr.f32.gmra.mrb[0].mxu0 %v6218
      %v7370 = vpop.f32.mrb[0].mxu0
      %v7371 = vadd.f32 0.0, %v7370
      %v7372 = vpop.f32.mrb[0].mxu0
      %7373 = vdwg.mxu0
      %v7374 = vmax.f32 %v7151, %v7221
      %v7375 = vmax.f32 %v7301, %v7371
      %vm7376 = vcmp.gt.f32.partialorder %v7221, %v7151
      %v7377 = vsel %vm7376, 1.0, 0.0
      %vm7378 = vcmp.gt.f32.partialorder %v7371, %v7301
      %v7379 = vsel %vm7378, 1.0, 0.0
      %vm7380 = vcmp.gt.f32.partialorder %v7375, %v7374
      %v7381 = vadd.f32 %v7379, 2.0
      %v7382 = vsel %vm7380, %v7381, %v7377
      %v7383 = vmax.f32 %v7374, %v7375
      %7384 = vst.msk [vmem:[%s394 + $0x29] sm:$0xff] %vm3137, %v7383
      %7385 = vst.msk [vmem:[%s399 + $0x29] sm:$0xff] %vm3137, %v7382
      %v7388 = vrot.slane %v6085, 3
      %v7389 = vrot.slane %v6086, 3
      %v7390 = vsel %vm6135, %v7388, %v7389
      %v7391 = vrot.slane %v6087, 3
      %v7392 = vsel %vm6135, %v7389, %v7391
      %7395 = vmatprep.subr.mxu0 0.0
      %7396 = vmatpush1.msra.mxu0 %v7390
      %7397 = vmatprep.subr.mxu0 0.0
      %7398 = vmatpush1.msra.mxu0 %v7392
      %7399 = vmatprep.subr.mxu0 0.0
      %7400 = vmatpush1.msra.mxu0 0.0
      %7401 = vmatprep.subr.mxu0 0.0
      %7402 = vmatpush1.msra.mxu0 0.0
      %7403 = vmatprep.subr.mxu0 0.0
      %7404 = vmatpush1.msra.mxu0 0.0
      %7405 = vmatprep.subr.mxu0 0.0
      %7406 = vmatpush1.msra.mxu0 0.0
      %7407 = vmatprep.subr.mxu0 0.0
      %7408 = vmatpush1.msra.mxu0 0.0
      %7409 = vmatprep.subr.mxu0 0.0
      %7410 = vmatpush1.msra.mxu0 0.0
      %7411 = vmatprep.subr.mxu0 0.0
      %7412 = vmatpush1.msra.mxu0 0.0
      %7413 = vmatprep.subr.mxu0 0.0
      %7414 = vmatpush1.msra.mxu0 0.0
      %7415 = vmatprep.subr.mxu0 0.0
      %7416 = vmatpush1.msra.mxu0 0.0
      %7417 = vmatprep.subr.mxu0 0.0
      %7418 = vmatpush1.msra.mxu0 0.0
      %7419 = vmatprep.subr.mxu0 0.0
      %7420 = vmatpush1.msra.mxu0 0.0
      %7421 = vmatprep.subr.mxu0 0.0
      %7422 = vmatpush1.msra.mxu0 0.0
      %7423 = vmatprep.subr.mxu0 0.0
      %7424 = vmatpush1.msra.mxu0 0.0
      %7425 = vmatprep.subr.mxu0 0.0
      %7426 = vmatpush1.msra.mxu0 0.0
      %7427 = vmatprep.subr.mxu0 0.0
      %7428 = vmatpush1.msra.mxu0 0.0
      %7429 = vmatprep.subr.mxu0 0.0
      %7430 = vmatpush1.msra.mxu0 0.0
      %7431 = vmatprep.subr.mxu0 0.0
      %7432 = vmatpush1.msra.mxu0 0.0
      %7433 = vmatprep.subr.mxu0 0.0
      %7434 = vmatpush1.msra.mxu0 0.0
      %7435 = vmatprep.subr.mxu0 0.0
      %7436 = vmatpush1.msra.mxu0 0.0
      %7437 = vmatprep.subr.mxu0 0.0
      %7438 = vmatpush1.msra.mxu0 0.0
      %7439 = vmatprep.subr.mxu0 0.0
      %7440 = vmatpush1.msra.mxu0 0.0
      %7441 = vmatprep.subr.mxu0 0.0
      %7442 = vmatpush1.msra.mxu0 0.0
      %7443 = vmatprep.subr.mxu0 0.0
      %7444 = vmatpush1.msra.mxu0 0.0
      %7445 = vmatprep.subr.mxu0 0.0
      %7446 = vmatpush1.msra.mxu0 0.0
      %7447 = vmatprep.subr.mxu0 0.0
      %7448 = vmatpush1.msra.mxu0 0.0
      %7449 = vmatprep.subr.mxu0 0.0
      %7450 = vmatpush1.msra.mxu0 0.0
      %7451 = vmatprep.subr.mxu0 0.0
      %7452 = vmatpush1.msra.mxu0 0.0
      %7453 = vmatprep.subr.mxu0 0.0
      %7454 = vmatpush1.msra.mxu0 0.0
      %7455 = vmatprep.subr.mxu0 0.0
      %7456 = vmatpush1.msra.mxu0 0.0
      %7457 = vmatprep.subr.mxu0 0.0
      %7458 = vmatpush1.msra.mxu0 0.0
      %7459 = vmatprep.mubr.f32.mxu0 0.0
      %7460 = vmatmul.mubr.f32.gmra.mrb[0].mxu0 %v6145
      %v7461 = vpop.f32.mrb[0].mxu0
      %v7462 = vadd.f32 0.0, %v7461
      %v7463 = vpop.f32.mrb[0].mxu0
      %7464 = vdwg.mxu0
      %7465 = vmatprep.subr.mxu0 0.0
      %7466 = vmatpush1.msra.mxu0 %v7390
      %7467 = vmatprep.subr.mxu0 0.0
      %7468 = vmatpush1.msra.mxu0 %v7392
      %7469 = vmatprep.subr.mxu0 0.0
      %7470 = vmatpush1.msra.mxu0 0.0
      %7471 = vmatprep.subr.mxu0 0.0
      %7472 = vmatpush1.msra.mxu0 0.0
      %7473 = vmatprep.subr.mxu0 0.0
      %7474 = vmatpush1.msra.mxu0 0.0
      %7475 = vmatprep.subr.mxu0 0.0
      %7476 = vmatpush1.msra.mxu0 0.0
      %7477 = vmatprep.subr.mxu0 0.0
      %7478 = vmatpush1.msra.mxu0 0.0
      %7479 = vmatprep.subr.mxu0 0.0
      %7480 = vmatpush1.msra.mxu0 0.0
      %7481 = vmatprep.subr.mxu0 0.0
      %7482 = vmatpush1.msra.mxu0 0.0
      %7483 = vmatprep.subr.mxu0 0.0
      %7484 = vmatpush1.msra.mxu0 0.0
      %7485 = vmatprep.subr.mxu0 0.0
      %7486 = vmatpush1.msra.mxu0 0.0
      %7487 = vmatprep.subr.mxu0 0.0
      %7488 = vmatpush1.msra.mxu0 0.0
      %7489 = vmatprep.subr.mxu0 0.0
      %7490 = vmatpush1.msra.mxu0 0.0
      %7491 = vmatprep.subr.mxu0 0.0
      %7492 = vmatpush1.msra.mxu0 0.0
      %7493 = vmatprep.subr.mxu0 0.0
      %7494 = vmatpush1.msra.mxu0 0.0
      %7495 = vmatprep.subr.mxu0 0.0
      %7496 = vmatpush1.msra.mxu0 0.0
      %7497 = vmatprep.subr.mxu0 0.0
      %7498 = vmatpush1.msra.mxu0 0.0
      %7499 = vmatprep.subr.mxu0 0.0
      %7500 = vmatpush1.msra.mxu0 0.0
      %7501 = vmatprep.subr.mxu0 0.0
      %7502 = vmatpush1.msra.mxu0 0.0
      %7503 = vmatprep.subr.mxu0 0.0
      %7504 = vmatpush1.msra.mxu0 0.0
      %7505 = vmatprep.subr.mxu0 0.0
      %7506 = vmatpush1.msra.mxu0 0.0
      %7507 = vmatprep.subr.mxu0 0.0
      %7508 = vmatpush1.msra.mxu0 0.0
      %7509 = vmatprep.subr.mxu0 0.0
      %7510 = vmatpush1.msra.mxu0 0.0
      %7511 = vmatprep.subr.mxu0 0.0
      %7512 = vmatpush1.msra.mxu0 0.0
      %7513 = vmatprep.subr.mxu0 0.0
      %7514 = vmatpush1.msra.mxu0 0.0
      %7515 = vmatprep.subr.mxu0 0.0
      %7516 = vmatpush1.msra.mxu0 0.0
      %7517 = vmatprep.subr.mxu0 0.0
      %7518 = vmatpush1.msra.mxu0 0.0
      %7519 = vmatprep.subr.mxu0 0.0
      %7520 = vmatpush1.msra.mxu0 0.0
      %7521 = vmatprep.subr.mxu0 0.0
      %7522 = vmatpush1.msra.mxu0 0.0
      %7523 = vmatprep.subr.mxu0 0.0
      %7524 = vmatpush1.msra.mxu0 0.0
      %7525 = vmatprep.subr.mxu0 0.0
      %7526 = vmatpush1.msra.mxu0 0.0
      %7527 = vmatprep.subr.mxu0 0.0
      %7528 = vmatpush1.msra.mxu0 0.0
      %7529 = vmatprep.mubr.f32.mxu0 0.0
      %7530 = vmatmul.mubr.f32.gmra.mrb[0].mxu0 %v6218
      %v7531 = vpop.f32.mrb[0].mxu0
      %v7532 = vadd.f32 0.0, %v7531
      %v7533 = vpop.f32.mrb[0].mxu0
      %7534 = vdwg.mxu0
      %v7537 = vrot.slane %v6087, 5
      %v7538 = vrot.slane %v6088, 5
      %v7539 = vsel %vm6292, %v7537, %v7538
      %v7540 = vrot.slane %v6089, 5
      %v7541 = vsel %vm6292, %v7538, %v7540
      %7544 = vmatprep.subr.mxu0 0.0
      %7545 = vmatpush1.msra.mxu0 %v7539
      %7546 = vmatprep.subr.mxu0 0.0
      %7547 = vmatpush1.msra.mxu0 %v7541
      %7548 = vmatprep.subr.mxu0 0.0
      %7549 = vmatpush1.msra.mxu0 0.0
      %7550 = vmatprep.subr.mxu0 0.0
      %7551 = vmatpush1.msra.mxu0 0.0
      %7552 = vmatprep.subr.mxu0 0.0
      %7553 = vmatpush1.msra.mxu0 0.0
      %7554 = vmatprep.subr.mxu0 0.0
      %7555 = vmatpush1.msra.mxu0 0.0
      %7556 = vmatprep.subr.mxu0 0.0
      %7557 = vmatpush1.msra.mxu0 0.0
      %7558 = vmatprep.subr.mxu0 0.0
      %7559 = vmatpush1.msra.mxu0 0.0
      %7560 = vmatprep.subr.mxu0 0.0
      %7561 = vmatpush1.msra.mxu0 0.0
      %7562 = vmatprep.subr.mxu0 0.0
      %7563 = vmatpush1.msra.mxu0 0.0
      %7564 = vmatprep.subr.mxu0 0.0
      %7565 = vmatpush1.msra.mxu0 0.0
      %7566 = vmatprep.subr.mxu0 0.0
      %7567 = vmatpush1.msra.mxu0 0.0
      %7568 = vmatprep.subr.mxu0 0.0
      %7569 = vmatpush1.msra.mxu0 0.0
      %7570 = vmatprep.subr.mxu0 0.0
      %7571 = vmatpush1.msra.mxu0 0.0
      %7572 = vmatprep.subr.mxu0 0.0
      %7573 = vmatpush1.msra.mxu0 0.0
      %7574 = vmatprep.subr.mxu0 0.0
      %7575 = vmatpush1.msra.mxu0 0.0
      %7576 = vmatprep.subr.mxu0 0.0
      %7577 = vmatpush1.msra.mxu0 0.0
      %7578 = vmatprep.subr.mxu0 0.0
      %7579 = vmatpush1.msra.mxu0 0.0
      %7580 = vmatprep.subr.mxu0 0.0
      %7581 = vmatpush1.msra.mxu0 0.0
      %7582 = vmatprep.subr.mxu0 0.0
      %7583 = vmatpush1.msra.mxu0 0.0
      %7584 = vmatprep.subr.mxu0 0.0
      %7585 = vmatpush1.msra.mxu0 0.0
      %7586 = vmatprep.subr.mxu0 0.0
      %7587 = vmatpush1.msra.mxu0 0.0
      %7588 = vmatprep.subr.mxu0 0.0
      %7589 = vmatpush1.msra.mxu0 0.0
      %7590 = vmatprep.subr.mxu0 0.0
      %7591 = vmatpush1.msra.mxu0 0.0
      %7592 = vmatprep.subr.mxu0 0.0
      %7593 = vmatpush1.msra.mxu0 0.0
      %7594 = vmatprep.subr.mxu0 0.0
      %7595 = vmatpush1.msra.mxu0 0.0
      %7596 = vmatprep.subr.mxu0 0.0
      %7597 = vmatpush1.msra.mxu0 0.0
      %7598 = vmatprep.subr.mxu0 0.0
      %7599 = vmatpush1.msra.mxu0 0.0
      %7600 = vmatprep.subr.mxu0 0.0
      %7601 = vmatpush1.msra.mxu0 0.0
      %7602 = vmatprep.subr.mxu0 0.0
      %7603 = vmatpush1.msra.mxu0 0.0
      %7604 = vmatprep.subr.mxu0 0.0
      %7605 = vmatpush1.msra.mxu0 0.0
      %7606 = vmatprep.subr.mxu0 0.0
      %7607 = vmatpush1.msra.mxu0 0.0
      %7608 = vmatprep.mubr.f32.mxu0 0.0
      %7609 = vmatmul.mubr.f32.gmra.mrb[0].mxu0 %v6145
      %v7610 = vpop.f32.mrb[0].mxu0
      %v7611 = vadd.f32 0.0, %v7610
      %v7612 = vpop.f32.mrb[0].mxu0
      %7613 = vdwg.mxu0
      %7614 = vmatprep.subr.mxu0 0.0
      %7615 = vmatpush1.msra.mxu0 %v7539
      %7616 = vmatprep.subr.mxu0 0.0
      %7617 = vmatpush1.msra.mxu0 %v7541
      %7618 = vmatprep.subr.mxu0 0.0
      %7619 = vmatpush1.msra.mxu0 0.0
      %7620 = vmatprep.subr.mxu0 0.0
      %7621 = vmatpush1.msra.mxu0 0.0
      %7622 = vmatprep.subr.mxu0 0.0
      %7623 = vmatpush1.msra.mxu0 0.0
      %7624 = vmatprep.subr.mxu0 0.0
      %7625 = vmatpush1.msra.mxu0 0.0
      %7626 = vmatprep.subr.mxu0 0.0
      %7627 = vmatpush1.msra.mxu0 0.0
      %7628 = vmatprep.subr.mxu0 0.0
      %7629 = vmatpush1.msra.mxu0 0.0
      %7630 = vmatprep.subr.mxu0 0.0
      %7631 = vmatpush1.msra.mxu0 0.0
      %7632 = vmatprep.subr.mxu0 0.0
      %7633 = vmatpush1.msra.mxu0 0.0
      %7634 = vmatprep.subr.mxu0 0.0
      %7635 = vmatpush1.msra.mxu0 0.0
      %7636 = vmatprep.subr.mxu0 0.0
      %7637 = vmatpush1.msra.mxu0 0.0
      %7638 = vmatprep.subr.mxu0 0.0
      %7639 = vmatpush1.msra.mxu0 0.0
      %7640 = vmatprep.subr.mxu0 0.0
      %7641 = vmatpush1.msra.mxu0 0.0
      %7642 = vmatprep.subr.mxu0 0.0
      %7643 = vmatpush1.msra.mxu0 0.0
      %7644 = vmatprep.subr.mxu0 0.0
      %7645 = vmatpush1.msra.mxu0 0.0
      %7646 = vmatprep.subr.mxu0 0.0
      %7647 = vmatpush1.msra.mxu0 0.0
      %7648 = vmatprep.subr.mxu0 0.0
      %7649 = vmatpush1.msra.mxu0 0.0
      %7650 = vmatprep.subr.mxu0 0.0
      %7651 = vmatpush1.msra.mxu0 0.0
      %7652 = vmatprep.subr.mxu0 0.0
      %7653 = vmatpush1.msra.mxu0 0.0
      %7654 = vmatprep.subr.mxu0 0.0
      %7655 = vmatpush1.msra.mxu0 0.0
      %7656 = vmatprep.subr.mxu0 0.0
      %7657 = vmatpush1.msra.mxu0 0.0
      %7658 = vmatprep.subr.mxu0 0.0
      %7659 = vmatpush1.msra.mxu0 0.0
      %7660 = vmatprep.subr.mxu0 0.0
      %7661 = vmatpush1.msra.mxu0 0.0
      %7662 = vmatprep.subr.mxu0 0.0
      %7663 = vmatpush1.msra.mxu0 0.0
      %7664 = vmatprep.subr.mxu0 0.0
      %7665 = vmatpush1.msra.mxu0 0.0
      %7666 = vmatprep.subr.mxu0 0.0
      %7667 = vmatpush1.msra.mxu0 0.0
      %7668 = vmatprep.subr.mxu0 0.0
      %7669 = vmatpush1.msra.mxu0 0.0
      %7670 = vmatprep.subr.mxu0 0.0
      %7671 = vmatpush1.msra.mxu0 0.0
      %7672 = vmatprep.subr.mxu0 0.0
      %7673 = vmatpush1.msra.mxu0 0.0
      %7674 = vmatprep.subr.mxu0 0.0
      %7675 = vmatpush1.msra.mxu0 0.0
      %7676 = vmatprep.subr.mxu0 0.0
      %7677 = vmatpush1.msra.mxu0 0.0
      %7678 = vmatprep.mubr.f32.mxu0 0.0
      %7679 = vmatmul.mubr.f32.gmra.mrb[0].mxu0 %v6218
      %v7680 = vpop.f32.mrb[0].mxu0
      %v7681 = vadd.f32 0.0, %v7680
      %v7682 = vpop.f32.mrb[0].mxu0
      %7683 = vdwg.mxu0
      %v7684 = vmax.f32 %v7462, %v7532
      %v7685 = vmax.f32 %v7611, %v7681
      %vm7686 = vcmp.gt.f32.partialorder %v7532, %v7462
      %v7687 = vsel %vm7686, 1.0, 0.0
      %vm7688 = vcmp.gt.f32.partialorder %v7681, %v7611
      %v7689 = vsel %vm7688, 1.0, 0.0
      %vm7690 = vcmp.gt.f32.partialorder %v7685, %v7684
      %v7691 = vadd.f32 %v7689, 2.0
      %v7692 = vsel %vm7690, %v7691, %v7687
      %v7693 = vmax.f32 %v7684, %v7685
      %7694 = vst.msk [vmem:[%s394 + $0x33] sm:$0xff] %vm3137, %v7693
      %7695 = vst.msk [vmem:[%s399 + $0x33] sm:$0xff] %vm3137, %v7692
      %v7698 = vrot.slane %v6089, 7
      %v7699 = vrot.slane %v6090, 7
      %v7700 = vsel %vm6454, %v7698, %v7699
      %v7701 = vrot.slane %v6091, 7
      %v7702 = vsel %vm6454, %v7699, %v7701
      %7705 = vmatprep.subr.mxu0 0.0
      %7706 = vmatpush1.msra.mxu0 %v7700
      %7707 = vmatprep.subr.mxu0 0.0
      %7708 = vmatpush1.msra.mxu0 %v7702
      %7709 = vmatprep.subr.mxu0 0.0
      %7710 = vmatpush1.msra.mxu0 0.0
      %7711 = vmatprep.subr.mxu0 0.0
      %7712 = vmatpush1.msra.mxu0 0.0
      %7713 = vmatprep.subr.mxu0 0.0
      %7714 = vmatpush1.msra.mxu0 0.0
      %7715 = vmatprep.subr.mxu0 0.0
      %7716 = vmatpush1.msra.mxu0 0.0
      %7717 = vmatprep.subr.mxu0 0.0
      %7718 = vmatpush1.msra.mxu0 0.0
      %7719 = vmatprep.subr.mxu0 0.0
      %7720 = vmatpush1.msra.mxu0 0.0
      %7721 = vmatprep.subr.mxu0 0.0
      %7722 = vmatpush1.msra.mxu0 0.0
      %7723 = vmatprep.subr.mxu0 0.0
      %7724 = vmatpush1.msra.mxu0 0.0
      %7725 = vmatprep.subr.mxu0 0.0
      %7726 = vmatpush1.msra.mxu0 0.0
      %7727 = vmatprep.subr.mxu0 0.0
      %7728 = vmatpush1.msra.mxu0 0.0
      %7729 = vmatprep.subr.mxu0 0.0
      %7730 = vmatpush1.msra.mxu0 0.0
      %7731 = vmatprep.subr.mxu0 0.0
      %7732 = vmatpush1.msra.mxu0 0.0
      %7733 = vmatprep.subr.mxu0 0.0
      %7734 = vmatpush1.msra.mxu0 0.0
      %7735 = vmatprep.subr.mxu0 0.0
      %7736 = vmatpush1.msra.mxu0 0.0
      %7737 = vmatprep.subr.mxu0 0.0
      %7738 = vmatpush1.msra.mxu0 0.0
      %7739 = vmatprep.subr.mxu0 0.0
      %7740 = vmatpush1.msra.mxu0 0.0
      %7741 = vmatprep.subr.mxu0 0.0
      %7742 = vmatpush1.msra.mxu0 0.0
      %7743 = vmatprep.subr.mxu0 0.0
      %7744 = vmatpush1.msra.mxu0 0.0
      %7745 = vmatprep.subr.mxu0 0.0
      %7746 = vmatpush1.msra.mxu0 0.0
      %7747 = vmatprep.subr.mxu0 0.0
      %7748 = vmatpush1.msra.mxu0 0.0
      %7749 = vmatprep.subr.mxu0 0.0
      %7750 = vmatpush1.msra.mxu0 0.0
      %7751 = vmatprep.subr.mxu0 0.0
      %7752 = vmatpush1.msra.mxu0 0.0
      %7753 = vmatprep.subr.mxu0 0.0
      %7754 = vmatpush1.msra.mxu0 0.0
      %7755 = vmatprep.subr.mxu0 0.0
      %7756 = vmatpush1.msra.mxu0 0.0
      %7757 = vmatprep.subr.mxu0 0.0
      %7758 = vmatpush1.msra.mxu0 0.0
      %7759 = vmatprep.subr.mxu0 0.0
      %7760 = vmatpush1.msra.mxu0 0.0
      %7761 = vmatprep.subr.mxu0 0.0
      %7762 = vmatpush1.msra.mxu0 0.0
      %7763 = vmatprep.subr.mxu0 0.0
      %7764 = vmatpush1.msra.mxu0 0.0
      %7765 = vmatprep.subr.mxu0 0.0
      %7766 = vmatpush1.msra.mxu0 0.0
      %7767 = vmatprep.subr.mxu0 0.0
      %7768 = vmatpush1.msra.mxu0 0.0
      %7769 = vmatprep.mubr.f32.mxu0 0.0
      %7770 = vmatmul.mubr.f32.gmra.mrb[0].mxu0 %v6145
      %v7771 = vpop.f32.mrb[0].mxu0
      %v7772 = vadd.f32 0.0, %v7771
      %v7773 = vpop.f32.mrb[0].mxu0
      %7774 = vdwg.mxu0
      %7775 = vmatprep.subr.mxu0 0.0
      %7776 = vmatpush1.msra.mxu0 %v7700
      %7777 = vmatprep.subr.mxu0 0.0
      %7778 = vmatpush1.msra.mxu0 %v7702
      %7779 = vmatprep.subr.mxu0 0.0
      %7780 = vmatpush1.msra.mxu0 0.0
      %7781 = vmatprep.subr.mxu0 0.0
      %7782 = vmatpush1.msra.mxu0 0.0
      %7783 = vmatprep.subr.mxu0 0.0
      %7784 = vmatpush1.msra.mxu0 0.0
      %7785 = vmatprep.subr.mxu0 0.0
      %7786 = vmatpush1.msra.mxu0 0.0
      %7787 = vmatprep.subr.mxu0 0.0
      %7788 = vmatpush1.msra.mxu0 0.0
      %7789 = vmatprep.subr.mxu0 0.0
      %7790 = vmatpush1.msra.mxu0 0.0
      %7791 = vmatprep.subr.mxu0 0.0
      %7792 = vmatpush1.msra.mxu0 0.0
      %7793 = vmatprep.subr.mxu0 0.0
      %7794 = vmatpush1.msra.mxu0 0.0
      %7795 = vmatprep.subr.mxu0 0.0
      %7796 = vmatpush1.msra.mxu0 0.0
      %7797 = vmatprep.subr.mxu0 0.0
      %7798 = vmatpush1.msra.mxu0 0.0
      %7799 = vmatprep.subr.mxu0 0.0
      %7800 = vmatpush1.msra.mxu0 0.0
      %7801 = vmatprep.subr.mxu0 0.0
      %7802 = vmatpush1.msra.mxu0 0.0
      %7803 = vmatprep.subr.mxu0 0.0
      %7804 = vmatpush1.msra.mxu0 0.0
      %7805 = vmatprep.subr.mxu0 0.0
      %7806 = vmatpush1.msra.mxu0 0.0
      %7807 = vmatprep.subr.mxu0 0.0
      %7808 = vmatpush1.msra.mxu0 0.0
      %7809 = vmatprep.subr.mxu0 0.0
      %7810 = vmatpush1.msra.mxu0 0.0
      %7811 = vmatprep.subr.mxu0 0.0
      %7812 = vmatpush1.msra.mxu0 0.0
      %7813 = vmatprep.subr.mxu0 0.0
      %7814 = vmatpush1.msra.mxu0 0.0
      %7815 = vmatprep.subr.mxu0 0.0
      %7816 = vmatpush1.msra.mxu0 0.0
      %7817 = vmatprep.subr.mxu0 0.0
      %7818 = vmatpush1.msra.mxu0 0.0
      %7819 = vmatprep.subr.mxu0 0.0
      %7820 = vmatpush1.msra.mxu0 0.0
      %7821 = vmatprep.subr.mxu0 0.0
      %7822 = vmatpush1.msra.mxu0 0.0
      %7823 = vmatprep.subr.mxu0 0.0
      %7824 = vmatpush1.msra.mxu0 0.0
      %7825 = vmatprep.subr.mxu0 0.0
      %7826 = vmatpush1.msra.mxu0 0.0
      %7827 = vmatprep.subr.mxu0 0.0
      %7828 = vmatpush1.msra.mxu0 0.0
      %7829 = vmatprep.subr.mxu0 0.0
      %7830 = vmatpush1.msra.mxu0 0.0
      %7831 = vmatprep.subr.mxu0 0.0
      %7832 = vmatpush1.msra.mxu0 0.0
      %7833 = vmatprep.subr.mxu0 0.0
      %7834 = vmatpush1.msra.mxu0 0.0
      %7835 = vmatprep.subr.mxu0 0.0
      %7836 = vmatpush1.msra.mxu0 0.0
      %7837 = vmatprep.subr.mxu0 0.0
      %7838 = vmatpush1.msra.mxu0 0.0
      %7839 = vmatprep.mubr.f32.mxu0 0.0
      %7840 = vmatmul.mubr.f32.gmra.mrb[0].mxu0 %v6218
      %v7841 = vpop.f32.mrb[0].mxu0
      %v7842 = vadd.f32 0.0, %v7841
      %v7843 = vpop.f32.mrb[0].mxu0
      %7844 = vdwg.mxu0
      %v7848 = vrot.slane %v6092, 1
      %v7849 = vrot.slane %v6093, 1
      %v7850 = vsel %vm6605, %v7848, %v7849
      %v7851 = vrot.slane %v6094, 1
      %v7852 = vsel %vm6605, %v7849, %v7851
      %7855 = vmatprep.subr.mxu0 0.0
      %7856 = vmatpush1.msra.mxu0 %v7850
      %7857 = vmatprep.subr.mxu0 0.0
      %7858 = vmatpush1.msra.mxu0 %v7852
      %7859 = vmatprep.subr.mxu0 0.0
      %7860 = vmatpush1.msra.mxu0 0.0
      %7861 = vmatprep.subr.mxu0 0.0
      %7862 = vmatpush1.msra.mxu0 0.0
      %7863 = vmatprep.subr.mxu0 0.0
      %7864 = vmatpush1.msra.mxu0 0.0
      %7865 = vmatprep.subr.mxu0 0.0
      %7866 = vmatpush1.msra.mxu0 0.0
      %7867 = vmatprep.subr.mxu0 0.0
      %7868 = vmatpush1.msra.mxu0 0.0
      %7869 = vmatprep.subr.mxu0 0.0
      %7870 = vmatpush1.msra.mxu0 0.0
      %7871 = vmatprep.subr.mxu0 0.0
      %7872 = vmatpush1.msra.mxu0 0.0
      %7873 = vmatprep.subr.mxu0 0.0
      %7874 = vmatpush1.msra.mxu0 0.0
      %7875 = vmatprep.subr.mxu0 0.0
      %7876 = vmatpush1.msra.mxu0 0.0
      %7877 = vmatprep.subr.mxu0 0.0
      %7878 = vmatpush1.msra.mxu0 0.0
      %7879 = vmatprep.subr.mxu0 0.0
      %7880 = vmatpush1.msra.mxu0 0.0
      %7881 = vmatprep.subr.mxu0 0.0
      %7882 = vmatpush1.msra.mxu0 0.0
      %7883 = vmatprep.subr.mxu0 0.0
      %7884 = vmatpush1.msra.mxu0 0.0
      %7885 = vmatprep.subr.mxu0 0.0
      %7886 = vmatpush1.msra.mxu0 0.0
      %7887 = vmatprep.subr.mxu0 0.0
      %7888 = vmatpush1.msra.mxu0 0.0
      %7889 = vmatprep.subr.mxu0 0.0
      %7890 = vmatpush1.msra.mxu0 0.0
      %7891 = vmatprep.subr.mxu0 0.0
      %7892 = vmatpush1.msra.mxu0 0.0
      %7893 = vmatprep.subr.mxu0 0.0
      %7894 = vmatpush1.msra.mxu0 0.0
      %7895 = vmatprep.subr.mxu0 0.0
      %7896 = vmatpush1.msra.mxu0 0.0
      %7897 = vmatprep.subr.mxu0 0.0
      %7898 = vmatpush1.msra.mxu0 0.0
      %7899 = vmatprep.subr.mxu0 0.0
      %7900 = vmatpush1.msra.mxu0 0.0
      %7901 = vmatprep.subr.mxu0 0.0
      %7902 = vmatpush1.msra.mxu0 0.0
      %7903 = vmatprep.subr.mxu0 0.0
      %7904 = vmatpush1.msra.mxu0 0.0
      %7905 = vmatprep.subr.mxu0 0.0
      %7906 = vmatpush1.msra.mxu0 0.0
      %7907 = vmatprep.subr.mxu0 0.0
      %7908 = vmatpush1.msra.mxu0 0.0
      %7909 = vmatprep.subr.mxu0 0.0
      %7910 = vmatpush1.msra.mxu0 0.0
      %7911 = vmatprep.subr.mxu0 0.0
      %7912 = vmatpush1.msra.mxu0 0.0
      %7913 = vmatprep.subr.mxu0 0.0
      %7914 = vmatpush1.msra.mxu0 0.0
      %7915 = vmatprep.subr.mxu0 0.0
      %7916 = vmatpush1.msra.mxu0 0.0
      %7917 = vmatprep.subr.mxu0 0.0
      %7918 = vmatpush1.msra.mxu0 0.0
      %7919 = vmatprep.mubr.f32.mxu0 0.0
      %7920 = vmatmul.mubr.f32.gmra.mrb[0].mxu0 %v6145
      %v7921 = vpop.f32.mrb[0].mxu0
      %v7922 = vadd.f32 0.0, %v7921
      %v7923 = vpop.f32.mrb[0].mxu0
      %7924 = vdwg.mxu0
      %7925 = vmatprep.subr.mxu0 0.0
      %7926 = vmatpush1.msra.mxu0 %v7850
      %7927 = vmatprep.subr.mxu0 0.0
      %7928 = vmatpush1.msra.mxu0 %v7852
      %7929 = vmatprep.subr.mxu0 0.0
      %7930 = vmatpush1.msra.mxu0 0.0
      %7931 = vmatprep.subr.mxu0 0.0
      %7932 = vmatpush1.msra.mxu0 0.0
      %7933 = vmatprep.subr.mxu0 0.0
      %7934 = vmatpush1.msra.mxu0 0.0
      %7935 = vmatprep.subr.mxu0 0.0
      %7936 = vmatpush1.msra.mxu0 0.0
      %7937 = vmatprep.subr.mxu0 0.0
      %7938 = vmatpush1.msra.mxu0 0.0
      %7939 = vmatprep.subr.mxu0 0.0
      %7940 = vmatpush1.msra.mxu0 0.0
      %7941 = vmatprep.subr.mxu0 0.0
      %7942 = vmatpush1.msra.mxu0 0.0
      %7943 = vmatprep.subr.mxu0 0.0
      %7944 = vmatpush1.msra.mxu0 0.0
      %7945 = vmatprep.subr.mxu0 0.0
      %7946 = vmatpush1.msra.mxu0 0.0
      %7947 = vmatprep.subr.mxu0 0.0
      %7948 = vmatpush1.msra.mxu0 0.0
      %7949 = vmatprep.subr.mxu0 0.0
      %7950 = vmatpush1.msra.mxu0 0.0
      %7951 = vmatprep.subr.mxu0 0.0
      %7952 = vmatpush1.msra.mxu0 0.0
      %7953 = vmatprep.subr.mxu0 0.0
      %7954 = vmatpush1.msra.mxu0 0.0
      %7955 = vmatprep.subr.mxu0 0.0
      %7956 = vmatpush1.msra.mxu0 0.0
      %7957 = vmatprep.subr.mxu0 0.0
      %7958 = vmatpush1.msra.mxu0 0.0
      %7959 = vmatprep.subr.mxu0 0.0
      %7960 = vmatpush1.msra.mxu0 0.0
      %7961 = vmatprep.subr.mxu0 0.0
      %7962 = vmatpush1.msra.mxu0 0.0
      %7963 = vmatprep.subr.mxu0 0.0
      %7964 = vmatpush1.msra.mxu0 0.0
      %7965 = vmatprep.subr.mxu0 0.0
      %7966 = vmatpush1.msra.mxu0 0.0
      %7967 = vmatprep.subr.mxu0 0.0
      %7968 = vmatpush1.msra.mxu0 0.0
      %7969 = vmatprep.subr.mxu0 0.0
      %7970 = vmatpush1.msra.mxu0 0.0
      %7971 = vmatprep.subr.mxu0 0.0
      %7972 = vmatpush1.msra.mxu0 0.0
      %7973 = vmatprep.subr.mxu0 0.0
      %7974 = vmatpush1.msra.mxu0 0.0
      %7975 = vmatprep.subr.mxu0 0.0
      %7976 = vmatpush1.msra.mxu0 0.0
      %7977 = vmatprep.subr.mxu0 0.0
      %7978 = vmatpush1.msra.mxu0 0.0
      %7979 = vmatprep.subr.mxu0 0.0
      %7980 = vmatpush1.msra.mxu0 0.0
      %7981 = vmatprep.subr.mxu0 0.0
      %7982 = vmatpush1.msra.mxu0 0.0
      %7983 = vmatprep.subr.mxu0 0.0
      %7984 = vmatpush1.msra.mxu0 0.0
      %7985 = vmatprep.subr.mxu0 0.0
      %7986 = vmatpush1.msra.mxu0 0.0
      %7987 = vmatprep.subr.mxu0 0.0
      %7988 = vmatpush1.msra.mxu0 0.0
      %7989 = vmatprep.mubr.f32.mxu0 0.0
      %7990 = vmatmul.mubr.f32.gmra.mrb[0].mxu0 %v6218
      %v7991 = vpop.f32.mrb[0].mxu0
      %v7992 = vadd.f32 0.0, %v7991
      %v7993 = vpop.f32.mrb[0].mxu0
      %7994 = vdwg.mxu0
      %v7995 = vmax.f32 %v7772, %v7842
      %v7996 = vmax.f32 %v7922, %v7992
      %vm7997 = vcmp.gt.f32.partialorder %v7842, %v7772
      %v7998 = vsel %vm7997, 1.0, 0.0
      %vm7999 = vcmp.gt.f32.partialorder %v7992, %v7922
      %v8000 = vsel %vm7999, 1.0, 0.0
      %vm8001 = vcmp.gt.f32.partialorder %v7996, %v7995
      %v8002 = vadd.f32 %v8000, 2.0
      %v8003 = vsel %vm8001, %v8002, %v7998
      %v8004 = vmax.f32 %v7995, %v7996
      %8005 = vst.msk [vmem:[%s394 + $0x3d] sm:$0xff] %vm3137, %v8004
      %8006 = vst.msk [vmem:[%s399 + $0x3d] sm:$0xff] %vm3137, %v8003
      %v8009 = vrot.slane %v6094, 3
      %v8010 = vrot.slane %v6095, 3
      %v8011 = vsel %vm6135, %v8009, %v8010
      %v8012 = vrot.slane %v6096, 3
      %v8013 = vsel %vm6135, %v8010, %v8012
      %8016 = vmatprep.subr.mxu0 0.0
      %8017 = vmatpush1.msra.mxu0 %v8011
      %8018 = vmatprep.subr.mxu0 0.0
      %8019 = vmatpush1.msra.mxu0 %v8013
      %8020 = vmatprep.subr.mxu0 0.0
      %8021 = vmatpush1.msra.mxu0 0.0
      %8022 = vmatprep.subr.mxu0 0.0
      %8023 = vmatpush1.msra.mxu0 0.0
      %8024 = vmatprep.subr.mxu0 0.0
      %8025 = vmatpush1.msra.mxu0 0.0
      %8026 = vmatprep.subr.mxu0 0.0
      %8027 = vmatpush1.msra.mxu0 0.0
      %8028 = vmatprep.subr.mxu0 0.0
      %8029 = vmatpush1.msra.mxu0 0.0
      %8030 = vmatprep.subr.mxu0 0.0
      %8031 = vmatpush1.msra.mxu0 0.0
      %8032 = vmatprep.subr.mxu0 0.0
      %8033 = vmatpush1.msra.mxu0 0.0
      %8034 = vmatprep.subr.mxu0 0.0
      %8035 = vmatpush1.msra.mxu0 0.0
      %8036 = vmatprep.subr.mxu0 0.0
      %8037 = vmatpush1.msra.mxu0 0.0
      %8038 = vmatprep.subr.mxu0 0.0
      %8039 = vmatpush1.msra.mxu0 0.0
      %8040 = vmatprep.subr.mxu0 0.0
      %8041 = vmatpush1.msra.mxu0 0.0
      %8042 = vmatprep.subr.mxu0 0.0
      %8043 = vmatpush1.msra.mxu0 0.0
      %8044 = vmatprep.subr.mxu0 0.0
      %8045 = vmatpush1.msra.mxu0 0.0
      %8046 = vmatprep.subr.mxu0 0.0
      %8047 = vmatpush1.msra.mxu0 0.0
      %8048 = vmatprep.subr.mxu0 0.0
      %8049 = vmatpush1.msra.mxu0 0.0
      %8050 = vmatprep.subr.mxu0 0.0
      %8051 = vmatpush1.msra.mxu0 0.0
      %8052 = vmatprep.subr.mxu0 0.0
      %8053 = vmatpush1.msra.mxu0 0.0
      %8054 = vmatprep.subr.mxu0 0.0
      %8055 = vmatpush1.msra.mxu0 0.0
      %8056 = vmatprep.subr.mxu0 0.0
      %8057 = vmatpush1.msra.mxu0 0.0
      %8058 = vmatprep.subr.mxu0 0.0
      %8059 = vmatpush1.msra.mxu0 0.0
      %8060 = vmatprep.subr.mxu0 0.0
      %8061 = vmatpush1.msra.mxu0 0.0
      %8062 = vmatprep.subr.mxu0 0.0
      %8063 = vmatpush1.msra.mxu0 0.0
      %8064 = vmatprep.subr.mxu0 0.0
      %8065 = vmatpush1.msra.mxu0 0.0
      %8066 = vmatprep.subr.mxu0 0.0
      %8067 = vmatpush1.msra.mxu0 0.0
      %8068 = vmatprep.subr.mxu0 0.0
      %8069 = vmatpush1.msra.mxu0 0.0
      %8070 = vmatprep.subr.mxu0 0.0
      %8071 = vmatpush1.msra.mxu0 0.0
      %8072 = vmatprep.subr.mxu0 0.0
      %8073 = vmatpush1.msra.mxu0 0.0
      %8074 = vmatprep.subr.mxu0 0.0
      %8075 = vmatpush1.msra.mxu0 0.0
      %8076 = vmatprep.subr.mxu0 0.0
      %8077 = vmatpush1.msra.mxu0 0.0
      %8078 = vmatprep.subr.mxu0 0.0
      %8079 = vmatpush1.msra.mxu0 0.0
      %8080 = vmatprep.mubr.f32.mxu0 0.0
      %8081 = vmatmul.mubr.f32.gmra.mrb[0].mxu0 %v6145
      %v8082 = vpop.f32.mrb[0].mxu0
      %v8083 = vadd.f32 0.0, %v8082
      %v8084 = vpop.f32.mrb[0].mxu0
      %8085 = vdwg.mxu0
      %8086 = vmatprep.subr.mxu0 0.0
      %8087 = vmatpush1.msra.mxu0 %v8011
      %8088 = vmatprep.subr.mxu0 0.0
      %8089 = vmatpush1.msra.mxu0 %v8013
      %8090 = vmatprep.subr.mxu0 0.0
      %8091 = vmatpush1.msra.mxu0 0.0
      %8092 = vmatprep.subr.mxu0 0.0
      %8093 = vmatpush1.msra.mxu0 0.0
      %8094 = vmatprep.subr.mxu0 0.0
      %8095 = vmatpush1.msra.mxu0 0.0
      %8096 = vmatprep.subr.mxu0 0.0
      %8097 = vmatpush1.msra.mxu0 0.0
      %8098 = vmatprep.subr.mxu0 0.0
      %8099 = vmatpush1.msra.mxu0 0.0
      %8100 = vmatprep.subr.mxu0 0.0
      %8101 = vmatpush1.msra.mxu0 0.0
      %8102 = vmatprep.subr.mxu0 0.0
      %8103 = vmatpush1.msra.mxu0 0.0
      %8104 = vmatprep.subr.mxu0 0.0
      %8105 = vmatpush1.msra.mxu0 0.0
      %8106 = vmatprep.subr.mxu0 0.0
      %8107 = vmatpush1.msra.mxu0 0.0
      %8108 = vmatprep.subr.mxu0 0.0
      %8109 = vmatpush1.msra.mxu0 0.0
      %8110 = vmatprep.subr.mxu0 0.0
      %8111 = vmatpush1.msra.mxu0 0.0
      %8112 = vmatprep.subr.mxu0 0.0
      %8113 = vmatpush1.msra.mxu0 0.0
      %8114 = vmatprep.subr.mxu0 0.0
      %8115 = vmatpush1.msra.mxu0 0.0
      %8116 = vmatprep.subr.mxu0 0.0
      %8117 = vmatpush1.msra.mxu0 0.0
      %8118 = vmatprep.subr.mxu0 0.0
      %8119 = vmatpush1.msra.mxu0 0.0
      %8120 = vmatprep.subr.mxu0 0.0
      %8121 = vmatpush1.msra.mxu0 0.0
      %8122 = vmatprep.subr.mxu0 0.0
      %8123 = vmatpush1.msra.mxu0 0.0
      %8124 = vmatprep.subr.mxu0 0.0
      %8125 = vmatpush1.msra.mxu0 0.0
      %8126 = vmatprep.subr.mxu0 0.0
      %8127 = vmatpush1.msra.mxu0 0.0
      %8128 = vmatprep.subr.mxu0 0.0
      %8129 = vmatpush1.msra.mxu0 0.0
      %8130 = vmatprep.subr.mxu0 0.0
      %8131 = vmatpush1.msra.mxu0 0.0
      %8132 = vmatprep.subr.mxu0 0.0
      %8133 = vmatpush1.msra.mxu0 0.0
      %8134 = vmatprep.subr.mxu0 0.0
      %8135 = vmatpush1.msra.mxu0 0.0
      %8136 = vmatprep.subr.mxu0 0.0
      %8137 = vmatpush1.msra.mxu0 0.0
      %8138 = vmatprep.subr.mxu0 0.0
      %8139 = vmatpush1.msra.mxu0 0.0
      %8140 = vmatprep.subr.mxu0 0.0
      %8141 = vmatpush1.msra.mxu0 0.0
      %8142 = vmatprep.subr.mxu0 0.0
      %8143 = vmatpush1.msra.mxu0 0.0
      %8144 = vmatprep.subr.mxu0 0.0
      %8145 = vmatpush1.msra.mxu0 0.0
      %8146 = vmatprep.subr.mxu0 0.0
      %8147 = vmatpush1.msra.mxu0 0.0
      %8148 = vmatprep.subr.mxu0 0.0
      %8149 = vmatpush1.msra.mxu0 0.0
      %8150 = vmatprep.mubr.f32.mxu0 0.0
      %8151 = vmatmul.mubr.f32.gmra.mrb[0].mxu0 %v6218
      %v8152 = vpop.f32.mrb[0].mxu0
      %v8153 = vadd.f32 0.0, %v8152
      %v8154 = vpop.f32.mrb[0].mxu0
      %8155 = vdwg.mxu0
      %v8158 = vrot.slane %v6096, 5
      %v8159 = vrot.slane %v6097, 5
      %v8160 = vsel %vm6292, %v8158, %v8159
      %v8161 = vrot.slane %v6098, 5
      %v8162 = vsel %vm6292, %v8159, %v8161
      %8165 = vmatprep.subr.mxu0 0.0
      %8166 = vmatpush1.msra.mxu0 %v8160
      %8167 = vmatprep.subr.mxu0 0.0
      %8168 = vmatpush1.msra.mxu0 %v8162
      %8169 = vmatprep.subr.mxu0 0.0
      %8170 = vmatpush1.msra.mxu0 0.0
      %8171 = vmatprep.subr.mxu0 0.0
      %8172 = vmatpush1.msra.mxu0 0.0
      %8173 = vmatprep.subr.mxu0 0.0
      %8174 = vmatpush1.msra.mxu0 0.0
      %8175 = vmatprep.subr.mxu0 0.0
      %8176 = vmatpush1.msra.mxu0 0.0
      %8177 = vmatprep.subr.mxu0 0.0
      %8178 = vmatpush1.msra.mxu0 0.0
      %8179 = vmatprep.subr.mxu0 0.0
      %8180 = vmatpush1.msra.mxu0 0.0
      %8181 = vmatprep.subr.mxu0 0.0
      %8182 = vmatpush1.msra.mxu0 0.0
      %8183 = vmatprep.subr.mxu0 0.0
      %8184 = vmatpush1.msra.mxu0 0.0
      %8185 = vmatprep.subr.mxu0 0.0
      %8186 = vmatpush1.msra.mxu0 0.0
      %8187 = vmatprep.subr.mxu0 0.0
      %8188 = vmatpush1.msra.mxu0 0.0
      %8189 = vmatprep.subr.mxu0 0.0
      %8190 = vmatpush1.msra.mxu0 0.0
      %8191 = vmatprep.subr.mxu0 0.0
      %8192 = vmatpush1.msra.mxu0 0.0
      %8193 = vmatprep.subr.mxu0 0.0
      %8194 = vmatpush1.msra.mxu0 0.0
      %8195 = vmatprep.subr.mxu0 0.0
      %8196 = vmatpush1.msra.mxu0 0.0
      %8197 = vmatprep.subr.mxu0 0.0
      %8198 = vmatpush1.msra.mxu0 0.0
      %8199 = vmatprep.subr.mxu0 0.0
      %8200 = vmatpush1.msra.mxu0 0.0
      %8201 = vmatprep.subr.mxu0 0.0
      %8202 = vmatpush1.msra.mxu0 0.0
      %8203 = vmatprep.subr.mxu0 0.0
      %8204 = vmatpush1.msra.mxu0 0.0
      %8205 = vmatprep.subr.mxu0 0.0
      %8206 = vmatpush1.msra.mxu0 0.0
      %8207 = vmatprep.subr.mxu0 0.0
      %8208 = vmatpush1.msra.mxu0 0.0
      %8209 = vmatprep.subr.mxu0 0.0
      %8210 = vmatpush1.msra.mxu0 0.0
      %8211 = vmatprep.subr.mxu0 0.0
      %8212 = vmatpush1.msra.mxu0 0.0
      %8213 = vmatprep.subr.mxu0 0.0
      %8214 = vmatpush1.msra.mxu0 0.0
      %8215 = vmatprep.subr.mxu0 0.0
      %8216 = vmatpush1.msra.mxu0 0.0
      %8217 = vmatprep.subr.mxu0 0.0
      %8218 = vmatpush1.msra.mxu0 0.0
      %8219 = vmatprep.subr.mxu0 0.0
      %8220 = vmatpush1.msra.mxu0 0.0
      %8221 = vmatprep.subr.mxu0 0.0
      %8222 = vmatpush1.msra.mxu0 0.0
      %8223 = vmatprep.subr.mxu0 0.0
      %8224 = vmatpush1.msra.mxu0 0.0
      %8225 = vmatprep.subr.mxu0 0.0
      %8226 = vmatpush1.msra.mxu0 0.0
      %8227 = vmatprep.subr.mxu0 0.0
      %8228 = vmatpush1.msra.mxu0 0.0
      %8229 = vmatprep.mubr.f32.mxu0 0.0
      %8230 = vmatmul.mubr.f32.gmra.mrb[0].mxu0 %v6145
      %v8231 = vpop.f32.mrb[0].mxu0
      %v8232 = vadd.f32 0.0, %v8231
      %v8233 = vpop.f32.mrb[0].mxu0
      %8234 = vdwg.mxu0
      %8235 = vmatprep.subr.mxu0 0.0
      %8236 = vmatpush1.msra.mxu0 %v8160
      %8237 = vmatprep.subr.mxu0 0.0
      %8238 = vmatpush1.msra.mxu0 %v8162
      %8239 = vmatprep.subr.mxu0 0.0
      %8240 = vmatpush1.msra.mxu0 0.0
      %8241 = vmatprep.subr.mxu0 0.0
      %8242 = vmatpush1.msra.mxu0 0.0
      %8243 = vmatprep.subr.mxu0 0.0
      %8244 = vmatpush1.msra.mxu0 0.0
      %8245 = vmatprep.subr.mxu0 0.0
      %8246 = vmatpush1.msra.mxu0 0.0
      %8247 = vmatprep.subr.mxu0 0.0
      %8248 = vmatpush1.msra.mxu0 0.0
      %8249 = vmatprep.subr.mxu0 0.0
      %8250 = vmatpush1.msra.mxu0 0.0
      %8251 = vmatprep.subr.mxu0 0.0
      %8252 = vmatpush1.msra.mxu0 0.0
      %8253 = vmatprep.subr.mxu0 0.0
      %8254 = vmatpush1.msra.mxu0 0.0
      %8255 = vmatprep.subr.mxu0 0.0
      %8256 = vmatpush1.msra.mxu0 0.0
      %8257 = vmatprep.subr.mxu0 0.0
      %8258 = vmatpush1.msra.mxu0 0.0
      %8259 = vmatprep.subr.mxu0 0.0
      %8260 = vmatpush1.msra.mxu0 0.0
      %8261 = vmatprep.subr.mxu0 0.0
      %8262 = vmatpush1.msra.mxu0 0.0
      %8263 = vmatprep.subr.mxu0 0.0
      %8264 = vmatpush1.msra.mxu0 0.0
      %8265 = vmatprep.subr.mxu0 0.0
      %8266 = vmatpush1.msra.mxu0 0.0
      %8267 = vmatprep.subr.mxu0 0.0
      %8268 = vmatpush1.msra.mxu0 0.0
      %8269 = vmatprep.subr.mxu0 0.0
      %8270 = vmatpush1.msra.mxu0 0.0
      %8271 = vmatprep.subr.mxu0 0.0
      %8272 = vmatpush1.msra.mxu0 0.0
      %8273 = vmatprep.subr.mxu0 0.0
      %8274 = vmatpush1.msra.mxu0 0.0
      %8275 = vmatprep.subr.mxu0 0.0
      %8276 = vmatpush1.msra.mxu0 0.0
      %8277 = vmatprep.subr.mxu0 0.0
      %8278 = vmatpush1.msra.mxu0 0.0
      %8279 = vmatprep.subr.mxu0 0.0
      %8280 = vmatpush1.msra.mxu0 0.0
      %8281 = vmatprep.subr.mxu0 0.0
      %8282 = vmatpush1.msra.mxu0 0.0
      %8283 = vmatprep.subr.mxu0 0.0
      %8284 = vmatpush1.msra.mxu0 0.0
      %8285 = vmatprep.subr.mxu0 0.0
      %8286 = vmatpush1.msra.mxu0 0.0
      %8287 = vmatprep.subr.mxu0 0.0
      %8288 = vmatpush1.msra.mxu0 0.0
      %8289 = vmatprep.subr.mxu0 0.0
      %8290 = vmatpush1.msra.mxu0 0.0
      %8291 = vmatprep.subr.mxu0 0.0
      %8292 = vmatpush1.msra.mxu0 0.0
      %8293 = vmatprep.subr.mxu0 0.0
      %8294 = vmatpush1.msra.mxu0 0.0
      %8295 = vmatprep.subr.mxu0 0.0
      %8296 = vmatpush1.msra.mxu0 0.0
      %8297 = vmatprep.subr.mxu0 0.0
      %8298 = vmatpush1.msra.mxu0 0.0
      %8299 = vmatprep.mubr.f32.mxu0 0.0
      %8300 = vmatmul.mubr.f32.gmra.mrb[0].mxu0 %v6218
      %v8301 = vpop.f32.mrb[0].mxu0
      %v8302 = vadd.f32 0.0, %v8301
      %v8303 = vpop.f32.mrb[0].mxu0
      %8304 = vdwg.mxu0
      %v8305 = vmax.f32 %v8083, %v8153
      %v8306 = vmax.f32 %v8232, %v8302
      %vm8307 = vcmp.gt.f32.partialorder %v8153, %v8083
      %v8308 = vsel %vm8307, 1.0, 0.0
      %vm8309 = vcmp.gt.f32.partialorder %v8302, %v8232
      %v8310 = vsel %vm8309, 1.0, 0.0
      %vm8311 = vcmp.gt.f32.partialorder %v8306, %v8305
      %v8312 = vadd.f32 %v8310, 2.0
      %v8313 = vsel %vm8311, %v8312, %v8308
      %v8314 = vmax.f32 %v8305, %v8306
      %8315 = vst.msk [vmem:[%s394 + $0x47] sm:$0xff] %vm3137, %v8314
      %8316 = vst.msk [vmem:[%s399 + $0x47] sm:$0xff] %vm3137, %v8313
      %v8319 = vrot.slane %v6098, 7
      %v8320 = vrot.slane %v6099, 7
      %v8321 = vsel %vm6454, %v8319, %v8320
      %v8322 = vrot.slane %v6100, 7
      %v8323 = vsel %vm6454, %v8320, %v8322
      %8326 = vmatprep.subr.mxu0 0.0
      %8327 = vmatpush1.msra.mxu0 %v8321
      %8328 = vmatprep.subr.mxu0 0.0
      %8329 = vmatpush1.msra.mxu0 %v8323
      %8330 = vmatprep.subr.mxu0 0.0
      %8331 = vmatpush1.msra.mxu0 0.0
      %8332 = vmatprep.subr.mxu0 0.0
      %8333 = vmatpush1.msra.mxu0 0.0
      %8334 = vmatprep.subr.mxu0 0.0
      %8335 = vmatpush1.msra.mxu0 0.0
      %8336 = vmatprep.subr.mxu0 0.0
      %8337 = vmatpush1.msra.mxu0 0.0
      %8338 = vmatprep.subr.mxu0 0.0
      %8339 = vmatpush1.msra.mxu0 0.0
      %8340 = vmatprep.subr.mxu0 0.0
      %8341 = vmatpush1.msra.mxu0 0.0
      %8342 = vmatprep.subr.mxu0 0.0
      %8343 = vmatpush1.msra.mxu0 0.0
      %8344 = vmatprep.subr.mxu0 0.0
      %8345 = vmatpush1.msra.mxu0 0.0
      %8346 = vmatprep.subr.mxu0 0.0
      %8347 = vmatpush1.msra.mxu0 0.0
      %8348 = vmatprep.subr.mxu0 0.0
      %8349 = vmatpush1.msra.mxu0 0.0
      %8350 = vmatprep.subr.mxu0 0.0
      %8351 = vmatpush1.msra.mxu0 0.0
      %8352 = vmatprep.subr.mxu0 0.0
      %8353 = vmatpush1.msra.mxu0 0.0
      %8354 = vmatprep.subr.mxu0 0.0
      %8355 = vmatpush1.msra.mxu0 0.0
      %8356 = vmatprep.subr.mxu0 0.0
      %8357 = vmatpush1.msra.mxu0 0.0
      %8358 = vmatprep.subr.mxu0 0.0
      %8359 = vmatpush1.msra.mxu0 0.0
      %8360 = vmatprep.subr.mxu0 0.0
      %8361 = vmatpush1.msra.mxu0 0.0
      %8362 = vmatprep.subr.mxu0 0.0
      %8363 = vmatpush1.msra.mxu0 0.0
      %8364 = vmatprep.subr.mxu0 0.0
      %8365 = vmatpush1.msra.mxu0 0.0
      %8366 = vmatprep.subr.mxu0 0.0
      %8367 = vmatpush1.msra.mxu0 0.0
      %8368 = vmatprep.subr.mxu0 0.0
      %8369 = vmatpush1.msra.mxu0 0.0
      %8370 = vmatprep.subr.mxu0 0.0
      %8371 = vmatpush1.msra.mxu0 0.0
      %8372 = vmatprep.subr.mxu0 0.0
      %8373 = vmatpush1.msra.mxu0 0.0
      %8374 = vmatprep.subr.mxu0 0.0
      %8375 = vmatpush1.msra.mxu0 0.0
      %8376 = vmatprep.subr.mxu0 0.0
      %8377 = vmatpush1.msra.mxu0 0.0
      %8378 = vmatprep.subr.mxu0 0.0
      %8379 = vmatpush1.msra.mxu0 0.0
      %8380 = vmatprep.subr.mxu0 0.0
      %8381 = vmatpush1.msra.mxu0 0.0
      %8382 = vmatprep.subr.mxu0 0.0
      %8383 = vmatpush1.msra.mxu0 0.0
      %8384 = vmatprep.subr.mxu0 0.0
      %8385 = vmatpush1.msra.mxu0 0.0
      %8386 = vmatprep.subr.mxu0 0.0
      %8387 = vmatpush1.msra.mxu0 0.0
      %8388 = vmatprep.subr.mxu0 0.0
      %8389 = vmatpush1.msra.mxu0 0.0
      %8390 = vmatprep.mubr.f32.mxu0 0.0
      %8391 = vmatmul.mubr.f32.gmra.mrb[0].mxu0 %v6145
      %v8392 = vpop.f32.mrb[0].mxu0
      %v8393 = vadd.f32 0.0, %v8392
      %v8394 = vpop.f32.mrb[0].mxu0
      %8395 = vdwg.mxu0
      %8396 = vmatprep.subr.mxu0 0.0
      %8397 = vmatpush1.msra.mxu0 %v8321
      %8398 = vmatprep.subr.mxu0 0.0
      %8399 = vmatpush1.msra.mxu0 %v8323
      %8400 = vmatprep.subr.mxu0 0.0
      %8401 = vmatpush1.msra.mxu0 0.0
      %8402 = vmatprep.subr.mxu0 0.0
      %8403 = vmatpush1.msra.mxu0 0.0
      %8404 = vmatprep.subr.mxu0 0.0
      %8405 = vmatpush1.msra.mxu0 0.0
      %8406 = vmatprep.subr.mxu0 0.0
      %8407 = vmatpush1.msra.mxu0 0.0
      %8408 = vmatprep.subr.mxu0 0.0
      %8409 = vmatpush1.msra.mxu0 0.0
      %8410 = vmatprep.subr.mxu0 0.0
      %8411 = vmatpush1.msra.mxu0 0.0
      %8412 = vmatprep.subr.mxu0 0.0
      %8413 = vmatpush1.msra.mxu0 0.0
      %8414 = vmatprep.subr.mxu0 0.0
      %8415 = vmatpush1.msra.mxu0 0.0
      %8416 = vmatprep.subr.mxu0 0.0
      %8417 = vmatpush1.msra.mxu0 0.0
      %8418 = vmatprep.subr.mxu0 0.0
      %8419 = vmatpush1.msra.mxu0 0.0
      %8420 = vmatprep.subr.mxu0 0.0
      %8421 = vmatpush1.msra.mxu0 0.0
      %8422 = vmatprep.subr.mxu0 0.0
      %8423 = vmatpush1.msra.mxu0 0.0
      %8424 = vmatprep.subr.mxu0 0.0
      %8425 = vmatpush1.msra.mxu0 0.0
      %8426 = vmatprep.subr.mxu0 0.0
      %8427 = vmatpush1.msra.mxu0 0.0
      %8428 = vmatprep.subr.mxu0 0.0
      %8429 = vmatpush1.msra.mxu0 0.0
      %8430 = vmatprep.subr.mxu0 0.0
      %8431 = vmatpush1.msra.mxu0 0.0
      %8432 = vmatprep.subr.mxu0 0.0
      %8433 = vmatpush1.msra.mxu0 0.0
      %8434 = vmatprep.subr.mxu0 0.0
      %8435 = vmatpush1.msra.mxu0 0.0
      %8436 = vmatprep.subr.mxu0 0.0
      %8437 = vmatpush1.msra.mxu0 0.0
      %8438 = vmatprep.subr.mxu0 0.0
      %8439 = vmatpush1.msra.mxu0 0.0
      %8440 = vmatprep.subr.mxu0 0.0
      %8441 = vmatpush1.msra.mxu0 0.0
      %8442 = vmatprep.subr.mxu0 0.0
      %8443 = vmatpush1.msra.mxu0 0.0
      %8444 = vmatprep.subr.mxu0 0.0
      %8445 = vmatpush1.msra.mxu0 0.0
      %8446 = vmatprep.subr.mxu0 0.0
      %8447 = vmatpush1.msra.mxu0 0.0
      %8448 = vmatprep.subr.mxu0 0.0
      %8449 = vmatpush1.msra.mxu0 0.0
      %8450 = vmatprep.subr.mxu0 0.0
      %8451 = vmatpush1.msra.mxu0 0.0
      %8452 = vmatprep.subr.mxu0 0.0
      %8453 = vmatpush1.msra.mxu0 0.0
      %8454 = vmatprep.subr.mxu0 0.0
      %8455 = vmatpush1.msra.mxu0 0.0
      %8456 = vmatprep.subr.mxu0 0.0
      %8457 = vmatpush1.msra.mxu0 0.0
      %8458 = vmatprep.subr.mxu0 0.0
      %8459 = vmatpush1.msra.mxu0 0.0
      %8460 = vmatprep.mubr.f32.mxu0 0.0
      %8461 = vmatmul.mubr.f32.gmra.mrb[0].mxu0 %v6218
      %v8462 = vpop.f32.mrb[0].mxu0
      %v8463 = vadd.f32 0.0, %v8462
      %v8464 = vpop.f32.mrb[0].mxu0
      %8465 = vdwg.mxu0
      %v8469 = vrot.slane %v6101, 1
      %v8470 = vrot.slane %v6102, 1
      %v8471 = vsel %vm6605, %v8469, %v8470
      %v8472 = vrot.slane %v6103, 1
      %v8473 = vsel %vm6605, %v8470, %v8472
      %8476 = vmatprep.subr.mxu0 0.0
      %8477 = vmatpush1.msra.mxu0 %v8471
      %8478 = vmatprep.subr.mxu0 0.0
      %8479 = vmatpush1.msra.mxu0 %v8473
      %8480 = vmatprep.subr.mxu0 0.0
      %8481 = vmatpush1.msra.mxu0 0.0
      %8482 = vmatprep.subr.mxu0 0.0
      %8483 = vmatpush1.msra.mxu0 0.0
      %8484 = vmatprep.subr.mxu0 0.0
      %8485 = vmatpush1.msra.mxu0 0.0
      %8486 = vmatprep.subr.mxu0 0.0
      %8487 = vmatpush1.msra.mxu0 0.0
      %8488 = vmatprep.subr.mxu0 0.0
      %8489 = vmatpush1.msra.mxu0 0.0
      %8490 = vmatprep.subr.mxu0 0.0
      %8491 = vmatpush1.msra.mxu0 0.0
      %8492 = vmatprep.subr.mxu0 0.0
      %8493 = vmatpush1.msra.mxu0 0.0
      %8494 = vmatprep.subr.mxu0 0.0
      %8495 = vmatpush1.msra.mxu0 0.0
      %8496 = vmatprep.subr.mxu0 0.0
      %8497 = vmatpush1.msra.mxu0 0.0
      %8498 = vmatprep.subr.mxu0 0.0
      %8499 = vmatpush1.msra.mxu0 0.0
      %8500 = vmatprep.subr.mxu0 0.0
      %8501 = vmatpush1.msra.mxu0 0.0
      %8502 = vmatprep.subr.mxu0 0.0
      %8503 = vmatpush1.msra.mxu0 0.0
      %8504 = vmatprep.subr.mxu0 0.0
      %8505 = vmatpush1.msra.mxu0 0.0
      %8506 = vmatprep.subr.mxu0 0.0
      %8507 = vmatpush1.msra.mxu0 0.0
      %8508 = vmatprep.subr.mxu0 0.0
      %8509 = vmatpush1.msra.mxu0 0.0
      %8510 = vmatprep.subr.mxu0 0.0
      %8511 = vmatpush1.msra.mxu0 0.0
      %8512 = vmatprep.subr.mxu0 0.0
      %8513 = vmatpush1.msra.mxu0 0.0
      %8514 = vmatprep.subr.mxu0 0.0
      %8515 = vmatpush1.msra.mxu0 0.0
      %8516 = vmatprep.subr.mxu0 0.0
      %8517 = vmatpush1.msra.mxu0 0.0
      %8518 = vmatprep.subr.mxu0 0.0
      %8519 = vmatpush1.msra.mxu0 0.0
      %8520 = vmatprep.subr.mxu0 0.0
      %8521 = vmatpush1.msra.mxu0 0.0
      %8522 = vmatprep.subr.mxu0 0.0
      %8523 = vmatpush1.msra.mxu0 0.0
      %8524 = vmatprep.subr.mxu0 0.0
      %8525 = vmatpush1.msra.mxu0 0.0
      %8526 = vmatprep.subr.mxu0 0.0
      %8527 = vmatpush1.msra.mxu0 0.0
      %8528 = vmatprep.subr.mxu0 0.0
      %8529 = vmatpush1.msra.mxu0 0.0
      %8530 = vmatprep.subr.mxu0 0.0
      %8531 = vmatpush1.msra.mxu0 0.0
      %8532 = vmatprep.subr.mxu0 0.0
      %8533 = vmatpush1.msra.mxu0 0.0
      %8534 = vmatprep.subr.mxu0 0.0
      %8535 = vmatpush1.msra.mxu0 0.0
      %8536 = vmatprep.subr.mxu0 0.0
      %8537 = vmatpush1.msra.mxu0 0.0
      %8538 = vmatprep.subr.mxu0 0.0
      %8539 = vmatpush1.msra.mxu0 0.0
      %8540 = vmatprep.mubr.f32.mxu0 0.0
      %8541 = vmatmul.mubr.f32.gmra.mrb[0].mxu0 %v6145
      %v8542 = vpop.f32.mrb[0].mxu0
      %v8543 = vadd.f32 0.0, %v8542
      %v8544 = vpop.f32.mrb[0].mxu0
      %8545 = vdwg.mxu0
      %8546 = vmatprep.subr.mxu0 0.0
      %8547 = vmatpush1.msra.mxu0 %v8471
      %8548 = vmatprep.subr.mxu0 0.0
      %8549 = vmatpush1.msra.mxu0 %v8473
      %8550 = vmatprep.subr.mxu0 0.0
      %8551 = vmatpush1.msra.mxu0 0.0
      %8552 = vmatprep.subr.mxu0 0.0
      %8553 = vmatpush1.msra.mxu0 0.0
      %8554 = vmatprep.subr.mxu0 0.0
      %8555 = vmatpush1.msra.mxu0 0.0
      %8556 = vmatprep.subr.mxu0 0.0
      %8557 = vmatpush1.msra.mxu0 0.0
      %8558 = vmatprep.subr.mxu0 0.0
      %8559 = vmatpush1.msra.mxu0 0.0
      %8560 = vmatprep.subr.mxu0 0.0
      %8561 = vmatpush1.msra.mxu0 0.0
      %8562 = vmatprep.subr.mxu0 0.0
      %8563 = vmatpush1.msra.mxu0 0.0
      %8564 = vmatprep.subr.mxu0 0.0
      %8565 = vmatpush1.msra.mxu0 0.0
      %8566 = vmatprep.subr.mxu0 0.0
      %8567 = vmatpush1.msra.mxu0 0.0
      %8568 = vmatprep.subr.mxu0 0.0
      %8569 = vmatpush1.msra.mxu0 0.0
      %8570 = vmatprep.subr.mxu0 0.0
      %8571 = vmatpush1.msra.mxu0 0.0
      %8572 = vmatprep.subr.mxu0 0.0
      %8573 = vmatpush1.msra.mxu0 0.0
      %8574 = vmatprep.subr.mxu0 0.0
      %8575 = vmatpush1.msra.mxu0 0.0
      %8576 = vmatprep.subr.mxu0 0.0
      %8577 = vmatpush1.msra.mxu0 0.0
      %8578 = vmatprep.subr.mxu0 0.0
      %8579 = vmatpush1.msra.mxu0 0.0
      %8580 = vmatprep.subr.mxu0 0.0
      %8581 = vmatpush1.msra.mxu0 0.0
      %8582 = vmatprep.subr.mxu0 0.0
      %8583 = vmatpush1.msra.mxu0 0.0
      %8584 = vmatprep.subr.mxu0 0.0
      %8585 = vmatpush1.msra.mxu0 0.0
      %8586 = vmatprep.subr.mxu0 0.0
      %8587 = vmatpush1.msra.mxu0 0.0
      %8588 = vmatprep.subr.mxu0 0.0
      %8589 = vmatpush1.msra.mxu0 0.0
      %8590 = vmatprep.subr.mxu0 0.0
      %8591 = vmatpush1.msra.mxu0 0.0
      %8592 = vmatprep.subr.mxu0 0.0
      %8593 = vmatpush1.msra.mxu0 0.0
      %8594 = vmatprep.subr.mxu0 0.0
      %8595 = vmatpush1.msra.mxu0 0.0
      %8596 = vmatprep.subr.mxu0 0.0
      %8597 = vmatpush1.msra.mxu0 0.0
      %8598 = vmatprep.subr.mxu0 0.0
      %8599 = vmatpush1.msra.mxu0 0.0
      %8600 = vmatprep.subr.mxu0 0.0
      %8601 = vmatpush1.msra.mxu0 0.0
      %8602 = vmatprep.subr.mxu0 0.0
      %8603 = vmatpush1.msra.mxu0 0.0
      %8604 = vmatprep.subr.mxu0 0.0
      %8605 = vmatpush1.msra.mxu0 0.0
      %8606 = vmatprep.subr.mxu0 0.0
      %8607 = vmatpush1.msra.mxu0 0.0
      %8608 = vmatprep.subr.mxu0 0.0
      %8609 = vmatpush1.msra.mxu0 0.0
      %8610 = vmatprep.mubr.f32.mxu0 0.0
      %8611 = vmatmul.mubr.f32.gmra.mrb[0].mxu0 %v6218
      %v8612 = vpop.f32.mrb[0].mxu0
      %v8613 = vadd.f32 0.0, %v8612
      %v8614 = vpop.f32.mrb[0].mxu0
      %8615 = vdwg.mxu0
      %v8616 = vmax.f32 %v8393, %v8463
      %v8617 = vmax.f32 %v8543, %v8613
      %vm8618 = vcmp.gt.f32.partialorder %v8463, %v8393
      %v8619 = vsel %vm8618, 1.0, 0.0
      %vm8620 = vcmp.gt.f32.partialorder %v8613, %v8543
      %v8621 = vsel %vm8620, 1.0, 0.0
      %vm8622 = vcmp.gt.f32.partialorder %v8617, %v8616
      %v8623 = vadd.f32 %v8621, 2.0
      %v8624 = vsel %vm8622, %v8623, %v8619
      %v8625 = vmax.f32 %v8616, %v8617
      %8626 = vst.msk [vmem:[%s394 + $0x51] sm:$0xff] %vm3137, %v8625
      %8627 = vst.msk [vmem:[%s399 + $0x51] sm:$0xff] %vm3137, %v8624
      %p8628 = scmp.lt.s32.totalorder %s23, 1
      %s8629 = scalar_select %p8628, %s23, 1
      %s8630 = smul.addr %s8629, 13
      %s8631 = smul.addr %s8630, 8
      %s8632 = scalar_lea.vmem %s10, %s8631
      %p8633 = scmp.lt.s32.totalorder %s23, 1
      %s8634 = scalar_select %p8633, %s23, 1
      %s8635 = smul.addr %s8634, 13
      %s8636 = smul.addr %s8635, 8
      %s8637 = scalar_lea.vmem %s11, %s8636
      // Predicated region
      $region61: #{tpu_custom_call.1} parent=59 // pred_check
        %p8638 = pneg %p256
      $region62: #{tpu_custom_call.1} parent=59 // pred_check_branch
        %8640 = sbr.rel (%p8638) target = $region64
      $region63: #{tpu_custom_call.1} parent=59 // pred_region
        _
      $region64: #{tpu_custom_call.1} parent=59 // pred_fallthru
        _
      // Predicated region
      $region65: #{tpu_custom_call.1} parent=59 // pred_check
        %p8641 = pneg %p282
      $region66: #{tpu_custom_call.1} parent=59 // pred_check_branch
        %8643 = sbr.rel (%p8641) target = $region68
      $region67: #{tpu_custom_call.1} parent=59 // pred_region
        _
      $region68: #{tpu_custom_call.1} parent=59 // pred_fallthru
        _
    $region60: #{tpu_custom_call.1} parent=5 // pred_fallthru
      _
    %p8644 = scmp.le.s32.totalorder 2, %s18
    // Predicated region
    $region69: #{tpu_custom_call.1} parent=5 // pred_check
      %p8645 = pneg %p8644
    $region70: #{tpu_custom_call.1} parent=5 // pred_check_branch
      %8647 = sbr.rel (%p8645) target = $region72
    $region71: #{tpu_custom_call.1} parent=5 // pred_region
      %s8648 = ssub.s32 %s18, 2
      // Predicated region
      $region73: #{tpu_custom_call.1} parent=71 // pred_check
        %p8649 = pneg %p262
      $region74: #{tpu_custom_call.1} parent=71 // pred_check_branch
        %8651 = sbr.rel (%p8649) target = $region76
      $region75: #{tpu_custom_call.1} parent=71 // pred_region
        %p8652 = scmp.lt.s32.totalorder %s24, 1
        %s8653 = scalar_select %p8652, %s24, 1
        %s8654 = smul.addr %s8653, 13
        %s8655 = smul.addr %s8654, 8
        %s8656 = scalar_lea.vmem %s10, %s8655
      $region76: #{tpu_custom_call.1} parent=71 // pred_fallthru
        _
      // Predicated region
      $region77: #{tpu_custom_call.1} parent=71 // pred_check
        %p8657 = pneg %p288
      $region78: #{tpu_custom_call.1} parent=71 // pred_check_branch
        %8659 = sbr.rel (%p8657) target = $region80
      $region79: #{tpu_custom_call.1} parent=71 // pred_region
        %p8660 = scmp.lt.s32.totalorder %s24, 1
        %s8661 = scalar_select %p8660, %s24, 1
        %s8662 = smul.addr %s8661, 13
        %s8663 = smul.addr %s8662, 8
        %s8664 = scalar_lea.vmem %s11, %s8663
      $region80: #{tpu_custom_call.1} parent=71 // pred_fallthru
        _
    $region72: #{tpu_custom_call.1} parent=5 // pred_fallthru
      _
  $region6: #{tpu_custom_call.1} parent=0 // loop_footer
    %s22 = sadd.s32 1, %s18
  $region7: #{tpu_custom_call.1} parent=0 // loop_footer_branch
    %17 = sbr.rel target = $region3
  $region8: #{tpu_custom_call.1} parent=0 // loop_exit
    _

</llo_original>
